<compile_context>
chip_gen: v7x
topology: tpu7x:2x2x1
jax: 0.10.0
libtpu: 0.0.40
codegen_flags: <defaults>
</compile_context>

<pallas_src>
import numpy as np
import jax
import jax.numpy as jnp
from jax import lax
from jax.experimental import pallas as pl
from jax.experimental.pallas import tpu as pltpu

DEFAULT_3D_OFFSETS = np.array(
    [[-1, 0, 0], [0, -1, 0], [0, 0, -1], [0, -9, 0], [0, 0, -9],
     [0, -9, -9], [0, 9, -9], [0, -9, -4], [0, -4, -9], [0, 4, -9],
     [0, 9, -4], [-1, -1, 0], [-1, 0, -1], [0, -27, 0], [0, 0, -27]], int)

SIG = 0.1          # logistic_similarity default sigma (pass_offset=False)
PAD_VAL = 1.0
CLAMP_MIN = 1e-10  # reference clamp; only affects affinities below ~2e-10


def _make_kernel(offsets, true_spatial, padded_spatial, num_channels):
    D, H, W = true_spatial
    _, Hp, Wp = padded_spatial
    # 2 / (1 + exp(sq / (2 sig^2))) == 1 - tanh(sq / (4 sig^2))
    inv_4sig2 = 1.0 / (4.0 * SIG * SIG)

    def kernel(emb_ref, out_ref):
        # emb_ref: (C, D, Hp, Wp) — resident across the whole K axis.
        # out_ref: (D, Hp, Wp)    — one affinity slab per grid step.
        k = pl.program_id(1)
        for idx, (oz, oy, ox) in enumerate(offsets):

            @pl.when(k == idx)
            def _(oz=oz, oy=oy, ox=ox):
                in_range = all(abs(o) < s
                               for o, s in zip((oz, oy, ox), (D, H, W)))
                if not in_range:
                    # TODO(synk): reference also prints a runtime warning here;
                    # we only reproduce the all-zeros slab it returns.
                    out_ref[...] = jnp.zeros((D, Hp, Wp), dtype=out_ref.dtype)
                else:
                    # Depth shift via static z-slices of the resident ref:
                    # valid anchor planes are [z0, z0+Dz); the partner plane is
                    # anchor+oz.  No roll copy and no z-mask compares needed.
                    if oz < 0:
                        z0, Dz, zx, zy = -oz, D + oz, -oz, 0
                    elif oz > 0:
                        z0, Dz, zx, zy = 0, D - oz, 0, oz
                    else:
                        z0, Dz, zx, zy = 0, D, 0, 0

                    sh_y = (-oy) % Hp
                    sh_x = (-ox) % Wp

                    def add_channel_sq(xc, yc, sq):
                        if oy != 0:
                            yc = pltpu.roll(yc, sh_y, axis=1)   # sublane (XLU)
                        if ox != 0:
                            yc = pltpu.roll(yc, sh_x, axis=2)   # lane (XLU)
                        d = xc - yc
                        return sq + d * d

                    # TODO(synk): the reviewed ||x-y||^2 = s + roll(s) - 2*x·roll(x)
                    # restructure (~2C vs 3C VALU ops) is intentionally NOT used:
                    # it cancels catastrophically when x ~= roll(x) and the error
                    # is amplified ~50x before the tanh.
                    sq0 = jnp.zeros((Dz, Hp, Wp), jnp.float32)
                    if num_channels < 8:
                        # Small C: static unroll, purely static ref indexing.
                        sq = sq0
                        for c in range(num_channels):
                            if oz == 0:
                                xc = emb_ref[c].astype(jnp.float32)
                                yc = xc
                            else:
                                xc = emb_ref[c, zx:zx + Dz].astype(jnp.float32)
                                yc = emb_ref[c, zy:zy + Dz].astype(jnp.float32)
                            sq = add_channel_sq(xc, yc, sq)
                    else:
                        # Large C: fori_loop bounds vreg live ranges (a fully
                        # unrolled 15-offset x C body risks spills); a small
                        # unroll keeps LLO scheduling visibility.
                        def body(c, sq):
                            full = emb_ref[c].astype(jnp.float32)  # (D,Hp,Wp)
                            xc = full[zx:zx + Dz]
                            yc = full[zy:zy + Dz] if oz != 0 else xc
                            return add_channel_sq(xc, yc, sq)
                        sq = lax.fori_loop(0, num_channels, body, sq0, unroll=2)

                    # One EUP transcendental instead of exp + clamp + recip.
                    # (Reference's 1e-10 clamp only changes results < ~2e-10.)
                    aff = 1.0 - jnp.tanh(sq * inv_4sig2)

                    # H/W validity: single compare per shifted axis at
                    # (1, Hp, Wp) — D-times smaller than aff — broadcast by the
                    # select.  Only "partner in bounds" is needed: anchor
                    # positions beyond the true H/W extent are cropped later.
                    mask = None
                    if oy != 0:
                        iy = lax.broadcasted_iota(jnp.int32, (1, Hp, Wp), 1)
                        m = (iy >= -oy) if oy < 0 else (iy < H - oy)
                        mask = m
                    if ox != 0:
                        ix = lax.broadcasted_iota(jnp.int32, (1, Hp, Wp), 2)
                        m = (ix >= -ox) if ox < 0 else (ix < W - ox)
                        mask = m if mask is None else mask & m
                    if mask is not None:
                        aff = jnp.where(mask, aff, PAD_VAL)

                    # Lane-dense stores: the computed slab plus |oz| PAD planes
                    # (all whole (Hp, Wp) tiles; no masked partial stores).
                    if oz == 0:
                        out_ref[...] = aff.astype(out_ref.dtype)
                    else:
                        out_ref[pl.ds(z0, Dz), :, :] = aff.astype(out_ref.dtype)
                        noz = abs(oz)
                        pad_start = 0 if oz < 0 else D - oz
                        out_ref[pl.ds(pad_start, noz), :, :] = jnp.full(
                            (noz, Hp, Wp), PAD_VAL, out_ref.dtype)

    return kernel


def embedding_to_affinities_pallas(emb, offsets=DEFAULT_3D_OFFSETS, *,
                                   out_dtype=None, crop=True):
    """emb: (B, C, D, H, W) -> (B, K, D, H, W) logistic-similarity affinities.

    out_dtype: output dtype (default emb.dtype).  Math is f32; bf16 halves
        output HBM traffic on store-bound chips (v5e).
    crop: if False, return the (D, Hp, Wp)-padded slab (values at h >= H or
        w >= W are don't-care) so the consumer can fuse the crop and skip an
        extra read+write pass over the output.
    """
    B, C, D, H, W = emb.shape
    offs = [tuple(int(v) for v in o) for o in np.asarray(offsets)]
    K = len(offs)
    out_dtype = jnp.dtype(emb.dtype if out_dtype is None else out_dtype)

    # Dtype-aware padding of the minor spatial dims: 128 lanes; native sublane
    # tile is 8 for 32-bit, 16 for bf16, 32 for int8/fp8.
    in_itemsize = jnp.dtype(emb.dtype).itemsize
    sub = 8 * max(1, 4 // in_itemsize)
    Hp = -(-H // sub) * sub
    Wp = -(-W // 128) * 128
    emb_p = emb
    if (Hp, Wp) != (H, W):
        emb_p = jnp.pad(emb, ((0, 0), (0, 0), (0, 0), (0, Hp - H), (0, Wp - W)))

    kernel = _make_kernel(offs, (D, H, W), (D, Hp, Wp), C)

    # ---- generation-aware VMEM budget --------------------------------------
    try:
        vmem_cap = pltpu.get_tpu_info().vmem_capacity_bytes  # 128 MiB v5e/v6e, 64 MiB v7x
    except Exception:
        vmem_cap = 64 * 2**20                                 # conservative fallback
    budget = vmem_cap - (10 << 20)                            # ~10 MiB headroom

    in_block = C * D * Hp * Wp * in_itemsize
    out_block = D * Hp * Wp * out_dtype.itemsize
    # per-offset f32 temporaries (xc, yc, rolled, dlt, sq, aff) + small masks
    tmp_bytes = 6 * D * Hp * Wp * 4 + 2 * Hp * Wp * 4

    # The embedding block is K-resident (its block index only changes with b).
    # If double-buffering it would blow the budget (v7x), keep a single buffer:
    # the exposed DMA is < 1/K of a block fetch per K-sweep.
    in_bufs = 2
    if 2 * in_block + 2 * out_block + tmp_bytes > budget:
        in_bufs = 1
    in_spec_kwargs = {} if in_bufs == 2 else {"pipeline_mode": pl.Buffered(1)}
    # TODO(synk): if in_block + 2*out_block still exceeds the budget, add a
    # D-axis grid dimension with a |oz| <= 1 halo instead of raising the limit.

    need = in_bufs * in_block + 2 * out_block + tmp_bytes
    vmem_limit = int(min(budget, max(need, 32 << 20)))

    # Megacore: split the batch so each core fetches its own input block once.
    # Only when B == 1 let the cores split K (duplicated input fetches).
    dims = ("parallel", "arbitrary") if B > 1 else ("arbitrary", "parallel")

    out_p = pl.pallas_call(
        kernel,
        out_shape=jax.ShapeDtypeStruct((B, K, D, Hp, Wp), out_dtype),
        grid=(B, K),
        in_specs=[pl.BlockSpec((None, C, D, Hp, Wp),
                               lambda b, k: (b, 0, 0, 0, 0),
                               **in_spec_kwargs)],
        out_specs=pl.BlockSpec((None, None, D, Hp, Wp),
                               lambda b, k: (b, k, 0, 0, 0)),
        compiler_params=pltpu.CompilerParams(
            dimension_semantics=dims,
            vmem_limit_bytes=vmem_limit),
    )(emb_p)

    if crop and (Hp, Wp) != (H, W):
        out_p = out_p[..., :H, :W]
    return out_p


def _reference_numpy(emb, offsets):
    """Pure numpy port of embedding_to_affinities with logistic_similarity."""
    B, C, D, H, W = emb.shape
    out = np.zeros((B, len(offsets), D, H, W), np.float32)

    def sl(o):
        if o == 0:
            return slice(None)
        return slice(o, None) if o > 0 else slice(0, o)

    for k, off in enumerate(offsets):
        oz, oy, ox = [int(v) for v in off]
        if not all(abs(o) < s for o, s in zip((oz, oy, ox), (D, H, W))):
            continue  # zeros slab
        s1 = tuple(sl(-o) for o in (oz, oy, ox))
        s2 = tuple(sl(o) for o in (oz, oy, ox))
        x = emb[(slice(None), slice(None)) + s1]
        y = emb[(slice(None), slice(None)) + s2]
        sq = ((x - y) ** 2).sum(axis=1)
        e = np.maximum(np.exp(-sq / (2.0 * SIG * SIG)), CLAMP_MIN)
        aff = 2.0 / (1.0 + 1.0 / e)
        slab = np.full((B, D, H, W), PAD_VAL, np.float32)
        slab[(slice(None),) + s1] = aff
        out[:, k] = slab
    return out


if __name__ == "__main__":
    key = jax.random.PRNGKey(0)
    k1, k2 = jax.random.split(key)

    # Case 1: every default-3D offset fits (|27| < 32, |1| < 4).
    B, C, D, H, W = 2, 4, 4, 32, 32
    emb = 0.1 * jax.random.normal(k1, (B, C, D, H, W), dtype=jnp.float32)
    out = jax.block_until_ready(embedding_to_affinities_pallas(emb))
    ref = _reference_numpy(np.asarray(emb), DEFAULT_3D_OFFSETS)
    assert out.shape == (B, len(DEFAULT_3D_OFFSETS), D, H, W), out.shape
    np.testing.assert_allclose(np.asarray(out), ref, rtol=5e-3, atol=5e-3)

    # Case 2: non-tile-aligned H/W plus offsets larger than the image
    # (|27| >= 20 -> all-zero slabs): exercises padding, crop and the
    # out-of-range branch.
    B2, C2, D2, H2, W2 = 1, 2, 3, 20, 20
    emb2 = 0.1 * jax.random.normal(k2, (B2, C2, D2, H2, W2), dtype=jnp.float32)
    out2 = jax.block_until_ready(embedding_to_affinities_pallas(emb2))
    ref2 = _reference_numpy(np.asarray(emb2), DEFAULT_3D_OFFSETS)
    assert out2.shape == (B2, len(DEFAULT_3D_OFFSETS), D2, H2, W2), out2.shape
    np.testing.assert_allclose(np.asarray(out2), ref2, rtol=5e-3, atol=5e-3)

    print("KERNEL_OK")
</pallas_src>

<mosaic_0001>
module attributes {stable_mosaic.version = 11 : i64} {
  func.func @kernel(%arg0: i32, %arg1: i32, %arg2: memref<1x4x4x32x128xf32, #tpu.memory_space<vmem>>, %arg3: memref<1x1x4x32x128xf32, #tpu.memory_space<vmem>>) attributes {dimension_semantics = [#tpu.dimension_semantics<parallel>, #tpu.dimension_semantics<arbitrary>], iteration_bounds = array<i64: 2, 15>, scalar_prefetch = 0 : i64, scratch_operands = 0 : i64, tpu.core_type = #tpu.core_type<tc>, window_params = [{transform_indices = @transform_0, window_bounds = array<i64: 1, 4, 4, 32, 128>}, {transform_indices = @transform_1, window_bounds = array<i64: 1, 1, 4, 32, 128>}]} {
    %c0_i32 = arith.constant 0 : i32
    %0 = arith.cmpi eq, %arg1, %c0_i32 : i32
    %1 = arith.extui %0 : i1 to i32
    %c0_i32_0 = arith.constant 0 : i32
    %2 = arith.cmpi ne, %1, %c0_i32_0 : i32
    scf.if %2 {
      %cst = arith.constant 0.000000e+00 : f32
      %45 = vector.broadcast %cst : f32 to vector<3x32x128xf32>
      %c0 = arith.constant 0 : index
      %c0_15 = arith.constant 0 : index
      %c1 = arith.constant 1 : index
      %c0_16 = arith.constant 0 : index
      %c0_17 = arith.constant 0 : index
      %46 = vector.load %arg2[%c0, %c0_15, %c1, %c0_16, %c0_17] : memref<1x4x4x32x128xf32, #tpu.memory_space<vmem>>, vector<1x1x3x32x128xf32>
      %47 = vector.shape_cast %46 : vector<1x1x3x32x128xf32> to vector<3x32x128xf32>
      %c0_18 = arith.constant 0 : index
      %c0_19 = arith.constant 0 : index
      %c0_20 = arith.constant 0 : index
      %c0_21 = arith.constant 0 : index
      %c0_22 = arith.constant 0 : index
      %48 = vector.load %arg2[%c0_18, %c0_19, %c0_20, %c0_21, %c0_22] : memref<1x4x4x32x128xf32, #tpu.memory_space<vmem>>, vector<1x1x3x32x128xf32>
      %49 = vector.shape_cast %48 : vector<1x1x3x32x128xf32> to vector<3x32x128xf32>
      %50 = arith.subf %47, %49 : vector<3x32x128xf32>
      %51 = arith.mulf %50, %50 : vector<3x32x128xf32>
      %52 = arith.addf %45, %51 : vector<3x32x128xf32>
      %c0_23 = arith.constant 0 : index
      %c1_24 = arith.constant 1 : index
      %c1_25 = arith.constant 1 : index
      %c0_26 = arith.constant 0 : index
      %c0_27 = arith.constant 0 : index
      %53 = vector.load %arg2[%c0_23, %c1_24, %c1_25, %c0_26, %c0_27] : memref<1x4x4x32x128xf32, #tpu.memory_space<vmem>>, vector<1x1x3x32x128xf32>
      %54 = vector.shape_cast %53 : vector<1x1x3x32x128xf32> to vector<3x32x128xf32>
      %c0_28 = arith.constant 0 : index
      %c1_29 = arith.constant 1 : index
      %c0_30 = arith.constant 0 : index
      %c0_31 = arith.constant 0 : index
      %c0_32 = arith.constant 0 : index
      %55 = vector.load %arg2[%c0_28, %c1_29, %c0_30, %c0_31, %c0_32] : memref<1x4x4x32x128xf32, #tpu.memory_space<vmem>>, vector<1x1x3x32x128xf32>
      %56 = vector.shape_cast %55 : vector<1x1x3x32x128xf32> to vector<3x32x128xf32>
      %57 = arith.subf %54, %56 : vector<3x32x128xf32>
      %58 = arith.mulf %57, %57 : vector<3x32x128xf32>
      %59 = arith.addf %52, %58 : vector<3x32x128xf32>
      %c0_33 = arith.constant 0 : index
      %c2 = arith.constant 2 : index
      %c1_34 = arith.constant 1 : index
      %c0_35 = arith.constant 0 : index
      %c0_36 = arith.constant 0 : index
      %60 = vector.load %arg2[%c0_33, %c2, %c1_34, %c0_35, %c0_36] : memref<1x4x4x32x128xf32, #tpu.memory_space<vmem>>, vector<1x1x3x32x128xf32>
      %61 = vector.shape_cast %60 : vector<1x1x3x32x128xf32> to vector<3x32x128xf32>
      %c0_37 = arith.constant 0 : index
      %c2_38 = arith.constant 2 : index
      %c0_39 = arith.constant 0 : index
      %c0_40 = arith.constant 0 : index
      %c0_41 = arith.constant 0 : index
      %62 = vector.load %arg2[%c0_37, %c2_38, %c0_39, %c0_40, %c0_41] : memref<1x4x4x32x128xf32, #tpu.memory_space<vmem>>, vector<1x1x3x32x128xf32>
      %63 = vector.shape_cast %62 : vector<1x1x3x32x128xf32> to vector<3x32x128xf32>
      %64 = arith.subf %61, %63 : vector<3x32x128xf32>
      %65 = arith.mulf %64, %64 : vector<3x32x128xf32>
      %66 = arith.addf %59, %65 : vector<3x32x128xf32>
      %c0_42 = arith.constant 0 : index
      %c3 = arith.constant 3 : index
      %c1_43 = arith.constant 1 : index
      %c0_44 = arith.constant 0 : index
      %c0_45 = arith.constant 0 : index
      %67 = vector.load %arg2[%c0_42, %c3, %c1_43, %c0_44, %c0_45] : memref<1x4x4x32x128xf32, #tpu.memory_space<vmem>>, vector<1x1x3x32x128xf32>
      %68 = vector.shape_cast %67 : vector<1x1x3x32x128xf32> to vector<3x32x128xf32>
      %c0_46 = arith.constant 0 : index
      %c3_47 = arith.constant 3 : index
      %c0_48 = arith.constant 0 : index
      %c0_49 = arith.constant 0 : index
      %c0_50 = arith.constant 0 : index
      %69 = vector.load %arg2[%c0_46, %c3_47, %c0_48, %c0_49, %c0_50] : memref<1x4x4x32x128xf32, #tpu.memory_space<vmem>>, vector<1x1x3x32x128xf32>
      %70 = vector.shape_cast %69 : vector<1x1x3x32x128xf32> to vector<3x32x128xf32>
      %71 = arith.subf %68, %70 : vector<3x32x128xf32>
      %72 = arith.mulf %71, %71 : vector<3x32x128xf32>
      %73 = arith.addf %66, %72 : vector<3x32x128xf32>
      %cst_51 = arith.constant 2.500000e+01 : f32
      %74 = vector.broadcast %cst_51 : f32 to vector<3x32x128xf32>
      %75 = arith.mulf %73, %74 : vector<3x32x128xf32>
      %76 = math.tanh %75 : vector<3x32x128xf32>
      %cst_52 = arith.constant 1.000000e+00 : f32
      %77 = vector.broadcast %cst_52 : f32 to vector<3x32x128xf32>
      %78 = arith.subf %77, %76 : vector<3x32x128xf32>
      %c0_53 = arith.constant 0 : index
      %c0_54 = arith.constant 0 : index
      %c1_55 = arith.constant 1 : index
      %c0_56 = arith.constant 0 : index
      %c0_57 = arith.constant 0 : index
      %79 = vector.load %arg3[%c0_53, %c0_54, %c1_55, %c0_56, %c0_57] : memref<1x1x4x32x128xf32, #tpu.memory_space<vmem>>, vector<1x1x3x32x128xf32>
      %80 = vector.shape_cast %79 : vector<1x1x3x32x128xf32> to vector<3x32x128xf32>
      %81 = vector.shape_cast %78 : vector<3x32x128xf32> to vector<1x1x3x32x128xf32>
      tpu.vector_store %arg3[%c0_53, %c0_54, %c1_55, %c0_56, %c0_57], %81 {strides = array<i32>} : memref<1x1x4x32x128xf32, #tpu.memory_space<vmem>>, vector<1x1x3x32x128xf32>,
      %cst_58 = arith.constant 1.000000e+00 : f32
      %82 = vector.broadcast %cst_58 : f32 to vector<1x32x128xf32>
      %c0_59 = arith.constant 0 : index
      %c0_60 = arith.constant 0 : index
      %c0_61 = arith.constant 0 : index
      %c0_62 = arith.constant 0 : index
      %c0_63 = arith.constant 0 : index
      %83 = vector.load %arg3[%c0_59, %c0_60, %c0_61, %c0_62, %c0_63] : memref<1x1x4x32x128xf32, #tpu.memory_space<vmem>>, vector<1x1x1x32x128xf32>
      %84 = vector.shape_cast %83 : vector<1x1x1x32x128xf32> to vector<1x32x128xf32>
      %85 = vector.shape_cast %82 : vector<1x32x128xf32> to vector<1x1x1x32x128xf32>
      tpu.vector_store %arg3[%c0_59, %c0_60, %c0_61, %c0_62, %c0_63], %85 {strides = array<i32>} : memref<1x1x4x32x128xf32, #tpu.memory_space<vmem>>, vector<1x1x1x32x128xf32>,
    } else {
    }
    %c1_i32 = arith.constant 1 : i32
    %3 = arith.cmpi eq, %arg1, %c1_i32 : i32
    %4 = arith.extui %3 : i1 to i32
    %c0_i32_1 = arith.constant 0 : i32
    %5 = arith.cmpi ne, %4, %c0_i32_1 : i32
    scf.if %5 {
      %cst = arith.constant 0.000000e+00 : f32
      %45 = vector.broadcast %cst : f32 to vector<4x32x128xf32>
      %c0 = arith.constant 0 : index
      %c0_15 = arith.constant 0 : index
      %c0_16 = arith.constant 0 : index
      %c0_17 = arith.constant 0 : index
      %c0_18 = arith.constant 0 : index
      %46 = vector.load %arg2[%c0, %c0_15, %c0_16, %c0_17, %c0_18] : memref<1x4x4x32x128xf32, #tpu.memory_space<vmem>>, vector<1x1x4x32x128xf32>
      %47 = vector.shape_cast %46 : vector<1x1x4x32x128xf32> to vector<4x32x128xf32>
      %c1_i32_19 = arith.constant 1 : i32
      %48 = tpu.dynamic_rotate %47 by %c1_i32_19 dim 1 : vector<4x32x128xf32>, i32 -> vector<4x32x128xf32>
      %49 = arith.subf %47, %48 : vector<4x32x128xf32>
      %50 = arith.mulf %49, %49 : vector<4x32x128xf32>
      %51 = arith.addf %45, %50 : vector<4x32x128xf32>
      %c0_20 = arith.constant 0 : index
      %c1 = arith.constant 1 : index
      %c0_21 = arith.constant 0 : index
      %c0_22 = arith.constant 0 : index
      %c0_23 = arith.constant 0 : index
      %52 = vector.load %arg2[%c0_20, %c1, %c0_21, %c0_22, %c0_23] : memref<1x4x4x32x128xf32, #tpu.memory_space<vmem>>, vector<1x1x4x32x128xf32>
      %53 = vector.shape_cast %52 : vector<1x1x4x32x128xf32> to vector<4x32x128xf32>
      %c1_i32_24 = arith.constant 1 : i32
      %54 = tpu.dynamic_rotate %53 by %c1_i32_24 dim 1 : vector<4x32x128xf32>, i32 -> vector<4x32x128xf32>
      %55 = arith.subf %53, %54 : vector<4x32x128xf32>
      %56 = arith.mulf %55, %55 : vector<4x32x128xf32>
      %57 = arith.addf %51, %56 : vector<4x32x128xf32>
      %c0_25 = arith.constant 0 : index
      %c2 = arith.constant 2 : index
      %c0_26 = arith.constant 0 : index
      %c0_27 = arith.constant 0 : index
      %c0_28 = arith.constant 0 : index
      %58 = vector.load %arg2[%c0_25, %c2, %c0_26, %c0_27, %c0_28] : memref<1x4x4x32x128xf32, #tpu.memory_space<vmem>>, vector<1x1x4x32x128xf32>
      %59 = vector.shape_cast %58 : vector<1x1x4x32x128xf32> to vector<4x32x128xf32>
      %c1_i32_29 = arith.constant 1 : i32
      %60 = tpu.dynamic_rotate %59 by %c1_i32_29 dim 1 : vector<4x32x128xf32>, i32 -> vector<4x32x128xf32>
      %61 = arith.subf %59, %60 : vector<4x32x128xf32>
      %62 = arith.mulf %61, %61 : vector<4x32x128xf32>
      %63 = arith.addf %57, %62 : vector<4x32x128xf32>
      %c0_30 = arith.constant 0 : index
      %c3 = arith.constant 3 : index
      %c0_31 = arith.constant 0 : index
      %c0_32 = arith.constant 0 : index
      %c0_33 = arith.constant 0 : index
      %64 = vector.load %arg2[%c0_30, %c3, %c0_31, %c0_32, %c0_33] : memref<1x4x4x32x128xf32, #tpu.memory_space<vmem>>, vector<1x1x4x32x128xf32>
      %65 = vector.shape_cast %64 : vector<1x1x4x32x128xf32> to vector<4x32x128xf32>
      %c1_i32_34 = arith.constant 1 : i32
      %66 = tpu.dynamic_rotate %65 by %c1_i32_34 dim 1 : vector<4x32x128xf32>, i32 -> vector<4x32x128xf32>
      %67 = arith.subf %65, %66 : vector<4x32x128xf32>
      %68 = arith.mulf %67, %67 : vector<4x32x128xf32>
      %69 = arith.addf %63, %68 : vector<4x32x128xf32>
      %cst_35 = arith.constant 2.500000e+01 : f32
      %70 = vector.broadcast %cst_35 : f32 to vector<4x32x128xf32>
      %71 = arith.mulf %69, %70 : vector<4x32x128xf32>
      %72 = math.tanh %71 : vector<4x32x128xf32>
      %cst_36 = arith.constant 1.000000e+00 : f32
      %73 = vector.broadcast %cst_36 : f32 to vector<4x32x128xf32>
      %74 = arith.subf %73, %72 : vector<4x32x128xf32>
      %75 = tpu.iota {dimensions = array<i32: 1>} : vector<1x32x128xi32>
      %c1_i32_37 = arith.constant 1 : i32
      %76 = vector.broadcast %c1_i32_37 : i32 to vector<1x32x128xi32>
      %77 = arith.cmpi sge, %75, %76 : vector<1x32x128xi32>
      %cst_38 = arith.constant 1.000000e+00 : f32
      %78 = vector.shape_cast %77 : vector<1x32x128xi1> to vector<1x32x128xi1>
      %79 = vector.broadcast %78 : vector<1x32x128xi1> to vector<4x32x128xi1>
      %80 = vector.broadcast %cst_38 : f32 to vector<4x32x128xf32>
      %81 = arith.select %79, %74, %80 : vector<4x32x128xi1>, vector<4x32x128xf32>
      %c0_39 = arith.constant 0 : index
      %c0_40 = arith.constant 0 : index
      %c0_41 = arith.constant 0 : index
      %c0_42 = arith.constant 0 : index
      %c0_43 = arith.constant 0 : index
      %82 = vector.load %arg3[%c0_39, %c0_40, %c0_41, %c0_42, %c0_43] : memref<1x1x4x32x128xf32, #tpu.memory_space<vmem>>, vector<1x1x4x32x128xf32>
      %83 = vector.shape_cast %82 : vector<1x1x4x32x128xf32> to vector<4x32x128xf32>
      %84 = vector.shape_cast %81 : vector<4x32x128xf32> to vector<1x1x4x32x128xf32>
      tpu.vector_store %arg3[%c0_39, %c0_40, %c0_41, %c0_42, %c0_43], %84 {strides = array<i32>} : memref<1x1x4x32x128xf32, #tpu.memory_space<vmem>>, vector<1x1x4x32x128xf32>,
    } else {
    }
    %c2_i32 = arith.constant 2 : i32
    %6 = arith.cmpi eq, %arg1, %c2_i32 : i32
    %7 = arith.extui %6 : i1 to i32
    %c0_i32_2 = arith.constant 0 : i32
    %8 = arith.cmpi ne, %7, %c0_i32_2 : i32
    scf.if %8 {
      %cst = arith.constant 0.000000e+00 : f32
      %45 = vector.broadcast %cst : f32 to vector<4x32x128xf32>
      %c0 = arith.constant 0 : index
      %c0_15 = arith.constant 0 : index
      %c0_16 = arith.constant 0 : index
      %c0_17 = arith.constant 0 : index
      %c0_18 = arith.constant 0 : index
      %46 = vector.load %arg2[%c0, %c0_15, %c0_16, %c0_17, %c0_18] : memref<1x4x4x32x128xf32, #tpu.memory_space<vmem>>, vector<1x1x4x32x128xf32>
      %47 = vector.shape_cast %46 : vector<1x1x4x32x128xf32> to vector<4x32x128xf32>
      %c1_i32_19 = arith.constant 1 : i32
      %48 = tpu.dynamic_rotate %47 by %c1_i32_19 dim 2 : vector<4x32x128xf32>, i32 -> vector<4x32x128xf32>
      %49 = arith.subf %47, %48 : vector<4x32x128xf32>
      %50 = arith.mulf %49, %49 : vector<4x32x128xf32>
      %51 = arith.addf %45, %50 : vector<4x32x128xf32>
      %c0_20 = arith.constant 0 : index
      %c1 = arith.constant 1 : index
      %c0_21 = arith.constant 0 : index
      %c0_22 = arith.constant 0 : index
      %c0_23 = arith.constant 0 : index
      %52 = vector.load %arg2[%c0_20, %c1, %c0_21, %c0_22, %c0_23] : memref<1x4x4x32x128xf32, #tpu.memory_space<vmem>>, vector<1x1x4x32x128xf32>
      %53 = vector.shape_cast %52 : vector<1x1x4x32x128xf32> to vector<4x32x128xf32>
      %c1_i32_24 = arith.constant 1 : i32
      %54 = tpu.dynamic_rotate %53 by %c1_i32_24 dim 2 : vector<4x32x128xf32>, i32 -> vector<4x32x128xf32>
      %55 = arith.subf %53, %54 : vector<4x32x128xf32>
      %56 = arith.mulf %55, %55 : vector<4x32x128xf32>
      %57 = arith.addf %51, %56 : vector<4x32x128xf32>
      %c0_25 = arith.constant 0 : index
      %c2 = arith.constant 2 : index
      %c0_26 = arith.constant 0 : index
      %c0_27 = arith.constant 0 : index
      %c0_28 = arith.constant 0 : index
      %58 = vector.load %arg2[%c0_25, %c2, %c0_26, %c0_27, %c0_28] : memref<1x4x4x32x128xf32, #tpu.memory_space<vmem>>, vector<1x1x4x32x128xf32>
      %59 = vector.shape_cast %58 : vector<1x1x4x32x128xf32> to vector<4x32x128xf32>
      %c1_i32_29 = arith.constant 1 : i32
      %60 = tpu.dynamic_rotate %59 by %c1_i32_29 dim 2 : vector<4x32x128xf32>, i32 -> vector<4x32x128xf32>
      %61 = arith.subf %59, %60 : vector<4x32x128xf32>
      %62 = arith.mulf %61, %61 : vector<4x32x128xf32>
      %63 = arith.addf %57, %62 : vector<4x32x128xf32>
      %c0_30 = arith.constant 0 : index
      %c3 = arith.constant 3 : index
      %c0_31 = arith.constant 0 : index
      %c0_32 = arith.constant 0 : index
      %c0_33 = arith.constant 0 : index
      %64 = vector.load %arg2[%c0_30, %c3, %c0_31, %c0_32, %c0_33] : memref<1x4x4x32x128xf32, #tpu.memory_space<vmem>>, vector<1x1x4x32x128xf32>
      %65 = vector.shape_cast %64 : vector<1x1x4x32x128xf32> to vector<4x32x128xf32>
      %c1_i32_34 = arith.constant 1 : i32
      %66 = tpu.dynamic_rotate %65 by %c1_i32_34 dim 2 : vector<4x32x128xf32>, i32 -> vector<4x32x128xf32>
      %67 = arith.subf %65, %66 : vector<4x32x128xf32>
      %68 = arith.mulf %67, %67 : vector<4x32x128xf32>
      %69 = arith.addf %63, %68 : vector<4x32x128xf32>
      %cst_35 = arith.constant 2.500000e+01 : f32
      %70 = vector.broadcast %cst_35 : f32 to vector<4x32x128xf32>
      %71 = arith.mulf %69, %70 : vector<4x32x128xf32>
      %72 = math.tanh %71 : vector<4x32x128xf32>
      %cst_36 = arith.constant 1.000000e+00 : f32
      %73 = vector.broadcast %cst_36 : f32 to vector<4x32x128xf32>
      %74 = arith.subf %73, %72 : vector<4x32x128xf32>
      %75 = tpu.iota {dimensions = array<i32: 2>} : vector<1x32x128xi32>
      %c1_i32_37 = arith.constant 1 : i32
      %76 = vector.broadcast %c1_i32_37 : i32 to vector<1x32x128xi32>
      %77 = arith.cmpi sge, %75, %76 : vector<1x32x128xi32>
      %cst_38 = arith.constant 1.000000e+00 : f32
      %78 = vector.shape_cast %77 : vector<1x32x128xi1> to vector<1x32x128xi1>
      %79 = vector.broadcast %78 : vector<1x32x128xi1> to vector<4x32x128xi1>
      %80 = vector.broadcast %cst_38 : f32 to vector<4x32x128xf32>
      %81 = arith.select %79, %74, %80 : vector<4x32x128xi1>, vector<4x32x128xf32>
      %c0_39 = arith.constant 0 : index
      %c0_40 = arith.constant 0 : index
      %c0_41 = arith.constant 0 : index
      %c0_42 = arith.constant 0 : index
      %c0_43 = arith.constant 0 : index
      %82 = vector.load %arg3[%c0_39, %c0_40, %c0_41, %c0_42, %c0_43] : memref<1x1x4x32x128xf32, #tpu.memory_space<vmem>>, vector<1x1x4x32x128xf32>
      %83 = vector.shape_cast %82 : vector<1x1x4x32x128xf32> to vector<4x32x128xf32>
      %84 = vector.shape_cast %81 : vector<4x32x128xf32> to vector<1x1x4x32x128xf32>
      tpu.vector_store %arg3[%c0_39, %c0_40, %c0_41, %c0_42, %c0_43], %84 {strides = array<i32>} : memref<1x1x4x32x128xf32, #tpu.memory_space<vmem>>, vector<1x1x4x32x128xf32>,
    } else {
    }
    %c3_i32 = arith.constant 3 : i32
    %9 = arith.cmpi eq, %arg1, %c3_i32 : i32
    %10 = arith.extui %9 : i1 to i32
    %c0_i32_3 = arith.constant 0 : i32
    %11 = arith.cmpi ne, %10, %c0_i32_3 : i32
    scf.if %11 {
      %cst = arith.constant 0.000000e+00 : f32
      %45 = vector.broadcast %cst : f32 to vector<4x32x128xf32>
      %c0 = arith.constant 0 : index
      %c0_15 = arith.constant 0 : index
      %c0_16 = arith.constant 0 : index
      %c0_17 = arith.constant 0 : index
      %c0_18 = arith.constant 0 : index
      %46 = vector.load %arg2[%c0, %c0_15, %c0_16, %c0_17, %c0_18] : memref<1x4x4x32x128xf32, #tpu.memory_space<vmem>>, vector<1x1x4x32x128xf32>
      %47 = vector.shape_cast %46 : vector<1x1x4x32x128xf32> to vector<4x32x128xf32>
      %c9_i32_19 = arith.constant 9 : i32
      %48 = tpu.dynamic_rotate %47 by %c9_i32_19 dim 1 : vector<4x32x128xf32>, i32 -> vector<4x32x128xf32>
      %49 = arith.subf %47, %48 : vector<4x32x128xf32>
      %50 = arith.mulf %49, %49 : vector<4x32x128xf32>
      %51 = arith.addf %45, %50 : vector<4x32x128xf32>
      %c0_20 = arith.constant 0 : index
      %c1 = arith.constant 1 : index
      %c0_21 = arith.constant 0 : index
      %c0_22 = arith.constant 0 : index
      %c0_23 = arith.constant 0 : index
      %52 = vector.load %arg2[%c0_20, %c1, %c0_21, %c0_22, %c0_23] : memref<1x4x4x32x128xf32, #tpu.memory_space<vmem>>, vector<1x1x4x32x128xf32>
      %53 = vector.shape_cast %52 : vector<1x1x4x32x128xf32> to vector<4x32x128xf32>
      %c9_i32_24 = arith.constant 9 : i32
      %54 = tpu.dynamic_rotate %53 by %c9_i32_24 dim 1 : vector<4x32x128xf32>, i32 -> vector<4x32x128xf32>
      %55 = arith.subf %53, %54 : vector<4x32x128xf32>
      %56 = arith.mulf %55, %55 : vector<4x32x128xf32>
      %57 = arith.addf %51, %56 : vector<4x32x128xf32>
      %c0_25 = arith.constant 0 : index
      %c2 = arith.constant 2 : index
      %c0_26 = arith.constant 0 : index
      %c0_27 = arith.constant 0 : index
      %c0_28 = arith.constant 0 : index
      %58 = vector.load %arg2[%c0_25, %c2, %c0_26, %c0_27, %c0_28] : memref<1x4x4x32x128xf32, #tpu.memory_space<vmem>>, vector<1x1x4x32x128xf32>
      %59 = vector.shape_cast %58 : vector<1x1x4x32x128xf32> to vector<4x32x128xf32>
      %c9_i32_29 = arith.constant 9 : i32
      %60 = tpu.dynamic_rotate %59 by %c9_i32_29 dim 1 : vector<4x32x128xf32>, i32 -> vector<4x32x128xf32>
      %61 = arith.subf %59, %60 : vector<4x32x128xf32>
      %62 = arith.mulf %61, %61 : vector<4x32x128xf32>
      %63 = arith.addf %57, %62 : vector<4x32x128xf32>
      %c0_30 = arith.constant 0 : index
      %c3 = arith.constant 3 : index
      %c0_31 = arith.constant 0 : index
      %c0_32 = arith.constant 0 : index
      %c0_33 = arith.constant 0 : index
      %64 = vector.load %arg2[%c0_30, %c3, %c0_31, %c0_32, %c0_33] : memref<1x4x4x32x128xf32, #tpu.memory_space<vmem>>, vector<1x1x4x32x128xf32>
      %65 = vector.shape_cast %64 : vector<1x1x4x32x128xf32> to vector<4x32x128xf32>
      %c9_i32_34 = arith.constant 9 : i32
      %66 = tpu.dynamic_rotate %65 by %c9_i32_34 dim 1 : vector<4x32x128xf32>, i32 -> vector<4x32x128xf32>
      %67 = arith.subf %65, %66 : vector<4x32x128xf32>
      %68 = arith.mulf %67, %67 : vector<4x32x128xf32>
      %69 = arith.addf %63, %68 : vector<4x32x128xf32>
      %cst_35 = arith.constant 2.500000e+01 : f32
      %70 = vector.broadcast %cst_35 : f32 to vector<4x32x128xf32>
      %71 = arith.mulf %69, %70 : vector<4x32x128xf32>
      %72 = math.tanh %71 : vector<4x32x128xf32>
      %cst_36 = arith.constant 1.000000e+00 : f32
      %73 = vector.broadcast %cst_36 : f32 to vector<4x32x128xf32>
      %74 = arith.subf %73, %72 : vector<4x32x128xf32>
      %75 = tpu.iota {dimensions = array<i32: 1>} : vector<1x32x128xi32>
      %c9_i32_37 = arith.constant 9 : i32
      %76 = vector.broadcast %c9_i32_37 : i32 to vector<1x32x128xi32>
      %77 = arith.cmpi sge, %75, %76 : vector<1x32x128xi32>
      %cst_38 = arith.constant 1.000000e+00 : f32
      %78 = vector.shape_cast %77 : vector<1x32x128xi1> to vector<1x32x128xi1>
      %79 = vector.broadcast %78 : vector<1x32x128xi1> to vector<4x32x128xi1>
      %80 = vector.broadcast %cst_38 : f32 to vector<4x32x128xf32>
      %81 = arith.select %79, %74, %80 : vector<4x32x128xi1>, vector<4x32x128xf32>
      %c0_39 = arith.constant 0 : index
      %c0_40 = arith.constant 0 : index
      %c0_41 = arith.constant 0 : index
      %c0_42 = arith.constant 0 : index
      %c0_43 = arith.constant 0 : index
      %82 = vector.load %arg3[%c0_39, %c0_40, %c0_41, %c0_42, %c0_43] : memref<1x1x4x32x128xf32, #tpu.memory_space<vmem>>, vector<1x1x4x32x128xf32>
      %83 = vector.shape_cast %82 : vector<1x1x4x32x128xf32> to vector<4x32x128xf32>
      %84 = vector.shape_cast %81 : vector<4x32x128xf32> to vector<1x1x4x32x128xf32>
      tpu.vector_store %arg3[%c0_39, %c0_40, %c0_41, %c0_42, %c0_43], %84 {strides = array<i32>} : memref<1x1x4x32x128xf32, #tpu.memory_space<vmem>>, vector<1x1x4x32x128xf32>,
    } else {
    }
    %c4_i32 = arith.constant 4 : i32
    %12 = arith.cmpi eq, %arg1, %c4_i32 : i32
    %13 = arith.extui %12 : i1 to i32
    %c0_i32_4 = arith.constant 0 : i32
    %14 = arith.cmpi ne, %13, %c0_i32_4 : i32
    scf.if %14 {
      %cst = arith.constant 0.000000e+00 : f32
      %45 = vector.broadcast %cst : f32 to vector<4x32x128xf32>
      %c0 = arith.constant 0 : index
      %c0_15 = arith.constant 0 : index
      %c0_16 = arith.constant 0 : index
      %c0_17 = arith.constant 0 : index
      %c0_18 = arith.constant 0 : index
      %46 = vector.load %arg2[%c0, %c0_15, %c0_16, %c0_17, %c0_18] : memref<1x4x4x32x128xf32, #tpu.memory_space<vmem>>, vector<1x1x4x32x128xf32>
      %47 = vector.shape_cast %46 : vector<1x1x4x32x128xf32> to vector<4x32x128xf32>
      %c9_i32_19 = arith.constant 9 : i32
      %48 = tpu.dynamic_rotate %47 by %c9_i32_19 dim 2 : vector<4x32x128xf32>, i32 -> vector<4x32x128xf32>
      %49 = arith.subf %47, %48 : vector<4x32x128xf32>
      %50 = arith.mulf %49, %49 : vector<4x32x128xf32>
      %51 = arith.addf %45, %50 : vector<4x32x128xf32>
      %c0_20 = arith.constant 0 : index
      %c1 = arith.constant 1 : index
      %c0_21 = arith.constant 0 : index
      %c0_22 = arith.constant 0 : index
      %c0_23 = arith.constant 0 : index
      %52 = vector.load %arg2[%c0_20, %c1, %c0_21, %c0_22, %c0_23] : memref<1x4x4x32x128xf32, #tpu.memory_space<vmem>>, vector<1x1x4x32x128xf32>
      %53 = vector.shape_cast %52 : vector<1x1x4x32x128xf32> to vector<4x32x128xf32>
      %c9_i32_24 = arith.constant 9 : i32
      %54 = tpu.dynamic_rotate %53 by %c9_i32_24 dim 2 : vector<4x32x128xf32>, i32 -> vector<4x32x128xf32>
      %55 = arith.subf %53, %54 : vector<4x32x128xf32>
      %56 = arith.mulf %55, %55 : vector<4x32x128xf32>
      %57 = arith.addf %51, %56 : vector<4x32x128xf32>
      %c0_25 = arith.constant 0 : index
      %c2 = arith.constant 2 : index
      %c0_26 = arith.constant 0 : index
      %c0_27 = arith.constant 0 : index
      %c0_28 = arith.constant 0 : index
      %58 = vector.load %arg2[%c0_25, %c2, %c0_26, %c0_27, %c0_28] : memref<1x4x4x32x128xf32, #tpu.memory_space<vmem>>, vector<1x1x4x32x128xf32>
      %59 = vector.shape_cast %58 : vector<1x1x4x32x128xf32> to vector<4x32x128xf32>
      %c9_i32_29 = arith.constant 9 : i32
      %60 = tpu.dynamic_rotate %59 by %c9_i32_29 dim 2 : vector<4x32x128xf32>, i32 -> vector<4x32x128xf32>
      %61 = arith.subf %59, %60 : vector<4x32x128xf32>
      %62 = arith.mulf %61, %61 : vector<4x32x128xf32>
      %63 = arith.addf %57, %62 : vector<4x32x128xf32>
      %c0_30 = arith.constant 0 : index
      %c3 = arith.constant 3 : index
      %c0_31 = arith.constant 0 : index
      %c0_32 = arith.constant 0 : index
      %c0_33 = arith.constant 0 : index
      %64 = vector.load %arg2[%c0_30, %c3, %c0_31, %c0_32, %c0_33] : memref<1x4x4x32x128xf32, #tpu.memory_space<vmem>>, vector<1x1x4x32x128xf32>
      %65 = vector.shape_cast %64 : vector<1x1x4x32x128xf32> to vector<4x32x128xf32>
      %c9_i32_34 = arith.constant 9 : i32
      %66 = tpu.dynamic_rotate %65 by %c9_i32_34 dim 2 : vector<4x32x128xf32>, i32 -> vector<4x32x128xf32>
      %67 = arith.subf %65, %66 : vector<4x32x128xf32>
      %68 = arith.mulf %67, %67 : vector<4x32x128xf32>
      %69 = arith.addf %63, %68 : vector<4x32x128xf32>
      %cst_35 = arith.constant 2.500000e+01 : f32
      %70 = vector.broadcast %cst_35 : f32 to vector<4x32x128xf32>
      %71 = arith.mulf %69, %70 : vector<4x32x128xf32>
      %72 = math.tanh %71 : vector<4x32x128xf32>
      %cst_36 = arith.constant 1.000000e+00 : f32
      %73 = vector.broadcast %cst_36 : f32 to vector<4x32x128xf32>
      %74 = arith.subf %73, %72 : vector<4x32x128xf32>
      %75 = tpu.iota {dimensions = array<i32: 2>} : vector<1x32x128xi32>
      %c9_i32_37 = arith.constant 9 : i32
      %76 = vector.broadcast %c9_i32_37 : i32 to vector<1x32x128xi32>
      %77 = arith.cmpi sge, %75, %76 : vector<1x32x128xi32>
      %cst_38 = arith.constant 1.000000e+00 : f32
      %78 = vector.shape_cast %77 : vector<1x32x128xi1> to vector<1x32x128xi1>
      %79 = vector.broadcast %78 : vector<1x32x128xi1> to vector<4x32x128xi1>
      %80 = vector.broadcast %cst_38 : f32 to vector<4x32x128xf32>
      %81 = arith.select %79, %74, %80 : vector<4x32x128xi1>, vector<4x32x128xf32>
      %c0_39 = arith.constant 0 : index
      %c0_40 = arith.constant 0 : index
      %c0_41 = arith.constant 0 : index
      %c0_42 = arith.constant 0 : index
      %c0_43 = arith.constant 0 : index
      %82 = vector.load %arg3[%c0_39, %c0_40, %c0_41, %c0_42, %c0_43] : memref<1x1x4x32x128xf32, #tpu.memory_space<vmem>>, vector<1x1x4x32x128xf32>
      %83 = vector.shape_cast %82 : vector<1x1x4x32x128xf32> to vector<4x32x128xf32>
      %84 = vector.shape_cast %81 : vector<4x32x128xf32> to vector<1x1x4x32x128xf32>
      tpu.vector_store %arg3[%c0_39, %c0_40, %c0_41, %c0_42, %c0_43], %84 {strides = array<i32>} : memref<1x1x4x32x128xf32, #tpu.memory_space<vmem>>, vector<1x1x4x32x128xf32>,
    } else {
    }
    %c5_i32 = arith.constant 5 : i32
    %15 = arith.cmpi eq, %arg1, %c5_i32 : i32
    %16 = arith.extui %15 : i1 to i32
    %c0_i32_5 = arith.constant 0 : i32
    %17 = arith.cmpi ne, %16, %c0_i32_5 : i32
    scf.if %17 {
      %cst = arith.constant 0.000000e+00 : f32
      %45 = vector.broadcast %cst : f32 to vector<4x32x128xf32>
      %c0 = arith.constant 0 : index
      %c0_15 = arith.constant 0 : index
      %c0_16 = arith.constant 0 : index
      %c0_17 = arith.constant 0 : index
      %c0_18 = arith.constant 0 : index
      %46 = vector.load %arg2[%c0, %c0_15, %c0_16, %c0_17, %c0_18] : memref<1x4x4x32x128xf32, #tpu.memory_space<vmem>>, vector<1x1x4x32x128xf32>
      %47 = vector.shape_cast %46 : vector<1x1x4x32x128xf32> to vector<4x32x128xf32>
      %c9_i32_19 = arith.constant 9 : i32
      %48 = tpu.dynamic_rotate %47 by %c9_i32_19 dim 1 : vector<4x32x128xf32>, i32 -> vector<4x32x128xf32>
      %c9_i32_20 = arith.constant 9 : i32
      %49 = tpu.dynamic_rotate %48 by %c9_i32_20 dim 2 : vector<4x32x128xf32>, i32 -> vector<4x32x128xf32>
      %50 = arith.subf %47, %49 : vector<4x32x128xf32>
      %51 = arith.mulf %50, %50 : vector<4x32x128xf32>
      %52 = arith.addf %45, %51 : vector<4x32x128xf32>
      %c0_21 = arith.constant 0 : index
      %c1 = arith.constant 1 : index
      %c0_22 = arith.constant 0 : index
      %c0_23 = arith.constant 0 : index
      %c0_24 = arith.constant 0 : index
      %53 = vector.load %arg2[%c0_21, %c1, %c0_22, %c0_23, %c0_24] : memref<1x4x4x32x128xf32, #tpu.memory_space<vmem>>, vector<1x1x4x32x128xf32>
      %54 = vector.shape_cast %53 : vector<1x1x4x32x128xf32> to vector<4x32x128xf32>
      %c9_i32_25 = arith.constant 9 : i32
      %55 = tpu.dynamic_rotate %54 by %c9_i32_25 dim 1 : vector<4x32x128xf32>, i32 -> vector<4x32x128xf32>
      %c9_i32_26 = arith.constant 9 : i32
      %56 = tpu.dynamic_rotate %55 by %c9_i32_26 dim 2 : vector<4x32x128xf32>, i32 -> vector<4x32x128xf32>
      %57 = arith.subf %54, %56 : vector<4x32x128xf32>
      %58 = arith.mulf %57, %57 : vector<4x32x128xf32>
      %59 = arith.addf %52, %58 : vector<4x32x128xf32>
      %c0_27 = arith.constant 0 : index
      %c2 = arith.constant 2 : index
      %c0_28 = arith.constant 0 : index
      %c0_29 = arith.constant 0 : index
      %c0_30 = arith.constant 0 : index
      %60 = vector.load %arg2[%c0_27, %c2, %c0_28, %c0_29, %c0_30] : memref<1x4x4x32x128xf32, #tpu.memory_space<vmem>>, vector<1x1x4x32x128xf32>
      %61 = vector.shape_cast %60 : vector<1x1x4x32x128xf32> to vector<4x32x128xf32>
      %c9_i32_31 = arith.constant 9 : i32
      %62 = tpu.dynamic_rotate %61 by %c9_i32_31 dim 1 : vector<4x32x128xf32>, i32 -> vector<4x32x128xf32>
      %c9_i32_32 = arith.constant 9 : i32
      %63 = tpu.dynamic_rotate %62 by %c9_i32_32 dim 2 : vector<4x32x128xf32>, i32 -> vector<4x32x128xf32>
      %64 = arith.subf %61, %63 : vector<4x32x128xf32>
      %65 = arith.mulf %64, %64 : vector<4x32x128xf32>
      %66 = arith.addf %59, %65 : vector<4x32x128xf32>
      %c0_33 = arith.constant 0 : index
      %c3 = arith.constant 3 : index
      %c0_34 = arith.constant 0 : index
      %c0_35 = arith.constant 0 : index
      %c0_36 = arith.constant 0 : index
      %67 = vector.load %arg2[%c0_33, %c3, %c0_34, %c0_35, %c0_36] : memref<1x4x4x32x128xf32, #tpu.memory_space<vmem>>, vector<1x1x4x32x128xf32>
      %68 = vector.shape_cast %67 : vector<1x1x4x32x128xf32> to vector<4x32x128xf32>
      %c9_i32_37 = arith.constant 9 : i32
      %69 = tpu.dynamic_rotate %68 by %c9_i32_37 dim 1 : vector<4x32x128xf32>, i32 -> vector<4x32x128xf32>
      %c9_i32_38 = arith.constant 9 : i32
      %70 = tpu.dynamic_rotate %69 by %c9_i32_38 dim 2 : vector<4x32x128xf32>, i32 -> vector<4x32x128xf32>
      %71 = arith.subf %68, %70 : vector<4x32x128xf32>
      %72 = arith.mulf %71, %71 : vector<4x32x128xf32>
      %73 = arith.addf %66, %72 : vector<4x32x128xf32>
      %cst_39 = arith.constant 2.500000e+01 : f32
      %74 = vector.broadcast %cst_39 : f32 to vector<4x32x128xf32>
      %75 = arith.mulf %73, %74 : vector<4x32x128xf32>
      %76 = math.tanh %75 : vector<4x32x128xf32>
      %cst_40 = arith.constant 1.000000e+00 : f32
      %77 = vector.broadcast %cst_40 : f32 to vector<4x32x128xf32>
      %78 = arith.subf %77, %76 : vector<4x32x128xf32>
      %79 = tpu.iota {dimensions = array<i32: 1>} : vector<1x32x128xi32>
      %c9_i32_41 = arith.constant 9 : i32
      %80 = vector.broadcast %c9_i32_41 : i32 to vector<1x32x128xi32>
      %81 = arith.cmpi sge, %79, %80 : vector<1x32x128xi32>
      %82 = tpu.iota {dimensions = array<i32: 2>} : vector<1x32x128xi32>
      %c9_i32_42 = arith.constant 9 : i32
      %83 = vector.broadcast %c9_i32_42 : i32 to vector<1x32x128xi32>
      %84 = arith.cmpi sge, %82, %83 : vector<1x32x128xi32>
      %85 = arith.andi %81, %84 : vector<1x32x128xi1>
      %cst_43 = arith.constant 1.000000e+00 : f32
      %86 = vector.shape_cast %85 : vector<1x32x128xi1> to vector<1x32x128xi1>
      %87 = vector.broadcast %86 : vector<1x32x128xi1> to vector<4x32x128xi1>
      %88 = vector.broadcast %cst_43 : f32 to vector<4x32x128xf32>
      %89 = arith.select %87, %78, %88 : vector<4x32x128xi1>, vector<4x32x128xf32>
      %c0_44 = arith.constant 0 : index
      %c0_45 = arith.constant 0 : index
      %c0_46 = arith.constant 0 : index
      %c0_47 = arith.constant 0 : index
      %c0_48 = arith.constant 0 : index
      %90 = vector.load %arg3[%c0_44, %c0_45, %c0_46, %c0_47, %c0_48] : memref<1x1x4x32x128xf32, #tpu.memory_space<vmem>>, vector<1x1x4x32x128xf32>
      %91 = vector.shape_cast %90 : vector<1x1x4x32x128xf32> to vector<4x32x128xf32>
      %92 = vector.shape_cast %89 : vector<4x32x128xf32> to vector<1x1x4x32x128xf32>
      tpu.vector_store %arg3[%c0_44, %c0_45, %c0_46, %c0_47, %c0_48], %92 {strides = array<i32>} : memref<1x1x4x32x128xf32, #tpu.memory_space<vmem>>, vector<1x1x4x32x128xf32>,
    } else {
    }
    %c6_i32 = arith.constant 6 : i32
    %18 = arith.cmpi eq, %arg1, %c6_i32 : i32
    %19 = arith.extui %18 : i1 to i32
    %c0_i32_6 = arith.constant 0 : i32
    %20 = arith.cmpi ne, %19, %c0_i32_6 : i32
    scf.if %20 {
      %cst = arith.constant 0.000000e+00 : f32
      %45 = vector.broadcast %cst : f32 to vector<4x32x128xf32>
      %c0 = arith.constant 0 : index
      %c0_15 = arith.constant 0 : index
      %c0_16 = arith.constant 0 : index
      %c0_17 = arith.constant 0 : index
      %c0_18 = arith.constant 0 : index
      %46 = vector.load %arg2[%c0, %c0_15, %c0_16, %c0_17, %c0_18] : memref<1x4x4x32x128xf32, #tpu.memory_space<vmem>>, vector<1x1x4x32x128xf32>
      %47 = vector.shape_cast %46 : vector<1x1x4x32x128xf32> to vector<4x32x128xf32>
      %c23_i32 = arith.constant 23 : i32
      %48 = tpu.dynamic_rotate %47 by %c23_i32 dim 1 : vector<4x32x128xf32>, i32 -> vector<4x32x128xf32>
      %c9_i32_19 = arith.constant 9 : i32
      %49 = tpu.dynamic_rotate %48 by %c9_i32_19 dim 2 : vector<4x32x128xf32>, i32 -> vector<4x32x128xf32>
      %50 = arith.subf %47, %49 : vector<4x32x128xf32>
      %51 = arith.mulf %50, %50 : vector<4x32x128xf32>
      %52 = arith.addf %45, %51 : vector<4x32x128xf32>
      %c0_20 = arith.constant 0 : index
      %c1 = arith.constant 1 : index
      %c0_21 = arith.constant 0 : index
      %c0_22 = arith.constant 0 : index
      %c0_23 = arith.constant 0 : index
      %53 = vector.load %arg2[%c0_20, %c1, %c0_21, %c0_22, %c0_23] : memref<1x4x4x32x128xf32, #tpu.memory_space<vmem>>, vector<1x1x4x32x128xf32>
      %54 = vector.shape_cast %53 : vector<1x1x4x32x128xf32> to vector<4x32x128xf32>
      %c23_i32_24 = arith.constant 23 : i32
      %55 = tpu.dynamic_rotate %54 by %c23_i32_24 dim 1 : vector<4x32x128xf32>, i32 -> vector<4x32x128xf32>
      %c9_i32_25 = arith.constant 9 : i32
      %56 = tpu.dynamic_rotate %55 by %c9_i32_25 dim 2 : vector<4x32x128xf32>, i32 -> vector<4x32x128xf32>
      %57 = arith.subf %54, %56 : vector<4x32x128xf32>
      %58 = arith.mulf %57, %57 : vector<4x32x128xf32>
      %59 = arith.addf %52, %58 : vector<4x32x128xf32>
      %c0_26 = arith.constant 0 : index
      %c2 = arith.constant 2 : index
      %c0_27 = arith.constant 0 : index
      %c0_28 = arith.constant 0 : index
      %c0_29 = arith.constant 0 : index
      %60 = vector.load %arg2[%c0_26, %c2, %c0_27, %c0_28, %c0_29] : memref<1x4x4x32x128xf32, #tpu.memory_space<vmem>>, vector<1x1x4x32x128xf32>
      %61 = vector.shape_cast %60 : vector<1x1x4x32x128xf32> to vector<4x32x128xf32>
      %c23_i32_30 = arith.constant 23 : i32
      %62 = tpu.dynamic_rotate %61 by %c23_i32_30 dim 1 : vector<4x32x128xf32>, i32 -> vector<4x32x128xf32>
      %c9_i32_31 = arith.constant 9 : i32
      %63 = tpu.dynamic_rotate %62 by %c9_i32_31 dim 2 : vector<4x32x128xf32>, i32 -> vector<4x32x128xf32>
      %64 = arith.subf %61, %63 : vector<4x32x128xf32>
      %65 = arith.mulf %64, %64 : vector<4x32x128xf32>
      %66 = arith.addf %59, %65 : vector<4x32x128xf32>
      %c0_32 = arith.constant 0 : index
      %c3 = arith.constant 3 : index
      %c0_33 = arith.constant 0 : index
      %c0_34 = arith.constant 0 : index
      %c0_35 = arith.constant 0 : index
      %67 = vector.load %arg2[%c0_32, %c3, %c0_33, %c0_34, %c0_35] : memref<1x4x4x32x128xf32, #tpu.memory_space<vmem>>, vector<1x1x4x32x128xf32>
      %68 = vector.shape_cast %67 : vector<1x1x4x32x128xf32> to vector<4x32x128xf32>
      %c23_i32_36 = arith.constant 23 : i32
      %69 = tpu.dynamic_rotate %68 by %c23_i32_36 dim 1 : vector<4x32x128xf32>, i32 -> vector<4x32x128xf32>
      %c9_i32_37 = arith.constant 9 : i32
      %70 = tpu.dynamic_rotate %69 by %c9_i32_37 dim 2 : vector<4x32x128xf32>, i32 -> vector<4x32x128xf32>
      %71 = arith.subf %68, %70 : vector<4x32x128xf32>
      %72 = arith.mulf %71, %71 : vector<4x32x128xf32>
      %73 = arith.addf %66, %72 : vector<4x32x128xf32>
      %cst_38 = arith.constant 2.500000e+01 : f32
      %74 = vector.broadcast %cst_38 : f32 to vector<4x32x128xf32>
      %75 = arith.mulf %73, %74 : vector<4x32x128xf32>
      %76 = math.tanh %75 : vector<4x32x128xf32>
      %cst_39 = arith.constant 1.000000e+00 : f32
      %77 = vector.broadcast %cst_39 : f32 to vector<4x32x128xf32>
      %78 = arith.subf %77, %76 : vector<4x32x128xf32>
      %79 = tpu.iota {dimensions = array<i32: 1>} : vector<1x32x128xi32>
      %c23_i32_40 = arith.constant 23 : i32
      %80 = vector.broadcast %c23_i32_40 : i32 to vector<1x32x128xi32>
      %81 = arith.cmpi slt, %79, %80 : vector<1x32x128xi32>
      %82 = tpu.iota {dimensions = array<i32: 2>} : vector<1x32x128xi32>
      %c9_i32_41 = arith.constant 9 : i32
      %83 = vector.broadcast %c9_i32_41 : i32 to vector<1x32x128xi32>
      %84 = arith.cmpi sge, %82, %83 : vector<1x32x128xi32>
      %85 = arith.andi %81, %84 : vector<1x32x128xi1>
      %cst_42 = arith.constant 1.000000e+00 : f32
      %86 = vector.shape_cast %85 : vector<1x32x128xi1> to vector<1x32x128xi1>
      %87 = vector.broadcast %86 : vector<1x32x128xi1> to vector<4x32x128xi1>
      %88 = vector.broadcast %cst_42 : f32 to vector<4x32x128xf32>
      %89 = arith.select %87, %78, %88 : vector<4x32x128xi1>, vector<4x32x128xf32>
      %c0_43 = arith.constant 0 : index
      %c0_44 = arith.constant 0 : index
      %c0_45 = arith.constant 0 : index
      %c0_46 = arith.constant 0 : index
      %c0_47 = arith.constant 0 : index
      %90 = vector.load %arg3[%c0_43, %c0_44, %c0_45, %c0_46, %c0_47] : memref<1x1x4x32x128xf32, #tpu.memory_space<vmem>>, vector<1x1x4x32x128xf32>
      %91 = vector.shape_cast %90 : vector<1x1x4x32x128xf32> to vector<4x32x128xf32>
      %92 = vector.shape_cast %89 : vector<4x32x128xf32> to vector<1x1x4x32x128xf32>
      tpu.vector_store %arg3[%c0_43, %c0_44, %c0_45, %c0_46, %c0_47], %92 {strides = array<i32>} : memref<1x1x4x32x128xf32, #tpu.memory_space<vmem>>, vector<1x1x4x32x128xf32>,
    } else {
    }
    %c7_i32 = arith.constant 7 : i32
    %21 = arith.cmpi eq, %arg1, %c7_i32 : i32
    %22 = arith.extui %21 : i1 to i32
    %c0_i32_7 = arith.constant 0 : i32
    %23 = arith.cmpi ne, %22, %c0_i32_7 : i32
    scf.if %23 {
      %cst = arith.constant 0.000000e+00 : f32
      %45 = vector.broadcast %cst : f32 to vector<4x32x128xf32>
      %c0 = arith.constant 0 : index
      %c0_15 = arith.constant 0 : index
      %c0_16 = arith.constant 0 : index
      %c0_17 = arith.constant 0 : index
      %c0_18 = arith.constant 0 : index
      %46 = vector.load %arg2[%c0, %c0_15, %c0_16, %c0_17, %c0_18] : memref<1x4x4x32x128xf32, #tpu.memory_space<vmem>>, vector<1x1x4x32x128xf32>
      %47 = vector.shape_cast %46 : vector<1x1x4x32x128xf32> to vector<4x32x128xf32>
      %c9_i32_19 = arith.constant 9 : i32
      %48 = tpu.dynamic_rotate %47 by %c9_i32_19 dim 1 : vector<4x32x128xf32>, i32 -> vector<4x32x128xf32>
      %c4_i32_20 = arith.constant 4 : i32
      %49 = tpu.dynamic_rotate %48 by %c4_i32_20 dim 2 : vector<4x32x128xf32>, i32 -> vector<4x32x128xf32>
      %50 = arith.subf %47, %49 : vector<4x32x128xf32>
      %51 = arith.mulf %50, %50 : vector<4x32x128xf32>
      %52 = arith.addf %45, %51 : vector<4x32x128xf32>
      %c0_21 = arith.constant 0 : index
      %c1 = arith.constant 1 : index
      %c0_22 = arith.constant 0 : index
      %c0_23 = arith.constant 0 : index
      %c0_24 = arith.constant 0 : index
      %53 = vector.load %arg2[%c0_21, %c1, %c0_22, %c0_23, %c0_24] : memref<1x4x4x32x128xf32, #tpu.memory_space<vmem>>, vector<1x1x4x32x128xf32>
      %54 = vector.shape_cast %53 : vector<1x1x4x32x128xf32> to vector<4x32x128xf32>
      %c9_i32_25 = arith.constant 9 : i32
      %55 = tpu.dynamic_rotate %54 by %c9_i32_25 dim 1 : vector<4x32x128xf32>, i32 -> vector<4x32x128xf32>
      %c4_i32_26 = arith.constant 4 : i32
      %56 = tpu.dynamic_rotate %55 by %c4_i32_26 dim 2 : vector<4x32x128xf32>, i32 -> vector<4x32x128xf32>
      %57 = arith.subf %54, %56 : vector<4x32x128xf32>
      %58 = arith.mulf %57, %57 : vector<4x32x128xf32>
      %59 = arith.addf %52, %58 : vector<4x32x128xf32>
      %c0_27 = arith.constant 0 : index
      %c2 = arith.constant 2 : index
      %c0_28 = arith.constant 0 : index
      %c0_29 = arith.constant 0 : index
      %c0_30 = arith.constant 0 : index
      %60 = vector.load %arg2[%c0_27, %c2, %c0_28, %c0_29, %c0_30] : memref<1x4x4x32x128xf32, #tpu.memory_space<vmem>>, vector<1x1x4x32x128xf32>
      %61 = vector.shape_cast %60 : vector<1x1x4x32x128xf32> to vector<4x32x128xf32>
      %c9_i32_31 = arith.constant 9 : i32
      %62 = tpu.dynamic_rotate %61 by %c9_i32_31 dim 1 : vector<4x32x128xf32>, i32 -> vector<4x32x128xf32>
      %c4_i32_32 = arith.constant 4 : i32
      %63 = tpu.dynamic_rotate %62 by %c4_i32_32 dim 2 : vector<4x32x128xf32>, i32 -> vector<4x32x128xf32>
      %64 = arith.subf %61, %63 : vector<4x32x128xf32>
      %65 = arith.mulf %64, %64 : vector<4x32x128xf32>
      %66 = arith.addf %59, %65 : vector<4x32x128xf32>
      %c0_33 = arith.constant 0 : index
      %c3 = arith.constant 3 : index
      %c0_34 = arith.constant 0 : index
      %c0_35 = arith.constant 0 : index
      %c0_36 = arith.constant 0 : index
      %67 = vector.load %arg2[%c0_33, %c3, %c0_34, %c0_35, %c0_36] : memref<1x4x4x32x128xf32, #tpu.memory_space<vmem>>, vector<1x1x4x32x128xf32>
      %68 = vector.shape_cast %67 : vector<1x1x4x32x128xf32> to vector<4x32x128xf32>
      %c9_i32_37 = arith.constant 9 : i32
      %69 = tpu.dynamic_rotate %68 by %c9_i32_37 dim 1 : vector<4x32x128xf32>, i32 -> vector<4x32x128xf32>
      %c4_i32_38 = arith.constant 4 : i32
      %70 = tpu.dynamic_rotate %69 by %c4_i32_38 dim 2 : vector<4x32x128xf32>, i32 -> vector<4x32x128xf32>
      %71 = arith.subf %68, %70 : vector<4x32x128xf32>
      %72 = arith.mulf %71, %71 : vector<4x32x128xf32>
      %73 = arith.addf %66, %72 : vector<4x32x128xf32>
      %cst_39 = arith.constant 2.500000e+01 : f32
      %74 = vector.broadcast %cst_39 : f32 to vector<4x32x128xf32>
      %75 = arith.mulf %73, %74 : vector<4x32x128xf32>
      %76 = math.tanh %75 : vector<4x32x128xf32>
      %cst_40 = arith.constant 1.000000e+00 : f32
      %77 = vector.broadcast %cst_40 : f32 to vector<4x32x128xf32>
      %78 = arith.subf %77, %76 : vector<4x32x128xf32>
      %79 = tpu.iota {dimensions = array<i32: 1>} : vector<1x32x128xi32>
      %c9_i32_41 = arith.constant 9 : i32
      %80 = vector.broadcast %c9_i32_41 : i32 to vector<1x32x128xi32>
      %81 = arith.cmpi sge, %79, %80 : vector<1x32x128xi32>
      %82 = tpu.iota {dimensions = array<i32: 2>} : vector<1x32x128xi32>
      %c4_i32_42 = arith.constant 4 : i32
      %83 = vector.broadcast %c4_i32_42 : i32 to vector<1x32x128xi32>
      %84 = arith.cmpi sge, %82, %83 : vector<1x32x128xi32>
      %85 = arith.andi %81, %84 : vector<1x32x128xi1>
      %cst_43 = arith.constant 1.000000e+00 : f32
      %86 = vector.shape_cast %85 : vector<1x32x128xi1> to vector<1x32x128xi1>
      %87 = vector.broadcast %86 : vector<1x32x128xi1> to vector<4x32x128xi1>
      %88 = vector.broadcast %cst_43 : f32 to vector<4x32x128xf32>
      %89 = arith.select %87, %78, %88 : vector<4x32x128xi1>, vector<4x32x128xf32>
      %c0_44 = arith.constant 0 : index
      %c0_45 = arith.constant 0 : index
      %c0_46 = arith.constant 0 : index
      %c0_47 = arith.constant 0 : index
      %c0_48 = arith.constant 0 : index
      %90 = vector.load %arg3[%c0_44, %c0_45, %c0_46, %c0_47, %c0_48] : memref<1x1x4x32x128xf32, #tpu.memory_space<vmem>>, vector<1x1x4x32x128xf32>
      %91 = vector.shape_cast %90 : vector<1x1x4x32x128xf32> to vector<4x32x128xf32>
      %92 = vector.shape_cast %89 : vector<4x32x128xf32> to vector<1x1x4x32x128xf32>
      tpu.vector_store %arg3[%c0_44, %c0_45, %c0_46, %c0_47, %c0_48], %92 {strides = array<i32>} : memref<1x1x4x32x128xf32, #tpu.memory_space<vmem>>, vector<1x1x4x32x128xf32>,
    } else {
    }
    %c8_i32 = arith.constant 8 : i32
    %24 = arith.cmpi eq, %arg1, %c8_i32 : i32
    %25 = arith.extui %24 : i1 to i32
    %c0_i32_8 = arith.constant 0 : i32
    %26 = arith.cmpi ne, %25, %c0_i32_8 : i32
    scf.if %26 {
      %cst = arith.constant 0.000000e+00 : f32
      %45 = vector.broadcast %cst : f32 to vector<4x32x128xf32>
      %c0 = arith.constant 0 : index
      %c0_15 = arith.constant 0 : index
      %c0_16 = arith.constant 0 : index
      %c0_17 = arith.constant 0 : index
      %c0_18 = arith.constant 0 : index
      %46 = vector.load %arg2[%c0, %c0_15, %c0_16, %c0_17, %c0_18] : memref<1x4x4x32x128xf32, #tpu.memory_space<vmem>>, vector<1x1x4x32x128xf32>
      %47 = vector.shape_cast %46 : vector<1x1x4x32x128xf32> to vector<4x32x128xf32>
      %c4_i32_19 = arith.constant 4 : i32
      %48 = tpu.dynamic_rotate %47 by %c4_i32_19 dim 1 : vector<4x32x128xf32>, i32 -> vector<4x32x128xf32>
      %c9_i32_20 = arith.constant 9 : i32
      %49 = tpu.dynamic_rotate %48 by %c9_i32_20 dim 2 : vector<4x32x128xf32>, i32 -> vector<4x32x128xf32>
      %50 = arith.subf %47, %49 : vector<4x32x128xf32>
      %51 = arith.mulf %50, %50 : vector<4x32x128xf32>
      %52 = arith.addf %45, %51 : vector<4x32x128xf32>
      %c0_21 = arith.constant 0 : index
      %c1 = arith.constant 1 : index
      %c0_22 = arith.constant 0 : index
      %c0_23 = arith.constant 0 : index
      %c0_24 = arith.constant 0 : index
      %53 = vector.load %arg2[%c0_21, %c1, %c0_22, %c0_23, %c0_24] : memref<1x4x4x32x128xf32, #tpu.memory_space<vmem>>, vector<1x1x4x32x128xf32>
      %54 = vector.shape_cast %53 : vector<1x1x4x32x128xf32> to vector<4x32x128xf32>
      %c4_i32_25 = arith.constant 4 : i32
      %55 = tpu.dynamic_rotate %54 by %c4_i32_25 dim 1 : vector<4x32x128xf32>, i32 -> vector<4x32x128xf32>
      %c9_i32_26 = arith.constant 9 : i32
      %56 = tpu.dynamic_rotate %55 by %c9_i32_26 dim 2 : vector<4x32x128xf32>, i32 -> vector<4x32x128xf32>
      %57 = arith.subf %54, %56 : vector<4x32x128xf32>
      %58 = arith.mulf %57, %57 : vector<4x32x128xf32>
      %59 = arith.addf %52, %58 : vector<4x32x128xf32>
      %c0_27 = arith.constant 0 : index
      %c2 = arith.constant 2 : index
      %c0_28 = arith.constant 0 : index
      %c0_29 = arith.constant 0 : index
      %c0_30 = arith.constant 0 : index
      %60 = vector.load %arg2[%c0_27, %c2, %c0_28, %c0_29, %c0_30] : memref<1x4x4x32x128xf32, #tpu.memory_space<vmem>>, vector<1x1x4x32x128xf32>
      %61 = vector.shape_cast %60 : vector<1x1x4x32x128xf32> to vector<4x32x128xf32>
      %c4_i32_31 = arith.constant 4 : i32
      %62 = tpu.dynamic_rotate %61 by %c4_i32_31 dim 1 : vector<4x32x128xf32>, i32 -> vector<4x32x128xf32>
      %c9_i32_32 = arith.constant 9 : i32
      %63 = tpu.dynamic_rotate %62 by %c9_i32_32 dim 2 : vector<4x32x128xf32>, i32 -> vector<4x32x128xf32>
      %64 = arith.subf %61, %63 : vector<4x32x128xf32>
      %65 = arith.mulf %64, %64 : vector<4x32x128xf32>
      %66 = arith.addf %59, %65 : vector<4x32x128xf32>
      %c0_33 = arith.constant 0 : index
      %c3 = arith.constant 3 : index
      %c0_34 = arith.constant 0 : index
      %c0_35 = arith.constant 0 : index
      %c0_36 = arith.constant 0 : index
      %67 = vector.load %arg2[%c0_33, %c3, %c0_34, %c0_35, %c0_36] : memref<1x4x4x32x128xf32, #tpu.memory_space<vmem>>, vector<1x1x4x32x128xf32>
      %68 = vector.shape_cast %67 : vector<1x1x4x32x128xf32> to vector<4x32x128xf32>
      %c4_i32_37 = arith.constant 4 : i32
      %69 = tpu.dynamic_rotate %68 by %c4_i32_37 dim 1 : vector<4x32x128xf32>, i32 -> vector<4x32x128xf32>
      %c9_i32_38 = arith.constant 9 : i32
      %70 = tpu.dynamic_rotate %69 by %c9_i32_38 dim 2 : vector<4x32x128xf32>, i32 -> vector<4x32x128xf32>
      %71 = arith.subf %68, %70 : vector<4x32x128xf32>
      %72 = arith.mulf %71, %71 : vector<4x32x128xf32>
      %73 = arith.addf %66, %72 : vector<4x32x128xf32>
      %cst_39 = arith.constant 2.500000e+01 : f32
      %74 = vector.broadcast %cst_39 : f32 to vector<4x32x128xf32>
      %75 = arith.mulf %73, %74 : vector<4x32x128xf32>
      %76 = math.tanh %75 : vector<4x32x128xf32>
      %cst_40 = arith.constant 1.000000e+00 : f32
      %77 = vector.broadcast %cst_40 : f32 to vector<4x32x128xf32>
      %78 = arith.subf %77, %76 : vector<4x32x128xf32>
      %79 = tpu.iota {dimensions = array<i32: 1>} : vector<1x32x128xi32>
      %c4_i32_41 = arith.constant 4 : i32
      %80 = vector.broadcast %c4_i32_41 : i32 to vector<1x32x128xi32>
      %81 = arith.cmpi sge, %79, %80 : vector<1x32x128xi32>
      %82 = tpu.iota {dimensions = array<i32: 2>} : vector<1x32x128xi32>
      %c9_i32_42 = arith.constant 9 : i32
      %83 = vector.broadcast %c9_i32_42 : i32 to vector<1x32x128xi32>
      %84 = arith.cmpi sge, %82, %83 : vector<1x32x128xi32>
      %85 = arith.andi %81, %84 : vector<1x32x128xi1>
      %cst_43 = arith.constant 1.000000e+00 : f32
      %86 = vector.shape_cast %85 : vector<1x32x128xi1> to vector<1x32x128xi1>
      %87 = vector.broadcast %86 : vector<1x32x128xi1> to vector<4x32x128xi1>
      %88 = vector.broadcast %cst_43 : f32 to vector<4x32x128xf32>
      %89 = arith.select %87, %78, %88 : vector<4x32x128xi1>, vector<4x32x128xf32>
      %c0_44 = arith.constant 0 : index
      %c0_45 = arith.constant 0 : index
      %c0_46 = arith.constant 0 : index
      %c0_47 = arith.constant 0 : index
      %c0_48 = arith.constant 0 : index
      %90 = vector.load %arg3[%c0_44, %c0_45, %c0_46, %c0_47, %c0_48] : memref<1x1x4x32x128xf32, #tpu.memory_space<vmem>>, vector<1x1x4x32x128xf32>
      %91 = vector.shape_cast %90 : vector<1x1x4x32x128xf32> to vector<4x32x128xf32>
      %92 = vector.shape_cast %89 : vector<4x32x128xf32> to vector<1x1x4x32x128xf32>
      tpu.vector_store %arg3[%c0_44, %c0_45, %c0_46, %c0_47, %c0_48], %92 {strides = array<i32>} : memref<1x1x4x32x128xf32, #tpu.memory_space<vmem>>, vector<1x1x4x32x128xf32>,
    } else {
    }
    %c9_i32 = arith.constant 9 : i32
    %27 = arith.cmpi eq, %arg1, %c9_i32 : i32
    %28 = arith.extui %27 : i1 to i32
    %c0_i32_9 = arith.constant 0 : i32
    %29 = arith.cmpi ne, %28, %c0_i32_9 : i32
    scf.if %29 {
      %cst = arith.constant 0.000000e+00 : f32
      %45 = vector.broadcast %cst : f32 to vector<4x32x128xf32>
      %c0 = arith.constant 0 : index
      %c0_15 = arith.constant 0 : index
      %c0_16 = arith.constant 0 : index
      %c0_17 = arith.constant 0 : index
      %c0_18 = arith.constant 0 : index
      %46 = vector.load %arg2[%c0, %c0_15, %c0_16, %c0_17, %c0_18] : memref<1x4x4x32x128xf32, #tpu.memory_space<vmem>>, vector<1x1x4x32x128xf32>
      %47 = vector.shape_cast %46 : vector<1x1x4x32x128xf32> to vector<4x32x128xf32>
      %c28_i32 = arith.constant 28 : i32
      %48 = tpu.dynamic_rotate %47 by %c28_i32 dim 1 : vector<4x32x128xf32>, i32 -> vector<4x32x128xf32>
      %c9_i32_19 = arith.constant 9 : i32
      %49 = tpu.dynamic_rotate %48 by %c9_i32_19 dim 2 : vector<4x32x128xf32>, i32 -> vector<4x32x128xf32>
      %50 = arith.subf %47, %49 : vector<4x32x128xf32>
      %51 = arith.mulf %50, %50 : vector<4x32x128xf32>
      %52 = arith.addf %45, %51 : vector<4x32x128xf32>
      %c0_20 = arith.constant 0 : index
      %c1 = arith.constant 1 : index
      %c0_21 = arith.constant 0 : index
      %c0_22 = arith.constant 0 : index
      %c0_23 = arith.constant 0 : index
      %53 = vector.load %arg2[%c0_20, %c1, %c0_21, %c0_22, %c0_23] : memref<1x4x4x32x128xf32, #tpu.memory_space<vmem>>, vector<1x1x4x32x128xf32>
      %54 = vector.shape_cast %53 : vector<1x1x4x32x128xf32> to vector<4x32x128xf32>
      %c28_i32_24 = arith.constant 28 : i32
      %55 = tpu.dynamic_rotate %54 by %c28_i32_24 dim 1 : vector<4x32x128xf32>, i32 -> vector<4x32x128xf32>
      %c9_i32_25 = arith.constant 9 : i32
      %56 = tpu.dynamic_rotate %55 by %c9_i32_25 dim 2 : vector<4x32x128xf32>, i32 -> vector<4x32x128xf32>
      %57 = arith.subf %54, %56 : vector<4x32x128xf32>
      %58 = arith.mulf %57, %57 : vector<4x32x128xf32>
      %59 = arith.addf %52, %58 : vector<4x32x128xf32>
      %c0_26 = arith.constant 0 : index
      %c2 = arith.constant 2 : index
      %c0_27 = arith.constant 0 : index
      %c0_28 = arith.constant 0 : index
      %c0_29 = arith.constant 0 : index
      %60 = vector.load %arg2[%c0_26, %c2, %c0_27, %c0_28, %c0_29] : memref<1x4x4x32x128xf32, #tpu.memory_space<vmem>>, vector<1x1x4x32x128xf32>
      %61 = vector.shape_cast %60 : vector<1x1x4x32x128xf32> to vector<4x32x128xf32>
      %c28_i32_30 = arith.constant 28 : i32
      %62 = tpu.dynamic_rotate %61 by %c28_i32_30 dim 1 : vector<4x32x128xf32>, i32 -> vector<4x32x128xf32>
      %c9_i32_31 = arith.constant 9 : i32
      %63 = tpu.dynamic_rotate %62 by %c9_i32_31 dim 2 : vector<4x32x128xf32>, i32 -> vector<4x32x128xf32>
      %64 = arith.subf %61, %63 : vector<4x32x128xf32>
      %65 = arith.mulf %64, %64 : vector<4x32x128xf32>
      %66 = arith.addf %59, %65 : vector<4x32x128xf32>
      %c0_32 = arith.constant 0 : index
      %c3 = arith.constant 3 : index
      %c0_33 = arith.constant 0 : index
      %c0_34 = arith.constant 0 : index
      %c0_35 = arith.constant 0 : index
      %67 = vector.load %arg2[%c0_32, %c3, %c0_33, %c0_34, %c0_35] : memref<1x4x4x32x128xf32, #tpu.memory_space<vmem>>, vector<1x1x4x32x128xf32>
      %68 = vector.shape_cast %67 : vector<1x1x4x32x128xf32> to vector<4x32x128xf32>
      %c28_i32_36 = arith.constant 28 : i32
      %69 = tpu.dynamic_rotate %68 by %c28_i32_36 dim 1 : vector<4x32x128xf32>, i32 -> vector<4x32x128xf32>
      %c9_i32_37 = arith.constant 9 : i32
      %70 = tpu.dynamic_rotate %69 by %c9_i32_37 dim 2 : vector<4x32x128xf32>, i32 -> vector<4x32x128xf32>
      %71 = arith.subf %68, %70 : vector<4x32x128xf32>
      %72 = arith.mulf %71, %71 : vector<4x32x128xf32>
      %73 = arith.addf %66, %72 : vector<4x32x128xf32>
      %cst_38 = arith.constant 2.500000e+01 : f32
      %74 = vector.broadcast %cst_38 : f32 to vector<4x32x128xf32>
      %75 = arith.mulf %73, %74 : vector<4x32x128xf32>
      %76 = math.tanh %75 : vector<4x32x128xf32>
      %cst_39 = arith.constant 1.000000e+00 : f32
      %77 = vector.broadcast %cst_39 : f32 to vector<4x32x128xf32>
      %78 = arith.subf %77, %76 : vector<4x32x128xf32>
      %79 = tpu.iota {dimensions = array<i32: 1>} : vector<1x32x128xi32>
      %c28_i32_40 = arith.constant 28 : i32
      %80 = vector.broadcast %c28_i32_40 : i32 to vector<1x32x128xi32>
      %81 = arith.cmpi slt, %79, %80 : vector<1x32x128xi32>
      %82 = tpu.iota {dimensions = array<i32: 2>} : vector<1x32x128xi32>
      %c9_i32_41 = arith.constant 9 : i32
      %83 = vector.broadcast %c9_i32_41 : i32 to vector<1x32x128xi32>
      %84 = arith.cmpi sge, %82, %83 : vector<1x32x128xi32>
      %85 = arith.andi %81, %84 : vector<1x32x128xi1>
      %cst_42 = arith.constant 1.000000e+00 : f32
      %86 = vector.shape_cast %85 : vector<1x32x128xi1> to vector<1x32x128xi1>
      %87 = vector.broadcast %86 : vector<1x32x128xi1> to vector<4x32x128xi1>
      %88 = vector.broadcast %cst_42 : f32 to vector<4x32x128xf32>
      %89 = arith.select %87, %78, %88 : vector<4x32x128xi1>, vector<4x32x128xf32>
      %c0_43 = arith.constant 0 : index
      %c0_44 = arith.constant 0 : index
      %c0_45 = arith.constant 0 : index
      %c0_46 = arith.constant 0 : index
      %c0_47 = arith.constant 0 : index
      %90 = vector.load %arg3[%c0_43, %c0_44, %c0_45, %c0_46, %c0_47] : memref<1x1x4x32x128xf32, #tpu.memory_space<vmem>>, vector<1x1x4x32x128xf32>
      %91 = vector.shape_cast %90 : vector<1x1x4x32x128xf32> to vector<4x32x128xf32>
      %92 = vector.shape_cast %89 : vector<4x32x128xf32> to vector<1x1x4x32x128xf32>
      tpu.vector_store %arg3[%c0_43, %c0_44, %c0_45, %c0_46, %c0_47], %92 {strides = array<i32>} : memref<1x1x4x32x128xf32, #tpu.memory_space<vmem>>, vector<1x1x4x32x128xf32>,
    } else {
    }
    %c10_i32 = arith.constant 10 : i32
    %30 = arith.cmpi eq, %arg1, %c10_i32 : i32
    %31 = arith.extui %30 : i1 to i32
    %c0_i32_10 = arith.constant 0 : i32
    %32 = arith.cmpi ne, %31, %c0_i32_10 : i32
    scf.if %32 {
      %cst = arith.constant 0.000000e+00 : f32
      %45 = vector.broadcast %cst : f32 to vector<4x32x128xf32>
      %c0 = arith.constant 0 : index
      %c0_15 = arith.constant 0 : index
      %c0_16 = arith.constant 0 : index
      %c0_17 = arith.constant 0 : index
      %c0_18 = arith.constant 0 : index
      %46 = vector.load %arg2[%c0, %c0_15, %c0_16, %c0_17, %c0_18] : memref<1x4x4x32x128xf32, #tpu.memory_space<vmem>>, vector<1x1x4x32x128xf32>
      %47 = vector.shape_cast %46 : vector<1x1x4x32x128xf32> to vector<4x32x128xf32>
      %c23_i32 = arith.constant 23 : i32
      %48 = tpu.dynamic_rotate %47 by %c23_i32 dim 1 : vector<4x32x128xf32>, i32 -> vector<4x32x128xf32>
      %c4_i32_19 = arith.constant 4 : i32
      %49 = tpu.dynamic_rotate %48 by %c4_i32_19 dim 2 : vector<4x32x128xf32>, i32 -> vector<4x32x128xf32>
      %50 = arith.subf %47, %49 : vector<4x32x128xf32>
      %51 = arith.mulf %50, %50 : vector<4x32x128xf32>
      %52 = arith.addf %45, %51 : vector<4x32x128xf32>
      %c0_20 = arith.constant 0 : index
      %c1 = arith.constant 1 : index
      %c0_21 = arith.constant 0 : index
      %c0_22 = arith.constant 0 : index
      %c0_23 = arith.constant 0 : index
      %53 = vector.load %arg2[%c0_20, %c1, %c0_21, %c0_22, %c0_23] : memref<1x4x4x32x128xf32, #tpu.memory_space<vmem>>, vector<1x1x4x32x128xf32>
      %54 = vector.shape_cast %53 : vector<1x1x4x32x128xf32> to vector<4x32x128xf32>
      %c23_i32_24 = arith.constant 23 : i32
      %55 = tpu.dynamic_rotate %54 by %c23_i32_24 dim 1 : vector<4x32x128xf32>, i32 -> vector<4x32x128xf32>
      %c4_i32_25 = arith.constant 4 : i32
      %56 = tpu.dynamic_rotate %55 by %c4_i32_25 dim 2 : vector<4x32x128xf32>, i32 -> vector<4x32x128xf32>
      %57 = arith.subf %54, %56 : vector<4x32x128xf32>
      %58 = arith.mulf %57, %57 : vector<4x32x128xf32>
      %59 = arith.addf %52, %58 : vector<4x32x128xf32>
      %c0_26 = arith.constant 0 : index
      %c2 = arith.constant 2 : index
      %c0_27 = arith.constant 0 : index
      %c0_28 = arith.constant 0 : index
      %c0_29 = arith.constant 0 : index
      %60 = vector.load %arg2[%c0_26, %c2, %c0_27, %c0_28, %c0_29] : memref<1x4x4x32x128xf32, #tpu.memory_space<vmem>>, vector<1x1x4x32x128xf32>
      %61 = vector.shape_cast %60 : vector<1x1x4x32x128xf32> to vector<4x32x128xf32>
      %c23_i32_30 = arith.constant 23 : i32
      %62 = tpu.dynamic_rotate %61 by %c23_i32_30 dim 1 : vector<4x32x128xf32>, i32 -> vector<4x32x128xf32>
      %c4_i32_31 = arith.constant 4 : i32
      %63 = tpu.dynamic_rotate %62 by %c4_i32_31 dim 2 : vector<4x32x128xf32>, i32 -> vector<4x32x128xf32>
      %64 = arith.subf %61, %63 : vector<4x32x128xf32>
      %65 = arith.mulf %64, %64 : vector<4x32x128xf32>
      %66 = arith.addf %59, %65 : vector<4x32x128xf32>
      %c0_32 = arith.constant 0 : index
      %c3 = arith.constant 3 : index
      %c0_33 = arith.constant 0 : index
      %c0_34 = arith.constant 0 : index
      %c0_35 = arith.constant 0 : index
      %67 = vector.load %arg2[%c0_32, %c3, %c0_33, %c0_34, %c0_35] : memref<1x4x4x32x128xf32, #tpu.memory_space<vmem>>, vector<1x1x4x32x128xf32>
      %68 = vector.shape_cast %67 : vector<1x1x4x32x128xf32> to vector<4x32x128xf32>
      %c23_i32_36 = arith.constant 23 : i32
      %69 = tpu.dynamic_rotate %68 by %c23_i32_36 dim 1 : vector<4x32x128xf32>, i32 -> vector<4x32x128xf32>
      %c4_i32_37 = arith.constant 4 : i32
      %70 = tpu.dynamic_rotate %69 by %c4_i32_37 dim 2 : vector<4x32x128xf32>, i32 -> vector<4x32x128xf32>
      %71 = arith.subf %68, %70 : vector<4x32x128xf32>
      %72 = arith.mulf %71, %71 : vector<4x32x128xf32>
      %73 = arith.addf %66, %72 : vector<4x32x128xf32>
      %cst_38 = arith.constant 2.500000e+01 : f32
      %74 = vector.broadcast %cst_38 : f32 to vector<4x32x128xf32>
      %75 = arith.mulf %73, %74 : vector<4x32x128xf32>
      %76 = math.tanh %75 : vector<4x32x128xf32>
      %cst_39 = arith.constant 1.000000e+00 : f32
      %77 = vector.broadcast %cst_39 : f32 to vector<4x32x128xf32>
      %78 = arith.subf %77, %76 : vector<4x32x128xf32>
      %79 = tpu.iota {dimensions = array<i32: 1>} : vector<1x32x128xi32>
      %c23_i32_40 = arith.constant 23 : i32
      %80 = vector.broadcast %c23_i32_40 : i32 to vector<1x32x128xi32>
      %81 = arith.cmpi slt, %79, %80 : vector<1x32x128xi32>
      %82 = tpu.iota {dimensions = array<i32: 2>} : vector<1x32x128xi32>
      %c4_i32_41 = arith.constant 4 : i32
      %83 = vector.broadcast %c4_i32_41 : i32 to vector<1x32x128xi32>
      %84 = arith.cmpi sge, %82, %83 : vector<1x32x128xi32>
      %85 = arith.andi %81, %84 : vector<1x32x128xi1>
      %cst_42 = arith.constant 1.000000e+00 : f32
      %86 = vector.shape_cast %85 : vector<1x32x128xi1> to vector<1x32x128xi1>
      %87 = vector.broadcast %86 : vector<1x32x128xi1> to vector<4x32x128xi1>
      %88 = vector.broadcast %cst_42 : f32 to vector<4x32x128xf32>
      %89 = arith.select %87, %78, %88 : vector<4x32x128xi1>, vector<4x32x128xf32>
      %c0_43 = arith.constant 0 : index
      %c0_44 = arith.constant 0 : index
      %c0_45 = arith.constant 0 : index
      %c0_46 = arith.constant 0 : index
      %c0_47 = arith.constant 0 : index
      %90 = vector.load %arg3[%c0_43, %c0_44, %c0_45, %c0_46, %c0_47] : memref<1x1x4x32x128xf32, #tpu.memory_space<vmem>>, vector<1x1x4x32x128xf32>
      %91 = vector.shape_cast %90 : vector<1x1x4x32x128xf32> to vector<4x32x128xf32>
      %92 = vector.shape_cast %89 : vector<4x32x128xf32> to vector<1x1x4x32x128xf32>
      tpu.vector_store %arg3[%c0_43, %c0_44, %c0_45, %c0_46, %c0_47], %92 {strides = array<i32>} : memref<1x1x4x32x128xf32, #tpu.memory_space<vmem>>, vector<1x1x4x32x128xf32>,
    } else {
    }
    %c11_i32 = arith.constant 11 : i32
    %33 = arith.cmpi eq, %arg1, %c11_i32 : i32
    %34 = arith.extui %33 : i1 to i32
    %c0_i32_11 = arith.constant 0 : i32
    %35 = arith.cmpi ne, %34, %c0_i32_11 : i32
    scf.if %35 {
      %cst = arith.constant 0.000000e+00 : f32
      %45 = vector.broadcast %cst : f32 to vector<3x32x128xf32>
      %c0 = arith.constant 0 : index
      %c0_15 = arith.constant 0 : index
      %c1 = arith.constant 1 : index
      %c0_16 = arith.constant 0 : index
      %c0_17 = arith.constant 0 : index
      %46 = vector.load %arg2[%c0, %c0_15, %c1, %c0_16, %c0_17] : memref<1x4x4x32x128xf32, #tpu.memory_space<vmem>>, vector<1x1x3x32x128xf32>
      %47 = vector.shape_cast %46 : vector<1x1x3x32x128xf32> to vector<3x32x128xf32>
      %c0_18 = arith.constant 0 : index
      %c0_19 = arith.constant 0 : index
      %c0_20 = arith.constant 0 : index
      %c0_21 = arith.constant 0 : index
      %c0_22 = arith.constant 0 : index
      %48 = vector.load %arg2[%c0_18, %c0_19, %c0_20, %c0_21, %c0_22] : memref<1x4x4x32x128xf32, #tpu.memory_space<vmem>>, vector<1x1x3x32x128xf32>
      %49 = vector.shape_cast %48 : vector<1x1x3x32x128xf32> to vector<3x32x128xf32>
      %c1_i32_23 = arith.constant 1 : i32
      %50 = tpu.dynamic_rotate %49 by %c1_i32_23 dim 1 : vector<3x32x128xf32>, i32 -> vector<3x32x128xf32>
      %51 = arith.subf %47, %50 : vector<3x32x128xf32>
      %52 = arith.mulf %51, %51 : vector<3x32x128xf32>
      %53 = arith.addf %45, %52 : vector<3x32x128xf32>
      %c0_24 = arith.constant 0 : index
      %c1_25 = arith.constant 1 : index
      %c1_26 = arith.constant 1 : index
      %c0_27 = arith.constant 0 : index
      %c0_28 = arith.constant 0 : index
      %54 = vector.load %arg2[%c0_24, %c1_25, %c1_26, %c0_27, %c0_28] : memref<1x4x4x32x128xf32, #tpu.memory_space<vmem>>, vector<1x1x3x32x128xf32>
      %55 = vector.shape_cast %54 : vector<1x1x3x32x128xf32> to vector<3x32x128xf32>
      %c0_29 = arith.constant 0 : index
      %c1_30 = arith.constant 1 : index
      %c0_31 = arith.constant 0 : index
      %c0_32 = arith.constant 0 : index
      %c0_33 = arith.constant 0 : index
      %56 = vector.load %arg2[%c0_29, %c1_30, %c0_31, %c0_32, %c0_33] : memref<1x4x4x32x128xf32, #tpu.memory_space<vmem>>, vector<1x1x3x32x128xf32>
      %57 = vector.shape_cast %56 : vector<1x1x3x32x128xf32> to vector<3x32x128xf32>
      %c1_i32_34 = arith.constant 1 : i32
      %58 = tpu.dynamic_rotate %57 by %c1_i32_34 dim 1 : vector<3x32x128xf32>, i32 -> vector<3x32x128xf32>
      %59 = arith.subf %55, %58 : vector<3x32x128xf32>
      %60 = arith.mulf %59, %59 : vector<3x32x128xf32>
      %61 = arith.addf %53, %60 : vector<3x32x128xf32>
      %c0_35 = arith.constant 0 : index
      %c2 = arith.constant 2 : index
      %c1_36 = arith.constant 1 : index
      %c0_37 = arith.constant 0 : index
      %c0_38 = arith.constant 0 : index
      %62 = vector.load %arg2[%c0_35, %c2, %c1_36, %c0_37, %c0_38] : memref<1x4x4x32x128xf32, #tpu.memory_space<vmem>>, vector<1x1x3x32x128xf32>
      %63 = vector.shape_cast %62 : vector<1x1x3x32x128xf32> to vector<3x32x128xf32>
      %c0_39 = arith.constant 0 : index
      %c2_40 = arith.constant 2 : index
      %c0_41 = arith.constant 0 : index
      %c0_42 = arith.constant 0 : index
      %c0_43 = arith.constant 0 : index
      %64 = vector.load %arg2[%c0_39, %c2_40, %c0_41, %c0_42, %c0_43] : memref<1x4x4x32x128xf32, #tpu.memory_space<vmem>>, vector<1x1x3x32x128xf32>
      %65 = vector.shape_cast %64 : vector<1x1x3x32x128xf32> to vector<3x32x128xf32>
      %c1_i32_44 = arith.constant 1 : i32
      %66 = tpu.dynamic_rotate %65 by %c1_i32_44 dim 1 : vector<3x32x128xf32>, i32 -> vector<3x32x128xf32>
      %67 = arith.subf %63, %66 : vector<3x32x128xf32>
      %68 = arith.mulf %67, %67 : vector<3x32x128xf32>
      %69 = arith.addf %61, %68 : vector<3x32x128xf32>
      %c0_45 = arith.constant 0 : index
      %c3 = arith.constant 3 : index
      %c1_46 = arith.constant 1 : index
      %c0_47 = arith.constant 0 : index
      %c0_48 = arith.constant 0 : index
      %70 = vector.load %arg2[%c0_45, %c3, %c1_46, %c0_47, %c0_48] : memref<1x4x4x32x128xf32, #tpu.memory_space<vmem>>, vector<1x1x3x32x128xf32>
      %71 = vector.shape_cast %70 : vector<1x1x3x32x128xf32> to vector<3x32x128xf32>
      %c0_49 = arith.constant 0 : index
      %c3_50 = arith.constant 3 : index
      %c0_51 = arith.constant 0 : index
      %c0_52 = arith.constant 0 : index
      %c0_53 = arith.constant 0 : index
      %72 = vector.load %arg2[%c0_49, %c3_50, %c0_51, %c0_52, %c0_53] : memref<1x4x4x32x128xf32, #tpu.memory_space<vmem>>, vector<1x1x3x32x128xf32>
      %73 = vector.shape_cast %72 : vector<1x1x3x32x128xf32> to vector<3x32x128xf32>
      %c1_i32_54 = arith.constant 1 : i32
      %74 = tpu.dynamic_rotate %73 by %c1_i32_54 dim 1 : vector<3x32x128xf32>, i32 -> vector<3x32x128xf32>
      %75 = arith.subf %71, %74 : vector<3x32x128xf32>
      %76 = arith.mulf %75, %75 : vector<3x32x128xf32>
      %77 = arith.addf %69, %76 : vector<3x32x128xf32>
      %cst_55 = arith.constant 2.500000e+01 : f32
      %78 = vector.broadcast %cst_55 : f32 to vector<3x32x128xf32>
      %79 = arith.mulf %77, %78 : vector<3x32x128xf32>
      %80 = math.tanh %79 : vector<3x32x128xf32>
      %cst_56 = arith.constant 1.000000e+00 : f32
      %81 = vector.broadcast %cst_56 : f32 to vector<3x32x128xf32>
      %82 = arith.subf %81, %80 : vector<3x32x128xf32>
      %83 = tpu.iota {dimensions = array<i32: 1>} : vector<1x32x128xi32>
      %c1_i32_57 = arith.constant 1 : i32
      %84 = vector.broadcast %c1_i32_57 : i32 to vector<1x32x128xi32>
      %85 = arith.cmpi sge, %83, %84 : vector<1x32x128xi32>
      %cst_58 = arith.constant 1.000000e+00 : f32
      %86 = vector.shape_cast %85 : vector<1x32x128xi1> to vector<1x32x128xi1>
      %87 = vector.broadcast %86 : vector<1x32x128xi1> to vector<3x32x128xi1>
      %88 = vector.broadcast %cst_58 : f32 to vector<3x32x128xf32>
      %89 = arith.select %87, %82, %88 : vector<3x32x128xi1>, vector<3x32x128xf32>
      %c0_59 = arith.constant 0 : index
      %c0_60 = arith.constant 0 : index
      %c1_61 = arith.constant 1 : index
      %c0_62 = arith.constant 0 : index
      %c0_63 = arith.constant 0 : index
      %90 = vector.load %arg3[%c0_59, %c0_60, %c1_61, %c0_62, %c0_63] : memref<1x1x4x32x128xf32, #tpu.memory_space<vmem>>, vector<1x1x3x32x128xf32>
      %91 = vector.shape_cast %90 : vector<1x1x3x32x128xf32> to vector<3x32x128xf32>
      %92 = vector.shape_cast %89 : vector<3x32x128xf32> to vector<1x1x3x32x128xf32>
      tpu.vector_store %arg3[%c0_59, %c0_60, %c1_61, %c0_62, %c0_63], %92 {strides = array<i32>} : memref<1x1x4x32x128xf32, #tpu.memory_space<vmem>>, vector<1x1x3x32x128xf32>,
      %cst_64 = arith.constant 1.000000e+00 : f32
      %93 = vector.broadcast %cst_64 : f32 to vector<1x32x128xf32>
      %c0_65 = arith.constant 0 : index
      %c0_66 = arith.constant 0 : index
      %c0_67 = arith.constant 0 : index
      %c0_68 = arith.constant 0 : index
      %c0_69 = arith.constant 0 : index
      %94 = vector.load %arg3[%c0_65, %c0_66, %c0_67, %c0_68, %c0_69] : memref<1x1x4x32x128xf32, #tpu.memory_space<vmem>>, vector<1x1x1x32x128xf32>
      %95 = vector.shape_cast %94 : vector<1x1x1x32x128xf32> to vector<1x32x128xf32>
      %96 = vector.shape_cast %93 : vector<1x32x128xf32> to vector<1x1x1x32x128xf32>
      tpu.vector_store %arg3[%c0_65, %c0_66, %c0_67, %c0_68, %c0_69], %96 {strides = array<i32>} : memref<1x1x4x32x128xf32, #tpu.memory_space<vmem>>, vector<1x1x1x32x128xf32>,
    } else {
    }
    %c12_i32 = arith.constant 12 : i32
    %36 = arith.cmpi eq, %arg1, %c12_i32 : i32
    %37 = arith.extui %36 : i1 to i32
    %c0_i32_12 = arith.constant 0 : i32
    %38 = arith.cmpi ne, %37, %c0_i32_12 : i32
    scf.if %38 {
      %cst = arith.constant 0.000000e+00 : f32
      %45 = vector.broadcast %cst : f32 to vector<3x32x128xf32>
      %c0 = arith.constant 0 : index
      %c0_15 = arith.constant 0 : index
      %c1 = arith.constant 1 : index
      %c0_16 = arith.constant 0 : index
      %c0_17 = arith.constant 0 : index
      %46 = vector.load %arg2[%c0, %c0_15, %c1, %c0_16, %c0_17] : memref<1x4x4x32x128xf32, #tpu.memory_space<vmem>>, vector<1x1x3x32x128xf32>
      %47 = vector.shape_cast %46 : vector<1x1x3x32x128xf32> to vector<3x32x128xf32>
      %c0_18 = arith.constant 0 : index
      %c0_19 = arith.constant 0 : index
      %c0_20 = arith.constant 0 : index
      %c0_21 = arith.constant 0 : index
      %c0_22 = arith.constant 0 : index
      %48 = vector.load %arg2[%c0_18, %c0_19, %c0_20, %c0_21, %c0_22] : memref<1x4x4x32x128xf32, #tpu.memory_space<vmem>>, vector<1x1x3x32x128xf32>
      %49 = vector.shape_cast %48 : vector<1x1x3x32x128xf32> to vector<3x32x128xf32>
      %c1_i32_23 = arith.constant 1 : i32
      %50 = tpu.dynamic_rotate %49 by %c1_i32_23 dim 2 : vector<3x32x128xf32>, i32 -> vector<3x32x128xf32>
      %51 = arith.subf %47, %50 : vector<3x32x128xf32>
      %52 = arith.mulf %51, %51 : vector<3x32x128xf32>
      %53 = arith.addf %45, %52 : vector<3x32x128xf32>
      %c0_24 = arith.constant 0 : index
      %c1_25 = arith.constant 1 : index
      %c1_26 = arith.constant 1 : index
      %c0_27 = arith.constant 0 : index
      %c0_28 = arith.constant 0 : index
      %54 = vector.load %arg2[%c0_24, %c1_25, %c1_26, %c0_27, %c0_28] : memref<1x4x4x32x128xf32, #tpu.memory_space<vmem>>, vector<1x1x3x32x128xf32>
      %55 = vector.shape_cast %54 : vector<1x1x3x32x128xf32> to vector<3x32x128xf32>
      %c0_29 = arith.constant 0 : index
      %c1_30 = arith.constant 1 : index
      %c0_31 = arith.constant 0 : index
      %c0_32 = arith.constant 0 : index
      %c0_33 = arith.constant 0 : index
      %56 = vector.load %arg2[%c0_29, %c1_30, %c0_31, %c0_32, %c0_33] : memref<1x4x4x32x128xf32, #tpu.memory_space<vmem>>, vector<1x1x3x32x128xf32>
      %57 = vector.shape_cast %56 : vector<1x1x3x32x128xf32> to vector<3x32x128xf32>
      %c1_i32_34 = arith.constant 1 : i32
      %58 = tpu.dynamic_rotate %57 by %c1_i32_34 dim 2 : vector<3x32x128xf32>, i32 -> vector<3x32x128xf32>
      %59 = arith.subf %55, %58 : vector<3x32x128xf32>
      %60 = arith.mulf %59, %59 : vector<3x32x128xf32>
      %61 = arith.addf %53, %60 : vector<3x32x128xf32>
      %c0_35 = arith.constant 0 : index
      %c2 = arith.constant 2 : index
      %c1_36 = arith.constant 1 : index
      %c0_37 = arith.constant 0 : index
      %c0_38 = arith.constant 0 : index
      %62 = vector.load %arg2[%c0_35, %c2, %c1_36, %c0_37, %c0_38] : memref<1x4x4x32x128xf32, #tpu.memory_space<vmem>>, vector<1x1x3x32x128xf32>
      %63 = vector.shape_cast %62 : vector<1x1x3x32x128xf32> to vector<3x32x128xf32>
      %c0_39 = arith.constant 0 : index
      %c2_40 = arith.constant 2 : index
      %c0_41 = arith.constant 0 : index
      %c0_42 = arith.constant 0 : index
      %c0_43 = arith.constant 0 : index
      %64 = vector.load %arg2[%c0_39, %c2_40, %c0_41, %c0_42, %c0_43] : memref<1x4x4x32x128xf32, #tpu.memory_space<vmem>>, vector<1x1x3x32x128xf32>
      %65 = vector.shape_cast %64 : vector<1x1x3x32x128xf32> to vector<3x32x128xf32>
      %c1_i32_44 = arith.constant 1 : i32
      %66 = tpu.dynamic_rotate %65 by %c1_i32_44 dim 2 : vector<3x32x128xf32>, i32 -> vector<3x32x128xf32>
      %67 = arith.subf %63, %66 : vector<3x32x128xf32>
      %68 = arith.mulf %67, %67 : vector<3x32x128xf32>
      %69 = arith.addf %61, %68 : vector<3x32x128xf32>
      %c0_45 = arith.constant 0 : index
      %c3 = arith.constant 3 : index
      %c1_46 = arith.constant 1 : index
      %c0_47 = arith.constant 0 : index
      %c0_48 = arith.constant 0 : index
      %70 = vector.load %arg2[%c0_45, %c3, %c1_46, %c0_47, %c0_48] : memref<1x4x4x32x128xf32, #tpu.memory_space<vmem>>, vector<1x1x3x32x128xf32>
      %71 = vector.shape_cast %70 : vector<1x1x3x32x128xf32> to vector<3x32x128xf32>
      %c0_49 = arith.constant 0 : index
      %c3_50 = arith.constant 3 : index
      %c0_51 = arith.constant 0 : index
      %c0_52 = arith.constant 0 : index
      %c0_53 = arith.constant 0 : index
      %72 = vector.load %arg2[%c0_49, %c3_50, %c0_51, %c0_52, %c0_53] : memref<1x4x4x32x128xf32, #tpu.memory_space<vmem>>, vector<1x1x3x32x128xf32>
      %73 = vector.shape_cast %72 : vector<1x1x3x32x128xf32> to vector<3x32x128xf32>
      %c1_i32_54 = arith.constant 1 : i32
      %74 = tpu.dynamic_rotate %73 by %c1_i32_54 dim 2 : vector<3x32x128xf32>, i32 -> vector<3x32x128xf32>
      %75 = arith.subf %71, %74 : vector<3x32x128xf32>
      %76 = arith.mulf %75, %75 : vector<3x32x128xf32>
      %77 = arith.addf %69, %76 : vector<3x32x128xf32>
      %cst_55 = arith.constant 2.500000e+01 : f32
      %78 = vector.broadcast %cst_55 : f32 to vector<3x32x128xf32>
      %79 = arith.mulf %77, %78 : vector<3x32x128xf32>
      %80 = math.tanh %79 : vector<3x32x128xf32>
      %cst_56 = arith.constant 1.000000e+00 : f32
      %81 = vector.broadcast %cst_56 : f32 to vector<3x32x128xf32>
      %82 = arith.subf %81, %80 : vector<3x32x128xf32>
      %83 = tpu.iota {dimensions = array<i32: 2>} : vector<1x32x128xi32>
      %c1_i32_57 = arith.constant 1 : i32
      %84 = vector.broadcast %c1_i32_57 : i32 to vector<1x32x128xi32>
      %85 = arith.cmpi sge, %83, %84 : vector<1x32x128xi32>
      %cst_58 = arith.constant 1.000000e+00 : f32
      %86 = vector.shape_cast %85 : vector<1x32x128xi1> to vector<1x32x128xi1>
      %87 = vector.broadcast %86 : vector<1x32x128xi1> to vector<3x32x128xi1>
      %88 = vector.broadcast %cst_58 : f32 to vector<3x32x128xf32>
      %89 = arith.select %87, %82, %88 : vector<3x32x128xi1>, vector<3x32x128xf32>
      %c0_59 = arith.constant 0 : index
      %c0_60 = arith.constant 0 : index
      %c1_61 = arith.constant 1 : index
      %c0_62 = arith.constant 0 : index
      %c0_63 = arith.constant 0 : index
      %90 = vector.load %arg3[%c0_59, %c0_60, %c1_61, %c0_62, %c0_63] : memref<1x1x4x32x128xf32, #tpu.memory_space<vmem>>, vector<1x1x3x32x128xf32>
      %91 = vector.shape_cast %90 : vector<1x1x3x32x128xf32> to vector<3x32x128xf32>
      %92 = vector.shape_cast %89 : vector<3x32x128xf32> to vector<1x1x3x32x128xf32>
      tpu.vector_store %arg3[%c0_59, %c0_60, %c1_61, %c0_62, %c0_63], %92 {strides = array<i32>} : memref<1x1x4x32x128xf32, #tpu.memory_space<vmem>>, vector<1x1x3x32x128xf32>,
      %cst_64 = arith.constant 1.000000e+00 : f32
      %93 = vector.broadcast %cst_64 : f32 to vector<1x32x128xf32>
      %c0_65 = arith.constant 0 : index
      %c0_66 = arith.constant 0 : index
      %c0_67 = arith.constant 0 : index
      %c0_68 = arith.constant 0 : index
      %c0_69 = arith.constant 0 : index
      %94 = vector.load %arg3[%c0_65, %c0_66, %c0_67, %c0_68, %c0_69] : memref<1x1x4x32x128xf32, #tpu.memory_space<vmem>>, vector<1x1x1x32x128xf32>
      %95 = vector.shape_cast %94 : vector<1x1x1x32x128xf32> to vector<1x32x128xf32>
      %96 = vector.shape_cast %93 : vector<1x32x128xf32> to vector<1x1x1x32x128xf32>
      tpu.vector_store %arg3[%c0_65, %c0_66, %c0_67, %c0_68, %c0_69], %96 {strides = array<i32>} : memref<1x1x4x32x128xf32, #tpu.memory_space<vmem>>, vector<1x1x1x32x128xf32>,
    } else {
    }
    %c13_i32 = arith.constant 13 : i32
    %39 = arith.cmpi eq, %arg1, %c13_i32 : i32
    %40 = arith.extui %39 : i1 to i32
    %c0_i32_13 = arith.constant 0 : i32
    %41 = arith.cmpi ne, %40, %c0_i32_13 : i32
    scf.if %41 {
      %cst = arith.constant 0.000000e+00 : f32
      %45 = vector.broadcast %cst : f32 to vector<4x32x128xf32>
      %c0 = arith.constant 0 : index
      %c0_15 = arith.constant 0 : index
      %c0_16 = arith.constant 0 : index
      %c0_17 = arith.constant 0 : index
      %c0_18 = arith.constant 0 : index
      %46 = vector.load %arg2[%c0, %c0_15, %c0_16, %c0_17, %c0_18] : memref<1x4x4x32x128xf32, #tpu.memory_space<vmem>>, vector<1x1x4x32x128xf32>
      %47 = vector.shape_cast %46 : vector<1x1x4x32x128xf32> to vector<4x32x128xf32>
      %c27_i32 = arith.constant 27 : i32
      %48 = tpu.dynamic_rotate %47 by %c27_i32 dim 1 : vector<4x32x128xf32>, i32 -> vector<4x32x128xf32>
      %49 = arith.subf %47, %48 : vector<4x32x128xf32>
      %50 = arith.mulf %49, %49 : vector<4x32x128xf32>
      %51 = arith.addf %45, %50 : vector<4x32x128xf32>
      %c0_19 = arith.constant 0 : index
      %c1 = arith.constant 1 : index
      %c0_20 = arith.constant 0 : index
      %c0_21 = arith.constant 0 : index
      %c0_22 = arith.constant 0 : index
      %52 = vector.load %arg2[%c0_19, %c1, %c0_20, %c0_21, %c0_22] : memref<1x4x4x32x128xf32, #tpu.memory_space<vmem>>, vector<1x1x4x32x128xf32>
      %53 = vector.shape_cast %52 : vector<1x1x4x32x128xf32> to vector<4x32x128xf32>
      %c27_i32_23 = arith.constant 27 : i32
      %54 = tpu.dynamic_rotate %53 by %c27_i32_23 dim 1 : vector<4x32x128xf32>, i32 -> vector<4x32x128xf32>
      %55 = arith.subf %53, %54 : vector<4x32x128xf32>
      %56 = arith.mulf %55, %55 : vector<4x32x128xf32>
      %57 = arith.addf %51, %56 : vector<4x32x128xf32>
      %c0_24 = arith.constant 0 : index
      %c2 = arith.constant 2 : index
      %c0_25 = arith.constant 0 : index
      %c0_26 = arith.constant 0 : index
      %c0_27 = arith.constant 0 : index
      %58 = vector.load %arg2[%c0_24, %c2, %c0_25, %c0_26, %c0_27] : memref<1x4x4x32x128xf32, #tpu.memory_space<vmem>>, vector<1x1x4x32x128xf32>
      %59 = vector.shape_cast %58 : vector<1x1x4x32x128xf32> to vector<4x32x128xf32>
      %c27_i32_28 = arith.constant 27 : i32
      %60 = tpu.dynamic_rotate %59 by %c27_i32_28 dim 1 : vector<4x32x128xf32>, i32 -> vector<4x32x128xf32>
      %61 = arith.subf %59, %60 : vector<4x32x128xf32>
      %62 = arith.mulf %61, %61 : vector<4x32x128xf32>
      %63 = arith.addf %57, %62 : vector<4x32x128xf32>
      %c0_29 = arith.constant 0 : index
      %c3 = arith.constant 3 : index
      %c0_30 = arith.constant 0 : index
      %c0_31 = arith.constant 0 : index
      %c0_32 = arith.constant 0 : index
      %64 = vector.load %arg2[%c0_29, %c3, %c0_30, %c0_31, %c0_32] : memref<1x4x4x32x128xf32, #tpu.memory_space<vmem>>, vector<1x1x4x32x128xf32>
      %65 = vector.shape_cast %64 : vector<1x1x4x32x128xf32> to vector<4x32x128xf32>
      %c27_i32_33 = arith.constant 27 : i32
      %66 = tpu.dynamic_rotate %65 by %c27_i32_33 dim 1 : vector<4x32x128xf32>, i32 -> vector<4x32x128xf32>
      %67 = arith.subf %65, %66 : vector<4x32x128xf32>
      %68 = arith.mulf %67, %67 : vector<4x32x128xf32>
      %69 = arith.addf %63, %68 : vector<4x32x128xf32>
      %cst_34 = arith.constant 2.500000e+01 : f32
      %70 = vector.broadcast %cst_34 : f32 to vector<4x32x128xf32>
      %71 = arith.mulf %69, %70 : vector<4x32x128xf32>
      %72 = math.tanh %71 : vector<4x32x128xf32>
      %cst_35 = arith.constant 1.000000e+00 : f32
      %73 = vector.broadcast %cst_35 : f32 to vector<4x32x128xf32>
      %74 = arith.subf %73, %72 : vector<4x32x128xf32>
      %75 = tpu.iota {dimensions = array<i32: 1>} : vector<1x32x128xi32>
      %c27_i32_36 = arith.constant 27 : i32
      %76 = vector.broadcast %c27_i32_36 : i32 to vector<1x32x128xi32>
      %77 = arith.cmpi sge, %75, %76 : vector<1x32x128xi32>
      %cst_37 = arith.constant 1.000000e+00 : f32
      %78 = vector.shape_cast %77 : vector<1x32x128xi1> to vector<1x32x128xi1>
      %79 = vector.broadcast %78 : vector<1x32x128xi1> to vector<4x32x128xi1>
      %80 = vector.broadcast %cst_37 : f32 to vector<4x32x128xf32>
      %81 = arith.select %79, %74, %80 : vector<4x32x128xi1>, vector<4x32x128xf32>
      %c0_38 = arith.constant 0 : index
      %c0_39 = arith.constant 0 : index
      %c0_40 = arith.constant 0 : index
      %c0_41 = arith.constant 0 : index
      %c0_42 = arith.constant 0 : index
      %82 = vector.load %arg3[%c0_38, %c0_39, %c0_40, %c0_41, %c0_42] : memref<1x1x4x32x128xf32, #tpu.memory_space<vmem>>, vector<1x1x4x32x128xf32>
      %83 = vector.shape_cast %82 : vector<1x1x4x32x128xf32> to vector<4x32x128xf32>
      %84 = vector.shape_cast %81 : vector<4x32x128xf32> to vector<1x1x4x32x128xf32>
      tpu.vector_store %arg3[%c0_38, %c0_39, %c0_40, %c0_41, %c0_42], %84 {strides = array<i32>} : memref<1x1x4x32x128xf32, #tpu.memory_space<vmem>>, vector<1x1x4x32x128xf32>,
    } else {
    }
    %c14_i32 = arith.constant 14 : i32
    %42 = arith.cmpi eq, %arg1, %c14_i32 : i32
    %43 = arith.extui %42 : i1 to i32
    %c0_i32_14 = arith.constant 0 : i32
    %44 = arith.cmpi ne, %43, %c0_i32_14 : i32
    scf.if %44 {
      %cst = arith.constant 0.000000e+00 : f32
      %45 = vector.broadcast %cst : f32 to vector<4x32x128xf32>
      %c0 = arith.constant 0 : index
      %c0_15 = arith.constant 0 : index
      %c0_16 = arith.constant 0 : index
      %c0_17 = arith.constant 0 : index
      %c0_18 = arith.constant 0 : index
      %46 = vector.load %arg2[%c0, %c0_15, %c0_16, %c0_17, %c0_18] : memref<1x4x4x32x128xf32, #tpu.memory_space<vmem>>, vector<1x1x4x32x128xf32>
      %47 = vector.shape_cast %46 : vector<1x1x4x32x128xf32> to vector<4x32x128xf32>
      %c27_i32 = arith.constant 27 : i32
      %48 = tpu.dynamic_rotate %47 by %c27_i32 dim 2 : vector<4x32x128xf32>, i32 -> vector<4x32x128xf32>
      %49 = arith.subf %47, %48 : vector<4x32x128xf32>
      %50 = arith.mulf %49, %49 : vector<4x32x128xf32>
      %51 = arith.addf %45, %50 : vector<4x32x128xf32>
      %c0_19 = arith.constant 0 : index
      %c1 = arith.constant 1 : index
      %c0_20 = arith.constant 0 : index
      %c0_21 = arith.constant 0 : index
      %c0_22 = arith.constant 0 : index
      %52 = vector.load %arg2[%c0_19, %c1, %c0_20, %c0_21, %c0_22] : memref<1x4x4x32x128xf32, #tpu.memory_space<vmem>>, vector<1x1x4x32x128xf32>
      %53 = vector.shape_cast %52 : vector<1x1x4x32x128xf32> to vector<4x32x128xf32>
      %c27_i32_23 = arith.constant 27 : i32
      %54 = tpu.dynamic_rotate %53 by %c27_i32_23 dim 2 : vector<4x32x128xf32>, i32 -> vector<4x32x128xf32>
      %55 = arith.subf %53, %54 : vector<4x32x128xf32>
      %56 = arith.mulf %55, %55 : vector<4x32x128xf32>
      %57 = arith.addf %51, %56 : vector<4x32x128xf32>
      %c0_24 = arith.constant 0 : index
      %c2 = arith.constant 2 : index
      %c0_25 = arith.constant 0 : index
      %c0_26 = arith.constant 0 : index
      %c0_27 = arith.constant 0 : index
      %58 = vector.load %arg2[%c0_24, %c2, %c0_25, %c0_26, %c0_27] : memref<1x4x4x32x128xf32, #tpu.memory_space<vmem>>, vector<1x1x4x32x128xf32>
      %59 = vector.shape_cast %58 : vector<1x1x4x32x128xf32> to vector<4x32x128xf32>
      %c27_i32_28 = arith.constant 27 : i32
      %60 = tpu.dynamic_rotate %59 by %c27_i32_28 dim 2 : vector<4x32x128xf32>, i32 -> vector<4x32x128xf32>
      %61 = arith.subf %59, %60 : vector<4x32x128xf32>
      %62 = arith.mulf %61, %61 : vector<4x32x128xf32>
      %63 = arith.addf %57, %62 : vector<4x32x128xf32>
      %c0_29 = arith.constant 0 : index
      %c3 = arith.constant 3 : index
      %c0_30 = arith.constant 0 : index
      %c0_31 = arith.constant 0 : index
      %c0_32 = arith.constant 0 : index
      %64 = vector.load %arg2[%c0_29, %c3, %c0_30, %c0_31, %c0_32] : memref<1x4x4x32x128xf32, #tpu.memory_space<vmem>>, vector<1x1x4x32x128xf32>
      %65 = vector.shape_cast %64 : vector<1x1x4x32x128xf32> to vector<4x32x128xf32>
      %c27_i32_33 = arith.constant 27 : i32
      %66 = tpu.dynamic_rotate %65 by %c27_i32_33 dim 2 : vector<4x32x128xf32>, i32 -> vector<4x32x128xf32>
      %67 = arith.subf %65, %66 : vector<4x32x128xf32>
      %68 = arith.mulf %67, %67 : vector<4x32x128xf32>
      %69 = arith.addf %63, %68 : vector<4x32x128xf32>
      %cst_34 = arith.constant 2.500000e+01 : f32
      %70 = vector.broadcast %cst_34 : f32 to vector<4x32x128xf32>
      %71 = arith.mulf %69, %70 : vector<4x32x128xf32>
      %72 = math.tanh %71 : vector<4x32x128xf32>
      %cst_35 = arith.constant 1.000000e+00 : f32
      %73 = vector.broadcast %cst_35 : f32 to vector<4x32x128xf32>
      %74 = arith.subf %73, %72 : vector<4x32x128xf32>
      %75 = tpu.iota {dimensions = array<i32: 2>} : vector<1x32x128xi32>
      %c27_i32_36 = arith.constant 27 : i32
      %76 = vector.broadcast %c27_i32_36 : i32 to vector<1x32x128xi32>
      %77 = arith.cmpi sge, %75, %76 : vector<1x32x128xi32>
      %cst_37 = arith.constant 1.000000e+00 : f32
      %78 = vector.shape_cast %77 : vector<1x32x128xi1> to vector<1x32x128xi1>
      %79 = vector.broadcast %78 : vector<1x32x128xi1> to vector<4x32x128xi1>
      %80 = vector.broadcast %cst_37 : f32 to vector<4x32x128xf32>
      %81 = arith.select %79, %74, %80 : vector<4x32x128xi1>, vector<4x32x128xf32>
      %c0_38 = arith.constant 0 : index
      %c0_39 = arith.constant 0 : index
      %c0_40 = arith.constant 0 : index
      %c0_41 = arith.constant 0 : index
      %c0_42 = arith.constant 0 : index
      %82 = vector.load %arg3[%c0_38, %c0_39, %c0_40, %c0_41, %c0_42] : memref<1x1x4x32x128xf32, #tpu.memory_space<vmem>>, vector<1x1x4x32x128xf32>
      %83 = vector.shape_cast %82 : vector<1x1x4x32x128xf32> to vector<4x32x128xf32>
      %84 = vector.shape_cast %81 : vector<4x32x128xf32> to vector<1x1x4x32x128xf32>
      tpu.vector_store %arg3[%c0_38, %c0_39, %c0_40, %c0_41, %c0_42], %84 {strides = array<i32>} : memref<1x1x4x32x128xf32, #tpu.memory_space<vmem>>, vector<1x1x4x32x128xf32>,
    } else {
    }
    return
  }
  func.func @transform_0(%arg0: i32, %arg1: i32) -> (i32, i32, i32, i32, i32) {
    %c0_i32 = arith.constant 0 : i32
    %c0_i32_0 = arith.constant 0 : i32
    %c0_i32_1 = arith.constant 0 : i32
    %c0_i32_2 = arith.constant 0 : i32
    %c0_i32_3 = arith.constant 0 : i32
    return %arg0, %c0_i32, %c0_i32_0, %c0_i32_1, %c0_i32_2 : i32, i32, i32, i32, i32
  }
  func.func @transform_1(%arg0: i32, %arg1: i32) -> (i32, i32, i32, i32, i32) {
    %c0_i32 = arith.constant 0 : i32
    %c0_i32_0 = arith.constant 0 : i32
    %c0_i32_1 = arith.constant 0 : i32
    %c0_i32_2 = arith.constant 0 : i32
    return %arg0, %arg1, %c0_i32, %c0_i32_0, %c0_i32_1 : i32, i32, i32, i32, i32
  }
}

</mosaic_0001>

<llo_original>
// kernel: tpu_custom_call.1
$region0: #{tpu_custom_call.1}
  #allocation0 [shape = 'u32[]', space=smem, size = 0x4, offset = 0x4, fixed_abs, tag = 'smem constant byte address 0x4 - core index']
  #allocation1 [shape = 'u32[144,128]{1,0:T(1,128)}', space=vmem, size = 0x12000, scoped, tag = 'internal scratch']
  %s0 = inlined_call_operand.hbm [shape: f32[2,4,4,32,128], index: 0, kind: input, shape index: {}]
  %s1 = inlined_call_operand.hbm [shape: f32[2,15,4,32,128], index: 1, kind: output, shape index: {}]
  %s2 = sld [smem:[#allocation0]]
  $region101: #{tpu_custom_call.1} parent=0
    _
  %s4 = ssub.s32 1, %s2
  %s5 = scalar_select 0, %s4, %s2
  $region1: #{tpu_custom_call.1} parent=0
    #allocation2 [shape = 'u8[524288]{0}', space=vmem, size = 0x80000, scoped, tag = 'input window, operand 0']
    #allocation3 [shape = 's32[2]{0}', space=sflag, size = 0x8, scoped, tag = 'scoped memory for tpu_custom_call.1']
    #allocation4 [shape = 's32[2]{0}', space=sflag, size = 0x8, scoped, tag = 'scoped memory for tpu_custom_call.1']
    #allocation5 [shape = 'u8[131072]{0}', space=vmem, size = 0x20000, scoped, tag = 'output window, operand 0']
    %6 = vsyncpa [#allocation3], 0
    %s7 = scalar_lea.sflag [#allocation3], 1
    %8 = vsyncpa %s7, 0
    %9 = vsyncpa [#allocation4], 0
    %s10 = scalar_lea.sflag [#allocation4], 1
    %11 = vsyncpa %s10, 0
    loop: start=0, step=1, limit=32
    $region2: #{tpu_custom_call.1} parent=1 // loop_pre_header
      _
    $region3: #{tpu_custom_call.1} parent=1 // loop_header
      %s13 = sphi 0, %s17
      %p14 = scmp.ge.s32.totalorder %s13, 32
      %s20 = sphi 0, %s32
      %s21 = sphi 0, %s28
      %s22 = sphi 0, %s20
      %s23 = sphi 0, %s21
      %s24 = sphi 0, %s22
      %s25 = sphi 0, %s23
      %s35 = sphi 0, %s37
      %s38 = sphi 0, %s35
      %s39 = sphi 0, %s38
      %s55 = sphi 0, %s39
      %s63 = sphi 0, %s65
      %s66 = sphi 0, %s63
      %s67 = sphi 0, %s66
      %s83 = sphi 0, %s67
    $region4: #{tpu_custom_call.1} parent=1 // loop_header_branch
      %16 = sbr.rel (%p14) target = $region8
    $region5: #{tpu_custom_call.1} parent=1 // loop_body
      %s18 = ssub.s32 %s13, 1
      %s19 = ssub.s32 %s13, 2
      %s26 = sadd.s32 1, %s21
      %p27 = scmp.ge.s32.totalorder %s26, 15
      %s28 = scalar_select %p27, 0, %s26
      %s29 = sadd.s32 1, %s20
      %s30 = scalar_select %p27, %s29, %s20
      %p31 = scmp.ge.s32.totalorder %s30, 2
      %s32 = scalar_select %p31, 0, %s30
      %s33 = ssub.s32 %s20, %s32
      %p34 = scmp.eq.s32.totalorder %s33, 0
      %s36 = sadd.s32 %s35, 1
      %s37 = scalar_select %p34, %s35, %s36
      %p40 = pneg %p34
      %p41 = scmp.eq.s32.totalorder %s13, 29
      %p42 = por %p40, %p41
      %p43 = scmp.ne.s32.totalorder %s35, %s38
      %p44 = scmp.eq.s32.totalorder %s13, 0
      %p45 = por %p43, %p44
      %p46 = scmp.ne.s32.totalorder %s35, %s38
      %p47 = scmp.eq.s32.totalorder %s18, 29
      %p48 = por %p46, %p47
      %p49 = scmp.ne.s32.totalorder %s38, %s39
      %p50 = scmp.eq.s32.totalorder %s18, 0
      %p51 = por %p49, %p50
      %p52 = scmp.ne.s32.totalorder %s38, %s39
      %p53 = scmp.eq.s32.totalorder %s19, 29
      %p54 = por %p52, %p53
      %p56 = scmp.ne.s32.totalorder %s39, %s55
      %p57 = scmp.eq.s32.totalorder %s19, 0
      %p58 = por %p56, %p57
      %s59 = ssub.s32 %s20, %s32
      %s60 = ssub.s32 %s21, %s28
      %s61 = sor.u32 %s59, %s60
      %p62 = scmp.eq.s32.totalorder %s61, 0
      %s64 = sadd.s32 %s63, 1
      %s65 = scalar_select %p62, %s63, %s64
      %p68 = pneg %p62
      %p69 = scmp.eq.s32.totalorder %s13, 29
      %p70 = por %p68, %p69
      %p71 = scmp.ne.s32.totalorder %s63, %s66
      %p72 = scmp.eq.s32.totalorder %s13, 0
      %p73 = por %p71, %p72
      %p74 = scmp.ne.s32.totalorder %s63, %s66
      %p75 = scmp.eq.s32.totalorder %s18, 29
      %p76 = por %p74, %p75
      %p77 = scmp.ne.s32.totalorder %s66, %s67
      %p78 = scmp.eq.s32.totalorder %s18, 0
      %p79 = por %p77, %p78
      %p80 = scmp.ne.s32.totalorder %s66, %s67
      %p81 = scmp.eq.s32.totalorder %s19, 29
      %p82 = por %p80, %p81
      %p84 = scmp.ne.s32.totalorder %s67, %s83
      %p85 = scmp.eq.s32.totalorder %s19, 0
      %p86 = por %p84, %p85
      %p87 = scmp.le.s32.totalorder 1, %s13
      %p88 = scmp.lt.s32.totalorder %s13, 31
      %p89 = pnand %p87, %p88
      %p90 = pneg %p89
      // Predicated region
      $region9: #{tpu_custom_call.1} parent=5 // pred_check
        _
      $region10: #{tpu_custom_call.1} parent=5 // pred_check_branch
        %92 = sbr.rel (%p89) target = $region12
      $region11: #{tpu_custom_call.1} parent=5 // pred_region
        %s93 = ssub.s32 %s13, 1
      $region12: #{tpu_custom_call.1} parent=5 // pred_fallthru
        _
      %p94 = scmp.lt.s32.totalorder %s13, 30
      // Predicated region
      $region13: #{tpu_custom_call.1} parent=5 // pred_check
        %p95 = pneg %p94
      $region14: #{tpu_custom_call.1} parent=5 // pred_check_branch
        %97 = sbr.rel (%p95) target = $region16
      $region15: #{tpu_custom_call.1} parent=5 // pred_region
        // Predicated region
        $region17: #{tpu_custom_call.1} parent=15 // pred_check
          %p98 = pneg %p45
        $region18: #{tpu_custom_call.1} parent=15 // pred_check_branch
          %100 = sbr.rel (%p98) target = $region20
        $region19: #{tpu_custom_call.1} parent=15 // pred_region
          %s101 = sand.u32 %s35, 1
          %s102 = scalar_lea.sflag [#allocation3], %s101
          %s103 = sand.u32 %s35, 1
          %s104 = smul.addr %s103, 512
          %s105 = scalar_lea.vmem [#allocation2], %s104
          %s107 = ssub.s32 8192, 8192
          %108 = vsyncadd %s102, %s107
          %s109 = smul.addr %s20, 64
          %s110 = smul.addr %s109, 128
          %s111 = scalar_lea.hbm %s0, %s110
          %s112 = sshll.u32 %s105, 4
          %s113 = int_to_ptr.vmem [resolvable:$true] %s112
          %118 = dma.hbm_to_vmem [thread:$0]  %s111, 8192, %s113, %s102, 128, 128, 8
        $region20: #{tpu_custom_call.1} parent=15 // pred_fallthru
          _
      $region16: #{tpu_custom_call.1} parent=5 // pred_fallthru
        _
      %p119 = scmp.le.s32.totalorder 1, %s13
      %p120 = scmp.lt.s32.totalorder %s13, 31
      %p121 = pnand %p119, %p120
      %p122 = pneg %p121
      // Predicated region
      $region21: #{tpu_custom_call.1} parent=5 // pred_check
        _
      $region22: #{tpu_custom_call.1} parent=5 // pred_check_branch
        %124 = sbr.rel (%p121) target = $region24
      $region23: #{tpu_custom_call.1} parent=5 // pred_region
        %s125 = ssub.s32 %s13, 1
        %s126 = sand.u32 %s38, 1
        %s127 = scalar_lea.sflag [#allocation3], %s126
        %s128 = sand.u32 %s38, 1
        %s129 = smul.addr %s128, 512
        %s130 = scalar_lea.vmem [#allocation2], %s129
        // Predicated region
        $region25: #{tpu_custom_call.1} parent=23 // pred_check
          %p131 = pneg %p51
        $region26: #{tpu_custom_call.1} parent=23 // pred_check_branch
          %133 = sbr.rel (%p131) target = $region28
        $region27: #{tpu_custom_call.1} parent=23 // pred_region
          %134 = dma.done %s127, 8192
        $region28: #{tpu_custom_call.1} parent=23 // pred_fallthru
          _
        %s135 = sand.u32 %s38, 1
        %s136 = scalar_lea.sflag [#allocation3], %s135
        %s137 = sand.u32 %s38, 1
        %s138 = smul.addr %s137, 512
        %s139 = scalar_lea.vmem [#allocation2], %s138
        %p140 = pneg %p51
        %p141 = pneg %p48
        %p142 = pneg %p79
        %p143 = pneg %p76
        %s144 = sand.u32 %s66, 1
        %s145 = scalar_lea.sflag [#allocation4], %s144
        %s146 = sand.u32 %s66, 1
        %s147 = smul.addr %s146, 128
        %s148 = scalar_lea.vmem [#allocation5], %s147
        %p149 = scmp.eq.s32.totalorder %s23, 0
        // Predicated region
        $region29: #{tpu_custom_call.1} parent=23 // pred_check
          %p150 = pneg %p149
        $region30: #{tpu_custom_call.1} parent=23 // pred_check_branch
          %152 = sbr.rel (%p150) target = $region32
        $region31: #{tpu_custom_call.1} parent=23 // pred_region
          %s153 = scalar_lea.vmem %s130, 32 [#allocation2]
          %v154 = vld [vmem:[%s153] sm:$0xff]
          %v155 = vld [vmem:[%s153 + $0x8] sm:$0xff]
          %v156 = vld [vmem:[%s153 + $0x10] sm:$0xff]
          %v157 = vld [vmem:[%s153 + $0x18] sm:$0xff]
          %v158 = vld [vmem:[%s153 + $0x20] sm:$0xff]
          %v159 = vld [vmem:[%s153 + $0x28] sm:$0xff]
          %v160 = vld [vmem:[%s153 + $0x30] sm:$0xff]
          %v161 = vld [vmem:[%s153 + $0x38] sm:$0xff]
          %v162 = vld [vmem:[%s153 + $0x40] sm:$0xff]
          %v163 = vld [vmem:[%s153 + $0x48] sm:$0xff]
          %v164 = vld [vmem:[%s153 + $0x50] sm:$0xff]
          %v165 = vld [vmem:[%s153 + $0x58] sm:$0xff]
          %v166 = vld [vmem:[%s130] sm:$0xff]
          %v167 = vld [vmem:[%s130 + $0x8] sm:$0xff]
          %v168 = vld [vmem:[%s130 + $0x10] sm:$0xff]
          %v169 = vld [vmem:[%s130 + $0x18] sm:$0xff]
          %v170 = vld [vmem:[%s130 + $0x20] sm:$0xff]
          %v171 = vld [vmem:[%s130 + $0x28] sm:$0xff]
          %v172 = vld [vmem:[%s130 + $0x30] sm:$0xff]
          %v173 = vld [vmem:[%s130 + $0x38] sm:$0xff]
          %v174 = vld [vmem:[%s130 + $0x40] sm:$0xff]
          %v175 = vld [vmem:[%s130 + $0x48] sm:$0xff]
          %v176 = vld [vmem:[%s130 + $0x50] sm:$0xff]
          %v177 = vld [vmem:[%s130 + $0x58] sm:$0xff]
          %v178 = vsub.f32 %v154, %v166
          %v179 = vsub.f32 %v155, %v167
          %v180 = vsub.f32 %v156, %v168
          %v181 = vsub.f32 %v157, %v169
          %v182 = vsub.f32 %v158, %v170
          %v183 = vsub.f32 %v159, %v171
          %v184 = vsub.f32 %v160, %v172
          %v185 = vsub.f32 %v161, %v173
          %v186 = vsub.f32 %v162, %v174
          %v187 = vsub.f32 %v163, %v175
          %v188 = vsub.f32 %v164, %v176
          %v189 = vsub.f32 %v165, %v177
          %v190 = vmul.f32 %v178, %v178
          %v191 = vmul.f32 %v179, %v179
          %v192 = vmul.f32 %v180, %v180
          %v193 = vmul.f32 %v181, %v181
          %v194 = vmul.f32 %v182, %v182
          %v195 = vmul.f32 %v183, %v183
          %v196 = vmul.f32 %v184, %v184
          %v197 = vmul.f32 %v185, %v185
          %v198 = vmul.f32 %v186, %v186
          %v199 = vmul.f32 %v187, %v187
          %v200 = vmul.f32 %v188, %v188
          %v201 = vmul.f32 %v189, %v189
          %v202 = vadd.f32 %v190, 0.0
          %v203 = vadd.f32 %v191, 0.0
          %v204 = vadd.f32 %v192, 0.0
          %v205 = vadd.f32 %v193, 0.0
          %v206 = vadd.f32 %v194, 0.0
          %v207 = vadd.f32 %v195, 0.0
          %v208 = vadd.f32 %v196, 0.0
          %v209 = vadd.f32 %v197, 0.0
          %v210 = vadd.f32 %v198, 0.0
          %v211 = vadd.f32 %v199, 0.0
          %v212 = vadd.f32 %v200, 0.0
          %v213 = vadd.f32 %v201, 0.0
          %s214 = scalar_lea.vmem %s130, 160 [#allocation2]
          %v215 = vld [vmem:[%s214] sm:$0xff]
          %v216 = vld [vmem:[%s214 + $0x8] sm:$0xff]
          %v217 = vld [vmem:[%s214 + $0x10] sm:$0xff]
          %v218 = vld [vmem:[%s214 + $0x18] sm:$0xff]
          %v219 = vld [vmem:[%s214 + $0x20] sm:$0xff]
          %v220 = vld [vmem:[%s214 + $0x28] sm:$0xff]
          %v221 = vld [vmem:[%s214 + $0x30] sm:$0xff]
          %v222 = vld [vmem:[%s214 + $0x38] sm:$0xff]
          %v223 = vld [vmem:[%s214 + $0x40] sm:$0xff]
          %v224 = vld [vmem:[%s214 + $0x48] sm:$0xff]
          %v225 = vld [vmem:[%s214 + $0x50] sm:$0xff]
          %v226 = vld [vmem:[%s214 + $0x58] sm:$0xff]
          %s227 = scalar_lea.vmem %s130, 128 [#allocation2]
          %v228 = vld [vmem:[%s227] sm:$0xff]
          %v229 = vld [vmem:[%s227 + $0x8] sm:$0xff]
          %v230 = vld [vmem:[%s227 + $0x10] sm:$0xff]
          %v231 = vld [vmem:[%s227 + $0x18] sm:$0xff]
          %v232 = vld [vmem:[%s227 + $0x20] sm:$0xff]
          %v233 = vld [vmem:[%s227 + $0x28] sm:$0xff]
          %v234 = vld [vmem:[%s227 + $0x30] sm:$0xff]
          %v235 = vld [vmem:[%s227 + $0x38] sm:$0xff]
          %v236 = vld [vmem:[%s227 + $0x40] sm:$0xff]
          %v237 = vld [vmem:[%s227 + $0x48] sm:$0xff]
          %v238 = vld [vmem:[%s227 + $0x50] sm:$0xff]
          %v239 = vld [vmem:[%s227 + $0x58] sm:$0xff]
          %v240 = vsub.f32 %v215, %v228
          %v241 = vsub.f32 %v216, %v229
          %v242 = vsub.f32 %v217, %v230
          %v243 = vsub.f32 %v218, %v231
          %v244 = vsub.f32 %v219, %v232
          %v245 = vsub.f32 %v220, %v233
          %v246 = vsub.f32 %v221, %v234
          %v247 = vsub.f32 %v222, %v235
          %v248 = vsub.f32 %v223, %v236
          %v249 = vsub.f32 %v224, %v237
          %v250 = vsub.f32 %v225, %v238
          %v251 = vsub.f32 %v226, %v239
          %v252 = vmul.f32 %v240, %v240
          %v253 = vmul.f32 %v241, %v241
          %v254 = vmul.f32 %v242, %v242
          %v255 = vmul.f32 %v243, %v243
          %v256 = vmul.f32 %v244, %v244
          %v257 = vmul.f32 %v245, %v245
          %v258 = vmul.f32 %v246, %v246
          %v259 = vmul.f32 %v247, %v247
          %v260 = vmul.f32 %v248, %v248
          %v261 = vmul.f32 %v249, %v249
          %v262 = vmul.f32 %v250, %v250
          %v263 = vmul.f32 %v251, %v251
          %v264 = vadd.f32 %v202, %v252
          %v265 = vadd.f32 %v203, %v253
          %v266 = vadd.f32 %v204, %v254
          %v267 = vadd.f32 %v205, %v255
          %v268 = vadd.f32 %v206, %v256
          %v269 = vadd.f32 %v207, %v257
          %v270 = vadd.f32 %v208, %v258
          %v271 = vadd.f32 %v209, %v259
          %v272 = vadd.f32 %v210, %v260
          %v273 = vadd.f32 %v211, %v261
          %v274 = vadd.f32 %v212, %v262
          %v275 = vadd.f32 %v213, %v263
          %s276 = scalar_lea.vmem %s130, 288 [#allocation2]
          %v277 = vld [vmem:[%s276] sm:$0xff]
          %v278 = vld [vmem:[%s276 + $0x8] sm:$0xff]
          %v279 = vld [vmem:[%s276 + $0x10] sm:$0xff]
          %v280 = vld [vmem:[%s276 + $0x18] sm:$0xff]
          %v281 = vld [vmem:[%s276 + $0x20] sm:$0xff]
          %v282 = vld [vmem:[%s276 + $0x28] sm:$0xff]
          %v283 = vld [vmem:[%s276 + $0x30] sm:$0xff]
          %v284 = vld [vmem:[%s276 + $0x38] sm:$0xff]
          %v285 = vld [vmem:[%s276 + $0x40] sm:$0xff]
          %v286 = vld [vmem:[%s276 + $0x48] sm:$0xff]
          %v287 = vld [vmem:[%s276 + $0x50] sm:$0xff]
          %v288 = vld [vmem:[%s276 + $0x58] sm:$0xff]
          %s289 = scalar_lea.vmem %s130, 256 [#allocation2]
          %v290 = vld [vmem:[%s289] sm:$0xff]
          %v291 = vld [vmem:[%s289 + $0x8] sm:$0xff]
          %v292 = vld [vmem:[%s289 + $0x10] sm:$0xff]
          %v293 = vld [vmem:[%s289 + $0x18] sm:$0xff]
          %v294 = vld [vmem:[%s289 + $0x20] sm:$0xff]
          %v295 = vld [vmem:[%s289 + $0x28] sm:$0xff]
          %v296 = vld [vmem:[%s289 + $0x30] sm:$0xff]
          %v297 = vld [vmem:[%s289 + $0x38] sm:$0xff]
          %v298 = vld [vmem:[%s289 + $0x40] sm:$0xff]
          %v299 = vld [vmem:[%s289 + $0x48] sm:$0xff]
          %v300 = vld [vmem:[%s289 + $0x50] sm:$0xff]
          %v301 = vld [vmem:[%s289 + $0x58] sm:$0xff]
          %v302 = vsub.f32 %v277, %v290
          %v303 = vsub.f32 %v278, %v291
          %v304 = vsub.f32 %v279, %v292
          %v305 = vsub.f32 %v280, %v293
          %v306 = vsub.f32 %v281, %v294
          %v307 = vsub.f32 %v282, %v295
          %v308 = vsub.f32 %v283, %v296
          %v309 = vsub.f32 %v284, %v297
          %v310 = vsub.f32 %v285, %v298
          %v311 = vsub.f32 %v286, %v299
          %v312 = vsub.f32 %v287, %v300
          %v313 = vsub.f32 %v288, %v301
          %v314 = vmul.f32 %v302, %v302
          %v315 = vmul.f32 %v303, %v303
          %v316 = vmul.f32 %v304, %v304
          %v317 = vmul.f32 %v305, %v305
          %v318 = vmul.f32 %v306, %v306
          %v319 = vmul.f32 %v307, %v307
          %v320 = vmul.f32 %v308, %v308
          %v321 = vmul.f32 %v309, %v309
          %v322 = vmul.f32 %v310, %v310
          %v323 = vmul.f32 %v311, %v311
          %v324 = vmul.f32 %v312, %v312
          %v325 = vmul.f32 %v313, %v313
          %v326 = vadd.f32 %v264, %v314
          %v327 = vadd.f32 %v265, %v315
          %v328 = vadd.f32 %v266, %v316
          %v329 = vadd.f32 %v267, %v317
          %v330 = vadd.f32 %v268, %v318
          %v331 = vadd.f32 %v269, %v319
          %v332 = vadd.f32 %v270, %v320
          %v333 = vadd.f32 %v271, %v321
          %v334 = vadd.f32 %v272, %v322
          %v335 = vadd.f32 %v273, %v323
          %v336 = vadd.f32 %v274, %v324
          %v337 = vadd.f32 %v275, %v325
          %s338 = scalar_lea.vmem %s130, 416 [#allocation2]
          %v339 = vld [vmem:[%s338] sm:$0xff]
          %v340 = vld [vmem:[%s338 + $0x8] sm:$0xff]
          %v341 = vld [vmem:[%s338 + $0x10] sm:$0xff]
          %v342 = vld [vmem:[%s338 + $0x18] sm:$0xff]
          %v343 = vld [vmem:[%s338 + $0x20] sm:$0xff]
          %v344 = vld [vmem:[%s338 + $0x28] sm:$0xff]
          %v345 = vld [vmem:[%s338 + $0x30] sm:$0xff]
          %v346 = vld [vmem:[%s338 + $0x38] sm:$0xff]
          %v347 = vld [vmem:[%s338 + $0x40] sm:$0xff]
          %v348 = vld [vmem:[%s338 + $0x48] sm:$0xff]
          %v349 = vld [vmem:[%s338 + $0x50] sm:$0xff]
          %v350 = vld [vmem:[%s338 + $0x58] sm:$0xff]
          %s351 = scalar_lea.vmem %s130, 384 [#allocation2]
          %v352 = vld [vmem:[%s351] sm:$0xff]
          %v353 = vld [vmem:[%s351 + $0x8] sm:$0xff]
          %v354 = vld [vmem:[%s351 + $0x10] sm:$0xff]
          %v355 = vld [vmem:[%s351 + $0x18] sm:$0xff]
          %v356 = vld [vmem:[%s351 + $0x20] sm:$0xff]
          %v357 = vld [vmem:[%s351 + $0x28] sm:$0xff]
          %v358 = vld [vmem:[%s351 + $0x30] sm:$0xff]
          %v359 = vld [vmem:[%s351 + $0x38] sm:$0xff]
          %v360 = vld [vmem:[%s351 + $0x40] sm:$0xff]
          %v361 = vld [vmem:[%s351 + $0x48] sm:$0xff]
          %v362 = vld [vmem:[%s351 + $0x50] sm:$0xff]
          %v363 = vld [vmem:[%s351 + $0x58] sm:$0xff]
          %v364 = vsub.f32 %v339, %v352
          %v365 = vsub.f32 %v340, %v353
          %v366 = vsub.f32 %v341, %v354
          %v367 = vsub.f32 %v342, %v355
          %v368 = vsub.f32 %v343, %v356
          %v369 = vsub.f32 %v344, %v357
          %v370 = vsub.f32 %v345, %v358
          %v371 = vsub.f32 %v346, %v359
          %v372 = vsub.f32 %v347, %v360
          %v373 = vsub.f32 %v348, %v361
          %v374 = vsub.f32 %v349, %v362
          %v375 = vsub.f32 %v350, %v363
          %v376 = vmul.f32 %v364, %v364
          %v377 = vmul.f32 %v365, %v365
          %v378 = vmul.f32 %v366, %v366
          %v379 = vmul.f32 %v367, %v367
          %v380 = vmul.f32 %v368, %v368
          %v381 = vmul.f32 %v369, %v369
          %v382 = vmul.f32 %v370, %v370
          %v383 = vmul.f32 %v371, %v371
          %v384 = vmul.f32 %v372, %v372
          %v385 = vmul.f32 %v373, %v373
          %v386 = vmul.f32 %v374, %v374
          %v387 = vmul.f32 %v375, %v375
          %v388 = vadd.f32 %v326, %v376
          %v389 = vadd.f32 %v327, %v377
          %v390 = vadd.f32 %v328, %v378
          %v391 = vadd.f32 %v329, %v379
          %v392 = vadd.f32 %v330, %v380
          %v393 = vadd.f32 %v331, %v381
          %v394 = vadd.f32 %v332, %v382
          %v395 = vadd.f32 %v333, %v383
          %v396 = vadd.f32 %v334, %v384
          %v397 = vadd.f32 %v335, %v385
          %v398 = vadd.f32 %v336, %v386
          %v399 = vadd.f32 %v337, %v387
          %v400 = vmul.f32 %v388, 25.0
          %v401 = vmul.f32 %v389, 25.0
          %v402 = vmul.f32 %v390, 25.0
          %v403 = vmul.f32 %v391, 25.0
          %v404 = vmul.f32 %v392, 25.0
          %v405 = vmul.f32 %v393, 25.0
          %v406 = vmul.f32 %v394, 25.0
          %v407 = vmul.f32 %v395, 25.0
          %v408 = vmul.f32 %v396, 25.0
          %v409 = vmul.f32 %v397, 25.0
          %v410 = vmul.f32 %v398, 25.0
          %v411 = vmul.f32 %v399, 25.0
          %v412 = vtanh.pop %v400
          %v413 = vtanh.pop %v401
          %v414 = vtanh.pop %v402
          %v415 = vtanh.pop %v403
          %v416 = vtanh.pop %v404
          %v417 = vtanh.pop %v405
          %v418 = vtanh.pop %v406
          %v419 = vtanh.pop %v407
          %v420 = vtanh.pop %v408
          %v421 = vtanh.pop %v409
          %v422 = vtanh.pop %v410
          %v423 = vtanh.pop %v411
          %v424 = vsub.f32 1.0, %v412
          %v425 = vsub.f32 1.0, %v413
          %v426 = vsub.f32 1.0, %v414
          %v427 = vsub.f32 1.0, %v415
          %v428 = vsub.f32 1.0, %v416
          %v429 = vsub.f32 1.0, %v417
          %v430 = vsub.f32 1.0, %v418
          %v431 = vsub.f32 1.0, %v419
          %v432 = vsub.f32 1.0, %v420
          %v433 = vsub.f32 1.0, %v421
          %v434 = vsub.f32 1.0, %v422
          %v435 = vsub.f32 1.0, %v423
          %s436 = scalar_lea.vmem %s148, 32 [#allocation5]
          %437 = vst [vmem:[%s436] sm:$0xff] %v424
          %438 = vst [vmem:[%s436 + $0x8] sm:$0xff] %v425
          %439 = vst [vmem:[%s436 + $0x10] sm:$0xff] %v426
          %440 = vst [vmem:[%s436 + $0x18] sm:$0xff] %v427
          %441 = vst [vmem:[%s436 + $0x20] sm:$0xff] %v428
          %442 = vst [vmem:[%s436 + $0x28] sm:$0xff] %v429
          %443 = vst [vmem:[%s436 + $0x30] sm:$0xff] %v430
          %444 = vst [vmem:[%s436 + $0x38] sm:$0xff] %v431
          %445 = vst [vmem:[%s436 + $0x40] sm:$0xff] %v432
          %446 = vst [vmem:[%s436 + $0x48] sm:$0xff] %v433
          %447 = vst [vmem:[%s436 + $0x50] sm:$0xff] %v434
          %448 = vst [vmem:[%s436 + $0x58] sm:$0xff] %v435
          %449 = vst [vmem:[%s148] sm:$0xff] 1.0
          %450 = vst [vmem:[%s148 + $0x8] sm:$0xff] 1.0
          %451 = vst [vmem:[%s148 + $0x10] sm:$0xff] 1.0
          %452 = vst [vmem:[%s148 + $0x18] sm:$0xff] 1.0
        $region32: #{tpu_custom_call.1} parent=23 // pred_fallthru
          _
        %p453 = scmp.eq.s32.totalorder %s23, 1
        // Predicated region
        $region33: #{tpu_custom_call.1} parent=23 // pred_check
          %p454 = pneg %p453
        $region34: #{tpu_custom_call.1} parent=23 // pred_check_branch
          %456 = sbr.rel (%p454) target = $region36
        $region35: #{tpu_custom_call.1} parent=23 // pred_region
          %v457 = vld [vmem:[%s130] sm:$0xff]
          %v458 = vld [vmem:[%s130 + $0x8] sm:$0xff]
          %v459 = vld [vmem:[%s130 + $0x10] sm:$0xff]
          %v460 = vld [vmem:[%s130 + $0x18] sm:$0xff]
          %v461 = vld [vmem:[%s130 + $0x20] sm:$0xff]
          %v462 = vld [vmem:[%s130 + $0x28] sm:$0xff]
          %v463 = vld [vmem:[%s130 + $0x30] sm:$0xff]
          %v464 = vld [vmem:[%s130 + $0x38] sm:$0xff]
          %v465 = vld [vmem:[%s130 + $0x40] sm:$0xff]
          %v466 = vld [vmem:[%s130 + $0x48] sm:$0xff]
          %v467 = vld [vmem:[%s130 + $0x50] sm:$0xff]
          %v468 = vld [vmem:[%s130 + $0x58] sm:$0xff]
          %v469 = vld [vmem:[%s130 + $0x60] sm:$0xff]
          %v470 = vld [vmem:[%s130 + $0x68] sm:$0xff]
          %v471 = vld [vmem:[%s130 + $0x70] sm:$0xff]
          %v472 = vld [vmem:[%s130 + $0x78] sm:$0xff]
          %v473 = vrot.slane %v457, 7
          %v474 = vrot.slane %v461, 7
          %v475 = vrot.slane %v465, 7
          %v476 = vrot.slane %v469, 7
          %v477 = vrot.slane %v458, 7
          %v478 = vrot.slane %v462, 7
          %v479 = vrot.slane %v466, 7
          %v480 = vrot.slane %v470, 7
          %v481 = vrot.slane %v459, 7
          %v482 = vrot.slane %v463, 7
          %v483 = vrot.slane %v467, 7
          %v484 = vrot.slane %v471, 7
          %v485 = vrot.slane %v460, 7
          %v486 = vrot.slane %v464, 7
          %v487 = vrot.slane %v468, 7
          %v488 = vrot.slane %v472, 7
          %v489 = vlaneseq
          %v490 = vshrl.u32 %v489, 7
          %vm491 = vcmp.lt.s32.totalorder %v490, 1
          %v492 = vsel %vm491, %v481, %v485
          %v493 = vsel %vm491, %v482, %v486
          %v494 = vsel %vm491, %v483, %v487
          %v495 = vsel %vm491, %v484, %v488
          %v496 = vsel %vm491, %v477, %v481
          %v497 = vsel %vm491, %v478, %v482
          %v498 = vsel %vm491, %v479, %v483
          %v499 = vsel %vm491, %v480, %v484
          %v500 = vsel %vm491, %v473, %v477
          %v501 = vsel %vm491, %v474, %v478
          %v502 = vsel %vm491, %v475, %v479
          %v503 = vsel %vm491, %v476, %v480
          %v504 = vsel %vm491, %v485, %v473
          %v505 = vsel %vm491, %v486, %v474
          %v506 = vsel %vm491, %v487, %v475
          %v507 = vsel %vm491, %v488, %v476
          %v508 = vsub.f32 %v457, %v504
          %v509 = vsub.f32 %v458, %v500
          %v510 = vsub.f32 %v459, %v496
          %v511 = vsub.f32 %v460, %v492
          %v512 = vsub.f32 %v461, %v505
          %v513 = vsub.f32 %v462, %v501
          %v514 = vsub.f32 %v463, %v497
          %v515 = vsub.f32 %v464, %v493
          %v516 = vsub.f32 %v465, %v506
          %v517 = vsub.f32 %v466, %v502
          %v518 = vsub.f32 %v467, %v498
          %v519 = vsub.f32 %v468, %v494
          %v520 = vsub.f32 %v469, %v507
          %v521 = vsub.f32 %v470, %v503
          %v522 = vsub.f32 %v471, %v499
          %v523 = vsub.f32 %v472, %v495
          %v524 = vmul.f32 %v508, %v508
          %v525 = vmul.f32 %v509, %v509
          %v526 = vmul.f32 %v510, %v510
          %v527 = vmul.f32 %v511, %v511
          %v528 = vmul.f32 %v512, %v512
          %v529 = vmul.f32 %v513, %v513
          %v530 = vmul.f32 %v514, %v514
          %v531 = vmul.f32 %v515, %v515
          %v532 = vmul.f32 %v516, %v516
          %v533 = vmul.f32 %v517, %v517
          %v534 = vmul.f32 %v518, %v518
          %v535 = vmul.f32 %v519, %v519
          %v536 = vmul.f32 %v520, %v520
          %v537 = vmul.f32 %v521, %v521
          %v538 = vmul.f32 %v522, %v522
          %v539 = vmul.f32 %v523, %v523
          %v540 = vadd.f32 %v524, 0.0
          %v541 = vadd.f32 %v525, 0.0
          %v542 = vadd.f32 %v526, 0.0
          %v543 = vadd.f32 %v527, 0.0
          %v544 = vadd.f32 %v528, 0.0
          %v545 = vadd.f32 %v529, 0.0
          %v546 = vadd.f32 %v530, 0.0
          %v547 = vadd.f32 %v531, 0.0
          %v548 = vadd.f32 %v532, 0.0
          %v549 = vadd.f32 %v533, 0.0
          %v550 = vadd.f32 %v534, 0.0
          %v551 = vadd.f32 %v535, 0.0
          %v552 = vadd.f32 %v536, 0.0
          %v553 = vadd.f32 %v537, 0.0
          %v554 = vadd.f32 %v538, 0.0
          %v555 = vadd.f32 %v539, 0.0
          %s556 = scalar_lea.vmem %s130, 128 [#allocation2]
          %v557 = vld [vmem:[%s556] sm:$0xff]
          %v558 = vld [vmem:[%s556 + $0x8] sm:$0xff]
          %v559 = vld [vmem:[%s556 + $0x10] sm:$0xff]
          %v560 = vld [vmem:[%s556 + $0x18] sm:$0xff]
          %v561 = vld [vmem:[%s556 + $0x20] sm:$0xff]
          %v562 = vld [vmem:[%s556 + $0x28] sm:$0xff]
          %v563 = vld [vmem:[%s556 + $0x30] sm:$0xff]
          %v564 = vld [vmem:[%s556 + $0x38] sm:$0xff]
          %v565 = vld [vmem:[%s556 + $0x40] sm:$0xff]
          %v566 = vld [vmem:[%s556 + $0x48] sm:$0xff]
          %v567 = vld [vmem:[%s556 + $0x50] sm:$0xff]
          %v568 = vld [vmem:[%s556 + $0x58] sm:$0xff]
          %v569 = vld [vmem:[%s556 + $0x60] sm:$0xff]
          %v570 = vld [vmem:[%s556 + $0x68] sm:$0xff]
          %v571 = vld [vmem:[%s556 + $0x70] sm:$0xff]
          %v572 = vld [vmem:[%s556 + $0x78] sm:$0xff]
          %v573 = vrot.slane %v557, 7
          %v574 = vrot.slane %v561, 7
          %v575 = vrot.slane %v565, 7
          %v576 = vrot.slane %v569, 7
          %v577 = vrot.slane %v558, 7
          %v578 = vrot.slane %v562, 7
          %v579 = vrot.slane %v566, 7
          %v580 = vrot.slane %v570, 7
          %v581 = vrot.slane %v559, 7
          %v582 = vrot.slane %v563, 7
          %v583 = vrot.slane %v567, 7
          %v584 = vrot.slane %v571, 7
          %v585 = vrot.slane %v560, 7
          %v586 = vrot.slane %v564, 7
          %v587 = vrot.slane %v568, 7
          %v588 = vrot.slane %v572, 7
          %v589 = vsel %vm491, %v581, %v585
          %v590 = vsel %vm491, %v582, %v586
          %v591 = vsel %vm491, %v583, %v587
          %v592 = vsel %vm491, %v584, %v588
          %v593 = vsel %vm491, %v577, %v581
          %v594 = vsel %vm491, %v578, %v582
          %v595 = vsel %vm491, %v579, %v583
          %v596 = vsel %vm491, %v580, %v584
          %v597 = vsel %vm491, %v573, %v577
          %v598 = vsel %vm491, %v574, %v578
          %v599 = vsel %vm491, %v575, %v579
          %v600 = vsel %vm491, %v576, %v580
          %v601 = vsel %vm491, %v585, %v573
          %v602 = vsel %vm491, %v586, %v574
          %v603 = vsel %vm491, %v587, %v575
          %v604 = vsel %vm491, %v588, %v576
          %v605 = vsub.f32 %v557, %v601
          %v606 = vsub.f32 %v558, %v597
          %v607 = vsub.f32 %v559, %v593
          %v608 = vsub.f32 %v560, %v589
          %v609 = vsub.f32 %v561, %v602
          %v610 = vsub.f32 %v562, %v598
          %v611 = vsub.f32 %v563, %v594
          %v612 = vsub.f32 %v564, %v590
          %v613 = vsub.f32 %v565, %v603
          %v614 = vsub.f32 %v566, %v599
          %v615 = vsub.f32 %v567, %v595
          %v616 = vsub.f32 %v568, %v591
          %v617 = vsub.f32 %v569, %v604
          %v618 = vsub.f32 %v570, %v600
          %v619 = vsub.f32 %v571, %v596
          %v620 = vsub.f32 %v572, %v592
          %v621 = vmul.f32 %v605, %v605
          %v622 = vmul.f32 %v606, %v606
          %v623 = vmul.f32 %v607, %v607
          %v624 = vmul.f32 %v608, %v608
          %v625 = vmul.f32 %v609, %v609
          %v626 = vmul.f32 %v610, %v610
          %v627 = vmul.f32 %v611, %v611
          %v628 = vmul.f32 %v612, %v612
          %v629 = vmul.f32 %v613, %v613
          %v630 = vmul.f32 %v614, %v614
          %v631 = vmul.f32 %v615, %v615
          %v632 = vmul.f32 %v616, %v616
          %v633 = vmul.f32 %v617, %v617
          %v634 = vmul.f32 %v618, %v618
          %v635 = vmul.f32 %v619, %v619
          %v636 = vmul.f32 %v620, %v620
          %v637 = vadd.f32 %v540, %v621
          %v638 = vadd.f32 %v541, %v622
          %v639 = vadd.f32 %v542, %v623
          %v640 = vadd.f32 %v543, %v624
          %v641 = vadd.f32 %v544, %v625
          %v642 = vadd.f32 %v545, %v626
          %v643 = vadd.f32 %v546, %v627
          %v644 = vadd.f32 %v547, %v628
          %v645 = vadd.f32 %v548, %v629
          %v646 = vadd.f32 %v549, %v630
          %v647 = vadd.f32 %v550, %v631
          %v648 = vadd.f32 %v551, %v632
          %v649 = vadd.f32 %v552, %v633
          %v650 = vadd.f32 %v553, %v634
          %v651 = vadd.f32 %v554, %v635
          %v652 = vadd.f32 %v555, %v636
          %s653 = scalar_lea.vmem %s130, 256 [#allocation2]
          %v654 = vld [vmem:[%s653] sm:$0xff]
          %v655 = vld [vmem:[%s653 + $0x8] sm:$0xff]
          %v656 = vld [vmem:[%s653 + $0x10] sm:$0xff]
          %v657 = vld [vmem:[%s653 + $0x18] sm:$0xff]
          %v658 = vld [vmem:[%s653 + $0x20] sm:$0xff]
          %v659 = vld [vmem:[%s653 + $0x28] sm:$0xff]
          %v660 = vld [vmem:[%s653 + $0x30] sm:$0xff]
          %v661 = vld [vmem:[%s653 + $0x38] sm:$0xff]
          %v662 = vld [vmem:[%s653 + $0x40] sm:$0xff]
          %v663 = vld [vmem:[%s653 + $0x48] sm:$0xff]
          %v664 = vld [vmem:[%s653 + $0x50] sm:$0xff]
          %v665 = vld [vmem:[%s653 + $0x58] sm:$0xff]
          %v666 = vld [vmem:[%s653 + $0x60] sm:$0xff]
          %v667 = vld [vmem:[%s653 + $0x68] sm:$0xff]
          %v668 = vld [vmem:[%s653 + $0x70] sm:$0xff]
          %v669 = vld [vmem:[%s653 + $0x78] sm:$0xff]
          %v670 = vrot.slane %v654, 7
          %v671 = vrot.slane %v658, 7
          %v672 = vrot.slane %v662, 7
          %v673 = vrot.slane %v666, 7
          %v674 = vrot.slane %v655, 7
          %v675 = vrot.slane %v659, 7
          %v676 = vrot.slane %v663, 7
          %v677 = vrot.slane %v667, 7
          %v678 = vrot.slane %v656, 7
          %v679 = vrot.slane %v660, 7
          %v680 = vrot.slane %v664, 7
          %v681 = vrot.slane %v668, 7
          %v682 = vrot.slane %v657, 7
          %v683 = vrot.slane %v661, 7
          %v684 = vrot.slane %v665, 7
          %v685 = vrot.slane %v669, 7
          %v686 = vsel %vm491, %v678, %v682
          %v687 = vsel %vm491, %v679, %v683
          %v688 = vsel %vm491, %v680, %v684
          %v689 = vsel %vm491, %v681, %v685
          %v690 = vsel %vm491, %v674, %v678
          %v691 = vsel %vm491, %v675, %v679
          %v692 = vsel %vm491, %v676, %v680
          %v693 = vsel %vm491, %v677, %v681
          %v694 = vsel %vm491, %v670, %v674
          %v695 = vsel %vm491, %v671, %v675
          %v696 = vsel %vm491, %v672, %v676
          %v697 = vsel %vm491, %v673, %v677
          %v698 = vsel %vm491, %v682, %v670
          %v699 = vsel %vm491, %v683, %v671
          %v700 = vsel %vm491, %v684, %v672
          %v701 = vsel %vm491, %v685, %v673
          %v702 = vsub.f32 %v654, %v698
          %v703 = vsub.f32 %v655, %v694
          %v704 = vsub.f32 %v656, %v690
          %v705 = vsub.f32 %v657, %v686
          %v706 = vsub.f32 %v658, %v699
          %v707 = vsub.f32 %v659, %v695
          %v708 = vsub.f32 %v660, %v691
          %v709 = vsub.f32 %v661, %v687
          %v710 = vsub.f32 %v662, %v700
          %v711 = vsub.f32 %v663, %v696
          %v712 = vsub.f32 %v664, %v692
          %v713 = vsub.f32 %v665, %v688
          %v714 = vsub.f32 %v666, %v701
          %v715 = vsub.f32 %v667, %v697
          %v716 = vsub.f32 %v668, %v693
          %v717 = vsub.f32 %v669, %v689
          %v718 = vmul.f32 %v702, %v702
          %v719 = vmul.f32 %v703, %v703
          %v720 = vmul.f32 %v704, %v704
          %v721 = vmul.f32 %v705, %v705
          %v722 = vmul.f32 %v706, %v706
          %v723 = vmul.f32 %v707, %v707
          %v724 = vmul.f32 %v708, %v708
          %v725 = vmul.f32 %v709, %v709
          %v726 = vmul.f32 %v710, %v710
          %v727 = vmul.f32 %v711, %v711
          %v728 = vmul.f32 %v712, %v712
          %v729 = vmul.f32 %v713, %v713
          %v730 = vmul.f32 %v714, %v714
          %v731 = vmul.f32 %v715, %v715
          %v732 = vmul.f32 %v716, %v716
          %v733 = vmul.f32 %v717, %v717
          %v734 = vadd.f32 %v637, %v718
          %v735 = vadd.f32 %v638, %v719
          %v736 = vadd.f32 %v639, %v720
          %v737 = vadd.f32 %v640, %v721
          %v738 = vadd.f32 %v641, %v722
          %v739 = vadd.f32 %v642, %v723
          %v740 = vadd.f32 %v643, %v724
          %v741 = vadd.f32 %v644, %v725
          %v742 = vadd.f32 %v645, %v726
          %v743 = vadd.f32 %v646, %v727
          %v744 = vadd.f32 %v647, %v728
          %v745 = vadd.f32 %v648, %v729
          %v746 = vadd.f32 %v649, %v730
          %v747 = vadd.f32 %v650, %v731
          %v748 = vadd.f32 %v651, %v732
          %v749 = vadd.f32 %v652, %v733
          %s750 = scalar_lea.vmem %s130, 384 [#allocation2]
          %v751 = vld [vmem:[%s750] sm:$0xff]
          %v752 = vld [vmem:[%s750 + $0x8] sm:$0xff]
          %v753 = vld [vmem:[%s750 + $0x10] sm:$0xff]
          %v754 = vld [vmem:[%s750 + $0x18] sm:$0xff]
          %v755 = vld [vmem:[%s750 + $0x20] sm:$0xff]
          %v756 = vld [vmem:[%s750 + $0x28] sm:$0xff]
          %v757 = vld [vmem:[%s750 + $0x30] sm:$0xff]
          %v758 = vld [vmem:[%s750 + $0x38] sm:$0xff]
          %v759 = vld [vmem:[%s750 + $0x40] sm:$0xff]
          %v760 = vld [vmem:[%s750 + $0x48] sm:$0xff]
          %v761 = vld [vmem:[%s750 + $0x50] sm:$0xff]
          %v762 = vld [vmem:[%s750 + $0x58] sm:$0xff]
          %v763 = vld [vmem:[%s750 + $0x60] sm:$0xff]
          %v764 = vld [vmem:[%s750 + $0x68] sm:$0xff]
          %v765 = vld [vmem:[%s750 + $0x70] sm:$0xff]
          %v766 = vld [vmem:[%s750 + $0x78] sm:$0xff]
          %v767 = vrot.slane %v751, 7
          %v768 = vrot.slane %v755, 7
          %v769 = vrot.slane %v759, 7
          %v770 = vrot.slane %v763, 7
          %v771 = vrot.slane %v752, 7
          %v772 = vrot.slane %v756, 7
          %v773 = vrot.slane %v760, 7
          %v774 = vrot.slane %v764, 7
          %v775 = vrot.slane %v753, 7
          %v776 = vrot.slane %v757, 7
          %v777 = vrot.slane %v761, 7
          %v778 = vrot.slane %v765, 7
          %v779 = vrot.slane %v754, 7
          %v780 = vrot.slane %v758, 7
          %v781 = vrot.slane %v762, 7
          %v782 = vrot.slane %v766, 7
          %v783 = vsel %vm491, %v775, %v779
          %v784 = vsel %vm491, %v776, %v780
          %v785 = vsel %vm491, %v777, %v781
          %v786 = vsel %vm491, %v778, %v782
          %v787 = vsel %vm491, %v771, %v775
          %v788 = vsel %vm491, %v772, %v776
          %v789 = vsel %vm491, %v773, %v777
          %v790 = vsel %vm491, %v774, %v778
          %v791 = vsel %vm491, %v767, %v771
          %v792 = vsel %vm491, %v768, %v772
          %v793 = vsel %vm491, %v769, %v773
          %v794 = vsel %vm491, %v770, %v774
          %v795 = vsel %vm491, %v779, %v767
          %v796 = vsel %vm491, %v780, %v768
          %v797 = vsel %vm491, %v781, %v769
          %v798 = vsel %vm491, %v782, %v770
          %v799 = vsub.f32 %v751, %v795
          %v800 = vsub.f32 %v752, %v791
          %v801 = vsub.f32 %v753, %v787
          %v802 = vsub.f32 %v754, %v783
          %v803 = vsub.f32 %v755, %v796
          %v804 = vsub.f32 %v756, %v792
          %v805 = vsub.f32 %v757, %v788
          %v806 = vsub.f32 %v758, %v784
          %v807 = vsub.f32 %v759, %v797
          %v808 = vsub.f32 %v760, %v793
          %v809 = vsub.f32 %v761, %v789
          %v810 = vsub.f32 %v762, %v785
          %v811 = vsub.f32 %v763, %v798
          %v812 = vsub.f32 %v764, %v794
          %v813 = vsub.f32 %v765, %v790
          %v814 = vsub.f32 %v766, %v786
          %v815 = vmul.f32 %v799, %v799
          %v816 = vmul.f32 %v800, %v800
          %v817 = vmul.f32 %v801, %v801
          %v818 = vmul.f32 %v802, %v802
          %v819 = vmul.f32 %v803, %v803
          %v820 = vmul.f32 %v804, %v804
          %v821 = vmul.f32 %v805, %v805
          %v822 = vmul.f32 %v806, %v806
          %v823 = vmul.f32 %v807, %v807
          %v824 = vmul.f32 %v808, %v808
          %v825 = vmul.f32 %v809, %v809
          %v826 = vmul.f32 %v810, %v810
          %v827 = vmul.f32 %v811, %v811
          %v828 = vmul.f32 %v812, %v812
          %v829 = vmul.f32 %v813, %v813
          %v830 = vmul.f32 %v814, %v814
          %v831 = vadd.f32 %v734, %v815
          %v832 = vadd.f32 %v735, %v816
          %v833 = vadd.f32 %v736, %v817
          %v834 = vadd.f32 %v737, %v818
          %v835 = vadd.f32 %v738, %v819
          %v836 = vadd.f32 %v739, %v820
          %v837 = vadd.f32 %v740, %v821
          %v838 = vadd.f32 %v741, %v822
          %v839 = vadd.f32 %v742, %v823
          %v840 = vadd.f32 %v743, %v824
          %v841 = vadd.f32 %v744, %v825
          %v842 = vadd.f32 %v745, %v826
          %v843 = vadd.f32 %v746, %v827
          %v844 = vadd.f32 %v747, %v828
          %v845 = vadd.f32 %v748, %v829
          %v846 = vadd.f32 %v749, %v830
          %v847 = vmul.f32 %v831, 25.0
          %v848 = vmul.f32 %v832, 25.0
          %v849 = vmul.f32 %v833, 25.0
          %v850 = vmul.f32 %v834, 25.0
          %v851 = vmul.f32 %v835, 25.0
          %v852 = vmul.f32 %v836, 25.0
          %v853 = vmul.f32 %v837, 25.0
          %v854 = vmul.f32 %v838, 25.0
          %v855 = vmul.f32 %v839, 25.0
          %v856 = vmul.f32 %v840, 25.0
          %v857 = vmul.f32 %v841, 25.0
          %v858 = vmul.f32 %v842, 25.0
          %v859 = vmul.f32 %v843, 25.0
          %v860 = vmul.f32 %v844, 25.0
          %v861 = vmul.f32 %v845, 25.0
          %v862 = vmul.f32 %v846, 25.0
          %v863 = vtanh.pop %v847
          %v864 = vtanh.pop %v848
          %v865 = vtanh.pop %v849
          %v866 = vtanh.pop %v850
          %v867 = vtanh.pop %v851
          %v868 = vtanh.pop %v852
          %v869 = vtanh.pop %v853
          %v870 = vtanh.pop %v854
          %v871 = vtanh.pop %v855
          %v872 = vtanh.pop %v856
          %v873 = vtanh.pop %v857
          %v874 = vtanh.pop %v858
          %v875 = vtanh.pop %v859
          %v876 = vtanh.pop %v860
          %v877 = vtanh.pop %v861
          %v878 = vtanh.pop %v862
          %v879 = vsub.f32 1.0, %v863
          %v880 = vsub.f32 1.0, %v864
          %v881 = vsub.f32 1.0, %v865
          %v882 = vsub.f32 1.0, %v866
          %v883 = vsub.f32 1.0, %v867
          %v884 = vsub.f32 1.0, %v868
          %v885 = vsub.f32 1.0, %v869
          %v886 = vsub.f32 1.0, %v870
          %v887 = vsub.f32 1.0, %v871
          %v888 = vsub.f32 1.0, %v872
          %v889 = vsub.f32 1.0, %v873
          %v890 = vsub.f32 1.0, %v874
          %v891 = vsub.f32 1.0, %v875
          %v892 = vsub.f32 1.0, %v876
          %v893 = vsub.f32 1.0, %v877
          %v894 = vsub.f32 1.0, %v878
          %v895 = vadd.s32 %v490, 8
          %v896 = vadd.s32 %v490, 16
          %v897 = vadd.s32 %v490, 24
          %vm898 = vcmp.ge.s32.totalorder %v490, 1
          %vm899 = vcmp.ge.s32.totalorder %v895, 1
          %vm900 = vcmp.ge.s32.totalorder %v896, 1
          %vm901 = vcmp.ge.s32.totalorder %v897, 1
          %v902 = vsel %vm898, 1, 0
          %v903 = vsel %vm899, 1, 0
          %v904 = vsel %vm900, 1, 0
          %v905 = vsel %vm901, 1, 0
          %vm906 = vcmp.eq.s32.totalorder %v902, 1
          %vm907 = vcmp.eq.s32.totalorder %v903, 1
          %vm908 = vcmp.eq.s32.totalorder %v904, 1
          %vm909 = vcmp.eq.s32.totalorder %v905, 1
          %v910 = vsel %vm906, %v879, 1.0
          %v911 = vsel %vm907, %v880, 1.0
          %v912 = vsel %vm908, %v881, 1.0
          %v913 = vsel %vm909, %v882, 1.0
          %v914 = vsel %vm906, %v883, 1.0
          %v915 = vsel %vm907, %v884, 1.0
          %v916 = vsel %vm908, %v885, 1.0
          %v917 = vsel %vm909, %v886, 1.0
          %v918 = vsel %vm906, %v887, 1.0
          %v919 = vsel %vm907, %v888, 1.0
          %v920 = vsel %vm908, %v889, 1.0
          %v921 = vsel %vm909, %v890, 1.0
          %v922 = vsel %vm906, %v891, 1.0
          %v923 = vsel %vm907, %v892, 1.0
          %v924 = vsel %vm908, %v893, 1.0
          %v925 = vsel %vm909, %v894, 1.0
          %926 = vst [vmem:[%s148] sm:$0xff] %v910
          %927 = vst [vmem:[%s148 + $0x8] sm:$0xff] %v911
          %928 = vst [vmem:[%s148 + $0x10] sm:$0xff] %v912
          %929 = vst [vmem:[%s148 + $0x18] sm:$0xff] %v913
          %930 = vst [vmem:[%s148 + $0x20] sm:$0xff] %v914
          %931 = vst [vmem:[%s148 + $0x28] sm:$0xff] %v915
          %932 = vst [vmem:[%s148 + $0x30] sm:$0xff] %v916
          %933 = vst [vmem:[%s148 + $0x38] sm:$0xff] %v917
          %934 = vst [vmem:[%s148 + $0x40] sm:$0xff] %v918
          %935 = vst [vmem:[%s148 + $0x48] sm:$0xff] %v919
          %936 = vst [vmem:[%s148 + $0x50] sm:$0xff] %v920
          %937 = vst [vmem:[%s148 + $0x58] sm:$0xff] %v921
          %938 = vst [vmem:[%s148 + $0x60] sm:$0xff] %v922
          %939 = vst [vmem:[%s148 + $0x68] sm:$0xff] %v923
          %940 = vst [vmem:[%s148 + $0x70] sm:$0xff] %v924
          %941 = vst [vmem:[%s148 + $0x78] sm:$0xff] %v925
        $region36: #{tpu_custom_call.1} parent=23 // pred_fallthru
          _
        %p942 = scmp.eq.s32.totalorder %s23, 2
        // Predicated region
        $region37: #{tpu_custom_call.1} parent=23 // pred_check
          %p943 = pneg %p942
        $region38: #{tpu_custom_call.1} parent=23 // pred_check_branch
          %945 = sbr.rel (%p943) target = $region40
        $region39: #{tpu_custom_call.1} parent=23 // pred_region
          %v946 = vld [vmem:[%s130] sm:$0xff]
          %v947 = vld [vmem:[%s130 + $0x8] sm:$0xff]
          %v948 = vld [vmem:[%s130 + $0x10] sm:$0xff]
          %v949 = vld [vmem:[%s130 + $0x18] sm:$0xff]
          %v950 = vld [vmem:[%s130 + $0x20] sm:$0xff]
          %v951 = vld [vmem:[%s130 + $0x28] sm:$0xff]
          %v952 = vld [vmem:[%s130 + $0x30] sm:$0xff]
          %v953 = vld [vmem:[%s130 + $0x38] sm:$0xff]
          %v954 = vld [vmem:[%s130 + $0x40] sm:$0xff]
          %v955 = vld [vmem:[%s130 + $0x48] sm:$0xff]
          %v956 = vld [vmem:[%s130 + $0x50] sm:$0xff]
          %v957 = vld [vmem:[%s130 + $0x58] sm:$0xff]
          %v958 = vld [vmem:[%s130 + $0x60] sm:$0xff]
          %v959 = vld [vmem:[%s130 + $0x68] sm:$0xff]
          %v960 = vld [vmem:[%s130 + $0x70] sm:$0xff]
          %v961 = vld [vmem:[%s130 + $0x78] sm:$0xff]
          %962 = vrot.lane.b32.xlu0 %v946, 1
          %v963 = vpop.permute.xlu0 %962
          %964 = vrot.lane.b32.xlu0 %v947, 1
          %v965 = vpop.permute.xlu0 %964
          %966 = vrot.lane.b32.xlu0 %v948, 1
          %v967 = vpop.permute.xlu0 %966
          %968 = vrot.lane.b32.xlu0 %v949, 1
          %v969 = vpop.permute.xlu0 %968
          %970 = vrot.lane.b32.xlu0 %v950, 1
          %v971 = vpop.permute.xlu0 %970
          %972 = vrot.lane.b32.xlu0 %v951, 1
          %v973 = vpop.permute.xlu0 %972
          %974 = vrot.lane.b32.xlu0 %v952, 1
          %v975 = vpop.permute.xlu0 %974
          %976 = vrot.lane.b32.xlu0 %v953, 1
          %v977 = vpop.permute.xlu0 %976
          %978 = vrot.lane.b32.xlu0 %v954, 1
          %v979 = vpop.permute.xlu0 %978
          %980 = vrot.lane.b32.xlu0 %v955, 1
          %v981 = vpop.permute.xlu0 %980
          %982 = vrot.lane.b32.xlu0 %v956, 1
          %v983 = vpop.permute.xlu0 %982
          %984 = vrot.lane.b32.xlu0 %v957, 1
          %v985 = vpop.permute.xlu0 %984
          %986 = vrot.lane.b32.xlu0 %v958, 1
          %v987 = vpop.permute.xlu0 %986
          %988 = vrot.lane.b32.xlu0 %v959, 1
          %v989 = vpop.permute.xlu0 %988
          %990 = vrot.lane.b32.xlu0 %v960, 1
          %v991 = vpop.permute.xlu0 %990
          %992 = vrot.lane.b32.xlu0 %v961, 1
          %v993 = vpop.permute.xlu0 %992
          %v994 = vsub.f32 %v946, %v963
          %v995 = vsub.f32 %v947, %v965
          %v996 = vsub.f32 %v948, %v967
          %v997 = vsub.f32 %v949, %v969
          %v998 = vsub.f32 %v950, %v971
          %v999 = vsub.f32 %v951, %v973
          %v1000 = vsub.f32 %v952, %v975
          %v1001 = vsub.f32 %v953, %v977
          %v1002 = vsub.f32 %v954, %v979
          %v1003 = vsub.f32 %v955, %v981
          %v1004 = vsub.f32 %v956, %v983
          %v1005 = vsub.f32 %v957, %v985
          %v1006 = vsub.f32 %v958, %v987
          %v1007 = vsub.f32 %v959, %v989
          %v1008 = vsub.f32 %v960, %v991
          %v1009 = vsub.f32 %v961, %v993
          %v1010 = vmul.f32 %v994, %v994
          %v1011 = vmul.f32 %v995, %v995
          %v1012 = vmul.f32 %v996, %v996
          %v1013 = vmul.f32 %v997, %v997
          %v1014 = vmul.f32 %v998, %v998
          %v1015 = vmul.f32 %v999, %v999
          %v1016 = vmul.f32 %v1000, %v1000
          %v1017 = vmul.f32 %v1001, %v1001
          %v1018 = vmul.f32 %v1002, %v1002
          %v1019 = vmul.f32 %v1003, %v1003
          %v1020 = vmul.f32 %v1004, %v1004
          %v1021 = vmul.f32 %v1005, %v1005
          %v1022 = vmul.f32 %v1006, %v1006
          %v1023 = vmul.f32 %v1007, %v1007
          %v1024 = vmul.f32 %v1008, %v1008
          %v1025 = vmul.f32 %v1009, %v1009
          %v1026 = vadd.f32 %v1010, 0.0
          %v1027 = vadd.f32 %v1011, 0.0
          %v1028 = vadd.f32 %v1012, 0.0
          %v1029 = vadd.f32 %v1013, 0.0
          %v1030 = vadd.f32 %v1014, 0.0
          %v1031 = vadd.f32 %v1015, 0.0
          %v1032 = vadd.f32 %v1016, 0.0
          %v1033 = vadd.f32 %v1017, 0.0
          %v1034 = vadd.f32 %v1018, 0.0
          %v1035 = vadd.f32 %v1019, 0.0
          %v1036 = vadd.f32 %v1020, 0.0
          %v1037 = vadd.f32 %v1021, 0.0
          %v1038 = vadd.f32 %v1022, 0.0
          %v1039 = vadd.f32 %v1023, 0.0
          %v1040 = vadd.f32 %v1024, 0.0
          %v1041 = vadd.f32 %v1025, 0.0
          %s1042 = scalar_lea.vmem %s130, 128 [#allocation2]
          %v1043 = vld [vmem:[%s1042] sm:$0xff]
          %v1044 = vld [vmem:[%s1042 + $0x8] sm:$0xff]
          %v1045 = vld [vmem:[%s1042 + $0x10] sm:$0xff]
          %v1046 = vld [vmem:[%s1042 + $0x18] sm:$0xff]
          %v1047 = vld [vmem:[%s1042 + $0x20] sm:$0xff]
          %v1048 = vld [vmem:[%s1042 + $0x28] sm:$0xff]
          %v1049 = vld [vmem:[%s1042 + $0x30] sm:$0xff]
          %v1050 = vld [vmem:[%s1042 + $0x38] sm:$0xff]
          %v1051 = vld [vmem:[%s1042 + $0x40] sm:$0xff]
          %v1052 = vld [vmem:[%s1042 + $0x48] sm:$0xff]
          %v1053 = vld [vmem:[%s1042 + $0x50] sm:$0xff]
          %v1054 = vld [vmem:[%s1042 + $0x58] sm:$0xff]
          %v1055 = vld [vmem:[%s1042 + $0x60] sm:$0xff]
          %v1056 = vld [vmem:[%s1042 + $0x68] sm:$0xff]
          %v1057 = vld [vmem:[%s1042 + $0x70] sm:$0xff]
          %v1058 = vld [vmem:[%s1042 + $0x78] sm:$0xff]
          %1059 = vrot.lane.b32.xlu0 %v1043, 1
          %v1060 = vpop.permute.xlu0 %1059
          %1061 = vrot.lane.b32.xlu0 %v1044, 1
          %v1062 = vpop.permute.xlu0 %1061
          %1063 = vrot.lane.b32.xlu0 %v1045, 1
          %v1064 = vpop.permute.xlu0 %1063
          %1065 = vrot.lane.b32.xlu0 %v1046, 1
          %v1066 = vpop.permute.xlu0 %1065
          %1067 = vrot.lane.b32.xlu0 %v1047, 1
          %v1068 = vpop.permute.xlu0 %1067
          %1069 = vrot.lane.b32.xlu0 %v1048, 1
          %v1070 = vpop.permute.xlu0 %1069
          %1071 = vrot.lane.b32.xlu0 %v1049, 1
          %v1072 = vpop.permute.xlu0 %1071
          %1073 = vrot.lane.b32.xlu0 %v1050, 1
          %v1074 = vpop.permute.xlu0 %1073
          %1075 = vrot.lane.b32.xlu0 %v1051, 1
          %v1076 = vpop.permute.xlu0 %1075
          %1077 = vrot.lane.b32.xlu0 %v1052, 1
          %v1078 = vpop.permute.xlu0 %1077
          %1079 = vrot.lane.b32.xlu0 %v1053, 1
          %v1080 = vpop.permute.xlu0 %1079
          %1081 = vrot.lane.b32.xlu0 %v1054, 1
          %v1082 = vpop.permute.xlu0 %1081
          %1083 = vrot.lane.b32.xlu0 %v1055, 1
          %v1084 = vpop.permute.xlu0 %1083
          %1085 = vrot.lane.b32.xlu0 %v1056, 1
          %v1086 = vpop.permute.xlu0 %1085
          %1087 = vrot.lane.b32.xlu0 %v1057, 1
          %v1088 = vpop.permute.xlu0 %1087
          %1089 = vrot.lane.b32.xlu0 %v1058, 1
          %v1090 = vpop.permute.xlu0 %1089
          %v1091 = vsub.f32 %v1043, %v1060
          %v1092 = vsub.f32 %v1044, %v1062
          %v1093 = vsub.f32 %v1045, %v1064
          %v1094 = vsub.f32 %v1046, %v1066
          %v1095 = vsub.f32 %v1047, %v1068
          %v1096 = vsub.f32 %v1048, %v1070
          %v1097 = vsub.f32 %v1049, %v1072
          %v1098 = vsub.f32 %v1050, %v1074
          %v1099 = vsub.f32 %v1051, %v1076
          %v1100 = vsub.f32 %v1052, %v1078
          %v1101 = vsub.f32 %v1053, %v1080
          %v1102 = vsub.f32 %v1054, %v1082
          %v1103 = vsub.f32 %v1055, %v1084
          %v1104 = vsub.f32 %v1056, %v1086
          %v1105 = vsub.f32 %v1057, %v1088
          %v1106 = vsub.f32 %v1058, %v1090
          %v1107 = vmul.f32 %v1091, %v1091
          %v1108 = vmul.f32 %v1092, %v1092
          %v1109 = vmul.f32 %v1093, %v1093
          %v1110 = vmul.f32 %v1094, %v1094
          %v1111 = vmul.f32 %v1095, %v1095
          %v1112 = vmul.f32 %v1096, %v1096
          %v1113 = vmul.f32 %v1097, %v1097
          %v1114 = vmul.f32 %v1098, %v1098
          %v1115 = vmul.f32 %v1099, %v1099
          %v1116 = vmul.f32 %v1100, %v1100
          %v1117 = vmul.f32 %v1101, %v1101
          %v1118 = vmul.f32 %v1102, %v1102
          %v1119 = vmul.f32 %v1103, %v1103
          %v1120 = vmul.f32 %v1104, %v1104
          %v1121 = vmul.f32 %v1105, %v1105
          %v1122 = vmul.f32 %v1106, %v1106
          %v1123 = vadd.f32 %v1026, %v1107
          %v1124 = vadd.f32 %v1027, %v1108
          %v1125 = vadd.f32 %v1028, %v1109
          %v1126 = vadd.f32 %v1029, %v1110
          %v1127 = vadd.f32 %v1030, %v1111
          %v1128 = vadd.f32 %v1031, %v1112
          %v1129 = vadd.f32 %v1032, %v1113
          %v1130 = vadd.f32 %v1033, %v1114
          %v1131 = vadd.f32 %v1034, %v1115
          %v1132 = vadd.f32 %v1035, %v1116
          %v1133 = vadd.f32 %v1036, %v1117
          %v1134 = vadd.f32 %v1037, %v1118
          %v1135 = vadd.f32 %v1038, %v1119
          %v1136 = vadd.f32 %v1039, %v1120
          %v1137 = vadd.f32 %v1040, %v1121
          %v1138 = vadd.f32 %v1041, %v1122
          %s1139 = scalar_lea.vmem %s130, 256 [#allocation2]
          %v1140 = vld [vmem:[%s1139] sm:$0xff]
          %v1141 = vld [vmem:[%s1139 + $0x8] sm:$0xff]
          %v1142 = vld [vmem:[%s1139 + $0x10] sm:$0xff]
          %v1143 = vld [vmem:[%s1139 + $0x18] sm:$0xff]
          %v1144 = vld [vmem:[%s1139 + $0x20] sm:$0xff]
          %v1145 = vld [vmem:[%s1139 + $0x28] sm:$0xff]
          %v1146 = vld [vmem:[%s1139 + $0x30] sm:$0xff]
          %v1147 = vld [vmem:[%s1139 + $0x38] sm:$0xff]
          %v1148 = vld [vmem:[%s1139 + $0x40] sm:$0xff]
          %v1149 = vld [vmem:[%s1139 + $0x48] sm:$0xff]
          %v1150 = vld [vmem:[%s1139 + $0x50] sm:$0xff]
          %v1151 = vld [vmem:[%s1139 + $0x58] sm:$0xff]
          %v1152 = vld [vmem:[%s1139 + $0x60] sm:$0xff]
          %v1153 = vld [vmem:[%s1139 + $0x68] sm:$0xff]
          %v1154 = vld [vmem:[%s1139 + $0x70] sm:$0xff]
          %v1155 = vld [vmem:[%s1139 + $0x78] sm:$0xff]
          %1156 = vrot.lane.b32.xlu0 %v1140, 1
          %v1157 = vpop.permute.xlu0 %1156
          %1158 = vrot.lane.b32.xlu0 %v1141, 1
          %v1159 = vpop.permute.xlu0 %1158
          %1160 = vrot.lane.b32.xlu0 %v1142, 1
          %v1161 = vpop.permute.xlu0 %1160
          %1162 = vrot.lane.b32.xlu0 %v1143, 1
          %v1163 = vpop.permute.xlu0 %1162
          %1164 = vrot.lane.b32.xlu0 %v1144, 1
          %v1165 = vpop.permute.xlu0 %1164
          %1166 = vrot.lane.b32.xlu0 %v1145, 1
          %v1167 = vpop.permute.xlu0 %1166
          %1168 = vrot.lane.b32.xlu0 %v1146, 1
          %v1169 = vpop.permute.xlu0 %1168
          %1170 = vrot.lane.b32.xlu0 %v1147, 1
          %v1171 = vpop.permute.xlu0 %1170
          %1172 = vrot.lane.b32.xlu0 %v1148, 1
          %v1173 = vpop.permute.xlu0 %1172
          %1174 = vrot.lane.b32.xlu0 %v1149, 1
          %v1175 = vpop.permute.xlu0 %1174
          %1176 = vrot.lane.b32.xlu0 %v1150, 1
          %v1177 = vpop.permute.xlu0 %1176
          %1178 = vrot.lane.b32.xlu0 %v1151, 1
          %v1179 = vpop.permute.xlu0 %1178
          %1180 = vrot.lane.b32.xlu0 %v1152, 1
          %v1181 = vpop.permute.xlu0 %1180
          %1182 = vrot.lane.b32.xlu0 %v1153, 1
          %v1183 = vpop.permute.xlu0 %1182
          %1184 = vrot.lane.b32.xlu0 %v1154, 1
          %v1185 = vpop.permute.xlu0 %1184
          %1186 = vrot.lane.b32.xlu0 %v1155, 1
          %v1187 = vpop.permute.xlu0 %1186
          %v1188 = vsub.f32 %v1140, %v1157
          %v1189 = vsub.f32 %v1141, %v1159
          %v1190 = vsub.f32 %v1142, %v1161
          %v1191 = vsub.f32 %v1143, %v1163
          %v1192 = vsub.f32 %v1144, %v1165
          %v1193 = vsub.f32 %v1145, %v1167
          %v1194 = vsub.f32 %v1146, %v1169
          %v1195 = vsub.f32 %v1147, %v1171
          %v1196 = vsub.f32 %v1148, %v1173
          %v1197 = vsub.f32 %v1149, %v1175
          %v1198 = vsub.f32 %v1150, %v1177
          %v1199 = vsub.f32 %v1151, %v1179
          %v1200 = vsub.f32 %v1152, %v1181
          %v1201 = vsub.f32 %v1153, %v1183
          %v1202 = vsub.f32 %v1154, %v1185
          %v1203 = vsub.f32 %v1155, %v1187
          %v1204 = vmul.f32 %v1188, %v1188
          %v1205 = vmul.f32 %v1189, %v1189
          %v1206 = vmul.f32 %v1190, %v1190
          %v1207 = vmul.f32 %v1191, %v1191
          %v1208 = vmul.f32 %v1192, %v1192
          %v1209 = vmul.f32 %v1193, %v1193
          %v1210 = vmul.f32 %v1194, %v1194
          %v1211 = vmul.f32 %v1195, %v1195
          %v1212 = vmul.f32 %v1196, %v1196
          %v1213 = vmul.f32 %v1197, %v1197
          %v1214 = vmul.f32 %v1198, %v1198
          %v1215 = vmul.f32 %v1199, %v1199
          %v1216 = vmul.f32 %v1200, %v1200
          %v1217 = vmul.f32 %v1201, %v1201
          %v1218 = vmul.f32 %v1202, %v1202
          %v1219 = vmul.f32 %v1203, %v1203
          %v1220 = vadd.f32 %v1123, %v1204
          %v1221 = vadd.f32 %v1124, %v1205
          %v1222 = vadd.f32 %v1125, %v1206
          %v1223 = vadd.f32 %v1126, %v1207
          %v1224 = vadd.f32 %v1127, %v1208
          %v1225 = vadd.f32 %v1128, %v1209
          %v1226 = vadd.f32 %v1129, %v1210
          %v1227 = vadd.f32 %v1130, %v1211
          %v1228 = vadd.f32 %v1131, %v1212
          %v1229 = vadd.f32 %v1132, %v1213
          %v1230 = vadd.f32 %v1133, %v1214
          %v1231 = vadd.f32 %v1134, %v1215
          %v1232 = vadd.f32 %v1135, %v1216
          %v1233 = vadd.f32 %v1136, %v1217
          %v1234 = vadd.f32 %v1137, %v1218
          %v1235 = vadd.f32 %v1138, %v1219
          %s1236 = scalar_lea.vmem %s130, 384 [#allocation2]
          %v1237 = vld [vmem:[%s1236] sm:$0xff]
          %v1238 = vld [vmem:[%s1236 + $0x8] sm:$0xff]
          %v1239 = vld [vmem:[%s1236 + $0x10] sm:$0xff]
          %v1240 = vld [vmem:[%s1236 + $0x18] sm:$0xff]
          %v1241 = vld [vmem:[%s1236 + $0x20] sm:$0xff]
          %v1242 = vld [vmem:[%s1236 + $0x28] sm:$0xff]
          %v1243 = vld [vmem:[%s1236 + $0x30] sm:$0xff]
          %v1244 = vld [vmem:[%s1236 + $0x38] sm:$0xff]
          %v1245 = vld [vmem:[%s1236 + $0x40] sm:$0xff]
          %v1246 = vld [vmem:[%s1236 + $0x48] sm:$0xff]
          %v1247 = vld [vmem:[%s1236 + $0x50] sm:$0xff]
          %v1248 = vld [vmem:[%s1236 + $0x58] sm:$0xff]
          %v1249 = vld [vmem:[%s1236 + $0x60] sm:$0xff]
          %v1250 = vld [vmem:[%s1236 + $0x68] sm:$0xff]
          %v1251 = vld [vmem:[%s1236 + $0x70] sm:$0xff]
          %v1252 = vld [vmem:[%s1236 + $0x78] sm:$0xff]
          %1253 = vrot.lane.b32.xlu0 %v1237, 1
          %v1254 = vpop.permute.xlu0 %1253
          %1255 = vrot.lane.b32.xlu0 %v1238, 1
          %v1256 = vpop.permute.xlu0 %1255
          %1257 = vrot.lane.b32.xlu0 %v1239, 1
          %v1258 = vpop.permute.xlu0 %1257
          %1259 = vrot.lane.b32.xlu0 %v1240, 1
          %v1260 = vpop.permute.xlu0 %1259
          %1261 = vrot.lane.b32.xlu0 %v1241, 1
          %v1262 = vpop.permute.xlu0 %1261
          %1263 = vrot.lane.b32.xlu0 %v1242, 1
          %v1264 = vpop.permute.xlu0 %1263
          %1265 = vrot.lane.b32.xlu0 %v1243, 1
          %v1266 = vpop.permute.xlu0 %1265
          %1267 = vrot.lane.b32.xlu0 %v1244, 1
          %v1268 = vpop.permute.xlu0 %1267
          %1269 = vrot.lane.b32.xlu0 %v1245, 1
          %v1270 = vpop.permute.xlu0 %1269
          %1271 = vrot.lane.b32.xlu0 %v1246, 1
          %v1272 = vpop.permute.xlu0 %1271
          %1273 = vrot.lane.b32.xlu0 %v1247, 1
          %v1274 = vpop.permute.xlu0 %1273
          %1275 = vrot.lane.b32.xlu0 %v1248, 1
          %v1276 = vpop.permute.xlu0 %1275
          %1277 = vrot.lane.b32.xlu0 %v1249, 1
          %v1278 = vpop.permute.xlu0 %1277
          %1279 = vrot.lane.b32.xlu0 %v1250, 1
          %v1280 = vpop.permute.xlu0 %1279
          %1281 = vrot.lane.b32.xlu0 %v1251, 1
          %v1282 = vpop.permute.xlu0 %1281
          %1283 = vrot.lane.b32.xlu0 %v1252, 1
          %v1284 = vpop.permute.xlu0 %1283
          %v1285 = vsub.f32 %v1237, %v1254
          %v1286 = vsub.f32 %v1238, %v1256
          %v1287 = vsub.f32 %v1239, %v1258
          %v1288 = vsub.f32 %v1240, %v1260
          %v1289 = vsub.f32 %v1241, %v1262
          %v1290 = vsub.f32 %v1242, %v1264
          %v1291 = vsub.f32 %v1243, %v1266
          %v1292 = vsub.f32 %v1244, %v1268
          %v1293 = vsub.f32 %v1245, %v1270
          %v1294 = vsub.f32 %v1246, %v1272
          %v1295 = vsub.f32 %v1247, %v1274
          %v1296 = vsub.f32 %v1248, %v1276
          %v1297 = vsub.f32 %v1249, %v1278
          %v1298 = vsub.f32 %v1250, %v1280
          %v1299 = vsub.f32 %v1251, %v1282
          %v1300 = vsub.f32 %v1252, %v1284
          %v1301 = vmul.f32 %v1285, %v1285
          %v1302 = vmul.f32 %v1286, %v1286
          %v1303 = vmul.f32 %v1287, %v1287
          %v1304 = vmul.f32 %v1288, %v1288
          %v1305 = vmul.f32 %v1289, %v1289
          %v1306 = vmul.f32 %v1290, %v1290
          %v1307 = vmul.f32 %v1291, %v1291
          %v1308 = vmul.f32 %v1292, %v1292
          %v1309 = vmul.f32 %v1293, %v1293
          %v1310 = vmul.f32 %v1294, %v1294
          %v1311 = vmul.f32 %v1295, %v1295
          %v1312 = vmul.f32 %v1296, %v1296
          %v1313 = vmul.f32 %v1297, %v1297
          %v1314 = vmul.f32 %v1298, %v1298
          %v1315 = vmul.f32 %v1299, %v1299
          %v1316 = vmul.f32 %v1300, %v1300
          %v1317 = vadd.f32 %v1220, %v1301
          %v1318 = vadd.f32 %v1221, %v1302
          %v1319 = vadd.f32 %v1222, %v1303
          %v1320 = vadd.f32 %v1223, %v1304
          %v1321 = vadd.f32 %v1224, %v1305
          %v1322 = vadd.f32 %v1225, %v1306
          %v1323 = vadd.f32 %v1226, %v1307
          %v1324 = vadd.f32 %v1227, %v1308
          %v1325 = vadd.f32 %v1228, %v1309
          %v1326 = vadd.f32 %v1229, %v1310
          %v1327 = vadd.f32 %v1230, %v1311
          %v1328 = vadd.f32 %v1231, %v1312
          %v1329 = vadd.f32 %v1232, %v1313
          %v1330 = vadd.f32 %v1233, %v1314
          %v1331 = vadd.f32 %v1234, %v1315
          %v1332 = vadd.f32 %v1235, %v1316
          %v1333 = vmul.f32 %v1317, 25.0
          %v1334 = vmul.f32 %v1318, 25.0
          %v1335 = vmul.f32 %v1319, 25.0
          %v1336 = vmul.f32 %v1320, 25.0
          %v1337 = vmul.f32 %v1321, 25.0
          %v1338 = vmul.f32 %v1322, 25.0
          %v1339 = vmul.f32 %v1323, 25.0
          %v1340 = vmul.f32 %v1324, 25.0
          %v1341 = vmul.f32 %v1325, 25.0
          %v1342 = vmul.f32 %v1326, 25.0
          %v1343 = vmul.f32 %v1327, 25.0
          %v1344 = vmul.f32 %v1328, 25.0
          %v1345 = vmul.f32 %v1329, 25.0
          %v1346 = vmul.f32 %v1330, 25.0
          %v1347 = vmul.f32 %v1331, 25.0
          %v1348 = vmul.f32 %v1332, 25.0
          %v1349 = vtanh.pop %v1333
          %v1350 = vtanh.pop %v1334
          %v1351 = vtanh.pop %v1335
          %v1352 = vtanh.pop %v1336
          %v1353 = vtanh.pop %v1337
          %v1354 = vtanh.pop %v1338
          %v1355 = vtanh.pop %v1339
          %v1356 = vtanh.pop %v1340
          %v1357 = vtanh.pop %v1341
          %v1358 = vtanh.pop %v1342
          %v1359 = vtanh.pop %v1343
          %v1360 = vtanh.pop %v1344
          %v1361 = vtanh.pop %v1345
          %v1362 = vtanh.pop %v1346
          %v1363 = vtanh.pop %v1347
          %v1364 = vtanh.pop %v1348
          %v1365 = vsub.f32 1.0, %v1349
          %v1366 = vsub.f32 1.0, %v1350
          %v1367 = vsub.f32 1.0, %v1351
          %v1368 = vsub.f32 1.0, %v1352
          %v1369 = vsub.f32 1.0, %v1353
          %v1370 = vsub.f32 1.0, %v1354
          %v1371 = vsub.f32 1.0, %v1355
          %v1372 = vsub.f32 1.0, %v1356
          %v1373 = vsub.f32 1.0, %v1357
          %v1374 = vsub.f32 1.0, %v1358
          %v1375 = vsub.f32 1.0, %v1359
          %v1376 = vsub.f32 1.0, %v1360
          %v1377 = vsub.f32 1.0, %v1361
          %v1378 = vsub.f32 1.0, %v1362
          %v1379 = vsub.f32 1.0, %v1363
          %v1380 = vsub.f32 1.0, %v1364
          %v1381 = vlaneseq
          %v1382 = vand.u32 %v1381, 127
          %vm1383 = vcmp.ge.s32.totalorder %v1382, 1
          %v1384 = vsel %vm1383, 1, 0
          %vm1385 = vcmp.eq.s32.totalorder %v1384, 1
          %v1386 = vsel %vm1385, %v1365, 1.0
          %v1387 = vsel %vm1385, %v1366, 1.0
          %v1388 = vsel %vm1385, %v1367, 1.0
          %v1389 = vsel %vm1385, %v1368, 1.0
          %v1390 = vsel %vm1385, %v1369, 1.0
          %v1391 = vsel %vm1385, %v1370, 1.0
          %v1392 = vsel %vm1385, %v1371, 1.0
          %v1393 = vsel %vm1385, %v1372, 1.0
          %v1394 = vsel %vm1385, %v1373, 1.0
          %v1395 = vsel %vm1385, %v1374, 1.0
          %v1396 = vsel %vm1385, %v1375, 1.0
          %v1397 = vsel %vm1385, %v1376, 1.0
          %v1398 = vsel %vm1385, %v1377, 1.0
          %v1399 = vsel %vm1385, %v1378, 1.0
          %v1400 = vsel %vm1385, %v1379, 1.0
          %v1401 = vsel %vm1385, %v1380, 1.0
          %1402 = vst [vmem:[%s148] sm:$0xff] %v1386
          %1403 = vst [vmem:[%s148 + $0x8] sm:$0xff] %v1387
          %1404 = vst [vmem:[%s148 + $0x10] sm:$0xff] %v1388
          %1405 = vst [vmem:[%s148 + $0x18] sm:$0xff] %v1389
          %1406 = vst [vmem:[%s148 + $0x20] sm:$0xff] %v1390
          %1407 = vst [vmem:[%s148 + $0x28] sm:$0xff] %v1391
          %1408 = vst [vmem:[%s148 + $0x30] sm:$0xff] %v1392
          %1409 = vst [vmem:[%s148 + $0x38] sm:$0xff] %v1393
          %1410 = vst [vmem:[%s148 + $0x40] sm:$0xff] %v1394
          %1411 = vst [vmem:[%s148 + $0x48] sm:$0xff] %v1395
          %1412 = vst [vmem:[%s148 + $0x50] sm:$0xff] %v1396
          %1413 = vst [vmem:[%s148 + $0x58] sm:$0xff] %v1397
          %1414 = vst [vmem:[%s148 + $0x60] sm:$0xff] %v1398
          %1415 = vst [vmem:[%s148 + $0x68] sm:$0xff] %v1399
          %1416 = vst [vmem:[%s148 + $0x70] sm:$0xff] %v1400
          %1417 = vst [vmem:[%s148 + $0x78] sm:$0xff] %v1401
        $region40: #{tpu_custom_call.1} parent=23 // pred_fallthru
          _
        %p1418 = scmp.eq.s32.totalorder %s23, 3
        // Predicated region
        $region41: #{tpu_custom_call.1} parent=23 // pred_check
          %p1419 = pneg %p1418
        $region42: #{tpu_custom_call.1} parent=23 // pred_check_branch
          %1421 = sbr.rel (%p1419) target = $region44
        $region43: #{tpu_custom_call.1} parent=23 // pred_region
          %v1422 = vld [vmem:[%s130] sm:$0xff]
          %v1423 = vld [vmem:[%s130 + $0x8] sm:$0xff]
          %v1424 = vld [vmem:[%s130 + $0x10] sm:$0xff]
          %v1425 = vld [vmem:[%s130 + $0x18] sm:$0xff]
          %v1426 = vld [vmem:[%s130 + $0x20] sm:$0xff]
          %v1427 = vld [vmem:[%s130 + $0x28] sm:$0xff]
          %v1428 = vld [vmem:[%s130 + $0x30] sm:$0xff]
          %v1429 = vld [vmem:[%s130 + $0x38] sm:$0xff]
          %v1430 = vld [vmem:[%s130 + $0x40] sm:$0xff]
          %v1431 = vld [vmem:[%s130 + $0x48] sm:$0xff]
          %v1432 = vld [vmem:[%s130 + $0x50] sm:$0xff]
          %v1433 = vld [vmem:[%s130 + $0x58] sm:$0xff]
          %v1434 = vld [vmem:[%s130 + $0x60] sm:$0xff]
          %v1435 = vld [vmem:[%s130 + $0x68] sm:$0xff]
          %v1436 = vld [vmem:[%s130 + $0x70] sm:$0xff]
          %v1437 = vld [vmem:[%s130 + $0x78] sm:$0xff]
          %v1438 = vrot.slane %v1422, 7
          %v1439 = vrot.slane %v1426, 7
          %v1440 = vrot.slane %v1430, 7
          %v1441 = vrot.slane %v1434, 7
          %v1442 = vrot.slane %v1423, 7
          %v1443 = vrot.slane %v1427, 7
          %v1444 = vrot.slane %v1431, 7
          %v1445 = vrot.slane %v1435, 7
          %v1446 = vrot.slane %v1424, 7
          %v1447 = vrot.slane %v1428, 7
          %v1448 = vrot.slane %v1432, 7
          %v1449 = vrot.slane %v1436, 7
          %v1450 = vrot.slane %v1425, 7
          %v1451 = vrot.slane %v1429, 7
          %v1452 = vrot.slane %v1433, 7
          %v1453 = vrot.slane %v1437, 7
          %v1454 = vlaneseq
          %v1455 = vshrl.u32 %v1454, 7
          %vm1456 = vcmp.lt.s32.totalorder %v1455, 1
          %v1457 = vsel %vm1456, %v1446, %v1450
          %v1458 = vsel %vm1456, %v1447, %v1451
          %v1459 = vsel %vm1456, %v1448, %v1452
          %v1460 = vsel %vm1456, %v1449, %v1453
          %v1461 = vsel %vm1456, %v1442, %v1446
          %v1462 = vsel %vm1456, %v1443, %v1447
          %v1463 = vsel %vm1456, %v1444, %v1448
          %v1464 = vsel %vm1456, %v1445, %v1449
          %v1465 = vsel %vm1456, %v1438, %v1442
          %v1466 = vsel %vm1456, %v1439, %v1443
          %v1467 = vsel %vm1456, %v1440, %v1444
          %v1468 = vsel %vm1456, %v1441, %v1445
          %v1469 = vsel %vm1456, %v1450, %v1438
          %v1470 = vsel %vm1456, %v1451, %v1439
          %v1471 = vsel %vm1456, %v1452, %v1440
          %v1472 = vsel %vm1456, %v1453, %v1441
          %v1473 = vsub.f32 %v1422, %v1457
          %v1474 = vsub.f32 %v1423, %v1469
          %v1475 = vsub.f32 %v1424, %v1465
          %v1476 = vsub.f32 %v1425, %v1461
          %v1477 = vsub.f32 %v1426, %v1458
          %v1478 = vsub.f32 %v1427, %v1470
          %v1479 = vsub.f32 %v1428, %v1466
          %v1480 = vsub.f32 %v1429, %v1462
          %v1481 = vsub.f32 %v1430, %v1459
          %v1482 = vsub.f32 %v1431, %v1471
          %v1483 = vsub.f32 %v1432, %v1467
          %v1484 = vsub.f32 %v1433, %v1463
          %v1485 = vsub.f32 %v1434, %v1460
          %v1486 = vsub.f32 %v1435, %v1472
          %v1487 = vsub.f32 %v1436, %v1468
          %v1488 = vsub.f32 %v1437, %v1464
          %v1489 = vmul.f32 %v1473, %v1473
          %v1490 = vmul.f32 %v1474, %v1474
          %v1491 = vmul.f32 %v1475, %v1475
          %v1492 = vmul.f32 %v1476, %v1476
          %v1493 = vmul.f32 %v1477, %v1477
          %v1494 = vmul.f32 %v1478, %v1478
          %v1495 = vmul.f32 %v1479, %v1479
          %v1496 = vmul.f32 %v1480, %v1480
          %v1497 = vmul.f32 %v1481, %v1481
          %v1498 = vmul.f32 %v1482, %v1482
          %v1499 = vmul.f32 %v1483, %v1483
          %v1500 = vmul.f32 %v1484, %v1484
          %v1501 = vmul.f32 %v1485, %v1485
          %v1502 = vmul.f32 %v1486, %v1486
          %v1503 = vmul.f32 %v1487, %v1487
          %v1504 = vmul.f32 %v1488, %v1488
          %v1505 = vadd.f32 %v1489, 0.0
          %v1506 = vadd.f32 %v1490, 0.0
          %v1507 = vadd.f32 %v1491, 0.0
          %v1508 = vadd.f32 %v1492, 0.0
          %v1509 = vadd.f32 %v1493, 0.0
          %v1510 = vadd.f32 %v1494, 0.0
          %v1511 = vadd.f32 %v1495, 0.0
          %v1512 = vadd.f32 %v1496, 0.0
          %v1513 = vadd.f32 %v1497, 0.0
          %v1514 = vadd.f32 %v1498, 0.0
          %v1515 = vadd.f32 %v1499, 0.0
          %v1516 = vadd.f32 %v1500, 0.0
          %v1517 = vadd.f32 %v1501, 0.0
          %v1518 = vadd.f32 %v1502, 0.0
          %v1519 = vadd.f32 %v1503, 0.0
          %v1520 = vadd.f32 %v1504, 0.0
          %s1521 = scalar_lea.vmem %s130, 128 [#allocation2]
          %v1522 = vld [vmem:[%s1521] sm:$0xff]
          %v1523 = vld [vmem:[%s1521 + $0x8] sm:$0xff]
          %v1524 = vld [vmem:[%s1521 + $0x10] sm:$0xff]
          %v1525 = vld [vmem:[%s1521 + $0x18] sm:$0xff]
          %v1526 = vld [vmem:[%s1521 + $0x20] sm:$0xff]
          %v1527 = vld [vmem:[%s1521 + $0x28] sm:$0xff]
          %v1528 = vld [vmem:[%s1521 + $0x30] sm:$0xff]
          %v1529 = vld [vmem:[%s1521 + $0x38] sm:$0xff]
          %v1530 = vld [vmem:[%s1521 + $0x40] sm:$0xff]
          %v1531 = vld [vmem:[%s1521 + $0x48] sm:$0xff]
          %v1532 = vld [vmem:[%s1521 + $0x50] sm:$0xff]
          %v1533 = vld [vmem:[%s1521 + $0x58] sm:$0xff]
          %v1534 = vld [vmem:[%s1521 + $0x60] sm:$0xff]
          %v1535 = vld [vmem:[%s1521 + $0x68] sm:$0xff]
          %v1536 = vld [vmem:[%s1521 + $0x70] sm:$0xff]
          %v1537 = vld [vmem:[%s1521 + $0x78] sm:$0xff]
          %v1538 = vrot.slane %v1522, 7
          %v1539 = vrot.slane %v1526, 7
          %v1540 = vrot.slane %v1530, 7
          %v1541 = vrot.slane %v1534, 7
          %v1542 = vrot.slane %v1523, 7
          %v1543 = vrot.slane %v1527, 7
          %v1544 = vrot.slane %v1531, 7
          %v1545 = vrot.slane %v1535, 7
          %v1546 = vrot.slane %v1524, 7
          %v1547 = vrot.slane %v1528, 7
          %v1548 = vrot.slane %v1532, 7
          %v1549 = vrot.slane %v1536, 7
          %v1550 = vrot.slane %v1525, 7
          %v1551 = vrot.slane %v1529, 7
          %v1552 = vrot.slane %v1533, 7
          %v1553 = vrot.slane %v1537, 7
          %v1554 = vsel %vm1456, %v1546, %v1550
          %v1555 = vsel %vm1456, %v1547, %v1551
          %v1556 = vsel %vm1456, %v1548, %v1552
          %v1557 = vsel %vm1456, %v1549, %v1553
          %v1558 = vsel %vm1456, %v1542, %v1546
          %v1559 = vsel %vm1456, %v1543, %v1547
          %v1560 = vsel %vm1456, %v1544, %v1548
          %v1561 = vsel %vm1456, %v1545, %v1549
          %v1562 = vsel %vm1456, %v1538, %v1542
          %v1563 = vsel %vm1456, %v1539, %v1543
          %v1564 = vsel %vm1456, %v1540, %v1544
          %v1565 = vsel %vm1456, %v1541, %v1545
          %v1566 = vsel %vm1456, %v1550, %v1538
          %v1567 = vsel %vm1456, %v1551, %v1539
          %v1568 = vsel %vm1456, %v1552, %v1540
          %v1569 = vsel %vm1456, %v1553, %v1541
          %v1570 = vsub.f32 %v1522, %v1554
          %v1571 = vsub.f32 %v1523, %v1566
          %v1572 = vsub.f32 %v1524, %v1562
          %v1573 = vsub.f32 %v1525, %v1558
          %v1574 = vsub.f32 %v1526, %v1555
          %v1575 = vsub.f32 %v1527, %v1567
          %v1576 = vsub.f32 %v1528, %v1563
          %v1577 = vsub.f32 %v1529, %v1559
          %v1578 = vsub.f32 %v1530, %v1556
          %v1579 = vsub.f32 %v1531, %v1568
          %v1580 = vsub.f32 %v1532, %v1564
          %v1581 = vsub.f32 %v1533, %v1560
          %v1582 = vsub.f32 %v1534, %v1557
          %v1583 = vsub.f32 %v1535, %v1569
          %v1584 = vsub.f32 %v1536, %v1565
          %v1585 = vsub.f32 %v1537, %v1561
          %v1586 = vmul.f32 %v1570, %v1570
          %v1587 = vmul.f32 %v1571, %v1571
          %v1588 = vmul.f32 %v1572, %v1572
          %v1589 = vmul.f32 %v1573, %v1573
          %v1590 = vmul.f32 %v1574, %v1574
          %v1591 = vmul.f32 %v1575, %v1575
          %v1592 = vmul.f32 %v1576, %v1576
          %v1593 = vmul.f32 %v1577, %v1577
          %v1594 = vmul.f32 %v1578, %v1578
          %v1595 = vmul.f32 %v1579, %v1579
          %v1596 = vmul.f32 %v1580, %v1580
          %v1597 = vmul.f32 %v1581, %v1581
          %v1598 = vmul.f32 %v1582, %v1582
          %v1599 = vmul.f32 %v1583, %v1583
          %v1600 = vmul.f32 %v1584, %v1584
          %v1601 = vmul.f32 %v1585, %v1585
          %v1602 = vadd.f32 %v1505, %v1586
          %v1603 = vadd.f32 %v1506, %v1587
          %v1604 = vadd.f32 %v1507, %v1588
          %v1605 = vadd.f32 %v1508, %v1589
          %v1606 = vadd.f32 %v1509, %v1590
          %v1607 = vadd.f32 %v1510, %v1591
          %v1608 = vadd.f32 %v1511, %v1592
          %v1609 = vadd.f32 %v1512, %v1593
          %v1610 = vadd.f32 %v1513, %v1594
          %v1611 = vadd.f32 %v1514, %v1595
          %v1612 = vadd.f32 %v1515, %v1596
          %v1613 = vadd.f32 %v1516, %v1597
          %v1614 = vadd.f32 %v1517, %v1598
          %v1615 = vadd.f32 %v1518, %v1599
          %v1616 = vadd.f32 %v1519, %v1600
          %v1617 = vadd.f32 %v1520, %v1601
          %s1618 = scalar_lea.vmem %s130, 256 [#allocation2]
          %v1619 = vld [vmem:[%s1618] sm:$0xff]
          %v1620 = vld [vmem:[%s1618 + $0x8] sm:$0xff]
          %v1621 = vld [vmem:[%s1618 + $0x10] sm:$0xff]
          %v1622 = vld [vmem:[%s1618 + $0x18] sm:$0xff]
          %v1623 = vld [vmem:[%s1618 + $0x20] sm:$0xff]
          %v1624 = vld [vmem:[%s1618 + $0x28] sm:$0xff]
          %v1625 = vld [vmem:[%s1618 + $0x30] sm:$0xff]
          %v1626 = vld [vmem:[%s1618 + $0x38] sm:$0xff]
          %v1627 = vld [vmem:[%s1618 + $0x40] sm:$0xff]
          %v1628 = vld [vmem:[%s1618 + $0x48] sm:$0xff]
          %v1629 = vld [vmem:[%s1618 + $0x50] sm:$0xff]
          %v1630 = vld [vmem:[%s1618 + $0x58] sm:$0xff]
          %v1631 = vld [vmem:[%s1618 + $0x60] sm:$0xff]
          %v1632 = vld [vmem:[%s1618 + $0x68] sm:$0xff]
          %v1633 = vld [vmem:[%s1618 + $0x70] sm:$0xff]
          %v1634 = vld [vmem:[%s1618 + $0x78] sm:$0xff]
          %v1635 = vrot.slane %v1619, 7
          %v1636 = vrot.slane %v1623, 7
          %v1637 = vrot.slane %v1627, 7
          %v1638 = vrot.slane %v1631, 7
          %v1639 = vrot.slane %v1620, 7
          %v1640 = vrot.slane %v1624, 7
          %v1641 = vrot.slane %v1628, 7
          %v1642 = vrot.slane %v1632, 7
          %v1643 = vrot.slane %v1621, 7
          %v1644 = vrot.slane %v1625, 7
          %v1645 = vrot.slane %v1629, 7
          %v1646 = vrot.slane %v1633, 7
          %v1647 = vrot.slane %v1622, 7
          %v1648 = vrot.slane %v1626, 7
          %v1649 = vrot.slane %v1630, 7
          %v1650 = vrot.slane %v1634, 7
          %v1651 = vsel %vm1456, %v1643, %v1647
          %v1652 = vsel %vm1456, %v1644, %v1648
          %v1653 = vsel %vm1456, %v1645, %v1649
          %v1654 = vsel %vm1456, %v1646, %v1650
          %v1655 = vsel %vm1456, %v1639, %v1643
          %v1656 = vsel %vm1456, %v1640, %v1644
          %v1657 = vsel %vm1456, %v1641, %v1645
          %v1658 = vsel %vm1456, %v1642, %v1646
          %v1659 = vsel %vm1456, %v1635, %v1639
          %v1660 = vsel %vm1456, %v1636, %v1640
          %v1661 = vsel %vm1456, %v1637, %v1641
          %v1662 = vsel %vm1456, %v1638, %v1642
          %v1663 = vsel %vm1456, %v1647, %v1635
          %v1664 = vsel %vm1456, %v1648, %v1636
          %v1665 = vsel %vm1456, %v1649, %v1637
          %v1666 = vsel %vm1456, %v1650, %v1638
          %v1667 = vsub.f32 %v1619, %v1651
          %v1668 = vsub.f32 %v1620, %v1663
          %v1669 = vsub.f32 %v1621, %v1659
          %v1670 = vsub.f32 %v1622, %v1655
          %v1671 = vsub.f32 %v1623, %v1652
          %v1672 = vsub.f32 %v1624, %v1664
          %v1673 = vsub.f32 %v1625, %v1660
          %v1674 = vsub.f32 %v1626, %v1656
          %v1675 = vsub.f32 %v1627, %v1653
          %v1676 = vsub.f32 %v1628, %v1665
          %v1677 = vsub.f32 %v1629, %v1661
          %v1678 = vsub.f32 %v1630, %v1657
          %v1679 = vsub.f32 %v1631, %v1654
          %v1680 = vsub.f32 %v1632, %v1666
          %v1681 = vsub.f32 %v1633, %v1662
          %v1682 = vsub.f32 %v1634, %v1658
          %v1683 = vmul.f32 %v1667, %v1667
          %v1684 = vmul.f32 %v1668, %v1668
          %v1685 = vmul.f32 %v1669, %v1669
          %v1686 = vmul.f32 %v1670, %v1670
          %v1687 = vmul.f32 %v1671, %v1671
          %v1688 = vmul.f32 %v1672, %v1672
          %v1689 = vmul.f32 %v1673, %v1673
          %v1690 = vmul.f32 %v1674, %v1674
          %v1691 = vmul.f32 %v1675, %v1675
          %v1692 = vmul.f32 %v1676, %v1676
          %v1693 = vmul.f32 %v1677, %v1677
          %v1694 = vmul.f32 %v1678, %v1678
          %v1695 = vmul.f32 %v1679, %v1679
          %v1696 = vmul.f32 %v1680, %v1680
          %v1697 = vmul.f32 %v1681, %v1681
          %v1698 = vmul.f32 %v1682, %v1682
          %v1699 = vadd.f32 %v1602, %v1683
          %v1700 = vadd.f32 %v1603, %v1684
          %v1701 = vadd.f32 %v1604, %v1685
          %v1702 = vadd.f32 %v1605, %v1686
          %v1703 = vadd.f32 %v1606, %v1687
          %v1704 = vadd.f32 %v1607, %v1688
          %v1705 = vadd.f32 %v1608, %v1689
          %v1706 = vadd.f32 %v1609, %v1690
          %v1707 = vadd.f32 %v1610, %v1691
          %v1708 = vadd.f32 %v1611, %v1692
          %v1709 = vadd.f32 %v1612, %v1693
          %v1710 = vadd.f32 %v1613, %v1694
          %v1711 = vadd.f32 %v1614, %v1695
          %v1712 = vadd.f32 %v1615, %v1696
          %v1713 = vadd.f32 %v1616, %v1697
          %v1714 = vadd.f32 %v1617, %v1698
          %s1715 = scalar_lea.vmem %s130, 384 [#allocation2]
          %v1716 = vld [vmem:[%s1715] sm:$0xff]
          %v1717 = vld [vmem:[%s1715 + $0x8] sm:$0xff]
          %v1718 = vld [vmem:[%s1715 + $0x10] sm:$0xff]
          %v1719 = vld [vmem:[%s1715 + $0x18] sm:$0xff]
          %v1720 = vld [vmem:[%s1715 + $0x20] sm:$0xff]
          %v1721 = vld [vmem:[%s1715 + $0x28] sm:$0xff]
          %v1722 = vld [vmem:[%s1715 + $0x30] sm:$0xff]
          %v1723 = vld [vmem:[%s1715 + $0x38] sm:$0xff]
          %v1724 = vld [vmem:[%s1715 + $0x40] sm:$0xff]
          %v1725 = vld [vmem:[%s1715 + $0x48] sm:$0xff]
          %v1726 = vld [vmem:[%s1715 + $0x50] sm:$0xff]
          %v1727 = vld [vmem:[%s1715 + $0x58] sm:$0xff]
          %v1728 = vld [vmem:[%s1715 + $0x60] sm:$0xff]
          %v1729 = vld [vmem:[%s1715 + $0x68] sm:$0xff]
          %v1730 = vld [vmem:[%s1715 + $0x70] sm:$0xff]
          %v1731 = vld [vmem:[%s1715 + $0x78] sm:$0xff]
          %v1732 = vrot.slane %v1716, 7
          %v1733 = vrot.slane %v1720, 7
          %v1734 = vrot.slane %v1724, 7
          %v1735 = vrot.slane %v1728, 7
          %v1736 = vrot.slane %v1717, 7
          %v1737 = vrot.slane %v1721, 7
          %v1738 = vrot.slane %v1725, 7
          %v1739 = vrot.slane %v1729, 7
          %v1740 = vrot.slane %v1718, 7
          %v1741 = vrot.slane %v1722, 7
          %v1742 = vrot.slane %v1726, 7
          %v1743 = vrot.slane %v1730, 7
          %v1744 = vrot.slane %v1719, 7
          %v1745 = vrot.slane %v1723, 7
          %v1746 = vrot.slane %v1727, 7
          %v1747 = vrot.slane %v1731, 7
          %v1748 = vsel %vm1456, %v1740, %v1744
          %v1749 = vsel %vm1456, %v1741, %v1745
          %v1750 = vsel %vm1456, %v1742, %v1746
          %v1751 = vsel %vm1456, %v1743, %v1747
          %v1752 = vsel %vm1456, %v1736, %v1740
          %v1753 = vsel %vm1456, %v1737, %v1741
          %v1754 = vsel %vm1456, %v1738, %v1742
          %v1755 = vsel %vm1456, %v1739, %v1743
          %v1756 = vsel %vm1456, %v1732, %v1736
          %v1757 = vsel %vm1456, %v1733, %v1737
          %v1758 = vsel %vm1456, %v1734, %v1738
          %v1759 = vsel %vm1456, %v1735, %v1739
          %v1760 = vsel %vm1456, %v1744, %v1732
          %v1761 = vsel %vm1456, %v1745, %v1733
          %v1762 = vsel %vm1456, %v1746, %v1734
          %v1763 = vsel %vm1456, %v1747, %v1735
          %v1764 = vsub.f32 %v1716, %v1748
          %v1765 = vsub.f32 %v1717, %v1760
          %v1766 = vsub.f32 %v1718, %v1756
          %v1767 = vsub.f32 %v1719, %v1752
          %v1768 = vsub.f32 %v1720, %v1749
          %v1769 = vsub.f32 %v1721, %v1761
          %v1770 = vsub.f32 %v1722, %v1757
          %v1771 = vsub.f32 %v1723, %v1753
          %v1772 = vsub.f32 %v1724, %v1750
          %v1773 = vsub.f32 %v1725, %v1762
          %v1774 = vsub.f32 %v1726, %v1758
          %v1775 = vsub.f32 %v1727, %v1754
          %v1776 = vsub.f32 %v1728, %v1751
          %v1777 = vsub.f32 %v1729, %v1763
          %v1778 = vsub.f32 %v1730, %v1759
          %v1779 = vsub.f32 %v1731, %v1755
          %v1780 = vmul.f32 %v1764, %v1764
          %v1781 = vmul.f32 %v1765, %v1765
          %v1782 = vmul.f32 %v1766, %v1766
          %v1783 = vmul.f32 %v1767, %v1767
          %v1784 = vmul.f32 %v1768, %v1768
          %v1785 = vmul.f32 %v1769, %v1769
          %v1786 = vmul.f32 %v1770, %v1770
          %v1787 = vmul.f32 %v1771, %v1771
          %v1788 = vmul.f32 %v1772, %v1772
          %v1789 = vmul.f32 %v1773, %v1773
          %v1790 = vmul.f32 %v1774, %v1774
          %v1791 = vmul.f32 %v1775, %v1775
          %v1792 = vmul.f32 %v1776, %v1776
          %v1793 = vmul.f32 %v1777, %v1777
          %v1794 = vmul.f32 %v1778, %v1778
          %v1795 = vmul.f32 %v1779, %v1779
          %v1796 = vadd.f32 %v1699, %v1780
          %v1797 = vadd.f32 %v1700, %v1781
          %v1798 = vadd.f32 %v1701, %v1782
          %v1799 = vadd.f32 %v1702, %v1783
          %v1800 = vadd.f32 %v1703, %v1784
          %v1801 = vadd.f32 %v1704, %v1785
          %v1802 = vadd.f32 %v1705, %v1786
          %v1803 = vadd.f32 %v1706, %v1787
          %v1804 = vadd.f32 %v1707, %v1788
          %v1805 = vadd.f32 %v1708, %v1789
          %v1806 = vadd.f32 %v1709, %v1790
          %v1807 = vadd.f32 %v1710, %v1791
          %v1808 = vadd.f32 %v1711, %v1792
          %v1809 = vadd.f32 %v1712, %v1793
          %v1810 = vadd.f32 %v1713, %v1794
          %v1811 = vadd.f32 %v1714, %v1795
          %v1812 = vmul.f32 %v1796, 25.0
          %v1813 = vmul.f32 %v1797, 25.0
          %v1814 = vmul.f32 %v1798, 25.0
          %v1815 = vmul.f32 %v1799, 25.0
          %v1816 = vmul.f32 %v1800, 25.0
          %v1817 = vmul.f32 %v1801, 25.0
          %v1818 = vmul.f32 %v1802, 25.0
          %v1819 = vmul.f32 %v1803, 25.0
          %v1820 = vmul.f32 %v1804, 25.0
          %v1821 = vmul.f32 %v1805, 25.0
          %v1822 = vmul.f32 %v1806, 25.0
          %v1823 = vmul.f32 %v1807, 25.0
          %v1824 = vmul.f32 %v1808, 25.0
          %v1825 = vmul.f32 %v1809, 25.0
          %v1826 = vmul.f32 %v1810, 25.0
          %v1827 = vmul.f32 %v1811, 25.0
          %v1828 = vtanh.pop %v1812
          %v1829 = vtanh.pop %v1813
          %v1830 = vtanh.pop %v1814
          %v1831 = vtanh.pop %v1815
          %v1832 = vtanh.pop %v1816
          %v1833 = vtanh.pop %v1817
          %v1834 = vtanh.pop %v1818
          %v1835 = vtanh.pop %v1819
          %v1836 = vtanh.pop %v1820
          %v1837 = vtanh.pop %v1821
          %v1838 = vtanh.pop %v1822
          %v1839 = vtanh.pop %v1823
          %v1840 = vtanh.pop %v1824
          %v1841 = vtanh.pop %v1825
          %v1842 = vtanh.pop %v1826
          %v1843 = vtanh.pop %v1827
          %v1844 = vsub.f32 1.0, %v1828
          %v1845 = vsub.f32 1.0, %v1829
          %v1846 = vsub.f32 1.0, %v1830
          %v1847 = vsub.f32 1.0, %v1831
          %v1848 = vsub.f32 1.0, %v1832
          %v1849 = vsub.f32 1.0, %v1833
          %v1850 = vsub.f32 1.0, %v1834
          %v1851 = vsub.f32 1.0, %v1835
          %v1852 = vsub.f32 1.0, %v1836
          %v1853 = vsub.f32 1.0, %v1837
          %v1854 = vsub.f32 1.0, %v1838
          %v1855 = vsub.f32 1.0, %v1839
          %v1856 = vsub.f32 1.0, %v1840
          %v1857 = vsub.f32 1.0, %v1841
          %v1858 = vsub.f32 1.0, %v1842
          %v1859 = vsub.f32 1.0, %v1843
          %v1860 = vadd.s32 %v1455, 8
          %v1861 = vadd.s32 %v1455, 16
          %v1862 = vadd.s32 %v1455, 24
          %vm1863 = vcmp.ge.s32.totalorder %v1455, 9
          %vm1864 = vcmp.ge.s32.totalorder %v1860, 9
          %vm1865 = vcmp.ge.s32.totalorder %v1861, 9
          %vm1866 = vcmp.ge.s32.totalorder %v1862, 9
          %v1867 = vsel %vm1863, 1, 0
          %v1868 = vsel %vm1864, 1, 0
          %v1869 = vsel %vm1865, 1, 0
          %v1870 = vsel %vm1866, 1, 0
          %vm1871 = vcmp.eq.s32.totalorder %v1867, 1
          %vm1872 = vcmp.eq.s32.totalorder %v1868, 1
          %vm1873 = vcmp.eq.s32.totalorder %v1869, 1
          %vm1874 = vcmp.eq.s32.totalorder %v1870, 1
          %v1875 = vsel %vm1871, %v1844, 1.0
          %v1876 = vsel %vm1872, %v1845, 1.0
          %v1877 = vsel %vm1873, %v1846, 1.0
          %v1878 = vsel %vm1874, %v1847, 1.0
          %v1879 = vsel %vm1871, %v1848, 1.0
          %v1880 = vsel %vm1872, %v1849, 1.0
          %v1881 = vsel %vm1873, %v1850, 1.0
          %v1882 = vsel %vm1874, %v1851, 1.0
          %v1883 = vsel %vm1871, %v1852, 1.0
          %v1884 = vsel %vm1872, %v1853, 1.0
          %v1885 = vsel %vm1873, %v1854, 1.0
          %v1886 = vsel %vm1874, %v1855, 1.0
          %v1887 = vsel %vm1871, %v1856, 1.0
          %v1888 = vsel %vm1872, %v1857, 1.0
          %v1889 = vsel %vm1873, %v1858, 1.0
          %v1890 = vsel %vm1874, %v1859, 1.0
          %1891 = vst [vmem:[%s148] sm:$0xff] %v1875
          %1892 = vst [vmem:[%s148 + $0x8] sm:$0xff] %v1876
          %1893 = vst [vmem:[%s148 + $0x10] sm:$0xff] %v1877
          %1894 = vst [vmem:[%s148 + $0x18] sm:$0xff] %v1878
          %1895 = vst [vmem:[%s148 + $0x20] sm:$0xff] %v1879
          %1896 = vst [vmem:[%s148 + $0x28] sm:$0xff] %v1880
          %1897 = vst [vmem:[%s148 + $0x30] sm:$0xff] %v1881
          %1898 = vst [vmem:[%s148 + $0x38] sm:$0xff] %v1882
          %1899 = vst [vmem:[%s148 + $0x40] sm:$0xff] %v1883
          %1900 = vst [vmem:[%s148 + $0x48] sm:$0xff] %v1884
          %1901 = vst [vmem:[%s148 + $0x50] sm:$0xff] %v1885
          %1902 = vst [vmem:[%s148 + $0x58] sm:$0xff] %v1886
          %1903 = vst [vmem:[%s148 + $0x60] sm:$0xff] %v1887
          %1904 = vst [vmem:[%s148 + $0x68] sm:$0xff] %v1888
          %1905 = vst [vmem:[%s148 + $0x70] sm:$0xff] %v1889
          %1906 = vst [vmem:[%s148 + $0x78] sm:$0xff] %v1890
        $region44: #{tpu_custom_call.1} parent=23 // pred_fallthru
          _
        %p1907 = scmp.eq.s32.totalorder %s23, 4
        // Predicated region
        $region45: #{tpu_custom_call.1} parent=23 // pred_check
          %p1908 = pneg %p1907
        $region46: #{tpu_custom_call.1} parent=23 // pred_check_branch
          %1910 = sbr.rel (%p1908) target = $region48
        $region47: #{tpu_custom_call.1} parent=23 // pred_region
          %v1911 = vld [vmem:[%s130] sm:$0xff]
          %v1912 = vld [vmem:[%s130 + $0x8] sm:$0xff]
          %v1913 = vld [vmem:[%s130 + $0x10] sm:$0xff]
          %v1914 = vld [vmem:[%s130 + $0x18] sm:$0xff]
          %v1915 = vld [vmem:[%s130 + $0x20] sm:$0xff]
          %v1916 = vld [vmem:[%s130 + $0x28] sm:$0xff]
          %v1917 = vld [vmem:[%s130 + $0x30] sm:$0xff]
          %v1918 = vld [vmem:[%s130 + $0x38] sm:$0xff]
          %v1919 = vld [vmem:[%s130 + $0x40] sm:$0xff]
          %v1920 = vld [vmem:[%s130 + $0x48] sm:$0xff]
          %v1921 = vld [vmem:[%s130 + $0x50] sm:$0xff]
          %v1922 = vld [vmem:[%s130 + $0x58] sm:$0xff]
          %v1923 = vld [vmem:[%s130 + $0x60] sm:$0xff]
          %v1924 = vld [vmem:[%s130 + $0x68] sm:$0xff]
          %v1925 = vld [vmem:[%s130 + $0x70] sm:$0xff]
          %v1926 = vld [vmem:[%s130 + $0x78] sm:$0xff]
          %1927 = vrot.lane.b32.xlu0 %v1911, 9
          %v1928 = vpop.permute.xlu0 %1927
          %1929 = vrot.lane.b32.xlu0 %v1912, 9
          %v1930 = vpop.permute.xlu0 %1929
          %1931 = vrot.lane.b32.xlu0 %v1913, 9
          %v1932 = vpop.permute.xlu0 %1931
          %1933 = vrot.lane.b32.xlu0 %v1914, 9
          %v1934 = vpop.permute.xlu0 %1933
          %1935 = vrot.lane.b32.xlu0 %v1915, 9
          %v1936 = vpop.permute.xlu0 %1935
          %1937 = vrot.lane.b32.xlu0 %v1916, 9
          %v1938 = vpop.permute.xlu0 %1937
          %1939 = vrot.lane.b32.xlu0 %v1917, 9
          %v1940 = vpop.permute.xlu0 %1939
          %1941 = vrot.lane.b32.xlu0 %v1918, 9
          %v1942 = vpop.permute.xlu0 %1941
          %1943 = vrot.lane.b32.xlu0 %v1919, 9
          %v1944 = vpop.permute.xlu0 %1943
          %1945 = vrot.lane.b32.xlu0 %v1920, 9
          %v1946 = vpop.permute.xlu0 %1945
          %1947 = vrot.lane.b32.xlu0 %v1921, 9
          %v1948 = vpop.permute.xlu0 %1947
          %1949 = vrot.lane.b32.xlu0 %v1922, 9
          %v1950 = vpop.permute.xlu0 %1949
          %1951 = vrot.lane.b32.xlu0 %v1923, 9
          %v1952 = vpop.permute.xlu0 %1951
          %1953 = vrot.lane.b32.xlu0 %v1924, 9
          %v1954 = vpop.permute.xlu0 %1953
          %1955 = vrot.lane.b32.xlu0 %v1925, 9
          %v1956 = vpop.permute.xlu0 %1955
          %1957 = vrot.lane.b32.xlu0 %v1926, 9
          %v1958 = vpop.permute.xlu0 %1957
          %v1959 = vsub.f32 %v1911, %v1928
          %v1960 = vsub.f32 %v1912, %v1930
          %v1961 = vsub.f32 %v1913, %v1932
          %v1962 = vsub.f32 %v1914, %v1934
          %v1963 = vsub.f32 %v1915, %v1936
          %v1964 = vsub.f32 %v1916, %v1938
          %v1965 = vsub.f32 %v1917, %v1940
          %v1966 = vsub.f32 %v1918, %v1942
          %v1967 = vsub.f32 %v1919, %v1944
          %v1968 = vsub.f32 %v1920, %v1946
          %v1969 = vsub.f32 %v1921, %v1948
          %v1970 = vsub.f32 %v1922, %v1950
          %v1971 = vsub.f32 %v1923, %v1952
          %v1972 = vsub.f32 %v1924, %v1954
          %v1973 = vsub.f32 %v1925, %v1956
          %v1974 = vsub.f32 %v1926, %v1958
          %v1975 = vmul.f32 %v1959, %v1959
          %v1976 = vmul.f32 %v1960, %v1960
          %v1977 = vmul.f32 %v1961, %v1961
          %v1978 = vmul.f32 %v1962, %v1962
          %v1979 = vmul.f32 %v1963, %v1963
          %v1980 = vmul.f32 %v1964, %v1964
          %v1981 = vmul.f32 %v1965, %v1965
          %v1982 = vmul.f32 %v1966, %v1966
          %v1983 = vmul.f32 %v1967, %v1967
          %v1984 = vmul.f32 %v1968, %v1968
          %v1985 = vmul.f32 %v1969, %v1969
          %v1986 = vmul.f32 %v1970, %v1970
          %v1987 = vmul.f32 %v1971, %v1971
          %v1988 = vmul.f32 %v1972, %v1972
          %v1989 = vmul.f32 %v1973, %v1973
          %v1990 = vmul.f32 %v1974, %v1974
          %v1991 = vadd.f32 %v1975, 0.0
          %v1992 = vadd.f32 %v1976, 0.0
          %v1993 = vadd.f32 %v1977, 0.0
          %v1994 = vadd.f32 %v1978, 0.0
          %v1995 = vadd.f32 %v1979, 0.0
          %v1996 = vadd.f32 %v1980, 0.0
          %v1997 = vadd.f32 %v1981, 0.0
          %v1998 = vadd.f32 %v1982, 0.0
          %v1999 = vadd.f32 %v1983, 0.0
          %v2000 = vadd.f32 %v1984, 0.0
          %v2001 = vadd.f32 %v1985, 0.0
          %v2002 = vadd.f32 %v1986, 0.0
          %v2003 = vadd.f32 %v1987, 0.0
          %v2004 = vadd.f32 %v1988, 0.0
          %v2005 = vadd.f32 %v1989, 0.0
          %v2006 = vadd.f32 %v1990, 0.0
          %s2007 = scalar_lea.vmem %s130, 128 [#allocation2]
          %v2008 = vld [vmem:[%s2007] sm:$0xff]
          %v2009 = vld [vmem:[%s2007 + $0x8] sm:$0xff]
          %v2010 = vld [vmem:[%s2007 + $0x10] sm:$0xff]
          %v2011 = vld [vmem:[%s2007 + $0x18] sm:$0xff]
          %v2012 = vld [vmem:[%s2007 + $0x20] sm:$0xff]
          %v2013 = vld [vmem:[%s2007 + $0x28] sm:$0xff]
          %v2014 = vld [vmem:[%s2007 + $0x30] sm:$0xff]
          %v2015 = vld [vmem:[%s2007 + $0x38] sm:$0xff]
          %v2016 = vld [vmem:[%s2007 + $0x40] sm:$0xff]
          %v2017 = vld [vmem:[%s2007 + $0x48] sm:$0xff]
          %v2018 = vld [vmem:[%s2007 + $0x50] sm:$0xff]
          %v2019 = vld [vmem:[%s2007 + $0x58] sm:$0xff]
          %v2020 = vld [vmem:[%s2007 + $0x60] sm:$0xff]
          %v2021 = vld [vmem:[%s2007 + $0x68] sm:$0xff]
          %v2022 = vld [vmem:[%s2007 + $0x70] sm:$0xff]
          %v2023 = vld [vmem:[%s2007 + $0x78] sm:$0xff]
          %2024 = vrot.lane.b32.xlu0 %v2008, 9
          %v2025 = vpop.permute.xlu0 %2024
          %2026 = vrot.lane.b32.xlu0 %v2009, 9
          %v2027 = vpop.permute.xlu0 %2026
          %2028 = vrot.lane.b32.xlu0 %v2010, 9
          %v2029 = vpop.permute.xlu0 %2028
          %2030 = vrot.lane.b32.xlu0 %v2011, 9
          %v2031 = vpop.permute.xlu0 %2030
          %2032 = vrot.lane.b32.xlu0 %v2012, 9
          %v2033 = vpop.permute.xlu0 %2032
          %2034 = vrot.lane.b32.xlu0 %v2013, 9
          %v2035 = vpop.permute.xlu0 %2034
          %2036 = vrot.lane.b32.xlu0 %v2014, 9
          %v2037 = vpop.permute.xlu0 %2036
          %2038 = vrot.lane.b32.xlu0 %v2015, 9
          %v2039 = vpop.permute.xlu0 %2038
          %2040 = vrot.lane.b32.xlu0 %v2016, 9
          %v2041 = vpop.permute.xlu0 %2040
          %2042 = vrot.lane.b32.xlu0 %v2017, 9
          %v2043 = vpop.permute.xlu0 %2042
          %2044 = vrot.lane.b32.xlu0 %v2018, 9
          %v2045 = vpop.permute.xlu0 %2044
          %2046 = vrot.lane.b32.xlu0 %v2019, 9
          %v2047 = vpop.permute.xlu0 %2046
          %2048 = vrot.lane.b32.xlu0 %v2020, 9
          %v2049 = vpop.permute.xlu0 %2048
          %2050 = vrot.lane.b32.xlu0 %v2021, 9
          %v2051 = vpop.permute.xlu0 %2050
          %2052 = vrot.lane.b32.xlu0 %v2022, 9
          %v2053 = vpop.permute.xlu0 %2052
          %2054 = vrot.lane.b32.xlu0 %v2023, 9
          %v2055 = vpop.permute.xlu0 %2054
          %v2056 = vsub.f32 %v2008, %v2025
          %v2057 = vsub.f32 %v2009, %v2027
          %v2058 = vsub.f32 %v2010, %v2029
          %v2059 = vsub.f32 %v2011, %v2031
          %v2060 = vsub.f32 %v2012, %v2033
          %v2061 = vsub.f32 %v2013, %v2035
          %v2062 = vsub.f32 %v2014, %v2037
          %v2063 = vsub.f32 %v2015, %v2039
          %v2064 = vsub.f32 %v2016, %v2041
          %v2065 = vsub.f32 %v2017, %v2043
          %v2066 = vsub.f32 %v2018, %v2045
          %v2067 = vsub.f32 %v2019, %v2047
          %v2068 = vsub.f32 %v2020, %v2049
          %v2069 = vsub.f32 %v2021, %v2051
          %v2070 = vsub.f32 %v2022, %v2053
          %v2071 = vsub.f32 %v2023, %v2055
          %v2072 = vmul.f32 %v2056, %v2056
          %v2073 = vmul.f32 %v2057, %v2057
          %v2074 = vmul.f32 %v2058, %v2058
          %v2075 = vmul.f32 %v2059, %v2059
          %v2076 = vmul.f32 %v2060, %v2060
          %v2077 = vmul.f32 %v2061, %v2061
          %v2078 = vmul.f32 %v2062, %v2062
          %v2079 = vmul.f32 %v2063, %v2063
          %v2080 = vmul.f32 %v2064, %v2064
          %v2081 = vmul.f32 %v2065, %v2065
          %v2082 = vmul.f32 %v2066, %v2066
          %v2083 = vmul.f32 %v2067, %v2067
          %v2084 = vmul.f32 %v2068, %v2068
          %v2085 = vmul.f32 %v2069, %v2069
          %v2086 = vmul.f32 %v2070, %v2070
          %v2087 = vmul.f32 %v2071, %v2071
          %v2088 = vadd.f32 %v1991, %v2072
          %v2089 = vadd.f32 %v1992, %v2073
          %v2090 = vadd.f32 %v1993, %v2074
          %v2091 = vadd.f32 %v1994, %v2075
          %v2092 = vadd.f32 %v1995, %v2076
          %v2093 = vadd.f32 %v1996, %v2077
          %v2094 = vadd.f32 %v1997, %v2078
          %v2095 = vadd.f32 %v1998, %v2079
          %v2096 = vadd.f32 %v1999, %v2080
          %v2097 = vadd.f32 %v2000, %v2081
          %v2098 = vadd.f32 %v2001, %v2082
          %v2099 = vadd.f32 %v2002, %v2083
          %v2100 = vadd.f32 %v2003, %v2084
          %v2101 = vadd.f32 %v2004, %v2085
          %v2102 = vadd.f32 %v2005, %v2086
          %v2103 = vadd.f32 %v2006, %v2087
          %s2104 = scalar_lea.vmem %s130, 256 [#allocation2]
          %v2105 = vld [vmem:[%s2104] sm:$0xff]
          %v2106 = vld [vmem:[%s2104 + $0x8] sm:$0xff]
          %v2107 = vld [vmem:[%s2104 + $0x10] sm:$0xff]
          %v2108 = vld [vmem:[%s2104 + $0x18] sm:$0xff]
          %v2109 = vld [vmem:[%s2104 + $0x20] sm:$0xff]
          %v2110 = vld [vmem:[%s2104 + $0x28] sm:$0xff]
          %v2111 = vld [vmem:[%s2104 + $0x30] sm:$0xff]
          %v2112 = vld [vmem:[%s2104 + $0x38] sm:$0xff]
          %v2113 = vld [vmem:[%s2104 + $0x40] sm:$0xff]
          %v2114 = vld [vmem:[%s2104 + $0x48] sm:$0xff]
          %v2115 = vld [vmem:[%s2104 + $0x50] sm:$0xff]
          %v2116 = vld [vmem:[%s2104 + $0x58] sm:$0xff]
          %v2117 = vld [vmem:[%s2104 + $0x60] sm:$0xff]
          %v2118 = vld [vmem:[%s2104 + $0x68] sm:$0xff]
          %v2119 = vld [vmem:[%s2104 + $0x70] sm:$0xff]
          %v2120 = vld [vmem:[%s2104 + $0x78] sm:$0xff]
          %2121 = vrot.lane.b32.xlu0 %v2105, 9
          %v2122 = vpop.permute.xlu0 %2121
          %2123 = vrot.lane.b32.xlu0 %v2106, 9
          %v2124 = vpop.permute.xlu0 %2123
          %2125 = vrot.lane.b32.xlu0 %v2107, 9
          %v2126 = vpop.permute.xlu0 %2125
          %2127 = vrot.lane.b32.xlu0 %v2108, 9
          %v2128 = vpop.permute.xlu0 %2127
          %2129 = vrot.lane.b32.xlu0 %v2109, 9
          %v2130 = vpop.permute.xlu0 %2129
          %2131 = vrot.lane.b32.xlu0 %v2110, 9
          %v2132 = vpop.permute.xlu0 %2131
          %2133 = vrot.lane.b32.xlu0 %v2111, 9
          %v2134 = vpop.permute.xlu0 %2133
          %2135 = vrot.lane.b32.xlu0 %v2112, 9
          %v2136 = vpop.permute.xlu0 %2135
          %2137 = vrot.lane.b32.xlu0 %v2113, 9
          %v2138 = vpop.permute.xlu0 %2137
          %2139 = vrot.lane.b32.xlu0 %v2114, 9
          %v2140 = vpop.permute.xlu0 %2139
          %2141 = vrot.lane.b32.xlu0 %v2115, 9
          %v2142 = vpop.permute.xlu0 %2141
          %2143 = vrot.lane.b32.xlu0 %v2116, 9
          %v2144 = vpop.permute.xlu0 %2143
          %2145 = vrot.lane.b32.xlu0 %v2117, 9
          %v2146 = vpop.permute.xlu0 %2145
          %2147 = vrot.lane.b32.xlu0 %v2118, 9
          %v2148 = vpop.permute.xlu0 %2147
          %2149 = vrot.lane.b32.xlu0 %v2119, 9
          %v2150 = vpop.permute.xlu0 %2149
          %2151 = vrot.lane.b32.xlu0 %v2120, 9
          %v2152 = vpop.permute.xlu0 %2151
          %v2153 = vsub.f32 %v2105, %v2122
          %v2154 = vsub.f32 %v2106, %v2124
          %v2155 = vsub.f32 %v2107, %v2126
          %v2156 = vsub.f32 %v2108, %v2128
          %v2157 = vsub.f32 %v2109, %v2130
          %v2158 = vsub.f32 %v2110, %v2132
          %v2159 = vsub.f32 %v2111, %v2134
          %v2160 = vsub.f32 %v2112, %v2136
          %v2161 = vsub.f32 %v2113, %v2138
          %v2162 = vsub.f32 %v2114, %v2140
          %v2163 = vsub.f32 %v2115, %v2142
          %v2164 = vsub.f32 %v2116, %v2144
          %v2165 = vsub.f32 %v2117, %v2146
          %v2166 = vsub.f32 %v2118, %v2148
          %v2167 = vsub.f32 %v2119, %v2150
          %v2168 = vsub.f32 %v2120, %v2152
          %v2169 = vmul.f32 %v2153, %v2153
          %v2170 = vmul.f32 %v2154, %v2154
          %v2171 = vmul.f32 %v2155, %v2155
          %v2172 = vmul.f32 %v2156, %v2156
          %v2173 = vmul.f32 %v2157, %v2157
          %v2174 = vmul.f32 %v2158, %v2158
          %v2175 = vmul.f32 %v2159, %v2159
          %v2176 = vmul.f32 %v2160, %v2160
          %v2177 = vmul.f32 %v2161, %v2161
          %v2178 = vmul.f32 %v2162, %v2162
          %v2179 = vmul.f32 %v2163, %v2163
          %v2180 = vmul.f32 %v2164, %v2164
          %v2181 = vmul.f32 %v2165, %v2165
          %v2182 = vmul.f32 %v2166, %v2166
          %v2183 = vmul.f32 %v2167, %v2167
          %v2184 = vmul.f32 %v2168, %v2168
          %v2185 = vadd.f32 %v2088, %v2169
          %v2186 = vadd.f32 %v2089, %v2170
          %v2187 = vadd.f32 %v2090, %v2171
          %v2188 = vadd.f32 %v2091, %v2172
          %v2189 = vadd.f32 %v2092, %v2173
          %v2190 = vadd.f32 %v2093, %v2174
          %v2191 = vadd.f32 %v2094, %v2175
          %v2192 = vadd.f32 %v2095, %v2176
          %v2193 = vadd.f32 %v2096, %v2177
          %v2194 = vadd.f32 %v2097, %v2178
          %v2195 = vadd.f32 %v2098, %v2179
          %v2196 = vadd.f32 %v2099, %v2180
          %v2197 = vadd.f32 %v2100, %v2181
          %v2198 = vadd.f32 %v2101, %v2182
          %v2199 = vadd.f32 %v2102, %v2183
          %v2200 = vadd.f32 %v2103, %v2184
          %s2201 = scalar_lea.vmem %s130, 384 [#allocation2]
          %v2202 = vld [vmem:[%s2201] sm:$0xff]
          %v2203 = vld [vmem:[%s2201 + $0x8] sm:$0xff]
          %v2204 = vld [vmem:[%s2201 + $0x10] sm:$0xff]
          %v2205 = vld [vmem:[%s2201 + $0x18] sm:$0xff]
          %v2206 = vld [vmem:[%s2201 + $0x20] sm:$0xff]
          %v2207 = vld [vmem:[%s2201 + $0x28] sm:$0xff]
          %v2208 = vld [vmem:[%s2201 + $0x30] sm:$0xff]
          %v2209 = vld [vmem:[%s2201 + $0x38] sm:$0xff]
          %v2210 = vld [vmem:[%s2201 + $0x40] sm:$0xff]
          %v2211 = vld [vmem:[%s2201 + $0x48] sm:$0xff]
          %v2212 = vld [vmem:[%s2201 + $0x50] sm:$0xff]
          %v2213 = vld [vmem:[%s2201 + $0x58] sm:$0xff]
          %v2214 = vld [vmem:[%s2201 + $0x60] sm:$0xff]
          %v2215 = vld [vmem:[%s2201 + $0x68] sm:$0xff]
          %v2216 = vld [vmem:[%s2201 + $0x70] sm:$0xff]
          %v2217 = vld [vmem:[%s2201 + $0x78] sm:$0xff]
          %2218 = vrot.lane.b32.xlu0 %v2202, 9
          %v2219 = vpop.permute.xlu0 %2218
          %2220 = vrot.lane.b32.xlu0 %v2203, 9
          %v2221 = vpop.permute.xlu0 %2220
          %2222 = vrot.lane.b32.xlu0 %v2204, 9
          %v2223 = vpop.permute.xlu0 %2222
          %2224 = vrot.lane.b32.xlu0 %v2205, 9
          %v2225 = vpop.permute.xlu0 %2224
          %2226 = vrot.lane.b32.xlu0 %v2206, 9
          %v2227 = vpop.permute.xlu0 %2226
          %2228 = vrot.lane.b32.xlu0 %v2207, 9
          %v2229 = vpop.permute.xlu0 %2228
          %2230 = vrot.lane.b32.xlu0 %v2208, 9
          %v2231 = vpop.permute.xlu0 %2230
          %2232 = vrot.lane.b32.xlu0 %v2209, 9
          %v2233 = vpop.permute.xlu0 %2232
          %2234 = vrot.lane.b32.xlu0 %v2210, 9
          %v2235 = vpop.permute.xlu0 %2234
          %2236 = vrot.lane.b32.xlu0 %v2211, 9
          %v2237 = vpop.permute.xlu0 %2236
          %2238 = vrot.lane.b32.xlu0 %v2212, 9
          %v2239 = vpop.permute.xlu0 %2238
          %2240 = vrot.lane.b32.xlu0 %v2213, 9
          %v2241 = vpop.permute.xlu0 %2240
          %2242 = vrot.lane.b32.xlu0 %v2214, 9
          %v2243 = vpop.permute.xlu0 %2242
          %2244 = vrot.lane.b32.xlu0 %v2215, 9
          %v2245 = vpop.permute.xlu0 %2244
          %2246 = vrot.lane.b32.xlu0 %v2216, 9
          %v2247 = vpop.permute.xlu0 %2246
          %2248 = vrot.lane.b32.xlu0 %v2217, 9
          %v2249 = vpop.permute.xlu0 %2248
          %v2250 = vsub.f32 %v2202, %v2219
          %v2251 = vsub.f32 %v2203, %v2221
          %v2252 = vsub.f32 %v2204, %v2223
          %v2253 = vsub.f32 %v2205, %v2225
          %v2254 = vsub.f32 %v2206, %v2227
          %v2255 = vsub.f32 %v2207, %v2229
          %v2256 = vsub.f32 %v2208, %v2231
          %v2257 = vsub.f32 %v2209, %v2233
          %v2258 = vsub.f32 %v2210, %v2235
          %v2259 = vsub.f32 %v2211, %v2237
          %v2260 = vsub.f32 %v2212, %v2239
          %v2261 = vsub.f32 %v2213, %v2241
          %v2262 = vsub.f32 %v2214, %v2243
          %v2263 = vsub.f32 %v2215, %v2245
          %v2264 = vsub.f32 %v2216, %v2247
          %v2265 = vsub.f32 %v2217, %v2249
          %v2266 = vmul.f32 %v2250, %v2250
          %v2267 = vmul.f32 %v2251, %v2251
          %v2268 = vmul.f32 %v2252, %v2252
          %v2269 = vmul.f32 %v2253, %v2253
          %v2270 = vmul.f32 %v2254, %v2254
          %v2271 = vmul.f32 %v2255, %v2255
          %v2272 = vmul.f32 %v2256, %v2256
          %v2273 = vmul.f32 %v2257, %v2257
          %v2274 = vmul.f32 %v2258, %v2258
          %v2275 = vmul.f32 %v2259, %v2259
          %v2276 = vmul.f32 %v2260, %v2260
          %v2277 = vmul.f32 %v2261, %v2261
          %v2278 = vmul.f32 %v2262, %v2262
          %v2279 = vmul.f32 %v2263, %v2263
          %v2280 = vmul.f32 %v2264, %v2264
          %v2281 = vmul.f32 %v2265, %v2265
          %v2282 = vadd.f32 %v2185, %v2266
          %v2283 = vadd.f32 %v2186, %v2267
          %v2284 = vadd.f32 %v2187, %v2268
          %v2285 = vadd.f32 %v2188, %v2269
          %v2286 = vadd.f32 %v2189, %v2270
          %v2287 = vadd.f32 %v2190, %v2271
          %v2288 = vadd.f32 %v2191, %v2272
          %v2289 = vadd.f32 %v2192, %v2273
          %v2290 = vadd.f32 %v2193, %v2274
          %v2291 = vadd.f32 %v2194, %v2275
          %v2292 = vadd.f32 %v2195, %v2276
          %v2293 = vadd.f32 %v2196, %v2277
          %v2294 = vadd.f32 %v2197, %v2278
          %v2295 = vadd.f32 %v2198, %v2279
          %v2296 = vadd.f32 %v2199, %v2280
          %v2297 = vadd.f32 %v2200, %v2281
          %v2298 = vmul.f32 %v2282, 25.0
          %v2299 = vmul.f32 %v2283, 25.0
          %v2300 = vmul.f32 %v2284, 25.0
          %v2301 = vmul.f32 %v2285, 25.0
          %v2302 = vmul.f32 %v2286, 25.0
          %v2303 = vmul.f32 %v2287, 25.0
          %v2304 = vmul.f32 %v2288, 25.0
          %v2305 = vmul.f32 %v2289, 25.0
          %v2306 = vmul.f32 %v2290, 25.0
          %v2307 = vmul.f32 %v2291, 25.0
          %v2308 = vmul.f32 %v2292, 25.0
          %v2309 = vmul.f32 %v2293, 25.0
          %v2310 = vmul.f32 %v2294, 25.0
          %v2311 = vmul.f32 %v2295, 25.0
          %v2312 = vmul.f32 %v2296, 25.0
          %v2313 = vmul.f32 %v2297, 25.0
          %v2314 = vtanh.pop %v2298
          %v2315 = vtanh.pop %v2299
          %v2316 = vtanh.pop %v2300
          %v2317 = vtanh.pop %v2301
          %v2318 = vtanh.pop %v2302
          %v2319 = vtanh.pop %v2303
          %v2320 = vtanh.pop %v2304
          %v2321 = vtanh.pop %v2305
          %v2322 = vtanh.pop %v2306
          %v2323 = vtanh.pop %v2307
          %v2324 = vtanh.pop %v2308
          %v2325 = vtanh.pop %v2309
          %v2326 = vtanh.pop %v2310
          %v2327 = vtanh.pop %v2311
          %v2328 = vtanh.pop %v2312
          %v2329 = vtanh.pop %v2313
          %v2330 = vsub.f32 1.0, %v2314
          %v2331 = vsub.f32 1.0, %v2315
          %v2332 = vsub.f32 1.0, %v2316
          %v2333 = vsub.f32 1.0, %v2317
          %v2334 = vsub.f32 1.0, %v2318
          %v2335 = vsub.f32 1.0, %v2319
          %v2336 = vsub.f32 1.0, %v2320
          %v2337 = vsub.f32 1.0, %v2321
          %v2338 = vsub.f32 1.0, %v2322
          %v2339 = vsub.f32 1.0, %v2323
          %v2340 = vsub.f32 1.0, %v2324
          %v2341 = vsub.f32 1.0, %v2325
          %v2342 = vsub.f32 1.0, %v2326
          %v2343 = vsub.f32 1.0, %v2327
          %v2344 = vsub.f32 1.0, %v2328
          %v2345 = vsub.f32 1.0, %v2329
          %v2346 = vlaneseq
          %v2347 = vand.u32 %v2346, 127
          %vm2348 = vcmp.ge.s32.totalorder %v2347, 9
          %v2349 = vsel %vm2348, 1, 0
          %vm2350 = vcmp.eq.s32.totalorder %v2349, 1
          %v2351 = vsel %vm2350, %v2330, 1.0
          %v2352 = vsel %vm2350, %v2331, 1.0
          %v2353 = vsel %vm2350, %v2332, 1.0
          %v2354 = vsel %vm2350, %v2333, 1.0
          %v2355 = vsel %vm2350, %v2334, 1.0
          %v2356 = vsel %vm2350, %v2335, 1.0
          %v2357 = vsel %vm2350, %v2336, 1.0
          %v2358 = vsel %vm2350, %v2337, 1.0
          %v2359 = vsel %vm2350, %v2338, 1.0
          %v2360 = vsel %vm2350, %v2339, 1.0
          %v2361 = vsel %vm2350, %v2340, 1.0
          %v2362 = vsel %vm2350, %v2341, 1.0
          %v2363 = vsel %vm2350, %v2342, 1.0
          %v2364 = vsel %vm2350, %v2343, 1.0
          %v2365 = vsel %vm2350, %v2344, 1.0
          %v2366 = vsel %vm2350, %v2345, 1.0
          %2367 = vst [vmem:[%s148] sm:$0xff] %v2351
          %2368 = vst [vmem:[%s148 + $0x8] sm:$0xff] %v2352
          %2369 = vst [vmem:[%s148 + $0x10] sm:$0xff] %v2353
          %2370 = vst [vmem:[%s148 + $0x18] sm:$0xff] %v2354
          %2371 = vst [vmem:[%s148 + $0x20] sm:$0xff] %v2355
          %2372 = vst [vmem:[%s148 + $0x28] sm:$0xff] %v2356
          %2373 = vst [vmem:[%s148 + $0x30] sm:$0xff] %v2357
          %2374 = vst [vmem:[%s148 + $0x38] sm:$0xff] %v2358
          %2375 = vst [vmem:[%s148 + $0x40] sm:$0xff] %v2359
          %2376 = vst [vmem:[%s148 + $0x48] sm:$0xff] %v2360
          %2377 = vst [vmem:[%s148 + $0x50] sm:$0xff] %v2361
          %2378 = vst [vmem:[%s148 + $0x58] sm:$0xff] %v2362
          %2379 = vst [vmem:[%s148 + $0x60] sm:$0xff] %v2363
          %2380 = vst [vmem:[%s148 + $0x68] sm:$0xff] %v2364
          %2381 = vst [vmem:[%s148 + $0x70] sm:$0xff] %v2365
          %2382 = vst [vmem:[%s148 + $0x78] sm:$0xff] %v2366
        $region48: #{tpu_custom_call.1} parent=23 // pred_fallthru
          _
        %p2383 = scmp.eq.s32.totalorder %s23, 5
        // Predicated region
        $region49: #{tpu_custom_call.1} parent=23 // pred_check
          %p2384 = pneg %p2383
        $region50: #{tpu_custom_call.1} parent=23 // pred_check_branch
          %2386 = sbr.rel (%p2384) target = $region52
        $region51: #{tpu_custom_call.1} parent=23 // pred_region
          %v2387 = vld [vmem:[%s130] sm:$0xff]
          %v2388 = vld [vmem:[%s130 + $0x8] sm:$0xff]
          %v2389 = vld [vmem:[%s130 + $0x10] sm:$0xff]
          %v2390 = vld [vmem:[%s130 + $0x18] sm:$0xff]
          %v2391 = vld [vmem:[%s130 + $0x20] sm:$0xff]
          %v2392 = vld [vmem:[%s130 + $0x28] sm:$0xff]
          %v2393 = vld [vmem:[%s130 + $0x30] sm:$0xff]
          %v2394 = vld [vmem:[%s130 + $0x38] sm:$0xff]
          %v2395 = vld [vmem:[%s130 + $0x40] sm:$0xff]
          %v2396 = vld [vmem:[%s130 + $0x48] sm:$0xff]
          %v2397 = vld [vmem:[%s130 + $0x50] sm:$0xff]
          %v2398 = vld [vmem:[%s130 + $0x58] sm:$0xff]
          %v2399 = vld [vmem:[%s130 + $0x60] sm:$0xff]
          %v2400 = vld [vmem:[%s130 + $0x68] sm:$0xff]
          %v2401 = vld [vmem:[%s130 + $0x70] sm:$0xff]
          %v2402 = vld [vmem:[%s130 + $0x78] sm:$0xff]
          %v2403 = vrot.slane %v2387, 7
          %v2404 = vrot.slane %v2391, 7
          %v2405 = vrot.slane %v2395, 7
          %v2406 = vrot.slane %v2399, 7
          %v2407 = vrot.slane %v2388, 7
          %v2408 = vrot.slane %v2392, 7
          %v2409 = vrot.slane %v2396, 7
          %v2410 = vrot.slane %v2400, 7
          %v2411 = vrot.slane %v2389, 7
          %v2412 = vrot.slane %v2393, 7
          %v2413 = vrot.slane %v2397, 7
          %v2414 = vrot.slane %v2401, 7
          %v2415 = vrot.slane %v2390, 7
          %v2416 = vrot.slane %v2394, 7
          %v2417 = vrot.slane %v2398, 7
          %v2418 = vrot.slane %v2402, 7
          %v2419 = vlaneseq
          %v2420 = vshrl.u32 %v2419, 7
          %vm2421 = vcmp.lt.s32.totalorder %v2420, 1
          %v2422 = vsel %vm2421, %v2411, %v2415
          %v2423 = vsel %vm2421, %v2412, %v2416
          %v2424 = vsel %vm2421, %v2413, %v2417
          %v2425 = vsel %vm2421, %v2414, %v2418
          %v2426 = vsel %vm2421, %v2407, %v2411
          %v2427 = vsel %vm2421, %v2408, %v2412
          %v2428 = vsel %vm2421, %v2409, %v2413
          %v2429 = vsel %vm2421, %v2410, %v2414
          %v2430 = vsel %vm2421, %v2403, %v2407
          %v2431 = vsel %vm2421, %v2404, %v2408
          %v2432 = vsel %vm2421, %v2405, %v2409
          %v2433 = vsel %vm2421, %v2406, %v2410
          %v2434 = vsel %vm2421, %v2415, %v2403
          %v2435 = vsel %vm2421, %v2416, %v2404
          %v2436 = vsel %vm2421, %v2417, %v2405
          %v2437 = vsel %vm2421, %v2418, %v2406
          %2438 = vrot.lane.b32.xlu0 %v2422, 9
          %v2439 = vpop.permute.xlu0 %2438
          %2440 = vrot.lane.b32.xlu0 %v2434, 9
          %v2441 = vpop.permute.xlu0 %2440
          %2442 = vrot.lane.b32.xlu0 %v2430, 9
          %v2443 = vpop.permute.xlu0 %2442
          %2444 = vrot.lane.b32.xlu0 %v2426, 9
          %v2445 = vpop.permute.xlu0 %2444
          %2446 = vrot.lane.b32.xlu0 %v2423, 9
          %v2447 = vpop.permute.xlu0 %2446
          %2448 = vrot.lane.b32.xlu0 %v2435, 9
          %v2449 = vpop.permute.xlu0 %2448
          %2450 = vrot.lane.b32.xlu0 %v2431, 9
          %v2451 = vpop.permute.xlu0 %2450
          %2452 = vrot.lane.b32.xlu0 %v2427, 9
          %v2453 = vpop.permute.xlu0 %2452
          %2454 = vrot.lane.b32.xlu0 %v2424, 9
          %v2455 = vpop.permute.xlu0 %2454
          %2456 = vrot.lane.b32.xlu0 %v2436, 9
          %v2457 = vpop.permute.xlu0 %2456
          %2458 = vrot.lane.b32.xlu0 %v2432, 9
          %v2459 = vpop.permute.xlu0 %2458
          %2460 = vrot.lane.b32.xlu0 %v2428, 9
          %v2461 = vpop.permute.xlu0 %2460
          %2462 = vrot.lane.b32.xlu0 %v2425, 9
          %v2463 = vpop.permute.xlu0 %2462
          %2464 = vrot.lane.b32.xlu0 %v2437, 9
          %v2465 = vpop.permute.xlu0 %2464
          %2466 = vrot.lane.b32.xlu0 %v2433, 9
          %v2467 = vpop.permute.xlu0 %2466
          %2468 = vrot.lane.b32.xlu0 %v2429, 9
          %v2469 = vpop.permute.xlu0 %2468
          %v2470 = vsub.f32 %v2387, %v2439
          %v2471 = vsub.f32 %v2388, %v2441
          %v2472 = vsub.f32 %v2389, %v2443
          %v2473 = vsub.f32 %v2390, %v2445
          %v2474 = vsub.f32 %v2391, %v2447
          %v2475 = vsub.f32 %v2392, %v2449
          %v2476 = vsub.f32 %v2393, %v2451
          %v2477 = vsub.f32 %v2394, %v2453
          %v2478 = vsub.f32 %v2395, %v2455
          %v2479 = vsub.f32 %v2396, %v2457
          %v2480 = vsub.f32 %v2397, %v2459
          %v2481 = vsub.f32 %v2398, %v2461
          %v2482 = vsub.f32 %v2399, %v2463
          %v2483 = vsub.f32 %v2400, %v2465
          %v2484 = vsub.f32 %v2401, %v2467
          %v2485 = vsub.f32 %v2402, %v2469
          %v2486 = vmul.f32 %v2470, %v2470
          %v2487 = vmul.f32 %v2471, %v2471
          %v2488 = vmul.f32 %v2472, %v2472
          %v2489 = vmul.f32 %v2473, %v2473
          %v2490 = vmul.f32 %v2474, %v2474
          %v2491 = vmul.f32 %v2475, %v2475
          %v2492 = vmul.f32 %v2476, %v2476
          %v2493 = vmul.f32 %v2477, %v2477
          %v2494 = vmul.f32 %v2478, %v2478
          %v2495 = vmul.f32 %v2479, %v2479
          %v2496 = vmul.f32 %v2480, %v2480
          %v2497 = vmul.f32 %v2481, %v2481
          %v2498 = vmul.f32 %v2482, %v2482
          %v2499 = vmul.f32 %v2483, %v2483
          %v2500 = vmul.f32 %v2484, %v2484
          %v2501 = vmul.f32 %v2485, %v2485
          %v2502 = vadd.f32 %v2486, 0.0
          %v2503 = vadd.f32 %v2487, 0.0
          %v2504 = vadd.f32 %v2488, 0.0
          %v2505 = vadd.f32 %v2489, 0.0
          %v2506 = vadd.f32 %v2490, 0.0
          %v2507 = vadd.f32 %v2491, 0.0
          %v2508 = vadd.f32 %v2492, 0.0
          %v2509 = vadd.f32 %v2493, 0.0
          %v2510 = vadd.f32 %v2494, 0.0
          %v2511 = vadd.f32 %v2495, 0.0
          %v2512 = vadd.f32 %v2496, 0.0
          %v2513 = vadd.f32 %v2497, 0.0
          %v2514 = vadd.f32 %v2498, 0.0
          %v2515 = vadd.f32 %v2499, 0.0
          %v2516 = vadd.f32 %v2500, 0.0
          %v2517 = vadd.f32 %v2501, 0.0
          %s2518 = scalar_lea.vmem %s130, 128 [#allocation2]
          %v2519 = vld [vmem:[%s2518] sm:$0xff]
          %v2520 = vld [vmem:[%s2518 + $0x8] sm:$0xff]
          %v2521 = vld [vmem:[%s2518 + $0x10] sm:$0xff]
          %v2522 = vld [vmem:[%s2518 + $0x18] sm:$0xff]
          %v2523 = vld [vmem:[%s2518 + $0x20] sm:$0xff]
          %v2524 = vld [vmem:[%s2518 + $0x28] sm:$0xff]
          %v2525 = vld [vmem:[%s2518 + $0x30] sm:$0xff]
          %v2526 = vld [vmem:[%s2518 + $0x38] sm:$0xff]
          %v2527 = vld [vmem:[%s2518 + $0x40] sm:$0xff]
          %v2528 = vld [vmem:[%s2518 + $0x48] sm:$0xff]
          %v2529 = vld [vmem:[%s2518 + $0x50] sm:$0xff]
          %v2530 = vld [vmem:[%s2518 + $0x58] sm:$0xff]
          %v2531 = vld [vmem:[%s2518 + $0x60] sm:$0xff]
          %v2532 = vld [vmem:[%s2518 + $0x68] sm:$0xff]
          %v2533 = vld [vmem:[%s2518 + $0x70] sm:$0xff]
          %v2534 = vld [vmem:[%s2518 + $0x78] sm:$0xff]
          %v2535 = vrot.slane %v2519, 7
          %v2536 = vrot.slane %v2523, 7
          %v2537 = vrot.slane %v2527, 7
          %v2538 = vrot.slane %v2531, 7
          %v2539 = vrot.slane %v2520, 7
          %v2540 = vrot.slane %v2524, 7
          %v2541 = vrot.slane %v2528, 7
          %v2542 = vrot.slane %v2532, 7
          %v2543 = vrot.slane %v2521, 7
          %v2544 = vrot.slane %v2525, 7
          %v2545 = vrot.slane %v2529, 7
          %v2546 = vrot.slane %v2533, 7
          %v2547 = vrot.slane %v2522, 7
          %v2548 = vrot.slane %v2526, 7
          %v2549 = vrot.slane %v2530, 7
          %v2550 = vrot.slane %v2534, 7
          %v2551 = vsel %vm2421, %v2543, %v2547
          %v2552 = vsel %vm2421, %v2544, %v2548
          %v2553 = vsel %vm2421, %v2545, %v2549
          %v2554 = vsel %vm2421, %v2546, %v2550
          %v2555 = vsel %vm2421, %v2539, %v2543
          %v2556 = vsel %vm2421, %v2540, %v2544
          %v2557 = vsel %vm2421, %v2541, %v2545
          %v2558 = vsel %vm2421, %v2542, %v2546
          %v2559 = vsel %vm2421, %v2535, %v2539
          %v2560 = vsel %vm2421, %v2536, %v2540
          %v2561 = vsel %vm2421, %v2537, %v2541
          %v2562 = vsel %vm2421, %v2538, %v2542
          %v2563 = vsel %vm2421, %v2547, %v2535
          %v2564 = vsel %vm2421, %v2548, %v2536
          %v2565 = vsel %vm2421, %v2549, %v2537
          %v2566 = vsel %vm2421, %v2550, %v2538
          %2567 = vrot.lane.b32.xlu0 %v2551, 9
          %v2568 = vpop.permute.xlu0 %2567
          %2569 = vrot.lane.b32.xlu0 %v2563, 9
          %v2570 = vpop.permute.xlu0 %2569
          %2571 = vrot.lane.b32.xlu0 %v2559, 9
          %v2572 = vpop.permute.xlu0 %2571
          %2573 = vrot.lane.b32.xlu0 %v2555, 9
          %v2574 = vpop.permute.xlu0 %2573
          %2575 = vrot.lane.b32.xlu0 %v2552, 9
          %v2576 = vpop.permute.xlu0 %2575
          %2577 = vrot.lane.b32.xlu0 %v2564, 9
          %v2578 = vpop.permute.xlu0 %2577
          %2579 = vrot.lane.b32.xlu0 %v2560, 9
          %v2580 = vpop.permute.xlu0 %2579
          %2581 = vrot.lane.b32.xlu0 %v2556, 9
          %v2582 = vpop.permute.xlu0 %2581
          %2583 = vrot.lane.b32.xlu0 %v2553, 9
          %v2584 = vpop.permute.xlu0 %2583
          %2585 = vrot.lane.b32.xlu0 %v2565, 9
          %v2586 = vpop.permute.xlu0 %2585
          %2587 = vrot.lane.b32.xlu0 %v2561, 9
          %v2588 = vpop.permute.xlu0 %2587
          %2589 = vrot.lane.b32.xlu0 %v2557, 9
          %v2590 = vpop.permute.xlu0 %2589
          %2591 = vrot.lane.b32.xlu0 %v2554, 9
          %v2592 = vpop.permute.xlu0 %2591
          %2593 = vrot.lane.b32.xlu0 %v2566, 9
          %v2594 = vpop.permute.xlu0 %2593
          %2595 = vrot.lane.b32.xlu0 %v2562, 9
          %v2596 = vpop.permute.xlu0 %2595
          %2597 = vrot.lane.b32.xlu0 %v2558, 9
          %v2598 = vpop.permute.xlu0 %2597
          %v2599 = vsub.f32 %v2519, %v2568
          %v2600 = vsub.f32 %v2520, %v2570
          %v2601 = vsub.f32 %v2521, %v2572
          %v2602 = vsub.f32 %v2522, %v2574
          %v2603 = vsub.f32 %v2523, %v2576
          %v2604 = vsub.f32 %v2524, %v2578
          %v2605 = vsub.f32 %v2525, %v2580
          %v2606 = vsub.f32 %v2526, %v2582
          %v2607 = vsub.f32 %v2527, %v2584
          %v2608 = vsub.f32 %v2528, %v2586
          %v2609 = vsub.f32 %v2529, %v2588
          %v2610 = vsub.f32 %v2530, %v2590
          %v2611 = vsub.f32 %v2531, %v2592
          %v2612 = vsub.f32 %v2532, %v2594
          %v2613 = vsub.f32 %v2533, %v2596
          %v2614 = vsub.f32 %v2534, %v2598
          %v2615 = vmul.f32 %v2599, %v2599
          %v2616 = vmul.f32 %v2600, %v2600
          %v2617 = vmul.f32 %v2601, %v2601
          %v2618 = vmul.f32 %v2602, %v2602
          %v2619 = vmul.f32 %v2603, %v2603
          %v2620 = vmul.f32 %v2604, %v2604
          %v2621 = vmul.f32 %v2605, %v2605
          %v2622 = vmul.f32 %v2606, %v2606
          %v2623 = vmul.f32 %v2607, %v2607
          %v2624 = vmul.f32 %v2608, %v2608
          %v2625 = vmul.f32 %v2609, %v2609
          %v2626 = vmul.f32 %v2610, %v2610
          %v2627 = vmul.f32 %v2611, %v2611
          %v2628 = vmul.f32 %v2612, %v2612
          %v2629 = vmul.f32 %v2613, %v2613
          %v2630 = vmul.f32 %v2614, %v2614
          %v2631 = vadd.f32 %v2502, %v2615
          %v2632 = vadd.f32 %v2503, %v2616
          %v2633 = vadd.f32 %v2504, %v2617
          %v2634 = vadd.f32 %v2505, %v2618
          %v2635 = vadd.f32 %v2506, %v2619
          %v2636 = vadd.f32 %v2507, %v2620
          %v2637 = vadd.f32 %v2508, %v2621
          %v2638 = vadd.f32 %v2509, %v2622
          %v2639 = vadd.f32 %v2510, %v2623
          %v2640 = vadd.f32 %v2511, %v2624
          %v2641 = vadd.f32 %v2512, %v2625
          %v2642 = vadd.f32 %v2513, %v2626
          %v2643 = vadd.f32 %v2514, %v2627
          %v2644 = vadd.f32 %v2515, %v2628
          %v2645 = vadd.f32 %v2516, %v2629
          %v2646 = vadd.f32 %v2517, %v2630
          %s2647 = scalar_lea.vmem %s130, 256 [#allocation2]
          %v2648 = vld [vmem:[%s2647] sm:$0xff]
          %v2649 = vld [vmem:[%s2647 + $0x8] sm:$0xff]
          %v2650 = vld [vmem:[%s2647 + $0x10] sm:$0xff]
          %v2651 = vld [vmem:[%s2647 + $0x18] sm:$0xff]
          %v2652 = vld [vmem:[%s2647 + $0x20] sm:$0xff]
          %v2653 = vld [vmem:[%s2647 + $0x28] sm:$0xff]
          %v2654 = vld [vmem:[%s2647 + $0x30] sm:$0xff]
          %v2655 = vld [vmem:[%s2647 + $0x38] sm:$0xff]
          %v2656 = vld [vmem:[%s2647 + $0x40] sm:$0xff]
          %v2657 = vld [vmem:[%s2647 + $0x48] sm:$0xff]
          %v2658 = vld [vmem:[%s2647 + $0x50] sm:$0xff]
          %v2659 = vld [vmem:[%s2647 + $0x58] sm:$0xff]
          %v2660 = vld [vmem:[%s2647 + $0x60] sm:$0xff]
          %v2661 = vld [vmem:[%s2647 + $0x68] sm:$0xff]
          %v2662 = vld [vmem:[%s2647 + $0x70] sm:$0xff]
          %v2663 = vld [vmem:[%s2647 + $0x78] sm:$0xff]
          %v2664 = vrot.slane %v2648, 7
          %v2665 = vrot.slane %v2652, 7
          %v2666 = vrot.slane %v2656, 7
          %v2667 = vrot.slane %v2660, 7
          %v2668 = vrot.slane %v2649, 7
          %v2669 = vrot.slane %v2653, 7
          %v2670 = vrot.slane %v2657, 7
          %v2671 = vrot.slane %v2661, 7
          %v2672 = vrot.slane %v2650, 7
          %v2673 = vrot.slane %v2654, 7
          %v2674 = vrot.slane %v2658, 7
          %v2675 = vrot.slane %v2662, 7
          %v2676 = vrot.slane %v2651, 7
          %v2677 = vrot.slane %v2655, 7
          %v2678 = vrot.slane %v2659, 7
          %v2679 = vrot.slane %v2663, 7
          %v2680 = vsel %vm2421, %v2672, %v2676
          %v2681 = vsel %vm2421, %v2673, %v2677
          %v2682 = vsel %vm2421, %v2674, %v2678
          %v2683 = vsel %vm2421, %v2675, %v2679
          %v2684 = vsel %vm2421, %v2668, %v2672
          %v2685 = vsel %vm2421, %v2669, %v2673
          %v2686 = vsel %vm2421, %v2670, %v2674
          %v2687 = vsel %vm2421, %v2671, %v2675
          %v2688 = vsel %vm2421, %v2664, %v2668
          %v2689 = vsel %vm2421, %v2665, %v2669
          %v2690 = vsel %vm2421, %v2666, %v2670
          %v2691 = vsel %vm2421, %v2667, %v2671
          %v2692 = vsel %vm2421, %v2676, %v2664
          %v2693 = vsel %vm2421, %v2677, %v2665
          %v2694 = vsel %vm2421, %v2678, %v2666
          %v2695 = vsel %vm2421, %v2679, %v2667
          %2696 = vrot.lane.b32.xlu0 %v2680, 9
          %v2697 = vpop.permute.xlu0 %2696
          %2698 = vrot.lane.b32.xlu0 %v2692, 9
          %v2699 = vpop.permute.xlu0 %2698
          %2700 = vrot.lane.b32.xlu0 %v2688, 9
          %v2701 = vpop.permute.xlu0 %2700
          %2702 = vrot.lane.b32.xlu0 %v2684, 9
          %v2703 = vpop.permute.xlu0 %2702
          %2704 = vrot.lane.b32.xlu0 %v2681, 9
          %v2705 = vpop.permute.xlu0 %2704
          %2706 = vrot.lane.b32.xlu0 %v2693, 9
          %v2707 = vpop.permute.xlu0 %2706
          %2708 = vrot.lane.b32.xlu0 %v2689, 9
          %v2709 = vpop.permute.xlu0 %2708
          %2710 = vrot.lane.b32.xlu0 %v2685, 9
          %v2711 = vpop.permute.xlu0 %2710
          %2712 = vrot.lane.b32.xlu0 %v2682, 9
          %v2713 = vpop.permute.xlu0 %2712
          %2714 = vrot.lane.b32.xlu0 %v2694, 9
          %v2715 = vpop.permute.xlu0 %2714
          %2716 = vrot.lane.b32.xlu0 %v2690, 9
          %v2717 = vpop.permute.xlu0 %2716
          %2718 = vrot.lane.b32.xlu0 %v2686, 9
          %v2719 = vpop.permute.xlu0 %2718
          %2720 = vrot.lane.b32.xlu0 %v2683, 9
          %v2721 = vpop.permute.xlu0 %2720
          %2722 = vrot.lane.b32.xlu0 %v2695, 9
          %v2723 = vpop.permute.xlu0 %2722
          %2724 = vrot.lane.b32.xlu0 %v2691, 9
          %v2725 = vpop.permute.xlu0 %2724
          %2726 = vrot.lane.b32.xlu0 %v2687, 9
          %v2727 = vpop.permute.xlu0 %2726
          %v2728 = vsub.f32 %v2648, %v2697
          %v2729 = vsub.f32 %v2649, %v2699
          %v2730 = vsub.f32 %v2650, %v2701
          %v2731 = vsub.f32 %v2651, %v2703
          %v2732 = vsub.f32 %v2652, %v2705
          %v2733 = vsub.f32 %v2653, %v2707
          %v2734 = vsub.f32 %v2654, %v2709
          %v2735 = vsub.f32 %v2655, %v2711
          %v2736 = vsub.f32 %v2656, %v2713
          %v2737 = vsub.f32 %v2657, %v2715
          %v2738 = vsub.f32 %v2658, %v2717
          %v2739 = vsub.f32 %v2659, %v2719
          %v2740 = vsub.f32 %v2660, %v2721
          %v2741 = vsub.f32 %v2661, %v2723
          %v2742 = vsub.f32 %v2662, %v2725
          %v2743 = vsub.f32 %v2663, %v2727
          %v2744 = vmul.f32 %v2728, %v2728
          %v2745 = vmul.f32 %v2729, %v2729
          %v2746 = vmul.f32 %v2730, %v2730
          %v2747 = vmul.f32 %v2731, %v2731
          %v2748 = vmul.f32 %v2732, %v2732
          %v2749 = vmul.f32 %v2733, %v2733
          %v2750 = vmul.f32 %v2734, %v2734
          %v2751 = vmul.f32 %v2735, %v2735
          %v2752 = vmul.f32 %v2736, %v2736
          %v2753 = vmul.f32 %v2737, %v2737
          %v2754 = vmul.f32 %v2738, %v2738
          %v2755 = vmul.f32 %v2739, %v2739
          %v2756 = vmul.f32 %v2740, %v2740
          %v2757 = vmul.f32 %v2741, %v2741
          %v2758 = vmul.f32 %v2742, %v2742
          %v2759 = vmul.f32 %v2743, %v2743
          %v2760 = vadd.f32 %v2631, %v2744
          %v2761 = vadd.f32 %v2632, %v2745
          %v2762 = vadd.f32 %v2633, %v2746
          %v2763 = vadd.f32 %v2634, %v2747
          %v2764 = vadd.f32 %v2635, %v2748
          %v2765 = vadd.f32 %v2636, %v2749
          %v2766 = vadd.f32 %v2637, %v2750
          %v2767 = vadd.f32 %v2638, %v2751
          %v2768 = vadd.f32 %v2639, %v2752
          %v2769 = vadd.f32 %v2640, %v2753
          %v2770 = vadd.f32 %v2641, %v2754
          %v2771 = vadd.f32 %v2642, %v2755
          %v2772 = vadd.f32 %v2643, %v2756
          %v2773 = vadd.f32 %v2644, %v2757
          %v2774 = vadd.f32 %v2645, %v2758
          %v2775 = vadd.f32 %v2646, %v2759
          %s2776 = scalar_lea.vmem %s130, 384 [#allocation2]
          %v2777 = vld [vmem:[%s2776] sm:$0xff]
          %v2778 = vld [vmem:[%s2776 + $0x8] sm:$0xff]
          %v2779 = vld [vmem:[%s2776 + $0x10] sm:$0xff]
          %v2780 = vld [vmem:[%s2776 + $0x18] sm:$0xff]
          %v2781 = vld [vmem:[%s2776 + $0x20] sm:$0xff]
          %v2782 = vld [vmem:[%s2776 + $0x28] sm:$0xff]
          %v2783 = vld [vmem:[%s2776 + $0x30] sm:$0xff]
          %v2784 = vld [vmem:[%s2776 + $0x38] sm:$0xff]
          %v2785 = vld [vmem:[%s2776 + $0x40] sm:$0xff]
          %v2786 = vld [vmem:[%s2776 + $0x48] sm:$0xff]
          %v2787 = vld [vmem:[%s2776 + $0x50] sm:$0xff]
          %v2788 = vld [vmem:[%s2776 + $0x58] sm:$0xff]
          %v2789 = vld [vmem:[%s2776 + $0x60] sm:$0xff]
          %v2790 = vld [vmem:[%s2776 + $0x68] sm:$0xff]
          %v2791 = vld [vmem:[%s2776 + $0x70] sm:$0xff]
          %v2792 = vld [vmem:[%s2776 + $0x78] sm:$0xff]
          %v2793 = vrot.slane %v2777, 7
          %v2794 = vrot.slane %v2781, 7
          %v2795 = vrot.slane %v2785, 7
          %v2796 = vrot.slane %v2789, 7
          %v2797 = vrot.slane %v2778, 7
          %v2798 = vrot.slane %v2782, 7
          %v2799 = vrot.slane %v2786, 7
          %v2800 = vrot.slane %v2790, 7
          %v2801 = vrot.slane %v2779, 7
          %v2802 = vrot.slane %v2783, 7
          %v2803 = vrot.slane %v2787, 7
          %v2804 = vrot.slane %v2791, 7
          %v2805 = vrot.slane %v2780, 7
          %v2806 = vrot.slane %v2784, 7
          %v2807 = vrot.slane %v2788, 7
          %v2808 = vrot.slane %v2792, 7
          %v2809 = vsel %vm2421, %v2801, %v2805
          %v2810 = vsel %vm2421, %v2802, %v2806
          %v2811 = vsel %vm2421, %v2803, %v2807
          %v2812 = vsel %vm2421, %v2804, %v2808
          %v2813 = vsel %vm2421, %v2797, %v2801
          %v2814 = vsel %vm2421, %v2798, %v2802
          %v2815 = vsel %vm2421, %v2799, %v2803
          %v2816 = vsel %vm2421, %v2800, %v2804
          %v2817 = vsel %vm2421, %v2793, %v2797
          %v2818 = vsel %vm2421, %v2794, %v2798
          %v2819 = vsel %vm2421, %v2795, %v2799
          %v2820 = vsel %vm2421, %v2796, %v2800
          %v2821 = vsel %vm2421, %v2805, %v2793
          %v2822 = vsel %vm2421, %v2806, %v2794
          %v2823 = vsel %vm2421, %v2807, %v2795
          %v2824 = vsel %vm2421, %v2808, %v2796
          %2825 = vrot.lane.b32.xlu0 %v2809, 9
          %v2826 = vpop.permute.xlu0 %2825
          %2827 = vrot.lane.b32.xlu0 %v2821, 9
          %v2828 = vpop.permute.xlu0 %2827
          %2829 = vrot.lane.b32.xlu0 %v2817, 9
          %v2830 = vpop.permute.xlu0 %2829
          %2831 = vrot.lane.b32.xlu0 %v2813, 9
          %v2832 = vpop.permute.xlu0 %2831
          %2833 = vrot.lane.b32.xlu0 %v2810, 9
          %v2834 = vpop.permute.xlu0 %2833
          %2835 = vrot.lane.b32.xlu0 %v2822, 9
          %v2836 = vpop.permute.xlu0 %2835
          %2837 = vrot.lane.b32.xlu0 %v2818, 9
          %v2838 = vpop.permute.xlu0 %2837
          %2839 = vrot.lane.b32.xlu0 %v2814, 9
          %v2840 = vpop.permute.xlu0 %2839
          %2841 = vrot.lane.b32.xlu0 %v2811, 9
          %v2842 = vpop.permute.xlu0 %2841
          %2843 = vrot.lane.b32.xlu0 %v2823, 9
          %v2844 = vpop.permute.xlu0 %2843
          %2845 = vrot.lane.b32.xlu0 %v2819, 9
          %v2846 = vpop.permute.xlu0 %2845
          %2847 = vrot.lane.b32.xlu0 %v2815, 9
          %v2848 = vpop.permute.xlu0 %2847
          %2849 = vrot.lane.b32.xlu0 %v2812, 9
          %v2850 = vpop.permute.xlu0 %2849
          %2851 = vrot.lane.b32.xlu0 %v2824, 9
          %v2852 = vpop.permute.xlu0 %2851
          %2853 = vrot.lane.b32.xlu0 %v2820, 9
          %v2854 = vpop.permute.xlu0 %2853
          %2855 = vrot.lane.b32.xlu0 %v2816, 9
          %v2856 = vpop.permute.xlu0 %2855
          %v2857 = vsub.f32 %v2777, %v2826
          %v2858 = vsub.f32 %v2778, %v2828
          %v2859 = vsub.f32 %v2779, %v2830
          %v2860 = vsub.f32 %v2780, %v2832
          %v2861 = vsub.f32 %v2781, %v2834
          %v2862 = vsub.f32 %v2782, %v2836
          %v2863 = vsub.f32 %v2783, %v2838
          %v2864 = vsub.f32 %v2784, %v2840
          %v2865 = vsub.f32 %v2785, %v2842
          %v2866 = vsub.f32 %v2786, %v2844
          %v2867 = vsub.f32 %v2787, %v2846
          %v2868 = vsub.f32 %v2788, %v2848
          %v2869 = vsub.f32 %v2789, %v2850
          %v2870 = vsub.f32 %v2790, %v2852
          %v2871 = vsub.f32 %v2791, %v2854
          %v2872 = vsub.f32 %v2792, %v2856
          %v2873 = vmul.f32 %v2857, %v2857
          %v2874 = vmul.f32 %v2858, %v2858
          %v2875 = vmul.f32 %v2859, %v2859
          %v2876 = vmul.f32 %v2860, %v2860
          %v2877 = vmul.f32 %v2861, %v2861
          %v2878 = vmul.f32 %v2862, %v2862
          %v2879 = vmul.f32 %v2863, %v2863
          %v2880 = vmul.f32 %v2864, %v2864
          %v2881 = vmul.f32 %v2865, %v2865
          %v2882 = vmul.f32 %v2866, %v2866
          %v2883 = vmul.f32 %v2867, %v2867
          %v2884 = vmul.f32 %v2868, %v2868
          %v2885 = vmul.f32 %v2869, %v2869
          %v2886 = vmul.f32 %v2870, %v2870
          %v2887 = vmul.f32 %v2871, %v2871
          %v2888 = vmul.f32 %v2872, %v2872
          %v2889 = vadd.f32 %v2760, %v2873
          %v2890 = vadd.f32 %v2761, %v2874
          %v2891 = vadd.f32 %v2762, %v2875
          %v2892 = vadd.f32 %v2763, %v2876
          %v2893 = vadd.f32 %v2764, %v2877
          %v2894 = vadd.f32 %v2765, %v2878
          %v2895 = vadd.f32 %v2766, %v2879
          %v2896 = vadd.f32 %v2767, %v2880
          %v2897 = vadd.f32 %v2768, %v2881
          %v2898 = vadd.f32 %v2769, %v2882
          %v2899 = vadd.f32 %v2770, %v2883
          %v2900 = vadd.f32 %v2771, %v2884
          %v2901 = vadd.f32 %v2772, %v2885
          %v2902 = vadd.f32 %v2773, %v2886
          %v2903 = vadd.f32 %v2774, %v2887
          %v2904 = vadd.f32 %v2775, %v2888
          %v2905 = vmul.f32 %v2889, 25.0
          %v2906 = vmul.f32 %v2890, 25.0
          %v2907 = vmul.f32 %v2891, 25.0
          %v2908 = vmul.f32 %v2892, 25.0
          %v2909 = vmul.f32 %v2893, 25.0
          %v2910 = vmul.f32 %v2894, 25.0
          %v2911 = vmul.f32 %v2895, 25.0
          %v2912 = vmul.f32 %v2896, 25.0
          %v2913 = vmul.f32 %v2897, 25.0
          %v2914 = vmul.f32 %v2898, 25.0
          %v2915 = vmul.f32 %v2899, 25.0
          %v2916 = vmul.f32 %v2900, 25.0
          %v2917 = vmul.f32 %v2901, 25.0
          %v2918 = vmul.f32 %v2902, 25.0
          %v2919 = vmul.f32 %v2903, 25.0
          %v2920 = vmul.f32 %v2904, 25.0
          %v2921 = vtanh.pop %v2905
          %v2922 = vtanh.pop %v2906
          %v2923 = vtanh.pop %v2907
          %v2924 = vtanh.pop %v2908
          %v2925 = vtanh.pop %v2909
          %v2926 = vtanh.pop %v2910
          %v2927 = vtanh.pop %v2911
          %v2928 = vtanh.pop %v2912
          %v2929 = vtanh.pop %v2913
          %v2930 = vtanh.pop %v2914
          %v2931 = vtanh.pop %v2915
          %v2932 = vtanh.pop %v2916
          %v2933 = vtanh.pop %v2917
          %v2934 = vtanh.pop %v2918
          %v2935 = vtanh.pop %v2919
          %v2936 = vtanh.pop %v2920
          %v2937 = vsub.f32 1.0, %v2921
          %v2938 = vsub.f32 1.0, %v2922
          %v2939 = vsub.f32 1.0, %v2923
          %v2940 = vsub.f32 1.0, %v2924
          %v2941 = vsub.f32 1.0, %v2925
          %v2942 = vsub.f32 1.0, %v2926
          %v2943 = vsub.f32 1.0, %v2927
          %v2944 = vsub.f32 1.0, %v2928
          %v2945 = vsub.f32 1.0, %v2929
          %v2946 = vsub.f32 1.0, %v2930
          %v2947 = vsub.f32 1.0, %v2931
          %v2948 = vsub.f32 1.0, %v2932
          %v2949 = vsub.f32 1.0, %v2933
          %v2950 = vsub.f32 1.0, %v2934
          %v2951 = vsub.f32 1.0, %v2935
          %v2952 = vsub.f32 1.0, %v2936
          %v2953 = vadd.s32 %v2420, 8
          %v2954 = vadd.s32 %v2420, 16
          %v2955 = vadd.s32 %v2420, 24
          %vm2956 = vcmp.ge.s32.totalorder %v2420, 9
          %vm2957 = vcmp.ge.s32.totalorder %v2953, 9
          %vm2958 = vcmp.ge.s32.totalorder %v2954, 9
          %vm2959 = vcmp.ge.s32.totalorder %v2955, 9
          %v2960 = vlaneseq
          %v2961 = vand.u32 %v2960, 127
          %vm2962 = vcmp.ge.s32.totalorder %v2961, 9
          %vm2963 = vmand %vm2956, %vm2962
          %vm2964 = vmand %vm2957, %vm2962
          %vm2965 = vmand %vm2958, %vm2962
          %vm2966 = vmand %vm2959, %vm2962
          %v2967 = vsel %vm2963, 1, 0
          %v2968 = vsel %vm2964, 1, 0
          %v2969 = vsel %vm2965, 1, 0
          %v2970 = vsel %vm2966, 1, 0
          %vm2971 = vcmp.eq.s32.totalorder %v2967, 1
          %vm2972 = vcmp.eq.s32.totalorder %v2968, 1
          %vm2973 = vcmp.eq.s32.totalorder %v2969, 1
          %vm2974 = vcmp.eq.s32.totalorder %v2970, 1
          %v2975 = vsel %vm2971, %v2937, 1.0
          %v2976 = vsel %vm2972, %v2938, 1.0
          %v2977 = vsel %vm2973, %v2939, 1.0
          %v2978 = vsel %vm2974, %v2940, 1.0
          %v2979 = vsel %vm2971, %v2941, 1.0
          %v2980 = vsel %vm2972, %v2942, 1.0
          %v2981 = vsel %vm2973, %v2943, 1.0
          %v2982 = vsel %vm2974, %v2944, 1.0
          %v2983 = vsel %vm2971, %v2945, 1.0
          %v2984 = vsel %vm2972, %v2946, 1.0
          %v2985 = vsel %vm2973, %v2947, 1.0
          %v2986 = vsel %vm2974, %v2948, 1.0
          %v2987 = vsel %vm2971, %v2949, 1.0
          %v2988 = vsel %vm2972, %v2950, 1.0
          %v2989 = vsel %vm2973, %v2951, 1.0
          %v2990 = vsel %vm2974, %v2952, 1.0
          %2991 = vst [vmem:[%s148] sm:$0xff] %v2975
          %2992 = vst [vmem:[%s148 + $0x8] sm:$0xff] %v2976
          %2993 = vst [vmem:[%s148 + $0x10] sm:$0xff] %v2977
          %2994 = vst [vmem:[%s148 + $0x18] sm:$0xff] %v2978
          %2995 = vst [vmem:[%s148 + $0x20] sm:$0xff] %v2979
          %2996 = vst [vmem:[%s148 + $0x28] sm:$0xff] %v2980
          %2997 = vst [vmem:[%s148 + $0x30] sm:$0xff] %v2981
          %2998 = vst [vmem:[%s148 + $0x38] sm:$0xff] %v2982
          %2999 = vst [vmem:[%s148 + $0x40] sm:$0xff] %v2983
          %3000 = vst [vmem:[%s148 + $0x48] sm:$0xff] %v2984
          %3001 = vst [vmem:[%s148 + $0x50] sm:$0xff] %v2985
          %3002 = vst [vmem:[%s148 + $0x58] sm:$0xff] %v2986
          %3003 = vst [vmem:[%s148 + $0x60] sm:$0xff] %v2987
          %3004 = vst [vmem:[%s148 + $0x68] sm:$0xff] %v2988
          %3005 = vst [vmem:[%s148 + $0x70] sm:$0xff] %v2989
          %3006 = vst [vmem:[%s148 + $0x78] sm:$0xff] %v2990
        $region52: #{tpu_custom_call.1} parent=23 // pred_fallthru
          _
        %p3007 = scmp.eq.s32.totalorder %s23, 6
        // Predicated region
        $region53: #{tpu_custom_call.1} parent=23 // pred_check
          %p3008 = pneg %p3007
        $region54: #{tpu_custom_call.1} parent=23 // pred_check_branch
          %3010 = sbr.rel (%p3008) target = $region56
        $region55: #{tpu_custom_call.1} parent=23 // pred_region
          %v3011 = vld [vmem:[%s130] sm:$0xff]
          %v3012 = vld [vmem:[%s130 + $0x8] sm:$0xff]
          %v3013 = vld [vmem:[%s130 + $0x10] sm:$0xff]
          %v3014 = vld [vmem:[%s130 + $0x18] sm:$0xff]
          %v3015 = vld [vmem:[%s130 + $0x20] sm:$0xff]
          %v3016 = vld [vmem:[%s130 + $0x28] sm:$0xff]
          %v3017 = vld [vmem:[%s130 + $0x30] sm:$0xff]
          %v3018 = vld [vmem:[%s130 + $0x38] sm:$0xff]
          %v3019 = vld [vmem:[%s130 + $0x40] sm:$0xff]
          %v3020 = vld [vmem:[%s130 + $0x48] sm:$0xff]
          %v3021 = vld [vmem:[%s130 + $0x50] sm:$0xff]
          %v3022 = vld [vmem:[%s130 + $0x58] sm:$0xff]
          %v3023 = vld [vmem:[%s130 + $0x60] sm:$0xff]
          %v3024 = vld [vmem:[%s130 + $0x68] sm:$0xff]
          %v3025 = vld [vmem:[%s130 + $0x70] sm:$0xff]
          %v3026 = vld [vmem:[%s130 + $0x78] sm:$0xff]
          %v3027 = vrot.slane %v3011, 1
          %v3028 = vrot.slane %v3015, 1
          %v3029 = vrot.slane %v3019, 1
          %v3030 = vrot.slane %v3023, 1
          %v3031 = vrot.slane %v3012, 1
          %v3032 = vrot.slane %v3016, 1
          %v3033 = vrot.slane %v3020, 1
          %v3034 = vrot.slane %v3024, 1
          %v3035 = vrot.slane %v3013, 1
          %v3036 = vrot.slane %v3017, 1
          %v3037 = vrot.slane %v3021, 1
          %v3038 = vrot.slane %v3025, 1
          %v3039 = vrot.slane %v3014, 1
          %v3040 = vrot.slane %v3018, 1
          %v3041 = vrot.slane %v3022, 1
          %v3042 = vrot.slane %v3026, 1
          %v3043 = vlaneseq
          %v3044 = vshrl.u32 %v3043, 7
          %vm3045 = vcmp.lt.s32.totalorder %v3044, 7
          %v3046 = vsel %vm3045, %v3035, %v3039
          %v3047 = vsel %vm3045, %v3036, %v3040
          %v3048 = vsel %vm3045, %v3037, %v3041
          %v3049 = vsel %vm3045, %v3038, %v3042
          %v3050 = vsel %vm3045, %v3031, %v3035
          %v3051 = vsel %vm3045, %v3032, %v3036
          %v3052 = vsel %vm3045, %v3033, %v3037
          %v3053 = vsel %vm3045, %v3034, %v3038
          %v3054 = vsel %vm3045, %v3027, %v3031
          %v3055 = vsel %vm3045, %v3028, %v3032
          %v3056 = vsel %vm3045, %v3029, %v3033
          %v3057 = vsel %vm3045, %v3030, %v3034
          %v3058 = vsel %vm3045, %v3039, %v3027
          %v3059 = vsel %vm3045, %v3040, %v3028
          %v3060 = vsel %vm3045, %v3041, %v3029
          %v3061 = vsel %vm3045, %v3042, %v3030
          %3062 = vrot.lane.b32.xlu0 %v3050, 9
          %v3063 = vpop.permute.xlu0 %3062
          %3064 = vrot.lane.b32.xlu0 %v3046, 9
          %v3065 = vpop.permute.xlu0 %3064
          %3066 = vrot.lane.b32.xlu0 %v3058, 9
          %v3067 = vpop.permute.xlu0 %3066
          %3068 = vrot.lane.b32.xlu0 %v3054, 9
          %v3069 = vpop.permute.xlu0 %3068
          %3070 = vrot.lane.b32.xlu0 %v3051, 9
          %v3071 = vpop.permute.xlu0 %3070
          %3072 = vrot.lane.b32.xlu0 %v3047, 9
          %v3073 = vpop.permute.xlu0 %3072
          %3074 = vrot.lane.b32.xlu0 %v3059, 9
          %v3075 = vpop.permute.xlu0 %3074
          %3076 = vrot.lane.b32.xlu0 %v3055, 9
          %v3077 = vpop.permute.xlu0 %3076
          %3078 = vrot.lane.b32.xlu0 %v3052, 9
          %v3079 = vpop.permute.xlu0 %3078
          %3080 = vrot.lane.b32.xlu0 %v3048, 9
          %v3081 = vpop.permute.xlu0 %3080
          %3082 = vrot.lane.b32.xlu0 %v3060, 9
          %v3083 = vpop.permute.xlu0 %3082
          %3084 = vrot.lane.b32.xlu0 %v3056, 9
          %v3085 = vpop.permute.xlu0 %3084
          %3086 = vrot.lane.b32.xlu0 %v3053, 9
          %v3087 = vpop.permute.xlu0 %3086
          %3088 = vrot.lane.b32.xlu0 %v3049, 9
          %v3089 = vpop.permute.xlu0 %3088
          %3090 = vrot.lane.b32.xlu0 %v3061, 9
          %v3091 = vpop.permute.xlu0 %3090
          %3092 = vrot.lane.b32.xlu0 %v3057, 9
          %v3093 = vpop.permute.xlu0 %3092
          %v3094 = vsub.f32 %v3011, %v3063
          %v3095 = vsub.f32 %v3012, %v3065
          %v3096 = vsub.f32 %v3013, %v3067
          %v3097 = vsub.f32 %v3014, %v3069
          %v3098 = vsub.f32 %v3015, %v3071
          %v3099 = vsub.f32 %v3016, %v3073
          %v3100 = vsub.f32 %v3017, %v3075
          %v3101 = vsub.f32 %v3018, %v3077
          %v3102 = vsub.f32 %v3019, %v3079
          %v3103 = vsub.f32 %v3020, %v3081
          %v3104 = vsub.f32 %v3021, %v3083
          %v3105 = vsub.f32 %v3022, %v3085
          %v3106 = vsub.f32 %v3023, %v3087
          %v3107 = vsub.f32 %v3024, %v3089
          %v3108 = vsub.f32 %v3025, %v3091
          %v3109 = vsub.f32 %v3026, %v3093
          %v3110 = vmul.f32 %v3094, %v3094
          %v3111 = vmul.f32 %v3095, %v3095
          %v3112 = vmul.f32 %v3096, %v3096
          %v3113 = vmul.f32 %v3097, %v3097
          %v3114 = vmul.f32 %v3098, %v3098
          %v3115 = vmul.f32 %v3099, %v3099
          %v3116 = vmul.f32 %v3100, %v3100
          %v3117 = vmul.f32 %v3101, %v3101
          %v3118 = vmul.f32 %v3102, %v3102
          %v3119 = vmul.f32 %v3103, %v3103
          %v3120 = vmul.f32 %v3104, %v3104
          %v3121 = vmul.f32 %v3105, %v3105
          %v3122 = vmul.f32 %v3106, %v3106
          %v3123 = vmul.f32 %v3107, %v3107
          %v3124 = vmul.f32 %v3108, %v3108
          %v3125 = vmul.f32 %v3109, %v3109
          %v3126 = vadd.f32 %v3110, 0.0
          %v3127 = vadd.f32 %v3111, 0.0
          %v3128 = vadd.f32 %v3112, 0.0
          %v3129 = vadd.f32 %v3113, 0.0
          %v3130 = vadd.f32 %v3114, 0.0
          %v3131 = vadd.f32 %v3115, 0.0
          %v3132 = vadd.f32 %v3116, 0.0
          %v3133 = vadd.f32 %v3117, 0.0
          %v3134 = vadd.f32 %v3118, 0.0
          %v3135 = vadd.f32 %v3119, 0.0
          %v3136 = vadd.f32 %v3120, 0.0
          %v3137 = vadd.f32 %v3121, 0.0
          %v3138 = vadd.f32 %v3122, 0.0
          %v3139 = vadd.f32 %v3123, 0.0
          %v3140 = vadd.f32 %v3124, 0.0
          %v3141 = vadd.f32 %v3125, 0.0
          %s3142 = scalar_lea.vmem %s130, 128 [#allocation2]
          %v3143 = vld [vmem:[%s3142] sm:$0xff]
          %v3144 = vld [vmem:[%s3142 + $0x8] sm:$0xff]
          %v3145 = vld [vmem:[%s3142 + $0x10] sm:$0xff]
          %v3146 = vld [vmem:[%s3142 + $0x18] sm:$0xff]
          %v3147 = vld [vmem:[%s3142 + $0x20] sm:$0xff]
          %v3148 = vld [vmem:[%s3142 + $0x28] sm:$0xff]
          %v3149 = vld [vmem:[%s3142 + $0x30] sm:$0xff]
          %v3150 = vld [vmem:[%s3142 + $0x38] sm:$0xff]
          %v3151 = vld [vmem:[%s3142 + $0x40] sm:$0xff]
          %v3152 = vld [vmem:[%s3142 + $0x48] sm:$0xff]
          %v3153 = vld [vmem:[%s3142 + $0x50] sm:$0xff]
          %v3154 = vld [vmem:[%s3142 + $0x58] sm:$0xff]
          %v3155 = vld [vmem:[%s3142 + $0x60] sm:$0xff]
          %v3156 = vld [vmem:[%s3142 + $0x68] sm:$0xff]
          %v3157 = vld [vmem:[%s3142 + $0x70] sm:$0xff]
          %v3158 = vld [vmem:[%s3142 + $0x78] sm:$0xff]
          %v3159 = vrot.slane %v3143, 1
          %v3160 = vrot.slane %v3147, 1
          %v3161 = vrot.slane %v3151, 1
          %v3162 = vrot.slane %v3155, 1
          %v3163 = vrot.slane %v3144, 1
          %v3164 = vrot.slane %v3148, 1
          %v3165 = vrot.slane %v3152, 1
          %v3166 = vrot.slane %v3156, 1
          %v3167 = vrot.slane %v3145, 1
          %v3168 = vrot.slane %v3149, 1
          %v3169 = vrot.slane %v3153, 1
          %v3170 = vrot.slane %v3157, 1
          %v3171 = vrot.slane %v3146, 1
          %v3172 = vrot.slane %v3150, 1
          %v3173 = vrot.slane %v3154, 1
          %v3174 = vrot.slane %v3158, 1
          %v3175 = vsel %vm3045, %v3167, %v3171
          %v3176 = vsel %vm3045, %v3168, %v3172
          %v3177 = vsel %vm3045, %v3169, %v3173
          %v3178 = vsel %vm3045, %v3170, %v3174
          %v3179 = vsel %vm3045, %v3163, %v3167
          %v3180 = vsel %vm3045, %v3164, %v3168
          %v3181 = vsel %vm3045, %v3165, %v3169
          %v3182 = vsel %vm3045, %v3166, %v3170
          %v3183 = vsel %vm3045, %v3159, %v3163
          %v3184 = vsel %vm3045, %v3160, %v3164
          %v3185 = vsel %vm3045, %v3161, %v3165
          %v3186 = vsel %vm3045, %v3162, %v3166
          %v3187 = vsel %vm3045, %v3171, %v3159
          %v3188 = vsel %vm3045, %v3172, %v3160
          %v3189 = vsel %vm3045, %v3173, %v3161
          %v3190 = vsel %vm3045, %v3174, %v3162
          %3191 = vrot.lane.b32.xlu0 %v3179, 9
          %v3192 = vpop.permute.xlu0 %3191
          %3193 = vrot.lane.b32.xlu0 %v3175, 9
          %v3194 = vpop.permute.xlu0 %3193
          %3195 = vrot.lane.b32.xlu0 %v3187, 9
          %v3196 = vpop.permute.xlu0 %3195
          %3197 = vrot.lane.b32.xlu0 %v3183, 9
          %v3198 = vpop.permute.xlu0 %3197
          %3199 = vrot.lane.b32.xlu0 %v3180, 9
          %v3200 = vpop.permute.xlu0 %3199
          %3201 = vrot.lane.b32.xlu0 %v3176, 9
          %v3202 = vpop.permute.xlu0 %3201
          %3203 = vrot.lane.b32.xlu0 %v3188, 9
          %v3204 = vpop.permute.xlu0 %3203
          %3205 = vrot.lane.b32.xlu0 %v3184, 9
          %v3206 = vpop.permute.xlu0 %3205
          %3207 = vrot.lane.b32.xlu0 %v3181, 9
          %v3208 = vpop.permute.xlu0 %3207
          %3209 = vrot.lane.b32.xlu0 %v3177, 9
          %v3210 = vpop.permute.xlu0 %3209
          %3211 = vrot.lane.b32.xlu0 %v3189, 9
          %v3212 = vpop.permute.xlu0 %3211
          %3213 = vrot.lane.b32.xlu0 %v3185, 9
          %v3214 = vpop.permute.xlu0 %3213
          %3215 = vrot.lane.b32.xlu0 %v3182, 9
          %v3216 = vpop.permute.xlu0 %3215
          %3217 = vrot.lane.b32.xlu0 %v3178, 9
          %v3218 = vpop.permute.xlu0 %3217
          %3219 = vrot.lane.b32.xlu0 %v3190, 9
          %v3220 = vpop.permute.xlu0 %3219
          %3221 = vrot.lane.b32.xlu0 %v3186, 9
          %v3222 = vpop.permute.xlu0 %3221
          %v3223 = vsub.f32 %v3143, %v3192
          %v3224 = vsub.f32 %v3144, %v3194
          %v3225 = vsub.f32 %v3145, %v3196
          %v3226 = vsub.f32 %v3146, %v3198
          %v3227 = vsub.f32 %v3147, %v3200
          %v3228 = vsub.f32 %v3148, %v3202
          %v3229 = vsub.f32 %v3149, %v3204
          %v3230 = vsub.f32 %v3150, %v3206
          %v3231 = vsub.f32 %v3151, %v3208
          %v3232 = vsub.f32 %v3152, %v3210
          %v3233 = vsub.f32 %v3153, %v3212
          %v3234 = vsub.f32 %v3154, %v3214
          %v3235 = vsub.f32 %v3155, %v3216
          %v3236 = vsub.f32 %v3156, %v3218
          %v3237 = vsub.f32 %v3157, %v3220
          %v3238 = vsub.f32 %v3158, %v3222
          %v3239 = vmul.f32 %v3223, %v3223
          %v3240 = vmul.f32 %v3224, %v3224
          %v3241 = vmul.f32 %v3225, %v3225
          %v3242 = vmul.f32 %v3226, %v3226
          %v3243 = vmul.f32 %v3227, %v3227
          %v3244 = vmul.f32 %v3228, %v3228
          %v3245 = vmul.f32 %v3229, %v3229
          %v3246 = vmul.f32 %v3230, %v3230
          %v3247 = vmul.f32 %v3231, %v3231
          %v3248 = vmul.f32 %v3232, %v3232
          %v3249 = vmul.f32 %v3233, %v3233
          %v3250 = vmul.f32 %v3234, %v3234
          %v3251 = vmul.f32 %v3235, %v3235
          %v3252 = vmul.f32 %v3236, %v3236
          %v3253 = vmul.f32 %v3237, %v3237
          %v3254 = vmul.f32 %v3238, %v3238
          %v3255 = vadd.f32 %v3126, %v3239
          %v3256 = vadd.f32 %v3127, %v3240
          %v3257 = vadd.f32 %v3128, %v3241
          %v3258 = vadd.f32 %v3129, %v3242
          %v3259 = vadd.f32 %v3130, %v3243
          %v3260 = vadd.f32 %v3131, %v3244
          %v3261 = vadd.f32 %v3132, %v3245
          %v3262 = vadd.f32 %v3133, %v3246
          %v3263 = vadd.f32 %v3134, %v3247
          %v3264 = vadd.f32 %v3135, %v3248
          %v3265 = vadd.f32 %v3136, %v3249
          %v3266 = vadd.f32 %v3137, %v3250
          %v3267 = vadd.f32 %v3138, %v3251
          %v3268 = vadd.f32 %v3139, %v3252
          %v3269 = vadd.f32 %v3140, %v3253
          %v3270 = vadd.f32 %v3141, %v3254
          %s3271 = scalar_lea.vmem %s130, 256 [#allocation2]
          %v3272 = vld [vmem:[%s3271] sm:$0xff]
          %v3273 = vld [vmem:[%s3271 + $0x8] sm:$0xff]
          %v3274 = vld [vmem:[%s3271 + $0x10] sm:$0xff]
          %v3275 = vld [vmem:[%s3271 + $0x18] sm:$0xff]
          %v3276 = vld [vmem:[%s3271 + $0x20] sm:$0xff]
          %v3277 = vld [vmem:[%s3271 + $0x28] sm:$0xff]
          %v3278 = vld [vmem:[%s3271 + $0x30] sm:$0xff]
          %v3279 = vld [vmem:[%s3271 + $0x38] sm:$0xff]
          %v3280 = vld [vmem:[%s3271 + $0x40] sm:$0xff]
          %v3281 = vld [vmem:[%s3271 + $0x48] sm:$0xff]
          %v3282 = vld [vmem:[%s3271 + $0x50] sm:$0xff]
          %v3283 = vld [vmem:[%s3271 + $0x58] sm:$0xff]
          %v3284 = vld [vmem:[%s3271 + $0x60] sm:$0xff]
          %v3285 = vld [vmem:[%s3271 + $0x68] sm:$0xff]
          %v3286 = vld [vmem:[%s3271 + $0x70] sm:$0xff]
          %v3287 = vld [vmem:[%s3271 + $0x78] sm:$0xff]
          %v3288 = vrot.slane %v3272, 1
          %v3289 = vrot.slane %v3276, 1
          %v3290 = vrot.slane %v3280, 1
          %v3291 = vrot.slane %v3284, 1
          %v3292 = vrot.slane %v3273, 1
          %v3293 = vrot.slane %v3277, 1
          %v3294 = vrot.slane %v3281, 1
          %v3295 = vrot.slane %v3285, 1
          %v3296 = vrot.slane %v3274, 1
          %v3297 = vrot.slane %v3278, 1
          %v3298 = vrot.slane %v3282, 1
          %v3299 = vrot.slane %v3286, 1
          %v3300 = vrot.slane %v3275, 1
          %v3301 = vrot.slane %v3279, 1
          %v3302 = vrot.slane %v3283, 1
          %v3303 = vrot.slane %v3287, 1
          %v3304 = vsel %vm3045, %v3296, %v3300
          %v3305 = vsel %vm3045, %v3297, %v3301
          %v3306 = vsel %vm3045, %v3298, %v3302
          %v3307 = vsel %vm3045, %v3299, %v3303
          %v3308 = vsel %vm3045, %v3292, %v3296
          %v3309 = vsel %vm3045, %v3293, %v3297
          %v3310 = vsel %vm3045, %v3294, %v3298
          %v3311 = vsel %vm3045, %v3295, %v3299
          %v3312 = vsel %vm3045, %v3288, %v3292
          %v3313 = vsel %vm3045, %v3289, %v3293
          %v3314 = vsel %vm3045, %v3290, %v3294
          %v3315 = vsel %vm3045, %v3291, %v3295
          %v3316 = vsel %vm3045, %v3300, %v3288
          %v3317 = vsel %vm3045, %v3301, %v3289
          %v3318 = vsel %vm3045, %v3302, %v3290
          %v3319 = vsel %vm3045, %v3303, %v3291
          %3320 = vrot.lane.b32.xlu0 %v3308, 9
          %v3321 = vpop.permute.xlu0 %3320
          %3322 = vrot.lane.b32.xlu0 %v3304, 9
          %v3323 = vpop.permute.xlu0 %3322
          %3324 = vrot.lane.b32.xlu0 %v3316, 9
          %v3325 = vpop.permute.xlu0 %3324
          %3326 = vrot.lane.b32.xlu0 %v3312, 9
          %v3327 = vpop.permute.xlu0 %3326
          %3328 = vrot.lane.b32.xlu0 %v3309, 9
          %v3329 = vpop.permute.xlu0 %3328
          %3330 = vrot.lane.b32.xlu0 %v3305, 9
          %v3331 = vpop.permute.xlu0 %3330
          %3332 = vrot.lane.b32.xlu0 %v3317, 9
          %v3333 = vpop.permute.xlu0 %3332
          %3334 = vrot.lane.b32.xlu0 %v3313, 9
          %v3335 = vpop.permute.xlu0 %3334
          %3336 = vrot.lane.b32.xlu0 %v3310, 9
          %v3337 = vpop.permute.xlu0 %3336
          %3338 = vrot.lane.b32.xlu0 %v3306, 9
          %v3339 = vpop.permute.xlu0 %3338
          %3340 = vrot.lane.b32.xlu0 %v3318, 9
          %v3341 = vpop.permute.xlu0 %3340
          %3342 = vrot.lane.b32.xlu0 %v3314, 9
          %v3343 = vpop.permute.xlu0 %3342
          %3344 = vrot.lane.b32.xlu0 %v3311, 9
          %v3345 = vpop.permute.xlu0 %3344
          %3346 = vrot.lane.b32.xlu0 %v3307, 9
          %v3347 = vpop.permute.xlu0 %3346
          %3348 = vrot.lane.b32.xlu0 %v3319, 9
          %v3349 = vpop.permute.xlu0 %3348
          %3350 = vrot.lane.b32.xlu0 %v3315, 9
          %v3351 = vpop.permute.xlu0 %3350
          %v3352 = vsub.f32 %v3272, %v3321
          %v3353 = vsub.f32 %v3273, %v3323
          %v3354 = vsub.f32 %v3274, %v3325
          %v3355 = vsub.f32 %v3275, %v3327
          %v3356 = vsub.f32 %v3276, %v3329
          %v3357 = vsub.f32 %v3277, %v3331
          %v3358 = vsub.f32 %v3278, %v3333
          %v3359 = vsub.f32 %v3279, %v3335
          %v3360 = vsub.f32 %v3280, %v3337
          %v3361 = vsub.f32 %v3281, %v3339
          %v3362 = vsub.f32 %v3282, %v3341
          %v3363 = vsub.f32 %v3283, %v3343
          %v3364 = vsub.f32 %v3284, %v3345
          %v3365 = vsub.f32 %v3285, %v3347
          %v3366 = vsub.f32 %v3286, %v3349
          %v3367 = vsub.f32 %v3287, %v3351
          %v3368 = vmul.f32 %v3352, %v3352
          %v3369 = vmul.f32 %v3353, %v3353
          %v3370 = vmul.f32 %v3354, %v3354
          %v3371 = vmul.f32 %v3355, %v3355
          %v3372 = vmul.f32 %v3356, %v3356
          %v3373 = vmul.f32 %v3357, %v3357
          %v3374 = vmul.f32 %v3358, %v3358
          %v3375 = vmul.f32 %v3359, %v3359
          %v3376 = vmul.f32 %v3360, %v3360
          %v3377 = vmul.f32 %v3361, %v3361
          %v3378 = vmul.f32 %v3362, %v3362
          %v3379 = vmul.f32 %v3363, %v3363
          %v3380 = vmul.f32 %v3364, %v3364
          %v3381 = vmul.f32 %v3365, %v3365
          %v3382 = vmul.f32 %v3366, %v3366
          %v3383 = vmul.f32 %v3367, %v3367
          %v3384 = vadd.f32 %v3255, %v3368
          %v3385 = vadd.f32 %v3256, %v3369
          %v3386 = vadd.f32 %v3257, %v3370
          %v3387 = vadd.f32 %v3258, %v3371
          %v3388 = vadd.f32 %v3259, %v3372
          %v3389 = vadd.f32 %v3260, %v3373
          %v3390 = vadd.f32 %v3261, %v3374
          %v3391 = vadd.f32 %v3262, %v3375
          %v3392 = vadd.f32 %v3263, %v3376
          %v3393 = vadd.f32 %v3264, %v3377
          %v3394 = vadd.f32 %v3265, %v3378
          %v3395 = vadd.f32 %v3266, %v3379
          %v3396 = vadd.f32 %v3267, %v3380
          %v3397 = vadd.f32 %v3268, %v3381
          %v3398 = vadd.f32 %v3269, %v3382
          %v3399 = vadd.f32 %v3270, %v3383
          %s3400 = scalar_lea.vmem %s130, 384 [#allocation2]
          %v3401 = vld [vmem:[%s3400] sm:$0xff]
          %v3402 = vld [vmem:[%s3400 + $0x8] sm:$0xff]
          %v3403 = vld [vmem:[%s3400 + $0x10] sm:$0xff]
          %v3404 = vld [vmem:[%s3400 + $0x18] sm:$0xff]
          %v3405 = vld [vmem:[%s3400 + $0x20] sm:$0xff]
          %v3406 = vld [vmem:[%s3400 + $0x28] sm:$0xff]
          %v3407 = vld [vmem:[%s3400 + $0x30] sm:$0xff]
          %v3408 = vld [vmem:[%s3400 + $0x38] sm:$0xff]
          %v3409 = vld [vmem:[%s3400 + $0x40] sm:$0xff]
          %v3410 = vld [vmem:[%s3400 + $0x48] sm:$0xff]
          %v3411 = vld [vmem:[%s3400 + $0x50] sm:$0xff]
          %v3412 = vld [vmem:[%s3400 + $0x58] sm:$0xff]
          %v3413 = vld [vmem:[%s3400 + $0x60] sm:$0xff]
          %v3414 = vld [vmem:[%s3400 + $0x68] sm:$0xff]
          %v3415 = vld [vmem:[%s3400 + $0x70] sm:$0xff]
          %v3416 = vld [vmem:[%s3400 + $0x78] sm:$0xff]
          %v3417 = vrot.slane %v3401, 1
          %v3418 = vrot.slane %v3405, 1
          %v3419 = vrot.slane %v3409, 1
          %v3420 = vrot.slane %v3413, 1
          %v3421 = vrot.slane %v3402, 1
          %v3422 = vrot.slane %v3406, 1
          %v3423 = vrot.slane %v3410, 1
          %v3424 = vrot.slane %v3414, 1
          %v3425 = vrot.slane %v3403, 1
          %v3426 = vrot.slane %v3407, 1
          %v3427 = vrot.slane %v3411, 1
          %v3428 = vrot.slane %v3415, 1
          %v3429 = vrot.slane %v3404, 1
          %v3430 = vrot.slane %v3408, 1
          %v3431 = vrot.slane %v3412, 1
          %v3432 = vrot.slane %v3416, 1
          %v3433 = vsel %vm3045, %v3425, %v3429
          %v3434 = vsel %vm3045, %v3426, %v3430
          %v3435 = vsel %vm3045, %v3427, %v3431
          %v3436 = vsel %vm3045, %v3428, %v3432
          %v3437 = vsel %vm3045, %v3421, %v3425
          %v3438 = vsel %vm3045, %v3422, %v3426
          %v3439 = vsel %vm3045, %v3423, %v3427
          %v3440 = vsel %vm3045, %v3424, %v3428
          %v3441 = vsel %vm3045, %v3417, %v3421
          %v3442 = vsel %vm3045, %v3418, %v3422
          %v3443 = vsel %vm3045, %v3419, %v3423
          %v3444 = vsel %vm3045, %v3420, %v3424
          %v3445 = vsel %vm3045, %v3429, %v3417
          %v3446 = vsel %vm3045, %v3430, %v3418
          %v3447 = vsel %vm3045, %v3431, %v3419
          %v3448 = vsel %vm3045, %v3432, %v3420
          %3449 = vrot.lane.b32.xlu0 %v3437, 9
          %v3450 = vpop.permute.xlu0 %3449
          %3451 = vrot.lane.b32.xlu0 %v3433, 9
          %v3452 = vpop.permute.xlu0 %3451
          %3453 = vrot.lane.b32.xlu0 %v3445, 9
          %v3454 = vpop.permute.xlu0 %3453
          %3455 = vrot.lane.b32.xlu0 %v3441, 9
          %v3456 = vpop.permute.xlu0 %3455
          %3457 = vrot.lane.b32.xlu0 %v3438, 9
          %v3458 = vpop.permute.xlu0 %3457
          %3459 = vrot.lane.b32.xlu0 %v3434, 9
          %v3460 = vpop.permute.xlu0 %3459
          %3461 = vrot.lane.b32.xlu0 %v3446, 9
          %v3462 = vpop.permute.xlu0 %3461
          %3463 = vrot.lane.b32.xlu0 %v3442, 9
          %v3464 = vpop.permute.xlu0 %3463
          %3465 = vrot.lane.b32.xlu0 %v3439, 9
          %v3466 = vpop.permute.xlu0 %3465
          %3467 = vrot.lane.b32.xlu0 %v3435, 9
          %v3468 = vpop.permute.xlu0 %3467
          %3469 = vrot.lane.b32.xlu0 %v3447, 9
          %v3470 = vpop.permute.xlu0 %3469
          %3471 = vrot.lane.b32.xlu0 %v3443, 9
          %v3472 = vpop.permute.xlu0 %3471
          %3473 = vrot.lane.b32.xlu0 %v3440, 9
          %v3474 = vpop.permute.xlu0 %3473
          %3475 = vrot.lane.b32.xlu0 %v3436, 9
          %v3476 = vpop.permute.xlu0 %3475
          %3477 = vrot.lane.b32.xlu0 %v3448, 9
          %v3478 = vpop.permute.xlu0 %3477
          %3479 = vrot.lane.b32.xlu0 %v3444, 9
          %v3480 = vpop.permute.xlu0 %3479
          %v3481 = vsub.f32 %v3401, %v3450
          %v3482 = vsub.f32 %v3402, %v3452
          %v3483 = vsub.f32 %v3403, %v3454
          %v3484 = vsub.f32 %v3404, %v3456
          %v3485 = vsub.f32 %v3405, %v3458
          %v3486 = vsub.f32 %v3406, %v3460
          %v3487 = vsub.f32 %v3407, %v3462
          %v3488 = vsub.f32 %v3408, %v3464
          %v3489 = vsub.f32 %v3409, %v3466
          %v3490 = vsub.f32 %v3410, %v3468
          %v3491 = vsub.f32 %v3411, %v3470
          %v3492 = vsub.f32 %v3412, %v3472
          %v3493 = vsub.f32 %v3413, %v3474
          %v3494 = vsub.f32 %v3414, %v3476
          %v3495 = vsub.f32 %v3415, %v3478
          %v3496 = vsub.f32 %v3416, %v3480
          %v3497 = vmul.f32 %v3481, %v3481
          %v3498 = vmul.f32 %v3482, %v3482
          %v3499 = vmul.f32 %v3483, %v3483
          %v3500 = vmul.f32 %v3484, %v3484
          %v3501 = vmul.f32 %v3485, %v3485
          %v3502 = vmul.f32 %v3486, %v3486
          %v3503 = vmul.f32 %v3487, %v3487
          %v3504 = vmul.f32 %v3488, %v3488
          %v3505 = vmul.f32 %v3489, %v3489
          %v3506 = vmul.f32 %v3490, %v3490
          %v3507 = vmul.f32 %v3491, %v3491
          %v3508 = vmul.f32 %v3492, %v3492
          %v3509 = vmul.f32 %v3493, %v3493
          %v3510 = vmul.f32 %v3494, %v3494
          %v3511 = vmul.f32 %v3495, %v3495
          %v3512 = vmul.f32 %v3496, %v3496
          %v3513 = vadd.f32 %v3384, %v3497
          %v3514 = vadd.f32 %v3385, %v3498
          %v3515 = vadd.f32 %v3386, %v3499
          %v3516 = vadd.f32 %v3387, %v3500
          %v3517 = vadd.f32 %v3388, %v3501
          %v3518 = vadd.f32 %v3389, %v3502
          %v3519 = vadd.f32 %v3390, %v3503
          %v3520 = vadd.f32 %v3391, %v3504
          %v3521 = vadd.f32 %v3392, %v3505
          %v3522 = vadd.f32 %v3393, %v3506
          %v3523 = vadd.f32 %v3394, %v3507
          %v3524 = vadd.f32 %v3395, %v3508
          %v3525 = vadd.f32 %v3396, %v3509
          %v3526 = vadd.f32 %v3397, %v3510
          %v3527 = vadd.f32 %v3398, %v3511
          %v3528 = vadd.f32 %v3399, %v3512
          %v3529 = vmul.f32 %v3513, 25.0
          %v3530 = vmul.f32 %v3514, 25.0
          %v3531 = vmul.f32 %v3515, 25.0
          %v3532 = vmul.f32 %v3516, 25.0
          %v3533 = vmul.f32 %v3517, 25.0
          %v3534 = vmul.f32 %v3518, 25.0
          %v3535 = vmul.f32 %v3519, 25.0
          %v3536 = vmul.f32 %v3520, 25.0
          %v3537 = vmul.f32 %v3521, 25.0
          %v3538 = vmul.f32 %v3522, 25.0
          %v3539 = vmul.f32 %v3523, 25.0
          %v3540 = vmul.f32 %v3524, 25.0
          %v3541 = vmul.f32 %v3525, 25.0
          %v3542 = vmul.f32 %v3526, 25.0
          %v3543 = vmul.f32 %v3527, 25.0
          %v3544 = vmul.f32 %v3528, 25.0
          %v3545 = vtanh.pop %v3529
          %v3546 = vtanh.pop %v3530
          %v3547 = vtanh.pop %v3531
          %v3548 = vtanh.pop %v3532
          %v3549 = vtanh.pop %v3533
          %v3550 = vtanh.pop %v3534
          %v3551 = vtanh.pop %v3535
          %v3552 = vtanh.pop %v3536
          %v3553 = vtanh.pop %v3537
          %v3554 = vtanh.pop %v3538
          %v3555 = vtanh.pop %v3539
          %v3556 = vtanh.pop %v3540
          %v3557 = vtanh.pop %v3541
          %v3558 = vtanh.pop %v3542
          %v3559 = vtanh.pop %v3543
          %v3560 = vtanh.pop %v3544
          %v3561 = vsub.f32 1.0, %v3545
          %v3562 = vsub.f32 1.0, %v3546
          %v3563 = vsub.f32 1.0, %v3547
          %v3564 = vsub.f32 1.0, %v3548
          %v3565 = vsub.f32 1.0, %v3549
          %v3566 = vsub.f32 1.0, %v3550
          %v3567 = vsub.f32 1.0, %v3551
          %v3568 = vsub.f32 1.0, %v3552
          %v3569 = vsub.f32 1.0, %v3553
          %v3570 = vsub.f32 1.0, %v3554
          %v3571 = vsub.f32 1.0, %v3555
          %v3572 = vsub.f32 1.0, %v3556
          %v3573 = vsub.f32 1.0, %v3557
          %v3574 = vsub.f32 1.0, %v3558
          %v3575 = vsub.f32 1.0, %v3559
          %v3576 = vsub.f32 1.0, %v3560
          %v3577 = vadd.s32 %v3044, 8
          %v3578 = vadd.s32 %v3044, 16
          %v3579 = vadd.s32 %v3044, 24
          %vm3580 = vcmp.lt.s32.totalorder %v3044, 23
          %vm3581 = vcmp.lt.s32.totalorder %v3577, 23
          %vm3582 = vcmp.lt.s32.totalorder %v3578, 23
          %vm3583 = vcmp.lt.s32.totalorder %v3579, 23
          %v3584 = vlaneseq
          %v3585 = vand.u32 %v3584, 127
          %vm3586 = vcmp.ge.s32.totalorder %v3585, 9
          %vm3587 = vmand %vm3580, %vm3586
          %vm3588 = vmand %vm3581, %vm3586
          %vm3589 = vmand %vm3582, %vm3586
          %vm3590 = vmand %vm3583, %vm3586
          %v3591 = vsel %vm3587, 1, 0
          %v3592 = vsel %vm3588, 1, 0
          %v3593 = vsel %vm3589, 1, 0
          %v3594 = vsel %vm3590, 1, 0
          %vm3595 = vcmp.eq.s32.totalorder %v3591, 1
          %vm3596 = vcmp.eq.s32.totalorder %v3592, 1
          %vm3597 = vcmp.eq.s32.totalorder %v3593, 1
          %vm3598 = vcmp.eq.s32.totalorder %v3594, 1
          %v3599 = vsel %vm3595, %v3561, 1.0
          %v3600 = vsel %vm3596, %v3562, 1.0
          %v3601 = vsel %vm3597, %v3563, 1.0
          %v3602 = vsel %vm3598, %v3564, 1.0
          %v3603 = vsel %vm3595, %v3565, 1.0
          %v3604 = vsel %vm3596, %v3566, 1.0
          %v3605 = vsel %vm3597, %v3567, 1.0
          %v3606 = vsel %vm3598, %v3568, 1.0
          %v3607 = vsel %vm3595, %v3569, 1.0
          %v3608 = vsel %vm3596, %v3570, 1.0
          %v3609 = vsel %vm3597, %v3571, 1.0
          %v3610 = vsel %vm3598, %v3572, 1.0
          %v3611 = vsel %vm3595, %v3573, 1.0
          %v3612 = vsel %vm3596, %v3574, 1.0
          %v3613 = vsel %vm3597, %v3575, 1.0
          %v3614 = vsel %vm3598, %v3576, 1.0
          %3615 = vst [vmem:[%s148] sm:$0xff] %v3599
          %3616 = vst [vmem:[%s148 + $0x8] sm:$0xff] %v3600
          %3617 = vst [vmem:[%s148 + $0x10] sm:$0xff] %v3601
          %3618 = vst [vmem:[%s148 + $0x18] sm:$0xff] %v3602
          %3619 = vst [vmem:[%s148 + $0x20] sm:$0xff] %v3603
          %3620 = vst [vmem:[%s148 + $0x28] sm:$0xff] %v3604
          %3621 = vst [vmem:[%s148 + $0x30] sm:$0xff] %v3605
          %3622 = vst [vmem:[%s148 + $0x38] sm:$0xff] %v3606
          %3623 = vst [vmem:[%s148 + $0x40] sm:$0xff] %v3607
          %3624 = vst [vmem:[%s148 + $0x48] sm:$0xff] %v3608
          %3625 = vst [vmem:[%s148 + $0x50] sm:$0xff] %v3609
          %3626 = vst [vmem:[%s148 + $0x58] sm:$0xff] %v3610
          %3627 = vst [vmem:[%s148 + $0x60] sm:$0xff] %v3611
          %3628 = vst [vmem:[%s148 + $0x68] sm:$0xff] %v3612
          %3629 = vst [vmem:[%s148 + $0x70] sm:$0xff] %v3613
          %3630 = vst [vmem:[%s148 + $0x78] sm:$0xff] %v3614
        $region56: #{tpu_custom_call.1} parent=23 // pred_fallthru
          _
        %p3631 = scmp.eq.s32.totalorder %s23, 7
        // Predicated region
        $region57: #{tpu_custom_call.1} parent=23 // pred_check
          %p3632 = pneg %p3631
        $region58: #{tpu_custom_call.1} parent=23 // pred_check_branch
          %3634 = sbr.rel (%p3632) target = $region60
        $region59: #{tpu_custom_call.1} parent=23 // pred_region
          %v3635 = vld [vmem:[%s130] sm:$0xff]
          %v3636 = vld [vmem:[%s130 + $0x8] sm:$0xff]
          %v3637 = vld [vmem:[%s130 + $0x10] sm:$0xff]
          %v3638 = vld [vmem:[%s130 + $0x18] sm:$0xff]
          %v3639 = vld [vmem:[%s130 + $0x20] sm:$0xff]
          %v3640 = vld [vmem:[%s130 + $0x28] sm:$0xff]
          %v3641 = vld [vmem:[%s130 + $0x30] sm:$0xff]
          %v3642 = vld [vmem:[%s130 + $0x38] sm:$0xff]
          %v3643 = vld [vmem:[%s130 + $0x40] sm:$0xff]
          %v3644 = vld [vmem:[%s130 + $0x48] sm:$0xff]
          %v3645 = vld [vmem:[%s130 + $0x50] sm:$0xff]
          %v3646 = vld [vmem:[%s130 + $0x58] sm:$0xff]
          %v3647 = vld [vmem:[%s130 + $0x60] sm:$0xff]
          %v3648 = vld [vmem:[%s130 + $0x68] sm:$0xff]
          %v3649 = vld [vmem:[%s130 + $0x70] sm:$0xff]
          %v3650 = vld [vmem:[%s130 + $0x78] sm:$0xff]
          %v3651 = vrot.slane %v3635, 7
          %v3652 = vrot.slane %v3639, 7
          %v3653 = vrot.slane %v3643, 7
          %v3654 = vrot.slane %v3647, 7
          %v3655 = vrot.slane %v3636, 7
          %v3656 = vrot.slane %v3640, 7
          %v3657 = vrot.slane %v3644, 7
          %v3658 = vrot.slane %v3648, 7
          %v3659 = vrot.slane %v3637, 7
          %v3660 = vrot.slane %v3641, 7
          %v3661 = vrot.slane %v3645, 7
          %v3662 = vrot.slane %v3649, 7
          %v3663 = vrot.slane %v3638, 7
          %v3664 = vrot.slane %v3642, 7
          %v3665 = vrot.slane %v3646, 7
          %v3666 = vrot.slane %v3650, 7
          %v3667 = vlaneseq
          %v3668 = vshrl.u32 %v3667, 7
          %vm3669 = vcmp.lt.s32.totalorder %v3668, 1
          %v3670 = vsel %vm3669, %v3659, %v3663
          %v3671 = vsel %vm3669, %v3660, %v3664
          %v3672 = vsel %vm3669, %v3661, %v3665
          %v3673 = vsel %vm3669, %v3662, %v3666
          %v3674 = vsel %vm3669, %v3655, %v3659
          %v3675 = vsel %vm3669, %v3656, %v3660
          %v3676 = vsel %vm3669, %v3657, %v3661
          %v3677 = vsel %vm3669, %v3658, %v3662
          %v3678 = vsel %vm3669, %v3651, %v3655
          %v3679 = vsel %vm3669, %v3652, %v3656
          %v3680 = vsel %vm3669, %v3653, %v3657
          %v3681 = vsel %vm3669, %v3654, %v3658
          %v3682 = vsel %vm3669, %v3663, %v3651
          %v3683 = vsel %vm3669, %v3664, %v3652
          %v3684 = vsel %vm3669, %v3665, %v3653
          %v3685 = vsel %vm3669, %v3666, %v3654
          %3686 = vrot.lane.b32.xlu0 %v3670, 4
          %v3687 = vpop.permute.xlu0 %3686
          %3688 = vrot.lane.b32.xlu0 %v3682, 4
          %v3689 = vpop.permute.xlu0 %3688
          %3690 = vrot.lane.b32.xlu0 %v3678, 4
          %v3691 = vpop.permute.xlu0 %3690
          %3692 = vrot.lane.b32.xlu0 %v3674, 4
          %v3693 = vpop.permute.xlu0 %3692
          %3694 = vrot.lane.b32.xlu0 %v3671, 4
          %v3695 = vpop.permute.xlu0 %3694
          %3696 = vrot.lane.b32.xlu0 %v3683, 4
          %v3697 = vpop.permute.xlu0 %3696
          %3698 = vrot.lane.b32.xlu0 %v3679, 4
          %v3699 = vpop.permute.xlu0 %3698
          %3700 = vrot.lane.b32.xlu0 %v3675, 4
          %v3701 = vpop.permute.xlu0 %3700
          %3702 = vrot.lane.b32.xlu0 %v3672, 4
          %v3703 = vpop.permute.xlu0 %3702
          %3704 = vrot.lane.b32.xlu0 %v3684, 4
          %v3705 = vpop.permute.xlu0 %3704
          %3706 = vrot.lane.b32.xlu0 %v3680, 4
          %v3707 = vpop.permute.xlu0 %3706
          %3708 = vrot.lane.b32.xlu0 %v3676, 4
          %v3709 = vpop.permute.xlu0 %3708
          %3710 = vrot.lane.b32.xlu0 %v3673, 4
          %v3711 = vpop.permute.xlu0 %3710
          %3712 = vrot.lane.b32.xlu0 %v3685, 4
          %v3713 = vpop.permute.xlu0 %3712
          %3714 = vrot.lane.b32.xlu0 %v3681, 4
          %v3715 = vpop.permute.xlu0 %3714
          %3716 = vrot.lane.b32.xlu0 %v3677, 4
          %v3717 = vpop.permute.xlu0 %3716
          %v3718 = vsub.f32 %v3635, %v3687
          %v3719 = vsub.f32 %v3636, %v3689
          %v3720 = vsub.f32 %v3637, %v3691
          %v3721 = vsub.f32 %v3638, %v3693
          %v3722 = vsub.f32 %v3639, %v3695
          %v3723 = vsub.f32 %v3640, %v3697
          %v3724 = vsub.f32 %v3641, %v3699
          %v3725 = vsub.f32 %v3642, %v3701
          %v3726 = vsub.f32 %v3643, %v3703
          %v3727 = vsub.f32 %v3644, %v3705
          %v3728 = vsub.f32 %v3645, %v3707
          %v3729 = vsub.f32 %v3646, %v3709
          %v3730 = vsub.f32 %v3647, %v3711
          %v3731 = vsub.f32 %v3648, %v3713
          %v3732 = vsub.f32 %v3649, %v3715
          %v3733 = vsub.f32 %v3650, %v3717
          %v3734 = vmul.f32 %v3718, %v3718
          %v3735 = vmul.f32 %v3719, %v3719
          %v3736 = vmul.f32 %v3720, %v3720
          %v3737 = vmul.f32 %v3721, %v3721
          %v3738 = vmul.f32 %v3722, %v3722
          %v3739 = vmul.f32 %v3723, %v3723
          %v3740 = vmul.f32 %v3724, %v3724
          %v3741 = vmul.f32 %v3725, %v3725
          %v3742 = vmul.f32 %v3726, %v3726
          %v3743 = vmul.f32 %v3727, %v3727
          %v3744 = vmul.f32 %v3728, %v3728
          %v3745 = vmul.f32 %v3729, %v3729
          %v3746 = vmul.f32 %v3730, %v3730
          %v3747 = vmul.f32 %v3731, %v3731
          %v3748 = vmul.f32 %v3732, %v3732
          %v3749 = vmul.f32 %v3733, %v3733
          %v3750 = vadd.f32 %v3734, 0.0
          %v3751 = vadd.f32 %v3735, 0.0
          %v3752 = vadd.f32 %v3736, 0.0
          %v3753 = vadd.f32 %v3737, 0.0
          %v3754 = vadd.f32 %v3738, 0.0
          %v3755 = vadd.f32 %v3739, 0.0
          %v3756 = vadd.f32 %v3740, 0.0
          %v3757 = vadd.f32 %v3741, 0.0
          %v3758 = vadd.f32 %v3742, 0.0
          %v3759 = vadd.f32 %v3743, 0.0
          %v3760 = vadd.f32 %v3744, 0.0
          %v3761 = vadd.f32 %v3745, 0.0
          %v3762 = vadd.f32 %v3746, 0.0
          %v3763 = vadd.f32 %v3747, 0.0
          %v3764 = vadd.f32 %v3748, 0.0
          %v3765 = vadd.f32 %v3749, 0.0
          %s3766 = scalar_lea.vmem %s130, 128 [#allocation2]
          %v3767 = vld [vmem:[%s3766] sm:$0xff]
          %v3768 = vld [vmem:[%s3766 + $0x8] sm:$0xff]
          %v3769 = vld [vmem:[%s3766 + $0x10] sm:$0xff]
          %v3770 = vld [vmem:[%s3766 + $0x18] sm:$0xff]
          %v3771 = vld [vmem:[%s3766 + $0x20] sm:$0xff]
          %v3772 = vld [vmem:[%s3766 + $0x28] sm:$0xff]
          %v3773 = vld [vmem:[%s3766 + $0x30] sm:$0xff]
          %v3774 = vld [vmem:[%s3766 + $0x38] sm:$0xff]
          %v3775 = vld [vmem:[%s3766 + $0x40] sm:$0xff]
          %v3776 = vld [vmem:[%s3766 + $0x48] sm:$0xff]
          %v3777 = vld [vmem:[%s3766 + $0x50] sm:$0xff]
          %v3778 = vld [vmem:[%s3766 + $0x58] sm:$0xff]
          %v3779 = vld [vmem:[%s3766 + $0x60] sm:$0xff]
          %v3780 = vld [vmem:[%s3766 + $0x68] sm:$0xff]
          %v3781 = vld [vmem:[%s3766 + $0x70] sm:$0xff]
          %v3782 = vld [vmem:[%s3766 + $0x78] sm:$0xff]
          %v3783 = vrot.slane %v3767, 7
          %v3784 = vrot.slane %v3771, 7
          %v3785 = vrot.slane %v3775, 7
          %v3786 = vrot.slane %v3779, 7
          %v3787 = vrot.slane %v3768, 7
          %v3788 = vrot.slane %v3772, 7
          %v3789 = vrot.slane %v3776, 7
          %v3790 = vrot.slane %v3780, 7
          %v3791 = vrot.slane %v3769, 7
          %v3792 = vrot.slane %v3773, 7
          %v3793 = vrot.slane %v3777, 7
          %v3794 = vrot.slane %v3781, 7
          %v3795 = vrot.slane %v3770, 7
          %v3796 = vrot.slane %v3774, 7
          %v3797 = vrot.slane %v3778, 7
          %v3798 = vrot.slane %v3782, 7
          %v3799 = vsel %vm3669, %v3791, %v3795
          %v3800 = vsel %vm3669, %v3792, %v3796
          %v3801 = vsel %vm3669, %v3793, %v3797
          %v3802 = vsel %vm3669, %v3794, %v3798
          %v3803 = vsel %vm3669, %v3787, %v3791
          %v3804 = vsel %vm3669, %v3788, %v3792
          %v3805 = vsel %vm3669, %v3789, %v3793
          %v3806 = vsel %vm3669, %v3790, %v3794
          %v3807 = vsel %vm3669, %v3783, %v3787
          %v3808 = vsel %vm3669, %v3784, %v3788
          %v3809 = vsel %vm3669, %v3785, %v3789
          %v3810 = vsel %vm3669, %v3786, %v3790
          %v3811 = vsel %vm3669, %v3795, %v3783
          %v3812 = vsel %vm3669, %v3796, %v3784
          %v3813 = vsel %vm3669, %v3797, %v3785
          %v3814 = vsel %vm3669, %v3798, %v3786
          %3815 = vrot.lane.b32.xlu0 %v3799, 4
          %v3816 = vpop.permute.xlu0 %3815
          %3817 = vrot.lane.b32.xlu0 %v3811, 4
          %v3818 = vpop.permute.xlu0 %3817
          %3819 = vrot.lane.b32.xlu0 %v3807, 4
          %v3820 = vpop.permute.xlu0 %3819
          %3821 = vrot.lane.b32.xlu0 %v3803, 4
          %v3822 = vpop.permute.xlu0 %3821
          %3823 = vrot.lane.b32.xlu0 %v3800, 4
          %v3824 = vpop.permute.xlu0 %3823
          %3825 = vrot.lane.b32.xlu0 %v3812, 4
          %v3826 = vpop.permute.xlu0 %3825
          %3827 = vrot.lane.b32.xlu0 %v3808, 4
          %v3828 = vpop.permute.xlu0 %3827
          %3829 = vrot.lane.b32.xlu0 %v3804, 4
          %v3830 = vpop.permute.xlu0 %3829
          %3831 = vrot.lane.b32.xlu0 %v3801, 4
          %v3832 = vpop.permute.xlu0 %3831
          %3833 = vrot.lane.b32.xlu0 %v3813, 4
          %v3834 = vpop.permute.xlu0 %3833
          %3835 = vrot.lane.b32.xlu0 %v3809, 4
          %v3836 = vpop.permute.xlu0 %3835
          %3837 = vrot.lane.b32.xlu0 %v3805, 4
          %v3838 = vpop.permute.xlu0 %3837
          %3839 = vrot.lane.b32.xlu0 %v3802, 4
          %v3840 = vpop.permute.xlu0 %3839
          %3841 = vrot.lane.b32.xlu0 %v3814, 4
          %v3842 = vpop.permute.xlu0 %3841
          %3843 = vrot.lane.b32.xlu0 %v3810, 4
          %v3844 = vpop.permute.xlu0 %3843
          %3845 = vrot.lane.b32.xlu0 %v3806, 4
          %v3846 = vpop.permute.xlu0 %3845
          %v3847 = vsub.f32 %v3767, %v3816
          %v3848 = vsub.f32 %v3768, %v3818
          %v3849 = vsub.f32 %v3769, %v3820
          %v3850 = vsub.f32 %v3770, %v3822
          %v3851 = vsub.f32 %v3771, %v3824
          %v3852 = vsub.f32 %v3772, %v3826
          %v3853 = vsub.f32 %v3773, %v3828
          %v3854 = vsub.f32 %v3774, %v3830
          %v3855 = vsub.f32 %v3775, %v3832
          %v3856 = vsub.f32 %v3776, %v3834
          %v3857 = vsub.f32 %v3777, %v3836
          %v3858 = vsub.f32 %v3778, %v3838
          %v3859 = vsub.f32 %v3779, %v3840
          %v3860 = vsub.f32 %v3780, %v3842
          %v3861 = vsub.f32 %v3781, %v3844
          %v3862 = vsub.f32 %v3782, %v3846
          %v3863 = vmul.f32 %v3847, %v3847
          %v3864 = vmul.f32 %v3848, %v3848
          %v3865 = vmul.f32 %v3849, %v3849
          %v3866 = vmul.f32 %v3850, %v3850
          %v3867 = vmul.f32 %v3851, %v3851
          %v3868 = vmul.f32 %v3852, %v3852
          %v3869 = vmul.f32 %v3853, %v3853
          %v3870 = vmul.f32 %v3854, %v3854
          %v3871 = vmul.f32 %v3855, %v3855
          %v3872 = vmul.f32 %v3856, %v3856
          %v3873 = vmul.f32 %v3857, %v3857
          %v3874 = vmul.f32 %v3858, %v3858
          %v3875 = vmul.f32 %v3859, %v3859
          %v3876 = vmul.f32 %v3860, %v3860
          %v3877 = vmul.f32 %v3861, %v3861
          %v3878 = vmul.f32 %v3862, %v3862
          %v3879 = vadd.f32 %v3750, %v3863
          %v3880 = vadd.f32 %v3751, %v3864
          %v3881 = vadd.f32 %v3752, %v3865
          %v3882 = vadd.f32 %v3753, %v3866
          %v3883 = vadd.f32 %v3754, %v3867
          %v3884 = vadd.f32 %v3755, %v3868
          %v3885 = vadd.f32 %v3756, %v3869
          %v3886 = vadd.f32 %v3757, %v3870
          %v3887 = vadd.f32 %v3758, %v3871
          %v3888 = vadd.f32 %v3759, %v3872
          %v3889 = vadd.f32 %v3760, %v3873
          %v3890 = vadd.f32 %v3761, %v3874
          %v3891 = vadd.f32 %v3762, %v3875
          %v3892 = vadd.f32 %v3763, %v3876
          %v3893 = vadd.f32 %v3764, %v3877
          %v3894 = vadd.f32 %v3765, %v3878
          %s3895 = scalar_lea.vmem %s130, 256 [#allocation2]
          %v3896 = vld [vmem:[%s3895] sm:$0xff]
          %v3897 = vld [vmem:[%s3895 + $0x8] sm:$0xff]
          %v3898 = vld [vmem:[%s3895 + $0x10] sm:$0xff]
          %v3899 = vld [vmem:[%s3895 + $0x18] sm:$0xff]
          %v3900 = vld [vmem:[%s3895 + $0x20] sm:$0xff]
          %v3901 = vld [vmem:[%s3895 + $0x28] sm:$0xff]
          %v3902 = vld [vmem:[%s3895 + $0x30] sm:$0xff]
          %v3903 = vld [vmem:[%s3895 + $0x38] sm:$0xff]
          %v3904 = vld [vmem:[%s3895 + $0x40] sm:$0xff]
          %v3905 = vld [vmem:[%s3895 + $0x48] sm:$0xff]
          %v3906 = vld [vmem:[%s3895 + $0x50] sm:$0xff]
          %v3907 = vld [vmem:[%s3895 + $0x58] sm:$0xff]
          %v3908 = vld [vmem:[%s3895 + $0x60] sm:$0xff]
          %v3909 = vld [vmem:[%s3895 + $0x68] sm:$0xff]
          %v3910 = vld [vmem:[%s3895 + $0x70] sm:$0xff]
          %v3911 = vld [vmem:[%s3895 + $0x78] sm:$0xff]
          %v3912 = vrot.slane %v3896, 7
          %v3913 = vrot.slane %v3900, 7
          %v3914 = vrot.slane %v3904, 7
          %v3915 = vrot.slane %v3908, 7
          %v3916 = vrot.slane %v3897, 7
          %v3917 = vrot.slane %v3901, 7
          %v3918 = vrot.slane %v3905, 7
          %v3919 = vrot.slane %v3909, 7
          %v3920 = vrot.slane %v3898, 7
          %v3921 = vrot.slane %v3902, 7
          %v3922 = vrot.slane %v3906, 7
          %v3923 = vrot.slane %v3910, 7
          %v3924 = vrot.slane %v3899, 7
          %v3925 = vrot.slane %v3903, 7
          %v3926 = vrot.slane %v3907, 7
          %v3927 = vrot.slane %v3911, 7
          %v3928 = vsel %vm3669, %v3920, %v3924
          %v3929 = vsel %vm3669, %v3921, %v3925
          %v3930 = vsel %vm3669, %v3922, %v3926
          %v3931 = vsel %vm3669, %v3923, %v3927
          %v3932 = vsel %vm3669, %v3916, %v3920
          %v3933 = vsel %vm3669, %v3917, %v3921
          %v3934 = vsel %vm3669, %v3918, %v3922
          %v3935 = vsel %vm3669, %v3919, %v3923
          %v3936 = vsel %vm3669, %v3912, %v3916
          %v3937 = vsel %vm3669, %v3913, %v3917
          %v3938 = vsel %vm3669, %v3914, %v3918
          %v3939 = vsel %vm3669, %v3915, %v3919
          %v3940 = vsel %vm3669, %v3924, %v3912
          %v3941 = vsel %vm3669, %v3925, %v3913
          %v3942 = vsel %vm3669, %v3926, %v3914
          %v3943 = vsel %vm3669, %v3927, %v3915
          %3944 = vrot.lane.b32.xlu0 %v3928, 4
          %v3945 = vpop.permute.xlu0 %3944
          %3946 = vrot.lane.b32.xlu0 %v3940, 4
          %v3947 = vpop.permute.xlu0 %3946
          %3948 = vrot.lane.b32.xlu0 %v3936, 4
          %v3949 = vpop.permute.xlu0 %3948
          %3950 = vrot.lane.b32.xlu0 %v3932, 4
          %v3951 = vpop.permute.xlu0 %3950
          %3952 = vrot.lane.b32.xlu0 %v3929, 4
          %v3953 = vpop.permute.xlu0 %3952
          %3954 = vrot.lane.b32.xlu0 %v3941, 4
          %v3955 = vpop.permute.xlu0 %3954
          %3956 = vrot.lane.b32.xlu0 %v3937, 4
          %v3957 = vpop.permute.xlu0 %3956
          %3958 = vrot.lane.b32.xlu0 %v3933, 4
          %v3959 = vpop.permute.xlu0 %3958
          %3960 = vrot.lane.b32.xlu0 %v3930, 4
          %v3961 = vpop.permute.xlu0 %3960
          %3962 = vrot.lane.b32.xlu0 %v3942, 4
          %v3963 = vpop.permute.xlu0 %3962
          %3964 = vrot.lane.b32.xlu0 %v3938, 4
          %v3965 = vpop.permute.xlu0 %3964
          %3966 = vrot.lane.b32.xlu0 %v3934, 4
          %v3967 = vpop.permute.xlu0 %3966
          %3968 = vrot.lane.b32.xlu0 %v3931, 4
          %v3969 = vpop.permute.xlu0 %3968
          %3970 = vrot.lane.b32.xlu0 %v3943, 4
          %v3971 = vpop.permute.xlu0 %3970
          %3972 = vrot.lane.b32.xlu0 %v3939, 4
          %v3973 = vpop.permute.xlu0 %3972
          %3974 = vrot.lane.b32.xlu0 %v3935, 4
          %v3975 = vpop.permute.xlu0 %3974
          %v3976 = vsub.f32 %v3896, %v3945
          %v3977 = vsub.f32 %v3897, %v3947
          %v3978 = vsub.f32 %v3898, %v3949
          %v3979 = vsub.f32 %v3899, %v3951
          %v3980 = vsub.f32 %v3900, %v3953
          %v3981 = vsub.f32 %v3901, %v3955
          %v3982 = vsub.f32 %v3902, %v3957
          %v3983 = vsub.f32 %v3903, %v3959
          %v3984 = vsub.f32 %v3904, %v3961
          %v3985 = vsub.f32 %v3905, %v3963
          %v3986 = vsub.f32 %v3906, %v3965
          %v3987 = vsub.f32 %v3907, %v3967
          %v3988 = vsub.f32 %v3908, %v3969
          %v3989 = vsub.f32 %v3909, %v3971
          %v3990 = vsub.f32 %v3910, %v3973
          %v3991 = vsub.f32 %v3911, %v3975
          %v3992 = vmul.f32 %v3976, %v3976
          %v3993 = vmul.f32 %v3977, %v3977
          %v3994 = vmul.f32 %v3978, %v3978
          %v3995 = vmul.f32 %v3979, %v3979
          %v3996 = vmul.f32 %v3980, %v3980
          %v3997 = vmul.f32 %v3981, %v3981
          %v3998 = vmul.f32 %v3982, %v3982
          %v3999 = vmul.f32 %v3983, %v3983
          %v4000 = vmul.f32 %v3984, %v3984
          %v4001 = vmul.f32 %v3985, %v3985
          %v4002 = vmul.f32 %v3986, %v3986
          %v4003 = vmul.f32 %v3987, %v3987
          %v4004 = vmul.f32 %v3988, %v3988
          %v4005 = vmul.f32 %v3989, %v3989
          %v4006 = vmul.f32 %v3990, %v3990
          %v4007 = vmul.f32 %v3991, %v3991
          %v4008 = vadd.f32 %v3879, %v3992
          %v4009 = vadd.f32 %v3880, %v3993
          %v4010 = vadd.f32 %v3881, %v3994
          %v4011 = vadd.f32 %v3882, %v3995
          %v4012 = vadd.f32 %v3883, %v3996
          %v4013 = vadd.f32 %v3884, %v3997
          %v4014 = vadd.f32 %v3885, %v3998
          %v4015 = vadd.f32 %v3886, %v3999
          %v4016 = vadd.f32 %v3887, %v4000
          %v4017 = vadd.f32 %v3888, %v4001
          %v4018 = vadd.f32 %v3889, %v4002
          %v4019 = vadd.f32 %v3890, %v4003
          %v4020 = vadd.f32 %v3891, %v4004
          %v4021 = vadd.f32 %v3892, %v4005
          %v4022 = vadd.f32 %v3893, %v4006
          %v4023 = vadd.f32 %v3894, %v4007
          %s4024 = scalar_lea.vmem %s130, 384 [#allocation2]
          %v4025 = vld [vmem:[%s4024] sm:$0xff]
          %v4026 = vld [vmem:[%s4024 + $0x8] sm:$0xff]
          %v4027 = vld [vmem:[%s4024 + $0x10] sm:$0xff]
          %v4028 = vld [vmem:[%s4024 + $0x18] sm:$0xff]
          %v4029 = vld [vmem:[%s4024 + $0x20] sm:$0xff]
          %v4030 = vld [vmem:[%s4024 + $0x28] sm:$0xff]
          %v4031 = vld [vmem:[%s4024 + $0x30] sm:$0xff]
          %v4032 = vld [vmem:[%s4024 + $0x38] sm:$0xff]
          %v4033 = vld [vmem:[%s4024 + $0x40] sm:$0xff]
          %v4034 = vld [vmem:[%s4024 + $0x48] sm:$0xff]
          %v4035 = vld [vmem:[%s4024 + $0x50] sm:$0xff]
          %v4036 = vld [vmem:[%s4024 + $0x58] sm:$0xff]
          %v4037 = vld [vmem:[%s4024 + $0x60] sm:$0xff]
          %v4038 = vld [vmem:[%s4024 + $0x68] sm:$0xff]
          %v4039 = vld [vmem:[%s4024 + $0x70] sm:$0xff]
          %v4040 = vld [vmem:[%s4024 + $0x78] sm:$0xff]
          %v4041 = vrot.slane %v4025, 7
          %v4042 = vrot.slane %v4029, 7
          %v4043 = vrot.slane %v4033, 7
          %v4044 = vrot.slane %v4037, 7
          %v4045 = vrot.slane %v4026, 7
          %v4046 = vrot.slane %v4030, 7
          %v4047 = vrot.slane %v4034, 7
          %v4048 = vrot.slane %v4038, 7
          %v4049 = vrot.slane %v4027, 7
          %v4050 = vrot.slane %v4031, 7
          %v4051 = vrot.slane %v4035, 7
          %v4052 = vrot.slane %v4039, 7
          %v4053 = vrot.slane %v4028, 7
          %v4054 = vrot.slane %v4032, 7
          %v4055 = vrot.slane %v4036, 7
          %v4056 = vrot.slane %v4040, 7
          %v4057 = vsel %vm3669, %v4049, %v4053
          %v4058 = vsel %vm3669, %v4050, %v4054
          %v4059 = vsel %vm3669, %v4051, %v4055
          %v4060 = vsel %vm3669, %v4052, %v4056
          %v4061 = vsel %vm3669, %v4045, %v4049
          %v4062 = vsel %vm3669, %v4046, %v4050
          %v4063 = vsel %vm3669, %v4047, %v4051
          %v4064 = vsel %vm3669, %v4048, %v4052
          %v4065 = vsel %vm3669, %v4041, %v4045
          %v4066 = vsel %vm3669, %v4042, %v4046
          %v4067 = vsel %vm3669, %v4043, %v4047
          %v4068 = vsel %vm3669, %v4044, %v4048
          %v4069 = vsel %vm3669, %v4053, %v4041
          %v4070 = vsel %vm3669, %v4054, %v4042
          %v4071 = vsel %vm3669, %v4055, %v4043
          %v4072 = vsel %vm3669, %v4056, %v4044
          %4073 = vrot.lane.b32.xlu0 %v4057, 4
          %v4074 = vpop.permute.xlu0 %4073
          %4075 = vrot.lane.b32.xlu0 %v4069, 4
          %v4076 = vpop.permute.xlu0 %4075
          %4077 = vrot.lane.b32.xlu0 %v4065, 4
          %v4078 = vpop.permute.xlu0 %4077
          %4079 = vrot.lane.b32.xlu0 %v4061, 4
          %v4080 = vpop.permute.xlu0 %4079
          %4081 = vrot.lane.b32.xlu0 %v4058, 4
          %v4082 = vpop.permute.xlu0 %4081
          %4083 = vrot.lane.b32.xlu0 %v4070, 4
          %v4084 = vpop.permute.xlu0 %4083
          %4085 = vrot.lane.b32.xlu0 %v4066, 4
          %v4086 = vpop.permute.xlu0 %4085
          %4087 = vrot.lane.b32.xlu0 %v4062, 4
          %v4088 = vpop.permute.xlu0 %4087
          %4089 = vrot.lane.b32.xlu0 %v4059, 4
          %v4090 = vpop.permute.xlu0 %4089
          %4091 = vrot.lane.b32.xlu0 %v4071, 4
          %v4092 = vpop.permute.xlu0 %4091
          %4093 = vrot.lane.b32.xlu0 %v4067, 4
          %v4094 = vpop.permute.xlu0 %4093
          %4095 = vrot.lane.b32.xlu0 %v4063, 4
          %v4096 = vpop.permute.xlu0 %4095
          %4097 = vrot.lane.b32.xlu0 %v4060, 4
          %v4098 = vpop.permute.xlu0 %4097
          %4099 = vrot.lane.b32.xlu0 %v4072, 4
          %v4100 = vpop.permute.xlu0 %4099
          %4101 = vrot.lane.b32.xlu0 %v4068, 4
          %v4102 = vpop.permute.xlu0 %4101
          %4103 = vrot.lane.b32.xlu0 %v4064, 4
          %v4104 = vpop.permute.xlu0 %4103
          %v4105 = vsub.f32 %v4025, %v4074
          %v4106 = vsub.f32 %v4026, %v4076
          %v4107 = vsub.f32 %v4027, %v4078
          %v4108 = vsub.f32 %v4028, %v4080
          %v4109 = vsub.f32 %v4029, %v4082
          %v4110 = vsub.f32 %v4030, %v4084
          %v4111 = vsub.f32 %v4031, %v4086
          %v4112 = vsub.f32 %v4032, %v4088
          %v4113 = vsub.f32 %v4033, %v4090
          %v4114 = vsub.f32 %v4034, %v4092
          %v4115 = vsub.f32 %v4035, %v4094
          %v4116 = vsub.f32 %v4036, %v4096
          %v4117 = vsub.f32 %v4037, %v4098
          %v4118 = vsub.f32 %v4038, %v4100
          %v4119 = vsub.f32 %v4039, %v4102
          %v4120 = vsub.f32 %v4040, %v4104
          %v4121 = vmul.f32 %v4105, %v4105
          %v4122 = vmul.f32 %v4106, %v4106
          %v4123 = vmul.f32 %v4107, %v4107
          %v4124 = vmul.f32 %v4108, %v4108
          %v4125 = vmul.f32 %v4109, %v4109
          %v4126 = vmul.f32 %v4110, %v4110
          %v4127 = vmul.f32 %v4111, %v4111
          %v4128 = vmul.f32 %v4112, %v4112
          %v4129 = vmul.f32 %v4113, %v4113
          %v4130 = vmul.f32 %v4114, %v4114
          %v4131 = vmul.f32 %v4115, %v4115
          %v4132 = vmul.f32 %v4116, %v4116
          %v4133 = vmul.f32 %v4117, %v4117
          %v4134 = vmul.f32 %v4118, %v4118
          %v4135 = vmul.f32 %v4119, %v4119
          %v4136 = vmul.f32 %v4120, %v4120
          %v4137 = vadd.f32 %v4008, %v4121
          %v4138 = vadd.f32 %v4009, %v4122
          %v4139 = vadd.f32 %v4010, %v4123
          %v4140 = vadd.f32 %v4011, %v4124
          %v4141 = vadd.f32 %v4012, %v4125
          %v4142 = vadd.f32 %v4013, %v4126
          %v4143 = vadd.f32 %v4014, %v4127
          %v4144 = vadd.f32 %v4015, %v4128
          %v4145 = vadd.f32 %v4016, %v4129
          %v4146 = vadd.f32 %v4017, %v4130
          %v4147 = vadd.f32 %v4018, %v4131
          %v4148 = vadd.f32 %v4019, %v4132
          %v4149 = vadd.f32 %v4020, %v4133
          %v4150 = vadd.f32 %v4021, %v4134
          %v4151 = vadd.f32 %v4022, %v4135
          %v4152 = vadd.f32 %v4023, %v4136
          %v4153 = vmul.f32 %v4137, 25.0
          %v4154 = vmul.f32 %v4138, 25.0
          %v4155 = vmul.f32 %v4139, 25.0
          %v4156 = vmul.f32 %v4140, 25.0
          %v4157 = vmul.f32 %v4141, 25.0
          %v4158 = vmul.f32 %v4142, 25.0
          %v4159 = vmul.f32 %v4143, 25.0
          %v4160 = vmul.f32 %v4144, 25.0
          %v4161 = vmul.f32 %v4145, 25.0
          %v4162 = vmul.f32 %v4146, 25.0
          %v4163 = vmul.f32 %v4147, 25.0
          %v4164 = vmul.f32 %v4148, 25.0
          %v4165 = vmul.f32 %v4149, 25.0
          %v4166 = vmul.f32 %v4150, 25.0
          %v4167 = vmul.f32 %v4151, 25.0
          %v4168 = vmul.f32 %v4152, 25.0
          %v4169 = vtanh.pop %v4153
          %v4170 = vtanh.pop %v4154
          %v4171 = vtanh.pop %v4155
          %v4172 = vtanh.pop %v4156
          %v4173 = vtanh.pop %v4157
          %v4174 = vtanh.pop %v4158
          %v4175 = vtanh.pop %v4159
          %v4176 = vtanh.pop %v4160
          %v4177 = vtanh.pop %v4161
          %v4178 = vtanh.pop %v4162
          %v4179 = vtanh.pop %v4163
          %v4180 = vtanh.pop %v4164
          %v4181 = vtanh.pop %v4165
          %v4182 = vtanh.pop %v4166
          %v4183 = vtanh.pop %v4167
          %v4184 = vtanh.pop %v4168
          %v4185 = vsub.f32 1.0, %v4169
          %v4186 = vsub.f32 1.0, %v4170
          %v4187 = vsub.f32 1.0, %v4171
          %v4188 = vsub.f32 1.0, %v4172
          %v4189 = vsub.f32 1.0, %v4173
          %v4190 = vsub.f32 1.0, %v4174
          %v4191 = vsub.f32 1.0, %v4175
          %v4192 = vsub.f32 1.0, %v4176
          %v4193 = vsub.f32 1.0, %v4177
          %v4194 = vsub.f32 1.0, %v4178
          %v4195 = vsub.f32 1.0, %v4179
          %v4196 = vsub.f32 1.0, %v4180
          %v4197 = vsub.f32 1.0, %v4181
          %v4198 = vsub.f32 1.0, %v4182
          %v4199 = vsub.f32 1.0, %v4183
          %v4200 = vsub.f32 1.0, %v4184
          %v4201 = vadd.s32 %v3668, 8
          %v4202 = vadd.s32 %v3668, 16
          %v4203 = vadd.s32 %v3668, 24
          %vm4204 = vcmp.ge.s32.totalorder %v3668, 9
          %vm4205 = vcmp.ge.s32.totalorder %v4201, 9
          %vm4206 = vcmp.ge.s32.totalorder %v4202, 9
          %vm4207 = vcmp.ge.s32.totalorder %v4203, 9
          %v4208 = vlaneseq
          %v4209 = vand.u32 %v4208, 127
          %vm4210 = vcmp.ge.s32.totalorder %v4209, 4
          %vm4211 = vmand %vm4204, %vm4210
          %vm4212 = vmand %vm4205, %vm4210
          %vm4213 = vmand %vm4206, %vm4210
          %vm4214 = vmand %vm4207, %vm4210
          %v4215 = vsel %vm4211, 1, 0
          %v4216 = vsel %vm4212, 1, 0
          %v4217 = vsel %vm4213, 1, 0
          %v4218 = vsel %vm4214, 1, 0
          %vm4219 = vcmp.eq.s32.totalorder %v4215, 1
          %vm4220 = vcmp.eq.s32.totalorder %v4216, 1
          %vm4221 = vcmp.eq.s32.totalorder %v4217, 1
          %vm4222 = vcmp.eq.s32.totalorder %v4218, 1
          %v4223 = vsel %vm4219, %v4185, 1.0
          %v4224 = vsel %vm4220, %v4186, 1.0
          %v4225 = vsel %vm4221, %v4187, 1.0
          %v4226 = vsel %vm4222, %v4188, 1.0
          %v4227 = vsel %vm4219, %v4189, 1.0
          %v4228 = vsel %vm4220, %v4190, 1.0
          %v4229 = vsel %vm4221, %v4191, 1.0
          %v4230 = vsel %vm4222, %v4192, 1.0
          %v4231 = vsel %vm4219, %v4193, 1.0
          %v4232 = vsel %vm4220, %v4194, 1.0
          %v4233 = vsel %vm4221, %v4195, 1.0
          %v4234 = vsel %vm4222, %v4196, 1.0
          %v4235 = vsel %vm4219, %v4197, 1.0
          %v4236 = vsel %vm4220, %v4198, 1.0
          %v4237 = vsel %vm4221, %v4199, 1.0
          %v4238 = vsel %vm4222, %v4200, 1.0
          %4239 = vst [vmem:[%s148] sm:$0xff] %v4223
          %4240 = vst [vmem:[%s148 + $0x8] sm:$0xff] %v4224
          %4241 = vst [vmem:[%s148 + $0x10] sm:$0xff] %v4225
          %4242 = vst [vmem:[%s148 + $0x18] sm:$0xff] %v4226
          %4243 = vst [vmem:[%s148 + $0x20] sm:$0xff] %v4227
          %4244 = vst [vmem:[%s148 + $0x28] sm:$0xff] %v4228
          %4245 = vst [vmem:[%s148 + $0x30] sm:$0xff] %v4229
          %4246 = vst [vmem:[%s148 + $0x38] sm:$0xff] %v4230
          %4247 = vst [vmem:[%s148 + $0x40] sm:$0xff] %v4231
          %4248 = vst [vmem:[%s148 + $0x48] sm:$0xff] %v4232
          %4249 = vst [vmem:[%s148 + $0x50] sm:$0xff] %v4233
          %4250 = vst [vmem:[%s148 + $0x58] sm:$0xff] %v4234
          %4251 = vst [vmem:[%s148 + $0x60] sm:$0xff] %v4235
          %4252 = vst [vmem:[%s148 + $0x68] sm:$0xff] %v4236
          %4253 = vst [vmem:[%s148 + $0x70] sm:$0xff] %v4237
          %4254 = vst [vmem:[%s148 + $0x78] sm:$0xff] %v4238
        $region60: #{tpu_custom_call.1} parent=23 // pred_fallthru
          _
        %p4255 = scmp.eq.s32.totalorder %s23, 8
        // Predicated region
        $region61: #{tpu_custom_call.1} parent=23 // pred_check
          %p4256 = pneg %p4255
        $region62: #{tpu_custom_call.1} parent=23 // pred_check_branch
          %4258 = sbr.rel (%p4256) target = $region64
        $region63: #{tpu_custom_call.1} parent=23 // pred_region
          %v4259 = vld [vmem:[%s130] sm:$0xff]
          %v4260 = vld [vmem:[%s130 + $0x8] sm:$0xff]
          %v4261 = vld [vmem:[%s130 + $0x10] sm:$0xff]
          %v4262 = vld [vmem:[%s130 + $0x18] sm:$0xff]
          %v4263 = vld [vmem:[%s130 + $0x20] sm:$0xff]
          %v4264 = vld [vmem:[%s130 + $0x28] sm:$0xff]
          %v4265 = vld [vmem:[%s130 + $0x30] sm:$0xff]
          %v4266 = vld [vmem:[%s130 + $0x38] sm:$0xff]
          %v4267 = vld [vmem:[%s130 + $0x40] sm:$0xff]
          %v4268 = vld [vmem:[%s130 + $0x48] sm:$0xff]
          %v4269 = vld [vmem:[%s130 + $0x50] sm:$0xff]
          %v4270 = vld [vmem:[%s130 + $0x58] sm:$0xff]
          %v4271 = vld [vmem:[%s130 + $0x60] sm:$0xff]
          %v4272 = vld [vmem:[%s130 + $0x68] sm:$0xff]
          %v4273 = vld [vmem:[%s130 + $0x70] sm:$0xff]
          %v4274 = vld [vmem:[%s130 + $0x78] sm:$0xff]
          %v4275 = vrot.slane %v4259, 4
          %v4276 = vrot.slane %v4263, 4
          %v4277 = vrot.slane %v4267, 4
          %v4278 = vrot.slane %v4271, 4
          %v4279 = vrot.slane %v4260, 4
          %v4280 = vrot.slane %v4264, 4
          %v4281 = vrot.slane %v4268, 4
          %v4282 = vrot.slane %v4272, 4
          %v4283 = vrot.slane %v4261, 4
          %v4284 = vrot.slane %v4265, 4
          %v4285 = vrot.slane %v4269, 4
          %v4286 = vrot.slane %v4273, 4
          %v4287 = vrot.slane %v4262, 4
          %v4288 = vrot.slane %v4266, 4
          %v4289 = vrot.slane %v4270, 4
          %v4290 = vrot.slane %v4274, 4
          %v4291 = vlaneseq
          %v4292 = vshrl.u32 %v4291, 7
          %vm4293 = vcmp.lt.s32.totalorder %v4292, 4
          %v4294 = vsel %vm4293, %v4283, %v4287
          %v4295 = vsel %vm4293, %v4284, %v4288
          %v4296 = vsel %vm4293, %v4285, %v4289
          %v4297 = vsel %vm4293, %v4286, %v4290
          %v4298 = vsel %vm4293, %v4279, %v4283
          %v4299 = vsel %vm4293, %v4280, %v4284
          %v4300 = vsel %vm4293, %v4281, %v4285
          %v4301 = vsel %vm4293, %v4282, %v4286
          %v4302 = vsel %vm4293, %v4275, %v4279
          %v4303 = vsel %vm4293, %v4276, %v4280
          %v4304 = vsel %vm4293, %v4277, %v4281
          %v4305 = vsel %vm4293, %v4278, %v4282
          %v4306 = vsel %vm4293, %v4287, %v4275
          %v4307 = vsel %vm4293, %v4288, %v4276
          %v4308 = vsel %vm4293, %v4289, %v4277
          %v4309 = vsel %vm4293, %v4290, %v4278
          %4310 = vrot.lane.b32.xlu0 %v4306, 9
          %v4311 = vpop.permute.xlu0 %4310
          %4312 = vrot.lane.b32.xlu0 %v4302, 9
          %v4313 = vpop.permute.xlu0 %4312
          %4314 = vrot.lane.b32.xlu0 %v4298, 9
          %v4315 = vpop.permute.xlu0 %4314
          %4316 = vrot.lane.b32.xlu0 %v4294, 9
          %v4317 = vpop.permute.xlu0 %4316
          %4318 = vrot.lane.b32.xlu0 %v4307, 9
          %v4319 = vpop.permute.xlu0 %4318
          %4320 = vrot.lane.b32.xlu0 %v4303, 9
          %v4321 = vpop.permute.xlu0 %4320
          %4322 = vrot.lane.b32.xlu0 %v4299, 9
          %v4323 = vpop.permute.xlu0 %4322
          %4324 = vrot.lane.b32.xlu0 %v4295, 9
          %v4325 = vpop.permute.xlu0 %4324
          %4326 = vrot.lane.b32.xlu0 %v4308, 9
          %v4327 = vpop.permute.xlu0 %4326
          %4328 = vrot.lane.b32.xlu0 %v4304, 9
          %v4329 = vpop.permute.xlu0 %4328
          %4330 = vrot.lane.b32.xlu0 %v4300, 9
          %v4331 = vpop.permute.xlu0 %4330
          %4332 = vrot.lane.b32.xlu0 %v4296, 9
          %v4333 = vpop.permute.xlu0 %4332
          %4334 = vrot.lane.b32.xlu0 %v4309, 9
          %v4335 = vpop.permute.xlu0 %4334
          %4336 = vrot.lane.b32.xlu0 %v4305, 9
          %v4337 = vpop.permute.xlu0 %4336
          %4338 = vrot.lane.b32.xlu0 %v4301, 9
          %v4339 = vpop.permute.xlu0 %4338
          %4340 = vrot.lane.b32.xlu0 %v4297, 9
          %v4341 = vpop.permute.xlu0 %4340
          %v4342 = vsub.f32 %v4259, %v4311
          %v4343 = vsub.f32 %v4260, %v4313
          %v4344 = vsub.f32 %v4261, %v4315
          %v4345 = vsub.f32 %v4262, %v4317
          %v4346 = vsub.f32 %v4263, %v4319
          %v4347 = vsub.f32 %v4264, %v4321
          %v4348 = vsub.f32 %v4265, %v4323
          %v4349 = vsub.f32 %v4266, %v4325
          %v4350 = vsub.f32 %v4267, %v4327
          %v4351 = vsub.f32 %v4268, %v4329
          %v4352 = vsub.f32 %v4269, %v4331
          %v4353 = vsub.f32 %v4270, %v4333
          %v4354 = vsub.f32 %v4271, %v4335
          %v4355 = vsub.f32 %v4272, %v4337
          %v4356 = vsub.f32 %v4273, %v4339
          %v4357 = vsub.f32 %v4274, %v4341
          %v4358 = vmul.f32 %v4342, %v4342
          %v4359 = vmul.f32 %v4343, %v4343
          %v4360 = vmul.f32 %v4344, %v4344
          %v4361 = vmul.f32 %v4345, %v4345
          %v4362 = vmul.f32 %v4346, %v4346
          %v4363 = vmul.f32 %v4347, %v4347
          %v4364 = vmul.f32 %v4348, %v4348
          %v4365 = vmul.f32 %v4349, %v4349
          %v4366 = vmul.f32 %v4350, %v4350
          %v4367 = vmul.f32 %v4351, %v4351
          %v4368 = vmul.f32 %v4352, %v4352
          %v4369 = vmul.f32 %v4353, %v4353
          %v4370 = vmul.f32 %v4354, %v4354
          %v4371 = vmul.f32 %v4355, %v4355
          %v4372 = vmul.f32 %v4356, %v4356
          %v4373 = vmul.f32 %v4357, %v4357
          %v4374 = vadd.f32 %v4358, 0.0
          %v4375 = vadd.f32 %v4359, 0.0
          %v4376 = vadd.f32 %v4360, 0.0
          %v4377 = vadd.f32 %v4361, 0.0
          %v4378 = vadd.f32 %v4362, 0.0
          %v4379 = vadd.f32 %v4363, 0.0
          %v4380 = vadd.f32 %v4364, 0.0
          %v4381 = vadd.f32 %v4365, 0.0
          %v4382 = vadd.f32 %v4366, 0.0
          %v4383 = vadd.f32 %v4367, 0.0
          %v4384 = vadd.f32 %v4368, 0.0
          %v4385 = vadd.f32 %v4369, 0.0
          %v4386 = vadd.f32 %v4370, 0.0
          %v4387 = vadd.f32 %v4371, 0.0
          %v4388 = vadd.f32 %v4372, 0.0
          %v4389 = vadd.f32 %v4373, 0.0
          %s4390 = scalar_lea.vmem %s130, 128 [#allocation2]
          %v4391 = vld [vmem:[%s4390] sm:$0xff]
          %v4392 = vld [vmem:[%s4390 + $0x8] sm:$0xff]
          %v4393 = vld [vmem:[%s4390 + $0x10] sm:$0xff]
          %v4394 = vld [vmem:[%s4390 + $0x18] sm:$0xff]
          %v4395 = vld [vmem:[%s4390 + $0x20] sm:$0xff]
          %v4396 = vld [vmem:[%s4390 + $0x28] sm:$0xff]
          %v4397 = vld [vmem:[%s4390 + $0x30] sm:$0xff]
          %v4398 = vld [vmem:[%s4390 + $0x38] sm:$0xff]
          %v4399 = vld [vmem:[%s4390 + $0x40] sm:$0xff]
          %v4400 = vld [vmem:[%s4390 + $0x48] sm:$0xff]
          %v4401 = vld [vmem:[%s4390 + $0x50] sm:$0xff]
          %v4402 = vld [vmem:[%s4390 + $0x58] sm:$0xff]
          %v4403 = vld [vmem:[%s4390 + $0x60] sm:$0xff]
          %v4404 = vld [vmem:[%s4390 + $0x68] sm:$0xff]
          %v4405 = vld [vmem:[%s4390 + $0x70] sm:$0xff]
          %v4406 = vld [vmem:[%s4390 + $0x78] sm:$0xff]
          %v4407 = vrot.slane %v4391, 4
          %v4408 = vrot.slane %v4395, 4
          %v4409 = vrot.slane %v4399, 4
          %v4410 = vrot.slane %v4403, 4
          %v4411 = vrot.slane %v4392, 4
          %v4412 = vrot.slane %v4396, 4
          %v4413 = vrot.slane %v4400, 4
          %v4414 = vrot.slane %v4404, 4
          %v4415 = vrot.slane %v4393, 4
          %v4416 = vrot.slane %v4397, 4
          %v4417 = vrot.slane %v4401, 4
          %v4418 = vrot.slane %v4405, 4
          %v4419 = vrot.slane %v4394, 4
          %v4420 = vrot.slane %v4398, 4
          %v4421 = vrot.slane %v4402, 4
          %v4422 = vrot.slane %v4406, 4
          %v4423 = vsel %vm4293, %v4415, %v4419
          %v4424 = vsel %vm4293, %v4416, %v4420
          %v4425 = vsel %vm4293, %v4417, %v4421
          %v4426 = vsel %vm4293, %v4418, %v4422
          %v4427 = vsel %vm4293, %v4411, %v4415
          %v4428 = vsel %vm4293, %v4412, %v4416
          %v4429 = vsel %vm4293, %v4413, %v4417
          %v4430 = vsel %vm4293, %v4414, %v4418
          %v4431 = vsel %vm4293, %v4407, %v4411
          %v4432 = vsel %vm4293, %v4408, %v4412
          %v4433 = vsel %vm4293, %v4409, %v4413
          %v4434 = vsel %vm4293, %v4410, %v4414
          %v4435 = vsel %vm4293, %v4419, %v4407
          %v4436 = vsel %vm4293, %v4420, %v4408
          %v4437 = vsel %vm4293, %v4421, %v4409
          %v4438 = vsel %vm4293, %v4422, %v4410
          %4439 = vrot.lane.b32.xlu0 %v4435, 9
          %v4440 = vpop.permute.xlu0 %4439
          %4441 = vrot.lane.b32.xlu0 %v4431, 9
          %v4442 = vpop.permute.xlu0 %4441
          %4443 = vrot.lane.b32.xlu0 %v4427, 9
          %v4444 = vpop.permute.xlu0 %4443
          %4445 = vrot.lane.b32.xlu0 %v4423, 9
          %v4446 = vpop.permute.xlu0 %4445
          %4447 = vrot.lane.b32.xlu0 %v4436, 9
          %v4448 = vpop.permute.xlu0 %4447
          %4449 = vrot.lane.b32.xlu0 %v4432, 9
          %v4450 = vpop.permute.xlu0 %4449
          %4451 = vrot.lane.b32.xlu0 %v4428, 9
          %v4452 = vpop.permute.xlu0 %4451
          %4453 = vrot.lane.b32.xlu0 %v4424, 9
          %v4454 = vpop.permute.xlu0 %4453
          %4455 = vrot.lane.b32.xlu0 %v4437, 9
          %v4456 = vpop.permute.xlu0 %4455
          %4457 = vrot.lane.b32.xlu0 %v4433, 9
          %v4458 = vpop.permute.xlu0 %4457
          %4459 = vrot.lane.b32.xlu0 %v4429, 9
          %v4460 = vpop.permute.xlu0 %4459
          %4461 = vrot.lane.b32.xlu0 %v4425, 9
          %v4462 = vpop.permute.xlu0 %4461
          %4463 = vrot.lane.b32.xlu0 %v4438, 9
          %v4464 = vpop.permute.xlu0 %4463
          %4465 = vrot.lane.b32.xlu0 %v4434, 9
          %v4466 = vpop.permute.xlu0 %4465
          %4467 = vrot.lane.b32.xlu0 %v4430, 9
          %v4468 = vpop.permute.xlu0 %4467
          %4469 = vrot.lane.b32.xlu0 %v4426, 9
          %v4470 = vpop.permute.xlu0 %4469
          %v4471 = vsub.f32 %v4391, %v4440
          %v4472 = vsub.f32 %v4392, %v4442
          %v4473 = vsub.f32 %v4393, %v4444
          %v4474 = vsub.f32 %v4394, %v4446
          %v4475 = vsub.f32 %v4395, %v4448
          %v4476 = vsub.f32 %v4396, %v4450
          %v4477 = vsub.f32 %v4397, %v4452
          %v4478 = vsub.f32 %v4398, %v4454
          %v4479 = vsub.f32 %v4399, %v4456
          %v4480 = vsub.f32 %v4400, %v4458
          %v4481 = vsub.f32 %v4401, %v4460
          %v4482 = vsub.f32 %v4402, %v4462
          %v4483 = vsub.f32 %v4403, %v4464
          %v4484 = vsub.f32 %v4404, %v4466
          %v4485 = vsub.f32 %v4405, %v4468
          %v4486 = vsub.f32 %v4406, %v4470
          %v4487 = vmul.f32 %v4471, %v4471
          %v4488 = vmul.f32 %v4472, %v4472
          %v4489 = vmul.f32 %v4473, %v4473
          %v4490 = vmul.f32 %v4474, %v4474
          %v4491 = vmul.f32 %v4475, %v4475
          %v4492 = vmul.f32 %v4476, %v4476
          %v4493 = vmul.f32 %v4477, %v4477
          %v4494 = vmul.f32 %v4478, %v4478
          %v4495 = vmul.f32 %v4479, %v4479
          %v4496 = vmul.f32 %v4480, %v4480
          %v4497 = vmul.f32 %v4481, %v4481
          %v4498 = vmul.f32 %v4482, %v4482
          %v4499 = vmul.f32 %v4483, %v4483
          %v4500 = vmul.f32 %v4484, %v4484
          %v4501 = vmul.f32 %v4485, %v4485
          %v4502 = vmul.f32 %v4486, %v4486
          %v4503 = vadd.f32 %v4374, %v4487
          %v4504 = vadd.f32 %v4375, %v4488
          %v4505 = vadd.f32 %v4376, %v4489
          %v4506 = vadd.f32 %v4377, %v4490
          %v4507 = vadd.f32 %v4378, %v4491
          %v4508 = vadd.f32 %v4379, %v4492
          %v4509 = vadd.f32 %v4380, %v4493
          %v4510 = vadd.f32 %v4381, %v4494
          %v4511 = vadd.f32 %v4382, %v4495
          %v4512 = vadd.f32 %v4383, %v4496
          %v4513 = vadd.f32 %v4384, %v4497
          %v4514 = vadd.f32 %v4385, %v4498
          %v4515 = vadd.f32 %v4386, %v4499
          %v4516 = vadd.f32 %v4387, %v4500
          %v4517 = vadd.f32 %v4388, %v4501
          %v4518 = vadd.f32 %v4389, %v4502
          %s4519 = scalar_lea.vmem %s130, 256 [#allocation2]
          %v4520 = vld [vmem:[%s4519] sm:$0xff]
          %v4521 = vld [vmem:[%s4519 + $0x8] sm:$0xff]
          %v4522 = vld [vmem:[%s4519 + $0x10] sm:$0xff]
          %v4523 = vld [vmem:[%s4519 + $0x18] sm:$0xff]
          %v4524 = vld [vmem:[%s4519 + $0x20] sm:$0xff]
          %v4525 = vld [vmem:[%s4519 + $0x28] sm:$0xff]
          %v4526 = vld [vmem:[%s4519 + $0x30] sm:$0xff]
          %v4527 = vld [vmem:[%s4519 + $0x38] sm:$0xff]
          %v4528 = vld [vmem:[%s4519 + $0x40] sm:$0xff]
          %v4529 = vld [vmem:[%s4519 + $0x48] sm:$0xff]
          %v4530 = vld [vmem:[%s4519 + $0x50] sm:$0xff]
          %v4531 = vld [vmem:[%s4519 + $0x58] sm:$0xff]
          %v4532 = vld [vmem:[%s4519 + $0x60] sm:$0xff]
          %v4533 = vld [vmem:[%s4519 + $0x68] sm:$0xff]
          %v4534 = vld [vmem:[%s4519 + $0x70] sm:$0xff]
          %v4535 = vld [vmem:[%s4519 + $0x78] sm:$0xff]
          %v4536 = vrot.slane %v4520, 4
          %v4537 = vrot.slane %v4524, 4
          %v4538 = vrot.slane %v4528, 4
          %v4539 = vrot.slane %v4532, 4
          %v4540 = vrot.slane %v4521, 4
          %v4541 = vrot.slane %v4525, 4
          %v4542 = vrot.slane %v4529, 4
          %v4543 = vrot.slane %v4533, 4
          %v4544 = vrot.slane %v4522, 4
          %v4545 = vrot.slane %v4526, 4
          %v4546 = vrot.slane %v4530, 4
          %v4547 = vrot.slane %v4534, 4
          %v4548 = vrot.slane %v4523, 4
          %v4549 = vrot.slane %v4527, 4
          %v4550 = vrot.slane %v4531, 4
          %v4551 = vrot.slane %v4535, 4
          %v4552 = vsel %vm4293, %v4544, %v4548
          %v4553 = vsel %vm4293, %v4545, %v4549
          %v4554 = vsel %vm4293, %v4546, %v4550
          %v4555 = vsel %vm4293, %v4547, %v4551
          %v4556 = vsel %vm4293, %v4540, %v4544
          %v4557 = vsel %vm4293, %v4541, %v4545
          %v4558 = vsel %vm4293, %v4542, %v4546
          %v4559 = vsel %vm4293, %v4543, %v4547
          %v4560 = vsel %vm4293, %v4536, %v4540
          %v4561 = vsel %vm4293, %v4537, %v4541
          %v4562 = vsel %vm4293, %v4538, %v4542
          %v4563 = vsel %vm4293, %v4539, %v4543
          %v4564 = vsel %vm4293, %v4548, %v4536
          %v4565 = vsel %vm4293, %v4549, %v4537
          %v4566 = vsel %vm4293, %v4550, %v4538
          %v4567 = vsel %vm4293, %v4551, %v4539
          %4568 = vrot.lane.b32.xlu0 %v4564, 9
          %v4569 = vpop.permute.xlu0 %4568
          %4570 = vrot.lane.b32.xlu0 %v4560, 9
          %v4571 = vpop.permute.xlu0 %4570
          %4572 = vrot.lane.b32.xlu0 %v4556, 9
          %v4573 = vpop.permute.xlu0 %4572
          %4574 = vrot.lane.b32.xlu0 %v4552, 9
          %v4575 = vpop.permute.xlu0 %4574
          %4576 = vrot.lane.b32.xlu0 %v4565, 9
          %v4577 = vpop.permute.xlu0 %4576
          %4578 = vrot.lane.b32.xlu0 %v4561, 9
          %v4579 = vpop.permute.xlu0 %4578
          %4580 = vrot.lane.b32.xlu0 %v4557, 9
          %v4581 = vpop.permute.xlu0 %4580
          %4582 = vrot.lane.b32.xlu0 %v4553, 9
          %v4583 = vpop.permute.xlu0 %4582
          %4584 = vrot.lane.b32.xlu0 %v4566, 9
          %v4585 = vpop.permute.xlu0 %4584
          %4586 = vrot.lane.b32.xlu0 %v4562, 9
          %v4587 = vpop.permute.xlu0 %4586
          %4588 = vrot.lane.b32.xlu0 %v4558, 9
          %v4589 = vpop.permute.xlu0 %4588
          %4590 = vrot.lane.b32.xlu0 %v4554, 9
          %v4591 = vpop.permute.xlu0 %4590
          %4592 = vrot.lane.b32.xlu0 %v4567, 9
          %v4593 = vpop.permute.xlu0 %4592
          %4594 = vrot.lane.b32.xlu0 %v4563, 9
          %v4595 = vpop.permute.xlu0 %4594
          %4596 = vrot.lane.b32.xlu0 %v4559, 9
          %v4597 = vpop.permute.xlu0 %4596
          %4598 = vrot.lane.b32.xlu0 %v4555, 9
          %v4599 = vpop.permute.xlu0 %4598
          %v4600 = vsub.f32 %v4520, %v4569
          %v4601 = vsub.f32 %v4521, %v4571
          %v4602 = vsub.f32 %v4522, %v4573
          %v4603 = vsub.f32 %v4523, %v4575
          %v4604 = vsub.f32 %v4524, %v4577
          %v4605 = vsub.f32 %v4525, %v4579
          %v4606 = vsub.f32 %v4526, %v4581
          %v4607 = vsub.f32 %v4527, %v4583
          %v4608 = vsub.f32 %v4528, %v4585
          %v4609 = vsub.f32 %v4529, %v4587
          %v4610 = vsub.f32 %v4530, %v4589
          %v4611 = vsub.f32 %v4531, %v4591
          %v4612 = vsub.f32 %v4532, %v4593
          %v4613 = vsub.f32 %v4533, %v4595
          %v4614 = vsub.f32 %v4534, %v4597
          %v4615 = vsub.f32 %v4535, %v4599
          %v4616 = vmul.f32 %v4600, %v4600
          %v4617 = vmul.f32 %v4601, %v4601
          %v4618 = vmul.f32 %v4602, %v4602
          %v4619 = vmul.f32 %v4603, %v4603
          %v4620 = vmul.f32 %v4604, %v4604
          %v4621 = vmul.f32 %v4605, %v4605
          %v4622 = vmul.f32 %v4606, %v4606
          %v4623 = vmul.f32 %v4607, %v4607
          %v4624 = vmul.f32 %v4608, %v4608
          %v4625 = vmul.f32 %v4609, %v4609
          %v4626 = vmul.f32 %v4610, %v4610
          %v4627 = vmul.f32 %v4611, %v4611
          %v4628 = vmul.f32 %v4612, %v4612
          %v4629 = vmul.f32 %v4613, %v4613
          %v4630 = vmul.f32 %v4614, %v4614
          %v4631 = vmul.f32 %v4615, %v4615
          %v4632 = vadd.f32 %v4503, %v4616
          %v4633 = vadd.f32 %v4504, %v4617
          %v4634 = vadd.f32 %v4505, %v4618
          %v4635 = vadd.f32 %v4506, %v4619
          %v4636 = vadd.f32 %v4507, %v4620
          %v4637 = vadd.f32 %v4508, %v4621
          %v4638 = vadd.f32 %v4509, %v4622
          %v4639 = vadd.f32 %v4510, %v4623
          %v4640 = vadd.f32 %v4511, %v4624
          %v4641 = vadd.f32 %v4512, %v4625
          %v4642 = vadd.f32 %v4513, %v4626
          %v4643 = vadd.f32 %v4514, %v4627
          %v4644 = vadd.f32 %v4515, %v4628
          %v4645 = vadd.f32 %v4516, %v4629
          %v4646 = vadd.f32 %v4517, %v4630
          %v4647 = vadd.f32 %v4518, %v4631
          %s4648 = scalar_lea.vmem %s130, 384 [#allocation2]
          %v4649 = vld [vmem:[%s4648] sm:$0xff]
          %v4650 = vld [vmem:[%s4648 + $0x8] sm:$0xff]
          %v4651 = vld [vmem:[%s4648 + $0x10] sm:$0xff]
          %v4652 = vld [vmem:[%s4648 + $0x18] sm:$0xff]
          %v4653 = vld [vmem:[%s4648 + $0x20] sm:$0xff]
          %v4654 = vld [vmem:[%s4648 + $0x28] sm:$0xff]
          %v4655 = vld [vmem:[%s4648 + $0x30] sm:$0xff]
          %v4656 = vld [vmem:[%s4648 + $0x38] sm:$0xff]
          %v4657 = vld [vmem:[%s4648 + $0x40] sm:$0xff]
          %v4658 = vld [vmem:[%s4648 + $0x48] sm:$0xff]
          %v4659 = vld [vmem:[%s4648 + $0x50] sm:$0xff]
          %v4660 = vld [vmem:[%s4648 + $0x58] sm:$0xff]
          %v4661 = vld [vmem:[%s4648 + $0x60] sm:$0xff]
          %v4662 = vld [vmem:[%s4648 + $0x68] sm:$0xff]
          %v4663 = vld [vmem:[%s4648 + $0x70] sm:$0xff]
          %v4664 = vld [vmem:[%s4648 + $0x78] sm:$0xff]
          %v4665 = vrot.slane %v4649, 4
          %v4666 = vrot.slane %v4653, 4
          %v4667 = vrot.slane %v4657, 4
          %v4668 = vrot.slane %v4661, 4
          %v4669 = vrot.slane %v4650, 4
          %v4670 = vrot.slane %v4654, 4
          %v4671 = vrot.slane %v4658, 4
          %v4672 = vrot.slane %v4662, 4
          %v4673 = vrot.slane %v4651, 4
          %v4674 = vrot.slane %v4655, 4
          %v4675 = vrot.slane %v4659, 4
          %v4676 = vrot.slane %v4663, 4
          %v4677 = vrot.slane %v4652, 4
          %v4678 = vrot.slane %v4656, 4
          %v4679 = vrot.slane %v4660, 4
          %v4680 = vrot.slane %v4664, 4
          %v4681 = vsel %vm4293, %v4673, %v4677
          %v4682 = vsel %vm4293, %v4674, %v4678
          %v4683 = vsel %vm4293, %v4675, %v4679
          %v4684 = vsel %vm4293, %v4676, %v4680
          %v4685 = vsel %vm4293, %v4669, %v4673
          %v4686 = vsel %vm4293, %v4670, %v4674
          %v4687 = vsel %vm4293, %v4671, %v4675
          %v4688 = vsel %vm4293, %v4672, %v4676
          %v4689 = vsel %vm4293, %v4665, %v4669
          %v4690 = vsel %vm4293, %v4666, %v4670
          %v4691 = vsel %vm4293, %v4667, %v4671
          %v4692 = vsel %vm4293, %v4668, %v4672
          %v4693 = vsel %vm4293, %v4677, %v4665
          %v4694 = vsel %vm4293, %v4678, %v4666
          %v4695 = vsel %vm4293, %v4679, %v4667
          %v4696 = vsel %vm4293, %v4680, %v4668
          %4697 = vrot.lane.b32.xlu0 %v4693, 9
          %v4698 = vpop.permute.xlu0 %4697
          %4699 = vrot.lane.b32.xlu0 %v4689, 9
          %v4700 = vpop.permute.xlu0 %4699
          %4701 = vrot.lane.b32.xlu0 %v4685, 9
          %v4702 = vpop.permute.xlu0 %4701
          %4703 = vrot.lane.b32.xlu0 %v4681, 9
          %v4704 = vpop.permute.xlu0 %4703
          %4705 = vrot.lane.b32.xlu0 %v4694, 9
          %v4706 = vpop.permute.xlu0 %4705
          %4707 = vrot.lane.b32.xlu0 %v4690, 9
          %v4708 = vpop.permute.xlu0 %4707
          %4709 = vrot.lane.b32.xlu0 %v4686, 9
          %v4710 = vpop.permute.xlu0 %4709
          %4711 = vrot.lane.b32.xlu0 %v4682, 9
          %v4712 = vpop.permute.xlu0 %4711
          %4713 = vrot.lane.b32.xlu0 %v4695, 9
          %v4714 = vpop.permute.xlu0 %4713
          %4715 = vrot.lane.b32.xlu0 %v4691, 9
          %v4716 = vpop.permute.xlu0 %4715
          %4717 = vrot.lane.b32.xlu0 %v4687, 9
          %v4718 = vpop.permute.xlu0 %4717
          %4719 = vrot.lane.b32.xlu0 %v4683, 9
          %v4720 = vpop.permute.xlu0 %4719
          %4721 = vrot.lane.b32.xlu0 %v4696, 9
          %v4722 = vpop.permute.xlu0 %4721
          %4723 = vrot.lane.b32.xlu0 %v4692, 9
          %v4724 = vpop.permute.xlu0 %4723
          %4725 = vrot.lane.b32.xlu0 %v4688, 9
          %v4726 = vpop.permute.xlu0 %4725
          %4727 = vrot.lane.b32.xlu0 %v4684, 9
          %v4728 = vpop.permute.xlu0 %4727
          %v4729 = vsub.f32 %v4649, %v4698
          %v4730 = vsub.f32 %v4650, %v4700
          %v4731 = vsub.f32 %v4651, %v4702
          %v4732 = vsub.f32 %v4652, %v4704
          %v4733 = vsub.f32 %v4653, %v4706
          %v4734 = vsub.f32 %v4654, %v4708
          %v4735 = vsub.f32 %v4655, %v4710
          %v4736 = vsub.f32 %v4656, %v4712
          %v4737 = vsub.f32 %v4657, %v4714
          %v4738 = vsub.f32 %v4658, %v4716
          %v4739 = vsub.f32 %v4659, %v4718
          %v4740 = vsub.f32 %v4660, %v4720
          %v4741 = vsub.f32 %v4661, %v4722
          %v4742 = vsub.f32 %v4662, %v4724
          %v4743 = vsub.f32 %v4663, %v4726
          %v4744 = vsub.f32 %v4664, %v4728
          %v4745 = vmul.f32 %v4729, %v4729
          %v4746 = vmul.f32 %v4730, %v4730
          %v4747 = vmul.f32 %v4731, %v4731
          %v4748 = vmul.f32 %v4732, %v4732
          %v4749 = vmul.f32 %v4733, %v4733
          %v4750 = vmul.f32 %v4734, %v4734
          %v4751 = vmul.f32 %v4735, %v4735
          %v4752 = vmul.f32 %v4736, %v4736
          %v4753 = vmul.f32 %v4737, %v4737
          %v4754 = vmul.f32 %v4738, %v4738
          %v4755 = vmul.f32 %v4739, %v4739
          %v4756 = vmul.f32 %v4740, %v4740
          %v4757 = vmul.f32 %v4741, %v4741
          %v4758 = vmul.f32 %v4742, %v4742
          %v4759 = vmul.f32 %v4743, %v4743
          %v4760 = vmul.f32 %v4744, %v4744
          %v4761 = vadd.f32 %v4632, %v4745
          %v4762 = vadd.f32 %v4633, %v4746
          %v4763 = vadd.f32 %v4634, %v4747
          %v4764 = vadd.f32 %v4635, %v4748
          %v4765 = vadd.f32 %v4636, %v4749
          %v4766 = vadd.f32 %v4637, %v4750
          %v4767 = vadd.f32 %v4638, %v4751
          %v4768 = vadd.f32 %v4639, %v4752
          %v4769 = vadd.f32 %v4640, %v4753
          %v4770 = vadd.f32 %v4641, %v4754
          %v4771 = vadd.f32 %v4642, %v4755
          %v4772 = vadd.f32 %v4643, %v4756
          %v4773 = vadd.f32 %v4644, %v4757
          %v4774 = vadd.f32 %v4645, %v4758
          %v4775 = vadd.f32 %v4646, %v4759
          %v4776 = vadd.f32 %v4647, %v4760
          %v4777 = vmul.f32 %v4761, 25.0
          %v4778 = vmul.f32 %v4762, 25.0
          %v4779 = vmul.f32 %v4763, 25.0
          %v4780 = vmul.f32 %v4764, 25.0
          %v4781 = vmul.f32 %v4765, 25.0
          %v4782 = vmul.f32 %v4766, 25.0
          %v4783 = vmul.f32 %v4767, 25.0
          %v4784 = vmul.f32 %v4768, 25.0
          %v4785 = vmul.f32 %v4769, 25.0
          %v4786 = vmul.f32 %v4770, 25.0
          %v4787 = vmul.f32 %v4771, 25.0
          %v4788 = vmul.f32 %v4772, 25.0
          %v4789 = vmul.f32 %v4773, 25.0
          %v4790 = vmul.f32 %v4774, 25.0
          %v4791 = vmul.f32 %v4775, 25.0
          %v4792 = vmul.f32 %v4776, 25.0
          %v4793 = vtanh.pop %v4777
          %v4794 = vtanh.pop %v4778
          %v4795 = vtanh.pop %v4779
          %v4796 = vtanh.pop %v4780
          %v4797 = vtanh.pop %v4781
          %v4798 = vtanh.pop %v4782
          %v4799 = vtanh.pop %v4783
          %v4800 = vtanh.pop %v4784
          %v4801 = vtanh.pop %v4785
          %v4802 = vtanh.pop %v4786
          %v4803 = vtanh.pop %v4787
          %v4804 = vtanh.pop %v4788
          %v4805 = vtanh.pop %v4789
          %v4806 = vtanh.pop %v4790
          %v4807 = vtanh.pop %v4791
          %v4808 = vtanh.pop %v4792
          %v4809 = vsub.f32 1.0, %v4793
          %v4810 = vsub.f32 1.0, %v4794
          %v4811 = vsub.f32 1.0, %v4795
          %v4812 = vsub.f32 1.0, %v4796
          %v4813 = vsub.f32 1.0, %v4797
          %v4814 = vsub.f32 1.0, %v4798
          %v4815 = vsub.f32 1.0, %v4799
          %v4816 = vsub.f32 1.0, %v4800
          %v4817 = vsub.f32 1.0, %v4801
          %v4818 = vsub.f32 1.0, %v4802
          %v4819 = vsub.f32 1.0, %v4803
          %v4820 = vsub.f32 1.0, %v4804
          %v4821 = vsub.f32 1.0, %v4805
          %v4822 = vsub.f32 1.0, %v4806
          %v4823 = vsub.f32 1.0, %v4807
          %v4824 = vsub.f32 1.0, %v4808
          %v4825 = vadd.s32 %v4292, 8
          %v4826 = vadd.s32 %v4292, 16
          %v4827 = vadd.s32 %v4292, 24
          %vm4828 = vcmp.ge.s32.totalorder %v4292, 4
          %vm4829 = vcmp.ge.s32.totalorder %v4825, 4
          %vm4830 = vcmp.ge.s32.totalorder %v4826, 4
          %vm4831 = vcmp.ge.s32.totalorder %v4827, 4
          %v4832 = vlaneseq
          %v4833 = vand.u32 %v4832, 127
          %vm4834 = vcmp.ge.s32.totalorder %v4833, 9
          %vm4835 = vmand %vm4828, %vm4834
          %vm4836 = vmand %vm4829, %vm4834
          %vm4837 = vmand %vm4830, %vm4834
          %vm4838 = vmand %vm4831, %vm4834
          %v4839 = vsel %vm4835, 1, 0
          %v4840 = vsel %vm4836, 1, 0
          %v4841 = vsel %vm4837, 1, 0
          %v4842 = vsel %vm4838, 1, 0
          %vm4843 = vcmp.eq.s32.totalorder %v4839, 1
          %vm4844 = vcmp.eq.s32.totalorder %v4840, 1
          %vm4845 = vcmp.eq.s32.totalorder %v4841, 1
          %vm4846 = vcmp.eq.s32.totalorder %v4842, 1
          %v4847 = vsel %vm4843, %v4809, 1.0
          %v4848 = vsel %vm4844, %v4810, 1.0
          %v4849 = vsel %vm4845, %v4811, 1.0
          %v4850 = vsel %vm4846, %v4812, 1.0
          %v4851 = vsel %vm4843, %v4813, 1.0
          %v4852 = vsel %vm4844, %v4814, 1.0
          %v4853 = vsel %vm4845, %v4815, 1.0
          %v4854 = vsel %vm4846, %v4816, 1.0
          %v4855 = vsel %vm4843, %v4817, 1.0
          %v4856 = vsel %vm4844, %v4818, 1.0
          %v4857 = vsel %vm4845, %v4819, 1.0
          %v4858 = vsel %vm4846, %v4820, 1.0
          %v4859 = vsel %vm4843, %v4821, 1.0
          %v4860 = vsel %vm4844, %v4822, 1.0
          %v4861 = vsel %vm4845, %v4823, 1.0
          %v4862 = vsel %vm4846, %v4824, 1.0
          %4863 = vst [vmem:[%s148] sm:$0xff] %v4847
          %4864 = vst [vmem:[%s148 + $0x8] sm:$0xff] %v4848
          %4865 = vst [vmem:[%s148 + $0x10] sm:$0xff] %v4849
          %4866 = vst [vmem:[%s148 + $0x18] sm:$0xff] %v4850
          %4867 = vst [vmem:[%s148 + $0x20] sm:$0xff] %v4851
          %4868 = vst [vmem:[%s148 + $0x28] sm:$0xff] %v4852
          %4869 = vst [vmem:[%s148 + $0x30] sm:$0xff] %v4853
          %4870 = vst [vmem:[%s148 + $0x38] sm:$0xff] %v4854
          %4871 = vst [vmem:[%s148 + $0x40] sm:$0xff] %v4855
          %4872 = vst [vmem:[%s148 + $0x48] sm:$0xff] %v4856
          %4873 = vst [vmem:[%s148 + $0x50] sm:$0xff] %v4857
          %4874 = vst [vmem:[%s148 + $0x58] sm:$0xff] %v4858
          %4875 = vst [vmem:[%s148 + $0x60] sm:$0xff] %v4859
          %4876 = vst [vmem:[%s148 + $0x68] sm:$0xff] %v4860
          %4877 = vst [vmem:[%s148 + $0x70] sm:$0xff] %v4861
          %4878 = vst [vmem:[%s148 + $0x78] sm:$0xff] %v4862
        $region64: #{tpu_custom_call.1} parent=23 // pred_fallthru
          _
        %p4879 = scmp.eq.s32.totalorder %s23, 9
        // Predicated region
        $region65: #{tpu_custom_call.1} parent=23 // pred_check
          %p4880 = pneg %p4879
        $region66: #{tpu_custom_call.1} parent=23 // pred_check_branch
          %4882 = sbr.rel (%p4880) target = $region68
        $region67: #{tpu_custom_call.1} parent=23 // pred_region
          %v4883 = vld [vmem:[%s130] sm:$0xff]
          %v4884 = vld [vmem:[%s130 + $0x8] sm:$0xff]
          %v4885 = vld [vmem:[%s130 + $0x10] sm:$0xff]
          %v4886 = vld [vmem:[%s130 + $0x18] sm:$0xff]
          %v4887 = vld [vmem:[%s130 + $0x20] sm:$0xff]
          %v4888 = vld [vmem:[%s130 + $0x28] sm:$0xff]
          %v4889 = vld [vmem:[%s130 + $0x30] sm:$0xff]
          %v4890 = vld [vmem:[%s130 + $0x38] sm:$0xff]
          %v4891 = vld [vmem:[%s130 + $0x40] sm:$0xff]
          %v4892 = vld [vmem:[%s130 + $0x48] sm:$0xff]
          %v4893 = vld [vmem:[%s130 + $0x50] sm:$0xff]
          %v4894 = vld [vmem:[%s130 + $0x58] sm:$0xff]
          %v4895 = vld [vmem:[%s130 + $0x60] sm:$0xff]
          %v4896 = vld [vmem:[%s130 + $0x68] sm:$0xff]
          %v4897 = vld [vmem:[%s130 + $0x70] sm:$0xff]
          %v4898 = vld [vmem:[%s130 + $0x78] sm:$0xff]
          %v4899 = vrot.slane %v4883, 4
          %v4900 = vrot.slane %v4887, 4
          %v4901 = vrot.slane %v4891, 4
          %v4902 = vrot.slane %v4895, 4
          %v4903 = vrot.slane %v4884, 4
          %v4904 = vrot.slane %v4888, 4
          %v4905 = vrot.slane %v4892, 4
          %v4906 = vrot.slane %v4896, 4
          %v4907 = vrot.slane %v4885, 4
          %v4908 = vrot.slane %v4889, 4
          %v4909 = vrot.slane %v4893, 4
          %v4910 = vrot.slane %v4897, 4
          %v4911 = vrot.slane %v4886, 4
          %v4912 = vrot.slane %v4890, 4
          %v4913 = vrot.slane %v4894, 4
          %v4914 = vrot.slane %v4898, 4
          %v4915 = vlaneseq
          %v4916 = vshrl.u32 %v4915, 7
          %vm4917 = vcmp.lt.s32.totalorder %v4916, 4
          %v4918 = vsel %vm4917, %v4907, %v4911
          %v4919 = vsel %vm4917, %v4908, %v4912
          %v4920 = vsel %vm4917, %v4909, %v4913
          %v4921 = vsel %vm4917, %v4910, %v4914
          %v4922 = vsel %vm4917, %v4903, %v4907
          %v4923 = vsel %vm4917, %v4904, %v4908
          %v4924 = vsel %vm4917, %v4905, %v4909
          %v4925 = vsel %vm4917, %v4906, %v4910
          %v4926 = vsel %vm4917, %v4899, %v4903
          %v4927 = vsel %vm4917, %v4900, %v4904
          %v4928 = vsel %vm4917, %v4901, %v4905
          %v4929 = vsel %vm4917, %v4902, %v4906
          %v4930 = vsel %vm4917, %v4911, %v4899
          %v4931 = vsel %vm4917, %v4912, %v4900
          %v4932 = vsel %vm4917, %v4913, %v4901
          %v4933 = vsel %vm4917, %v4914, %v4902
          %4934 = vrot.lane.b32.xlu0 %v4926, 9
          %v4935 = vpop.permute.xlu0 %4934
          %4936 = vrot.lane.b32.xlu0 %v4922, 9
          %v4937 = vpop.permute.xlu0 %4936
          %4938 = vrot.lane.b32.xlu0 %v4918, 9
          %v4939 = vpop.permute.xlu0 %4938
          %4940 = vrot.lane.b32.xlu0 %v4930, 9
          %v4941 = vpop.permute.xlu0 %4940
          %4942 = vrot.lane.b32.xlu0 %v4927, 9
          %v4943 = vpop.permute.xlu0 %4942
          %4944 = vrot.lane.b32.xlu0 %v4923, 9
          %v4945 = vpop.permute.xlu0 %4944
          %4946 = vrot.lane.b32.xlu0 %v4919, 9
          %v4947 = vpop.permute.xlu0 %4946
          %4948 = vrot.lane.b32.xlu0 %v4931, 9
          %v4949 = vpop.permute.xlu0 %4948
          %4950 = vrot.lane.b32.xlu0 %v4928, 9
          %v4951 = vpop.permute.xlu0 %4950
          %4952 = vrot.lane.b32.xlu0 %v4924, 9
          %v4953 = vpop.permute.xlu0 %4952
          %4954 = vrot.lane.b32.xlu0 %v4920, 9
          %v4955 = vpop.permute.xlu0 %4954
          %4956 = vrot.lane.b32.xlu0 %v4932, 9
          %v4957 = vpop.permute.xlu0 %4956
          %4958 = vrot.lane.b32.xlu0 %v4929, 9
          %v4959 = vpop.permute.xlu0 %4958
          %4960 = vrot.lane.b32.xlu0 %v4925, 9
          %v4961 = vpop.permute.xlu0 %4960
          %4962 = vrot.lane.b32.xlu0 %v4921, 9
          %v4963 = vpop.permute.xlu0 %4962
          %4964 = vrot.lane.b32.xlu0 %v4933, 9
          %v4965 = vpop.permute.xlu0 %4964
          %v4966 = vsub.f32 %v4883, %v4935
          %v4967 = vsub.f32 %v4884, %v4937
          %v4968 = vsub.f32 %v4885, %v4939
          %v4969 = vsub.f32 %v4886, %v4941
          %v4970 = vsub.f32 %v4887, %v4943
          %v4971 = vsub.f32 %v4888, %v4945
          %v4972 = vsub.f32 %v4889, %v4947
          %v4973 = vsub.f32 %v4890, %v4949
          %v4974 = vsub.f32 %v4891, %v4951
          %v4975 = vsub.f32 %v4892, %v4953
          %v4976 = vsub.f32 %v4893, %v4955
          %v4977 = vsub.f32 %v4894, %v4957
          %v4978 = vsub.f32 %v4895, %v4959
          %v4979 = vsub.f32 %v4896, %v4961
          %v4980 = vsub.f32 %v4897, %v4963
          %v4981 = vsub.f32 %v4898, %v4965
          %v4982 = vmul.f32 %v4966, %v4966
          %v4983 = vmul.f32 %v4967, %v4967
          %v4984 = vmul.f32 %v4968, %v4968
          %v4985 = vmul.f32 %v4969, %v4969
          %v4986 = vmul.f32 %v4970, %v4970
          %v4987 = vmul.f32 %v4971, %v4971
          %v4988 = vmul.f32 %v4972, %v4972
          %v4989 = vmul.f32 %v4973, %v4973
          %v4990 = vmul.f32 %v4974, %v4974
          %v4991 = vmul.f32 %v4975, %v4975
          %v4992 = vmul.f32 %v4976, %v4976
          %v4993 = vmul.f32 %v4977, %v4977
          %v4994 = vmul.f32 %v4978, %v4978
          %v4995 = vmul.f32 %v4979, %v4979
          %v4996 = vmul.f32 %v4980, %v4980
          %v4997 = vmul.f32 %v4981, %v4981
          %v4998 = vadd.f32 %v4982, 0.0
          %v4999 = vadd.f32 %v4983, 0.0
          %v5000 = vadd.f32 %v4984, 0.0
          %v5001 = vadd.f32 %v4985, 0.0
          %v5002 = vadd.f32 %v4986, 0.0
          %v5003 = vadd.f32 %v4987, 0.0
          %v5004 = vadd.f32 %v4988, 0.0
          %v5005 = vadd.f32 %v4989, 0.0
          %v5006 = vadd.f32 %v4990, 0.0
          %v5007 = vadd.f32 %v4991, 0.0
          %v5008 = vadd.f32 %v4992, 0.0
          %v5009 = vadd.f32 %v4993, 0.0
          %v5010 = vadd.f32 %v4994, 0.0
          %v5011 = vadd.f32 %v4995, 0.0
          %v5012 = vadd.f32 %v4996, 0.0
          %v5013 = vadd.f32 %v4997, 0.0
          %s5014 = scalar_lea.vmem %s130, 128 [#allocation2]
          %v5015 = vld [vmem:[%s5014] sm:$0xff]
          %v5016 = vld [vmem:[%s5014 + $0x8] sm:$0xff]
          %v5017 = vld [vmem:[%s5014 + $0x10] sm:$0xff]
          %v5018 = vld [vmem:[%s5014 + $0x18] sm:$0xff]
          %v5019 = vld [vmem:[%s5014 + $0x20] sm:$0xff]
          %v5020 = vld [vmem:[%s5014 + $0x28] sm:$0xff]
          %v5021 = vld [vmem:[%s5014 + $0x30] sm:$0xff]
          %v5022 = vld [vmem:[%s5014 + $0x38] sm:$0xff]
          %v5023 = vld [vmem:[%s5014 + $0x40] sm:$0xff]
          %v5024 = vld [vmem:[%s5014 + $0x48] sm:$0xff]
          %v5025 = vld [vmem:[%s5014 + $0x50] sm:$0xff]
          %v5026 = vld [vmem:[%s5014 + $0x58] sm:$0xff]
          %v5027 = vld [vmem:[%s5014 + $0x60] sm:$0xff]
          %v5028 = vld [vmem:[%s5014 + $0x68] sm:$0xff]
          %v5029 = vld [vmem:[%s5014 + $0x70] sm:$0xff]
          %v5030 = vld [vmem:[%s5014 + $0x78] sm:$0xff]
          %v5031 = vrot.slane %v5015, 4
          %v5032 = vrot.slane %v5019, 4
          %v5033 = vrot.slane %v5023, 4
          %v5034 = vrot.slane %v5027, 4
          %v5035 = vrot.slane %v5016, 4
          %v5036 = vrot.slane %v5020, 4
          %v5037 = vrot.slane %v5024, 4
          %v5038 = vrot.slane %v5028, 4
          %v5039 = vrot.slane %v5017, 4
          %v5040 = vrot.slane %v5021, 4
          %v5041 = vrot.slane %v5025, 4
          %v5042 = vrot.slane %v5029, 4
          %v5043 = vrot.slane %v5018, 4
          %v5044 = vrot.slane %v5022, 4
          %v5045 = vrot.slane %v5026, 4
          %v5046 = vrot.slane %v5030, 4
          %v5047 = vsel %vm4917, %v5039, %v5043
          %v5048 = vsel %vm4917, %v5040, %v5044
          %v5049 = vsel %vm4917, %v5041, %v5045
          %v5050 = vsel %vm4917, %v5042, %v5046
          %v5051 = vsel %vm4917, %v5035, %v5039
          %v5052 = vsel %vm4917, %v5036, %v5040
          %v5053 = vsel %vm4917, %v5037, %v5041
          %v5054 = vsel %vm4917, %v5038, %v5042
          %v5055 = vsel %vm4917, %v5031, %v5035
          %v5056 = vsel %vm4917, %v5032, %v5036
          %v5057 = vsel %vm4917, %v5033, %v5037
          %v5058 = vsel %vm4917, %v5034, %v5038
          %v5059 = vsel %vm4917, %v5043, %v5031
          %v5060 = vsel %vm4917, %v5044, %v5032
          %v5061 = vsel %vm4917, %v5045, %v5033
          %v5062 = vsel %vm4917, %v5046, %v5034
          %5063 = vrot.lane.b32.xlu0 %v5055, 9
          %v5064 = vpop.permute.xlu0 %5063
          %5065 = vrot.lane.b32.xlu0 %v5051, 9
          %v5066 = vpop.permute.xlu0 %5065
          %5067 = vrot.lane.b32.xlu0 %v5047, 9
          %v5068 = vpop.permute.xlu0 %5067
          %5069 = vrot.lane.b32.xlu0 %v5059, 9
          %v5070 = vpop.permute.xlu0 %5069
          %5071 = vrot.lane.b32.xlu0 %v5056, 9
          %v5072 = vpop.permute.xlu0 %5071
          %5073 = vrot.lane.b32.xlu0 %v5052, 9
          %v5074 = vpop.permute.xlu0 %5073
          %5075 = vrot.lane.b32.xlu0 %v5048, 9
          %v5076 = vpop.permute.xlu0 %5075
          %5077 = vrot.lane.b32.xlu0 %v5060, 9
          %v5078 = vpop.permute.xlu0 %5077
          %5079 = vrot.lane.b32.xlu0 %v5057, 9
          %v5080 = vpop.permute.xlu0 %5079
          %5081 = vrot.lane.b32.xlu0 %v5053, 9
          %v5082 = vpop.permute.xlu0 %5081
          %5083 = vrot.lane.b32.xlu0 %v5049, 9
          %v5084 = vpop.permute.xlu0 %5083
          %5085 = vrot.lane.b32.xlu0 %v5061, 9
          %v5086 = vpop.permute.xlu0 %5085
          %5087 = vrot.lane.b32.xlu0 %v5058, 9
          %v5088 = vpop.permute.xlu0 %5087
          %5089 = vrot.lane.b32.xlu0 %v5054, 9
          %v5090 = vpop.permute.xlu0 %5089
          %5091 = vrot.lane.b32.xlu0 %v5050, 9
          %v5092 = vpop.permute.xlu0 %5091
          %5093 = vrot.lane.b32.xlu0 %v5062, 9
          %v5094 = vpop.permute.xlu0 %5093
          %v5095 = vsub.f32 %v5015, %v5064
          %v5096 = vsub.f32 %v5016, %v5066
          %v5097 = vsub.f32 %v5017, %v5068
          %v5098 = vsub.f32 %v5018, %v5070
          %v5099 = vsub.f32 %v5019, %v5072
          %v5100 = vsub.f32 %v5020, %v5074
          %v5101 = vsub.f32 %v5021, %v5076
          %v5102 = vsub.f32 %v5022, %v5078
          %v5103 = vsub.f32 %v5023, %v5080
          %v5104 = vsub.f32 %v5024, %v5082
          %v5105 = vsub.f32 %v5025, %v5084
          %v5106 = vsub.f32 %v5026, %v5086
          %v5107 = vsub.f32 %v5027, %v5088
          %v5108 = vsub.f32 %v5028, %v5090
          %v5109 = vsub.f32 %v5029, %v5092
          %v5110 = vsub.f32 %v5030, %v5094
          %v5111 = vmul.f32 %v5095, %v5095
          %v5112 = vmul.f32 %v5096, %v5096
          %v5113 = vmul.f32 %v5097, %v5097
          %v5114 = vmul.f32 %v5098, %v5098
          %v5115 = vmul.f32 %v5099, %v5099
          %v5116 = vmul.f32 %v5100, %v5100
          %v5117 = vmul.f32 %v5101, %v5101
          %v5118 = vmul.f32 %v5102, %v5102
          %v5119 = vmul.f32 %v5103, %v5103
          %v5120 = vmul.f32 %v5104, %v5104
          %v5121 = vmul.f32 %v5105, %v5105
          %v5122 = vmul.f32 %v5106, %v5106
          %v5123 = vmul.f32 %v5107, %v5107
          %v5124 = vmul.f32 %v5108, %v5108
          %v5125 = vmul.f32 %v5109, %v5109
          %v5126 = vmul.f32 %v5110, %v5110
          %v5127 = vadd.f32 %v4998, %v5111
          %v5128 = vadd.f32 %v4999, %v5112
          %v5129 = vadd.f32 %v5000, %v5113
          %v5130 = vadd.f32 %v5001, %v5114
          %v5131 = vadd.f32 %v5002, %v5115
          %v5132 = vadd.f32 %v5003, %v5116
          %v5133 = vadd.f32 %v5004, %v5117
          %v5134 = vadd.f32 %v5005, %v5118
          %v5135 = vadd.f32 %v5006, %v5119
          %v5136 = vadd.f32 %v5007, %v5120
          %v5137 = vadd.f32 %v5008, %v5121
          %v5138 = vadd.f32 %v5009, %v5122
          %v5139 = vadd.f32 %v5010, %v5123
          %v5140 = vadd.f32 %v5011, %v5124
          %v5141 = vadd.f32 %v5012, %v5125
          %v5142 = vadd.f32 %v5013, %v5126
          %s5143 = scalar_lea.vmem %s130, 256 [#allocation2]
          %v5144 = vld [vmem:[%s5143] sm:$0xff]
          %v5145 = vld [vmem:[%s5143 + $0x8] sm:$0xff]
          %v5146 = vld [vmem:[%s5143 + $0x10] sm:$0xff]
          %v5147 = vld [vmem:[%s5143 + $0x18] sm:$0xff]
          %v5148 = vld [vmem:[%s5143 + $0x20] sm:$0xff]
          %v5149 = vld [vmem:[%s5143 + $0x28] sm:$0xff]
          %v5150 = vld [vmem:[%s5143 + $0x30] sm:$0xff]
          %v5151 = vld [vmem:[%s5143 + $0x38] sm:$0xff]
          %v5152 = vld [vmem:[%s5143 + $0x40] sm:$0xff]
          %v5153 = vld [vmem:[%s5143 + $0x48] sm:$0xff]
          %v5154 = vld [vmem:[%s5143 + $0x50] sm:$0xff]
          %v5155 = vld [vmem:[%s5143 + $0x58] sm:$0xff]
          %v5156 = vld [vmem:[%s5143 + $0x60] sm:$0xff]
          %v5157 = vld [vmem:[%s5143 + $0x68] sm:$0xff]
          %v5158 = vld [vmem:[%s5143 + $0x70] sm:$0xff]
          %v5159 = vld [vmem:[%s5143 + $0x78] sm:$0xff]
          %v5160 = vrot.slane %v5144, 4
          %v5161 = vrot.slane %v5148, 4
          %v5162 = vrot.slane %v5152, 4
          %v5163 = vrot.slane %v5156, 4
          %v5164 = vrot.slane %v5145, 4
          %v5165 = vrot.slane %v5149, 4
          %v5166 = vrot.slane %v5153, 4
          %v5167 = vrot.slane %v5157, 4
          %v5168 = vrot.slane %v5146, 4
          %v5169 = vrot.slane %v5150, 4
          %v5170 = vrot.slane %v5154, 4
          %v5171 = vrot.slane %v5158, 4
          %v5172 = vrot.slane %v5147, 4
          %v5173 = vrot.slane %v5151, 4
          %v5174 = vrot.slane %v5155, 4
          %v5175 = vrot.slane %v5159, 4
          %v5176 = vsel %vm4917, %v5168, %v5172
          %v5177 = vsel %vm4917, %v5169, %v5173
          %v5178 = vsel %vm4917, %v5170, %v5174
          %v5179 = vsel %vm4917, %v5171, %v5175
          %v5180 = vsel %vm4917, %v5164, %v5168
          %v5181 = vsel %vm4917, %v5165, %v5169
          %v5182 = vsel %vm4917, %v5166, %v5170
          %v5183 = vsel %vm4917, %v5167, %v5171
          %v5184 = vsel %vm4917, %v5160, %v5164
          %v5185 = vsel %vm4917, %v5161, %v5165
          %v5186 = vsel %vm4917, %v5162, %v5166
          %v5187 = vsel %vm4917, %v5163, %v5167
          %v5188 = vsel %vm4917, %v5172, %v5160
          %v5189 = vsel %vm4917, %v5173, %v5161
          %v5190 = vsel %vm4917, %v5174, %v5162
          %v5191 = vsel %vm4917, %v5175, %v5163
          %5192 = vrot.lane.b32.xlu0 %v5184, 9
          %v5193 = vpop.permute.xlu0 %5192
          %5194 = vrot.lane.b32.xlu0 %v5180, 9
          %v5195 = vpop.permute.xlu0 %5194
          %5196 = vrot.lane.b32.xlu0 %v5176, 9
          %v5197 = vpop.permute.xlu0 %5196
          %5198 = vrot.lane.b32.xlu0 %v5188, 9
          %v5199 = vpop.permute.xlu0 %5198
          %5200 = vrot.lane.b32.xlu0 %v5185, 9
          %v5201 = vpop.permute.xlu0 %5200
          %5202 = vrot.lane.b32.xlu0 %v5181, 9
          %v5203 = vpop.permute.xlu0 %5202
          %5204 = vrot.lane.b32.xlu0 %v5177, 9
          %v5205 = vpop.permute.xlu0 %5204
          %5206 = vrot.lane.b32.xlu0 %v5189, 9
          %v5207 = vpop.permute.xlu0 %5206
          %5208 = vrot.lane.b32.xlu0 %v5186, 9
          %v5209 = vpop.permute.xlu0 %5208
          %5210 = vrot.lane.b32.xlu0 %v5182, 9
          %v5211 = vpop.permute.xlu0 %5210
          %5212 = vrot.lane.b32.xlu0 %v5178, 9
          %v5213 = vpop.permute.xlu0 %5212
          %5214 = vrot.lane.b32.xlu0 %v5190, 9
          %v5215 = vpop.permute.xlu0 %5214
          %5216 = vrot.lane.b32.xlu0 %v5187, 9
          %v5217 = vpop.permute.xlu0 %5216
          %5218 = vrot.lane.b32.xlu0 %v5183, 9
          %v5219 = vpop.permute.xlu0 %5218
          %5220 = vrot.lane.b32.xlu0 %v5179, 9
          %v5221 = vpop.permute.xlu0 %5220
          %5222 = vrot.lane.b32.xlu0 %v5191, 9
          %v5223 = vpop.permute.xlu0 %5222
          %v5224 = vsub.f32 %v5144, %v5193
          %v5225 = vsub.f32 %v5145, %v5195
          %v5226 = vsub.f32 %v5146, %v5197
          %v5227 = vsub.f32 %v5147, %v5199
          %v5228 = vsub.f32 %v5148, %v5201
          %v5229 = vsub.f32 %v5149, %v5203
          %v5230 = vsub.f32 %v5150, %v5205
          %v5231 = vsub.f32 %v5151, %v5207
          %v5232 = vsub.f32 %v5152, %v5209
          %v5233 = vsub.f32 %v5153, %v5211
          %v5234 = vsub.f32 %v5154, %v5213
          %v5235 = vsub.f32 %v5155, %v5215
          %v5236 = vsub.f32 %v5156, %v5217
          %v5237 = vsub.f32 %v5157, %v5219
          %v5238 = vsub.f32 %v5158, %v5221
          %v5239 = vsub.f32 %v5159, %v5223
          %v5240 = vmul.f32 %v5224, %v5224
          %v5241 = vmul.f32 %v5225, %v5225
          %v5242 = vmul.f32 %v5226, %v5226
          %v5243 = vmul.f32 %v5227, %v5227
          %v5244 = vmul.f32 %v5228, %v5228
          %v5245 = vmul.f32 %v5229, %v5229
          %v5246 = vmul.f32 %v5230, %v5230
          %v5247 = vmul.f32 %v5231, %v5231
          %v5248 = vmul.f32 %v5232, %v5232
          %v5249 = vmul.f32 %v5233, %v5233
          %v5250 = vmul.f32 %v5234, %v5234
          %v5251 = vmul.f32 %v5235, %v5235
          %v5252 = vmul.f32 %v5236, %v5236
          %v5253 = vmul.f32 %v5237, %v5237
          %v5254 = vmul.f32 %v5238, %v5238
          %v5255 = vmul.f32 %v5239, %v5239
          %v5256 = vadd.f32 %v5127, %v5240
          %v5257 = vadd.f32 %v5128, %v5241
          %v5258 = vadd.f32 %v5129, %v5242
          %v5259 = vadd.f32 %v5130, %v5243
          %v5260 = vadd.f32 %v5131, %v5244
          %v5261 = vadd.f32 %v5132, %v5245
          %v5262 = vadd.f32 %v5133, %v5246
          %v5263 = vadd.f32 %v5134, %v5247
          %v5264 = vadd.f32 %v5135, %v5248
          %v5265 = vadd.f32 %v5136, %v5249
          %v5266 = vadd.f32 %v5137, %v5250
          %v5267 = vadd.f32 %v5138, %v5251
          %v5268 = vadd.f32 %v5139, %v5252
          %v5269 = vadd.f32 %v5140, %v5253
          %v5270 = vadd.f32 %v5141, %v5254
          %v5271 = vadd.f32 %v5142, %v5255
          %s5272 = scalar_lea.vmem %s130, 384 [#allocation2]
          %v5273 = vld [vmem:[%s5272] sm:$0xff]
          %v5274 = vld [vmem:[%s5272 + $0x8] sm:$0xff]
          %v5275 = vld [vmem:[%s5272 + $0x10] sm:$0xff]
          %v5276 = vld [vmem:[%s5272 + $0x18] sm:$0xff]
          %v5277 = vld [vmem:[%s5272 + $0x20] sm:$0xff]
          %v5278 = vld [vmem:[%s5272 + $0x28] sm:$0xff]
          %v5279 = vld [vmem:[%s5272 + $0x30] sm:$0xff]
          %v5280 = vld [vmem:[%s5272 + $0x38] sm:$0xff]
          %v5281 = vld [vmem:[%s5272 + $0x40] sm:$0xff]
          %v5282 = vld [vmem:[%s5272 + $0x48] sm:$0xff]
          %v5283 = vld [vmem:[%s5272 + $0x50] sm:$0xff]
          %v5284 = vld [vmem:[%s5272 + $0x58] sm:$0xff]
          %v5285 = vld [vmem:[%s5272 + $0x60] sm:$0xff]
          %v5286 = vld [vmem:[%s5272 + $0x68] sm:$0xff]
          %v5287 = vld [vmem:[%s5272 + $0x70] sm:$0xff]
          %v5288 = vld [vmem:[%s5272 + $0x78] sm:$0xff]
          %v5289 = vrot.slane %v5273, 4
          %v5290 = vrot.slane %v5277, 4
          %v5291 = vrot.slane %v5281, 4
          %v5292 = vrot.slane %v5285, 4
          %v5293 = vrot.slane %v5274, 4
          %v5294 = vrot.slane %v5278, 4
          %v5295 = vrot.slane %v5282, 4
          %v5296 = vrot.slane %v5286, 4
          %v5297 = vrot.slane %v5275, 4
          %v5298 = vrot.slane %v5279, 4
          %v5299 = vrot.slane %v5283, 4
          %v5300 = vrot.slane %v5287, 4
          %v5301 = vrot.slane %v5276, 4
          %v5302 = vrot.slane %v5280, 4
          %v5303 = vrot.slane %v5284, 4
          %v5304 = vrot.slane %v5288, 4
          %v5305 = vsel %vm4917, %v5297, %v5301
          %v5306 = vsel %vm4917, %v5298, %v5302
          %v5307 = vsel %vm4917, %v5299, %v5303
          %v5308 = vsel %vm4917, %v5300, %v5304
          %v5309 = vsel %vm4917, %v5293, %v5297
          %v5310 = vsel %vm4917, %v5294, %v5298
          %v5311 = vsel %vm4917, %v5295, %v5299
          %v5312 = vsel %vm4917, %v5296, %v5300
          %v5313 = vsel %vm4917, %v5289, %v5293
          %v5314 = vsel %vm4917, %v5290, %v5294
          %v5315 = vsel %vm4917, %v5291, %v5295
          %v5316 = vsel %vm4917, %v5292, %v5296
          %v5317 = vsel %vm4917, %v5301, %v5289
          %v5318 = vsel %vm4917, %v5302, %v5290
          %v5319 = vsel %vm4917, %v5303, %v5291
          %v5320 = vsel %vm4917, %v5304, %v5292
          %5321 = vrot.lane.b32.xlu0 %v5313, 9
          %v5322 = vpop.permute.xlu0 %5321
          %5323 = vrot.lane.b32.xlu0 %v5309, 9
          %v5324 = vpop.permute.xlu0 %5323
          %5325 = vrot.lane.b32.xlu0 %v5305, 9
          %v5326 = vpop.permute.xlu0 %5325
          %5327 = vrot.lane.b32.xlu0 %v5317, 9
          %v5328 = vpop.permute.xlu0 %5327
          %5329 = vrot.lane.b32.xlu0 %v5314, 9
          %v5330 = vpop.permute.xlu0 %5329
          %5331 = vrot.lane.b32.xlu0 %v5310, 9
          %v5332 = vpop.permute.xlu0 %5331
          %5333 = vrot.lane.b32.xlu0 %v5306, 9
          %v5334 = vpop.permute.xlu0 %5333
          %5335 = vrot.lane.b32.xlu0 %v5318, 9
          %v5336 = vpop.permute.xlu0 %5335
          %5337 = vrot.lane.b32.xlu0 %v5315, 9
          %v5338 = vpop.permute.xlu0 %5337
          %5339 = vrot.lane.b32.xlu0 %v5311, 9
          %v5340 = vpop.permute.xlu0 %5339
          %5341 = vrot.lane.b32.xlu0 %v5307, 9
          %v5342 = vpop.permute.xlu0 %5341
          %5343 = vrot.lane.b32.xlu0 %v5319, 9
          %v5344 = vpop.permute.xlu0 %5343
          %5345 = vrot.lane.b32.xlu0 %v5316, 9
          %v5346 = vpop.permute.xlu0 %5345
          %5347 = vrot.lane.b32.xlu0 %v5312, 9
          %v5348 = vpop.permute.xlu0 %5347
          %5349 = vrot.lane.b32.xlu0 %v5308, 9
          %v5350 = vpop.permute.xlu0 %5349
          %5351 = vrot.lane.b32.xlu0 %v5320, 9
          %v5352 = vpop.permute.xlu0 %5351
          %v5353 = vsub.f32 %v5273, %v5322
          %v5354 = vsub.f32 %v5274, %v5324
          %v5355 = vsub.f32 %v5275, %v5326
          %v5356 = vsub.f32 %v5276, %v5328
          %v5357 = vsub.f32 %v5277, %v5330
          %v5358 = vsub.f32 %v5278, %v5332
          %v5359 = vsub.f32 %v5279, %v5334
          %v5360 = vsub.f32 %v5280, %v5336
          %v5361 = vsub.f32 %v5281, %v5338
          %v5362 = vsub.f32 %v5282, %v5340
          %v5363 = vsub.f32 %v5283, %v5342
          %v5364 = vsub.f32 %v5284, %v5344
          %v5365 = vsub.f32 %v5285, %v5346
          %v5366 = vsub.f32 %v5286, %v5348
          %v5367 = vsub.f32 %v5287, %v5350
          %v5368 = vsub.f32 %v5288, %v5352
          %v5369 = vmul.f32 %v5353, %v5353
          %v5370 = vmul.f32 %v5354, %v5354
          %v5371 = vmul.f32 %v5355, %v5355
          %v5372 = vmul.f32 %v5356, %v5356
          %v5373 = vmul.f32 %v5357, %v5357
          %v5374 = vmul.f32 %v5358, %v5358
          %v5375 = vmul.f32 %v5359, %v5359
          %v5376 = vmul.f32 %v5360, %v5360
          %v5377 = vmul.f32 %v5361, %v5361
          %v5378 = vmul.f32 %v5362, %v5362
          %v5379 = vmul.f32 %v5363, %v5363
          %v5380 = vmul.f32 %v5364, %v5364
          %v5381 = vmul.f32 %v5365, %v5365
          %v5382 = vmul.f32 %v5366, %v5366
          %v5383 = vmul.f32 %v5367, %v5367
          %v5384 = vmul.f32 %v5368, %v5368
          %v5385 = vadd.f32 %v5256, %v5369
          %v5386 = vadd.f32 %v5257, %v5370
          %v5387 = vadd.f32 %v5258, %v5371
          %v5388 = vadd.f32 %v5259, %v5372
          %v5389 = vadd.f32 %v5260, %v5373
          %v5390 = vadd.f32 %v5261, %v5374
          %v5391 = vadd.f32 %v5262, %v5375
          %v5392 = vadd.f32 %v5263, %v5376
          %v5393 = vadd.f32 %v5264, %v5377
          %v5394 = vadd.f32 %v5265, %v5378
          %v5395 = vadd.f32 %v5266, %v5379
          %v5396 = vadd.f32 %v5267, %v5380
          %v5397 = vadd.f32 %v5268, %v5381
          %v5398 = vadd.f32 %v5269, %v5382
          %v5399 = vadd.f32 %v5270, %v5383
          %v5400 = vadd.f32 %v5271, %v5384
          %v5401 = vmul.f32 %v5385, 25.0
          %v5402 = vmul.f32 %v5386, 25.0
          %v5403 = vmul.f32 %v5387, 25.0
          %v5404 = vmul.f32 %v5388, 25.0
          %v5405 = vmul.f32 %v5389, 25.0
          %v5406 = vmul.f32 %v5390, 25.0
          %v5407 = vmul.f32 %v5391, 25.0
          %v5408 = vmul.f32 %v5392, 25.0
          %v5409 = vmul.f32 %v5393, 25.0
          %v5410 = vmul.f32 %v5394, 25.0
          %v5411 = vmul.f32 %v5395, 25.0
          %v5412 = vmul.f32 %v5396, 25.0
          %v5413 = vmul.f32 %v5397, 25.0
          %v5414 = vmul.f32 %v5398, 25.0
          %v5415 = vmul.f32 %v5399, 25.0
          %v5416 = vmul.f32 %v5400, 25.0
          %v5417 = vtanh.pop %v5401
          %v5418 = vtanh.pop %v5402
          %v5419 = vtanh.pop %v5403
          %v5420 = vtanh.pop %v5404
          %v5421 = vtanh.pop %v5405
          %v5422 = vtanh.pop %v5406
          %v5423 = vtanh.pop %v5407
          %v5424 = vtanh.pop %v5408
          %v5425 = vtanh.pop %v5409
          %v5426 = vtanh.pop %v5410
          %v5427 = vtanh.pop %v5411
          %v5428 = vtanh.pop %v5412
          %v5429 = vtanh.pop %v5413
          %v5430 = vtanh.pop %v5414
          %v5431 = vtanh.pop %v5415
          %v5432 = vtanh.pop %v5416
          %v5433 = vsub.f32 1.0, %v5417
          %v5434 = vsub.f32 1.0, %v5418
          %v5435 = vsub.f32 1.0, %v5419
          %v5436 = vsub.f32 1.0, %v5420
          %v5437 = vsub.f32 1.0, %v5421
          %v5438 = vsub.f32 1.0, %v5422
          %v5439 = vsub.f32 1.0, %v5423
          %v5440 = vsub.f32 1.0, %v5424
          %v5441 = vsub.f32 1.0, %v5425
          %v5442 = vsub.f32 1.0, %v5426
          %v5443 = vsub.f32 1.0, %v5427
          %v5444 = vsub.f32 1.0, %v5428
          %v5445 = vsub.f32 1.0, %v5429
          %v5446 = vsub.f32 1.0, %v5430
          %v5447 = vsub.f32 1.0, %v5431
          %v5448 = vsub.f32 1.0, %v5432
          %v5449 = vadd.s32 %v4916, 8
          %v5450 = vadd.s32 %v4916, 16
          %v5451 = vadd.s32 %v4916, 24
          %vm5452 = vcmp.lt.s32.totalorder %v4916, 28
          %vm5453 = vcmp.lt.s32.totalorder %v5449, 28
          %vm5454 = vcmp.lt.s32.totalorder %v5450, 28
          %vm5455 = vcmp.lt.s32.totalorder %v5451, 28
          %v5456 = vlaneseq
          %v5457 = vand.u32 %v5456, 127
          %vm5458 = vcmp.ge.s32.totalorder %v5457, 9
          %vm5459 = vmand %vm5452, %vm5458
          %vm5460 = vmand %vm5453, %vm5458
          %vm5461 = vmand %vm5454, %vm5458
          %vm5462 = vmand %vm5455, %vm5458
          %v5463 = vsel %vm5459, 1, 0
          %v5464 = vsel %vm5460, 1, 0
          %v5465 = vsel %vm5461, 1, 0
          %v5466 = vsel %vm5462, 1, 0
          %vm5467 = vcmp.eq.s32.totalorder %v5463, 1
          %vm5468 = vcmp.eq.s32.totalorder %v5464, 1
          %vm5469 = vcmp.eq.s32.totalorder %v5465, 1
          %vm5470 = vcmp.eq.s32.totalorder %v5466, 1
          %v5471 = vsel %vm5467, %v5433, 1.0
          %v5472 = vsel %vm5468, %v5434, 1.0
          %v5473 = vsel %vm5469, %v5435, 1.0
          %v5474 = vsel %vm5470, %v5436, 1.0
          %v5475 = vsel %vm5467, %v5437, 1.0
          %v5476 = vsel %vm5468, %v5438, 1.0
          %v5477 = vsel %vm5469, %v5439, 1.0
          %v5478 = vsel %vm5470, %v5440, 1.0
          %v5479 = vsel %vm5467, %v5441, 1.0
          %v5480 = vsel %vm5468, %v5442, 1.0
          %v5481 = vsel %vm5469, %v5443, 1.0
          %v5482 = vsel %vm5470, %v5444, 1.0
          %v5483 = vsel %vm5467, %v5445, 1.0
          %v5484 = vsel %vm5468, %v5446, 1.0
          %v5485 = vsel %vm5469, %v5447, 1.0
          %v5486 = vsel %vm5470, %v5448, 1.0
          %5487 = vst [vmem:[%s148] sm:$0xff] %v5471
          %5488 = vst [vmem:[%s148 + $0x8] sm:$0xff] %v5472
          %5489 = vst [vmem:[%s148 + $0x10] sm:$0xff] %v5473
          %5490 = vst [vmem:[%s148 + $0x18] sm:$0xff] %v5474
          %5491 = vst [vmem:[%s148 + $0x20] sm:$0xff] %v5475
          %5492 = vst [vmem:[%s148 + $0x28] sm:$0xff] %v5476
          %5493 = vst [vmem:[%s148 + $0x30] sm:$0xff] %v5477
          %5494 = vst [vmem:[%s148 + $0x38] sm:$0xff] %v5478
          %5495 = vst [vmem:[%s148 + $0x40] sm:$0xff] %v5479
          %5496 = vst [vmem:[%s148 + $0x48] sm:$0xff] %v5480
          %5497 = vst [vmem:[%s148 + $0x50] sm:$0xff] %v5481
          %5498 = vst [vmem:[%s148 + $0x58] sm:$0xff] %v5482
          %5499 = vst [vmem:[%s148 + $0x60] sm:$0xff] %v5483
          %5500 = vst [vmem:[%s148 + $0x68] sm:$0xff] %v5484
          %5501 = vst [vmem:[%s148 + $0x70] sm:$0xff] %v5485
          %5502 = vst [vmem:[%s148 + $0x78] sm:$0xff] %v5486
        $region68: #{tpu_custom_call.1} parent=23 // pred_fallthru
          _
        %p5503 = scmp.eq.s32.totalorder %s23, 10
        // Predicated region
        $region69: #{tpu_custom_call.1} parent=23 // pred_check
          %p5504 = pneg %p5503
        $region70: #{tpu_custom_call.1} parent=23 // pred_check_branch
          %5506 = sbr.rel (%p5504) target = $region72
        $region71: #{tpu_custom_call.1} parent=23 // pred_region
          %v5507 = vld [vmem:[%s130] sm:$0xff]
          %v5508 = vld [vmem:[%s130 + $0x8] sm:$0xff]
          %v5509 = vld [vmem:[%s130 + $0x10] sm:$0xff]
          %v5510 = vld [vmem:[%s130 + $0x18] sm:$0xff]
          %v5511 = vld [vmem:[%s130 + $0x20] sm:$0xff]
          %v5512 = vld [vmem:[%s130 + $0x28] sm:$0xff]
          %v5513 = vld [vmem:[%s130 + $0x30] sm:$0xff]
          %v5514 = vld [vmem:[%s130 + $0x38] sm:$0xff]
          %v5515 = vld [vmem:[%s130 + $0x40] sm:$0xff]
          %v5516 = vld [vmem:[%s130 + $0x48] sm:$0xff]
          %v5517 = vld [vmem:[%s130 + $0x50] sm:$0xff]
          %v5518 = vld [vmem:[%s130 + $0x58] sm:$0xff]
          %v5519 = vld [vmem:[%s130 + $0x60] sm:$0xff]
          %v5520 = vld [vmem:[%s130 + $0x68] sm:$0xff]
          %v5521 = vld [vmem:[%s130 + $0x70] sm:$0xff]
          %v5522 = vld [vmem:[%s130 + $0x78] sm:$0xff]
          %v5523 = vrot.slane %v5507, 1
          %v5524 = vrot.slane %v5511, 1
          %v5525 = vrot.slane %v5515, 1
          %v5526 = vrot.slane %v5519, 1
          %v5527 = vrot.slane %v5508, 1
          %v5528 = vrot.slane %v5512, 1
          %v5529 = vrot.slane %v5516, 1
          %v5530 = vrot.slane %v5520, 1
          %v5531 = vrot.slane %v5509, 1
          %v5532 = vrot.slane %v5513, 1
          %v5533 = vrot.slane %v5517, 1
          %v5534 = vrot.slane %v5521, 1
          %v5535 = vrot.slane %v5510, 1
          %v5536 = vrot.slane %v5514, 1
          %v5537 = vrot.slane %v5518, 1
          %v5538 = vrot.slane %v5522, 1
          %v5539 = vlaneseq
          %v5540 = vshrl.u32 %v5539, 7
          %vm5541 = vcmp.lt.s32.totalorder %v5540, 7
          %v5542 = vsel %vm5541, %v5531, %v5535
          %v5543 = vsel %vm5541, %v5532, %v5536
          %v5544 = vsel %vm5541, %v5533, %v5537
          %v5545 = vsel %vm5541, %v5534, %v5538
          %v5546 = vsel %vm5541, %v5527, %v5531
          %v5547 = vsel %vm5541, %v5528, %v5532
          %v5548 = vsel %vm5541, %v5529, %v5533
          %v5549 = vsel %vm5541, %v5530, %v5534
          %v5550 = vsel %vm5541, %v5523, %v5527
          %v5551 = vsel %vm5541, %v5524, %v5528
          %v5552 = vsel %vm5541, %v5525, %v5529
          %v5553 = vsel %vm5541, %v5526, %v5530
          %v5554 = vsel %vm5541, %v5535, %v5523
          %v5555 = vsel %vm5541, %v5536, %v5524
          %v5556 = vsel %vm5541, %v5537, %v5525
          %v5557 = vsel %vm5541, %v5538, %v5526
          %5558 = vrot.lane.b32.xlu0 %v5546, 4
          %v5559 = vpop.permute.xlu0 %5558
          %5560 = vrot.lane.b32.xlu0 %v5542, 4
          %v5561 = vpop.permute.xlu0 %5560
          %5562 = vrot.lane.b32.xlu0 %v5554, 4
          %v5563 = vpop.permute.xlu0 %5562
          %5564 = vrot.lane.b32.xlu0 %v5550, 4
          %v5565 = vpop.permute.xlu0 %5564
          %5566 = vrot.lane.b32.xlu0 %v5547, 4
          %v5567 = vpop.permute.xlu0 %5566
          %5568 = vrot.lane.b32.xlu0 %v5543, 4
          %v5569 = vpop.permute.xlu0 %5568
          %5570 = vrot.lane.b32.xlu0 %v5555, 4
          %v5571 = vpop.permute.xlu0 %5570
          %5572 = vrot.lane.b32.xlu0 %v5551, 4
          %v5573 = vpop.permute.xlu0 %5572
          %5574 = vrot.lane.b32.xlu0 %v5548, 4
          %v5575 = vpop.permute.xlu0 %5574
          %5576 = vrot.lane.b32.xlu0 %v5544, 4
          %v5577 = vpop.permute.xlu0 %5576
          %5578 = vrot.lane.b32.xlu0 %v5556, 4
          %v5579 = vpop.permute.xlu0 %5578
          %5580 = vrot.lane.b32.xlu0 %v5552, 4
          %v5581 = vpop.permute.xlu0 %5580
          %5582 = vrot.lane.b32.xlu0 %v5549, 4
          %v5583 = vpop.permute.xlu0 %5582
          %5584 = vrot.lane.b32.xlu0 %v5545, 4
          %v5585 = vpop.permute.xlu0 %5584
          %5586 = vrot.lane.b32.xlu0 %v5557, 4
          %v5587 = vpop.permute.xlu0 %5586
          %5588 = vrot.lane.b32.xlu0 %v5553, 4
          %v5589 = vpop.permute.xlu0 %5588
          %v5590 = vsub.f32 %v5507, %v5559
          %v5591 = vsub.f32 %v5508, %v5561
          %v5592 = vsub.f32 %v5509, %v5563
          %v5593 = vsub.f32 %v5510, %v5565
          %v5594 = vsub.f32 %v5511, %v5567
          %v5595 = vsub.f32 %v5512, %v5569
          %v5596 = vsub.f32 %v5513, %v5571
          %v5597 = vsub.f32 %v5514, %v5573
          %v5598 = vsub.f32 %v5515, %v5575
          %v5599 = vsub.f32 %v5516, %v5577
          %v5600 = vsub.f32 %v5517, %v5579
          %v5601 = vsub.f32 %v5518, %v5581
          %v5602 = vsub.f32 %v5519, %v5583
          %v5603 = vsub.f32 %v5520, %v5585
          %v5604 = vsub.f32 %v5521, %v5587
          %v5605 = vsub.f32 %v5522, %v5589
          %v5606 = vmul.f32 %v5590, %v5590
          %v5607 = vmul.f32 %v5591, %v5591
          %v5608 = vmul.f32 %v5592, %v5592
          %v5609 = vmul.f32 %v5593, %v5593
          %v5610 = vmul.f32 %v5594, %v5594
          %v5611 = vmul.f32 %v5595, %v5595
          %v5612 = vmul.f32 %v5596, %v5596
          %v5613 = vmul.f32 %v5597, %v5597
          %v5614 = vmul.f32 %v5598, %v5598
          %v5615 = vmul.f32 %v5599, %v5599
          %v5616 = vmul.f32 %v5600, %v5600
          %v5617 = vmul.f32 %v5601, %v5601
          %v5618 = vmul.f32 %v5602, %v5602
          %v5619 = vmul.f32 %v5603, %v5603
          %v5620 = vmul.f32 %v5604, %v5604
          %v5621 = vmul.f32 %v5605, %v5605
          %v5622 = vadd.f32 %v5606, 0.0
          %v5623 = vadd.f32 %v5607, 0.0
          %v5624 = vadd.f32 %v5608, 0.0
          %v5625 = vadd.f32 %v5609, 0.0
          %v5626 = vadd.f32 %v5610, 0.0
          %v5627 = vadd.f32 %v5611, 0.0
          %v5628 = vadd.f32 %v5612, 0.0
          %v5629 = vadd.f32 %v5613, 0.0
          %v5630 = vadd.f32 %v5614, 0.0
          %v5631 = vadd.f32 %v5615, 0.0
          %v5632 = vadd.f32 %v5616, 0.0
          %v5633 = vadd.f32 %v5617, 0.0
          %v5634 = vadd.f32 %v5618, 0.0
          %v5635 = vadd.f32 %v5619, 0.0
          %v5636 = vadd.f32 %v5620, 0.0
          %v5637 = vadd.f32 %v5621, 0.0
          %s5638 = scalar_lea.vmem %s130, 128 [#allocation2]
          %v5639 = vld [vmem:[%s5638] sm:$0xff]
          %v5640 = vld [vmem:[%s5638 + $0x8] sm:$0xff]
          %v5641 = vld [vmem:[%s5638 + $0x10] sm:$0xff]
          %v5642 = vld [vmem:[%s5638 + $0x18] sm:$0xff]
          %v5643 = vld [vmem:[%s5638 + $0x20] sm:$0xff]
          %v5644 = vld [vmem:[%s5638 + $0x28] sm:$0xff]
          %v5645 = vld [vmem:[%s5638 + $0x30] sm:$0xff]
          %v5646 = vld [vmem:[%s5638 + $0x38] sm:$0xff]
          %v5647 = vld [vmem:[%s5638 + $0x40] sm:$0xff]
          %v5648 = vld [vmem:[%s5638 + $0x48] sm:$0xff]
          %v5649 = vld [vmem:[%s5638 + $0x50] sm:$0xff]
          %v5650 = vld [vmem:[%s5638 + $0x58] sm:$0xff]
          %v5651 = vld [vmem:[%s5638 + $0x60] sm:$0xff]
          %v5652 = vld [vmem:[%s5638 + $0x68] sm:$0xff]
          %v5653 = vld [vmem:[%s5638 + $0x70] sm:$0xff]
          %v5654 = vld [vmem:[%s5638 + $0x78] sm:$0xff]
          %v5655 = vrot.slane %v5639, 1
          %v5656 = vrot.slane %v5643, 1
          %v5657 = vrot.slane %v5647, 1
          %v5658 = vrot.slane %v5651, 1
          %v5659 = vrot.slane %v5640, 1
          %v5660 = vrot.slane %v5644, 1
          %v5661 = vrot.slane %v5648, 1
          %v5662 = vrot.slane %v5652, 1
          %v5663 = vrot.slane %v5641, 1
          %v5664 = vrot.slane %v5645, 1
          %v5665 = vrot.slane %v5649, 1
          %v5666 = vrot.slane %v5653, 1
          %v5667 = vrot.slane %v5642, 1
          %v5668 = vrot.slane %v5646, 1
          %v5669 = vrot.slane %v5650, 1
          %v5670 = vrot.slane %v5654, 1
          %v5671 = vsel %vm5541, %v5663, %v5667
          %v5672 = vsel %vm5541, %v5664, %v5668
          %v5673 = vsel %vm5541, %v5665, %v5669
          %v5674 = vsel %vm5541, %v5666, %v5670
          %v5675 = vsel %vm5541, %v5659, %v5663
          %v5676 = vsel %vm5541, %v5660, %v5664
          %v5677 = vsel %vm5541, %v5661, %v5665
          %v5678 = vsel %vm5541, %v5662, %v5666
          %v5679 = vsel %vm5541, %v5655, %v5659
          %v5680 = vsel %vm5541, %v5656, %v5660
          %v5681 = vsel %vm5541, %v5657, %v5661
          %v5682 = vsel %vm5541, %v5658, %v5662
          %v5683 = vsel %vm5541, %v5667, %v5655
          %v5684 = vsel %vm5541, %v5668, %v5656
          %v5685 = vsel %vm5541, %v5669, %v5657
          %v5686 = vsel %vm5541, %v5670, %v5658
          %5687 = vrot.lane.b32.xlu0 %v5675, 4
          %v5688 = vpop.permute.xlu0 %5687
          %5689 = vrot.lane.b32.xlu0 %v5671, 4
          %v5690 = vpop.permute.xlu0 %5689
          %5691 = vrot.lane.b32.xlu0 %v5683, 4
          %v5692 = vpop.permute.xlu0 %5691
          %5693 = vrot.lane.b32.xlu0 %v5679, 4
          %v5694 = vpop.permute.xlu0 %5693
          %5695 = vrot.lane.b32.xlu0 %v5676, 4
          %v5696 = vpop.permute.xlu0 %5695
          %5697 = vrot.lane.b32.xlu0 %v5672, 4
          %v5698 = vpop.permute.xlu0 %5697
          %5699 = vrot.lane.b32.xlu0 %v5684, 4
          %v5700 = vpop.permute.xlu0 %5699
          %5701 = vrot.lane.b32.xlu0 %v5680, 4
          %v5702 = vpop.permute.xlu0 %5701
          %5703 = vrot.lane.b32.xlu0 %v5677, 4
          %v5704 = vpop.permute.xlu0 %5703
          %5705 = vrot.lane.b32.xlu0 %v5673, 4
          %v5706 = vpop.permute.xlu0 %5705
          %5707 = vrot.lane.b32.xlu0 %v5685, 4
          %v5708 = vpop.permute.xlu0 %5707
          %5709 = vrot.lane.b32.xlu0 %v5681, 4
          %v5710 = vpop.permute.xlu0 %5709
          %5711 = vrot.lane.b32.xlu0 %v5678, 4
          %v5712 = vpop.permute.xlu0 %5711
          %5713 = vrot.lane.b32.xlu0 %v5674, 4
          %v5714 = vpop.permute.xlu0 %5713
          %5715 = vrot.lane.b32.xlu0 %v5686, 4
          %v5716 = vpop.permute.xlu0 %5715
          %5717 = vrot.lane.b32.xlu0 %v5682, 4
          %v5718 = vpop.permute.xlu0 %5717
          %v5719 = vsub.f32 %v5639, %v5688
          %v5720 = vsub.f32 %v5640, %v5690
          %v5721 = vsub.f32 %v5641, %v5692
          %v5722 = vsub.f32 %v5642, %v5694
          %v5723 = vsub.f32 %v5643, %v5696
          %v5724 = vsub.f32 %v5644, %v5698
          %v5725 = vsub.f32 %v5645, %v5700
          %v5726 = vsub.f32 %v5646, %v5702
          %v5727 = vsub.f32 %v5647, %v5704
          %v5728 = vsub.f32 %v5648, %v5706
          %v5729 = vsub.f32 %v5649, %v5708
          %v5730 = vsub.f32 %v5650, %v5710
          %v5731 = vsub.f32 %v5651, %v5712
          %v5732 = vsub.f32 %v5652, %v5714
          %v5733 = vsub.f32 %v5653, %v5716
          %v5734 = vsub.f32 %v5654, %v5718
          %v5735 = vmul.f32 %v5719, %v5719
          %v5736 = vmul.f32 %v5720, %v5720
          %v5737 = vmul.f32 %v5721, %v5721
          %v5738 = vmul.f32 %v5722, %v5722
          %v5739 = vmul.f32 %v5723, %v5723
          %v5740 = vmul.f32 %v5724, %v5724
          %v5741 = vmul.f32 %v5725, %v5725
          %v5742 = vmul.f32 %v5726, %v5726
          %v5743 = vmul.f32 %v5727, %v5727
          %v5744 = vmul.f32 %v5728, %v5728
          %v5745 = vmul.f32 %v5729, %v5729
          %v5746 = vmul.f32 %v5730, %v5730
          %v5747 = vmul.f32 %v5731, %v5731
          %v5748 = vmul.f32 %v5732, %v5732
          %v5749 = vmul.f32 %v5733, %v5733
          %v5750 = vmul.f32 %v5734, %v5734
          %v5751 = vadd.f32 %v5622, %v5735
          %v5752 = vadd.f32 %v5623, %v5736
          %v5753 = vadd.f32 %v5624, %v5737
          %v5754 = vadd.f32 %v5625, %v5738
          %v5755 = vadd.f32 %v5626, %v5739
          %v5756 = vadd.f32 %v5627, %v5740
          %v5757 = vadd.f32 %v5628, %v5741
          %v5758 = vadd.f32 %v5629, %v5742
          %v5759 = vadd.f32 %v5630, %v5743
          %v5760 = vadd.f32 %v5631, %v5744
          %v5761 = vadd.f32 %v5632, %v5745
          %v5762 = vadd.f32 %v5633, %v5746
          %v5763 = vadd.f32 %v5634, %v5747
          %v5764 = vadd.f32 %v5635, %v5748
          %v5765 = vadd.f32 %v5636, %v5749
          %v5766 = vadd.f32 %v5637, %v5750
          %s5767 = scalar_lea.vmem %s130, 256 [#allocation2]
          %v5768 = vld [vmem:[%s5767] sm:$0xff]
          %v5769 = vld [vmem:[%s5767 + $0x8] sm:$0xff]
          %v5770 = vld [vmem:[%s5767 + $0x10] sm:$0xff]
          %v5771 = vld [vmem:[%s5767 + $0x18] sm:$0xff]
          %v5772 = vld [vmem:[%s5767 + $0x20] sm:$0xff]
          %v5773 = vld [vmem:[%s5767 + $0x28] sm:$0xff]
          %v5774 = vld [vmem:[%s5767 + $0x30] sm:$0xff]
          %v5775 = vld [vmem:[%s5767 + $0x38] sm:$0xff]
          %v5776 = vld [vmem:[%s5767 + $0x40] sm:$0xff]
          %v5777 = vld [vmem:[%s5767 + $0x48] sm:$0xff]
          %v5778 = vld [vmem:[%s5767 + $0x50] sm:$0xff]
          %v5779 = vld [vmem:[%s5767 + $0x58] sm:$0xff]
          %v5780 = vld [vmem:[%s5767 + $0x60] sm:$0xff]
          %v5781 = vld [vmem:[%s5767 + $0x68] sm:$0xff]
          %v5782 = vld [vmem:[%s5767 + $0x70] sm:$0xff]
          %v5783 = vld [vmem:[%s5767 + $0x78] sm:$0xff]
          %v5784 = vrot.slane %v5768, 1
          %v5785 = vrot.slane %v5772, 1
          %v5786 = vrot.slane %v5776, 1
          %v5787 = vrot.slane %v5780, 1
          %v5788 = vrot.slane %v5769, 1
          %v5789 = vrot.slane %v5773, 1
          %v5790 = vrot.slane %v5777, 1
          %v5791 = vrot.slane %v5781, 1
          %v5792 = vrot.slane %v5770, 1
          %v5793 = vrot.slane %v5774, 1
          %v5794 = vrot.slane %v5778, 1
          %v5795 = vrot.slane %v5782, 1
          %v5796 = vrot.slane %v5771, 1
          %v5797 = vrot.slane %v5775, 1
          %v5798 = vrot.slane %v5779, 1
          %v5799 = vrot.slane %v5783, 1
          %v5800 = vsel %vm5541, %v5792, %v5796
          %v5801 = vsel %vm5541, %v5793, %v5797
          %v5802 = vsel %vm5541, %v5794, %v5798
          %v5803 = vsel %vm5541, %v5795, %v5799
          %v5804 = vsel %vm5541, %v5788, %v5792
          %v5805 = vsel %vm5541, %v5789, %v5793
          %v5806 = vsel %vm5541, %v5790, %v5794
          %v5807 = vsel %vm5541, %v5791, %v5795
          %v5808 = vsel %vm5541, %v5784, %v5788
          %v5809 = vsel %vm5541, %v5785, %v5789
          %v5810 = vsel %vm5541, %v5786, %v5790
          %v5811 = vsel %vm5541, %v5787, %v5791
          %v5812 = vsel %vm5541, %v5796, %v5784
          %v5813 = vsel %vm5541, %v5797, %v5785
          %v5814 = vsel %vm5541, %v5798, %v5786
          %v5815 = vsel %vm5541, %v5799, %v5787
          %5816 = vrot.lane.b32.xlu0 %v5804, 4
          %v5817 = vpop.permute.xlu0 %5816
          %5818 = vrot.lane.b32.xlu0 %v5800, 4
          %v5819 = vpop.permute.xlu0 %5818
          %5820 = vrot.lane.b32.xlu0 %v5812, 4
          %v5821 = vpop.permute.xlu0 %5820
          %5822 = vrot.lane.b32.xlu0 %v5808, 4
          %v5823 = vpop.permute.xlu0 %5822
          %5824 = vrot.lane.b32.xlu0 %v5805, 4
          %v5825 = vpop.permute.xlu0 %5824
          %5826 = vrot.lane.b32.xlu0 %v5801, 4
          %v5827 = vpop.permute.xlu0 %5826
          %5828 = vrot.lane.b32.xlu0 %v5813, 4
          %v5829 = vpop.permute.xlu0 %5828
          %5830 = vrot.lane.b32.xlu0 %v5809, 4
          %v5831 = vpop.permute.xlu0 %5830
          %5832 = vrot.lane.b32.xlu0 %v5806, 4
          %v5833 = vpop.permute.xlu0 %5832
          %5834 = vrot.lane.b32.xlu0 %v5802, 4
          %v5835 = vpop.permute.xlu0 %5834
          %5836 = vrot.lane.b32.xlu0 %v5814, 4
          %v5837 = vpop.permute.xlu0 %5836
          %5838 = vrot.lane.b32.xlu0 %v5810, 4
          %v5839 = vpop.permute.xlu0 %5838
          %5840 = vrot.lane.b32.xlu0 %v5807, 4
          %v5841 = vpop.permute.xlu0 %5840
          %5842 = vrot.lane.b32.xlu0 %v5803, 4
          %v5843 = vpop.permute.xlu0 %5842
          %5844 = vrot.lane.b32.xlu0 %v5815, 4
          %v5845 = vpop.permute.xlu0 %5844
          %5846 = vrot.lane.b32.xlu0 %v5811, 4
          %v5847 = vpop.permute.xlu0 %5846
          %v5848 = vsub.f32 %v5768, %v5817
          %v5849 = vsub.f32 %v5769, %v5819
          %v5850 = vsub.f32 %v5770, %v5821
          %v5851 = vsub.f32 %v5771, %v5823
          %v5852 = vsub.f32 %v5772, %v5825
          %v5853 = vsub.f32 %v5773, %v5827
          %v5854 = vsub.f32 %v5774, %v5829
          %v5855 = vsub.f32 %v5775, %v5831
          %v5856 = vsub.f32 %v5776, %v5833
          %v5857 = vsub.f32 %v5777, %v5835
          %v5858 = vsub.f32 %v5778, %v5837
          %v5859 = vsub.f32 %v5779, %v5839
          %v5860 = vsub.f32 %v5780, %v5841
          %v5861 = vsub.f32 %v5781, %v5843
          %v5862 = vsub.f32 %v5782, %v5845
          %v5863 = vsub.f32 %v5783, %v5847
          %v5864 = vmul.f32 %v5848, %v5848
          %v5865 = vmul.f32 %v5849, %v5849
          %v5866 = vmul.f32 %v5850, %v5850
          %v5867 = vmul.f32 %v5851, %v5851
          %v5868 = vmul.f32 %v5852, %v5852
          %v5869 = vmul.f32 %v5853, %v5853
          %v5870 = vmul.f32 %v5854, %v5854
          %v5871 = vmul.f32 %v5855, %v5855
          %v5872 = vmul.f32 %v5856, %v5856
          %v5873 = vmul.f32 %v5857, %v5857
          %v5874 = vmul.f32 %v5858, %v5858
          %v5875 = vmul.f32 %v5859, %v5859
          %v5876 = vmul.f32 %v5860, %v5860
          %v5877 = vmul.f32 %v5861, %v5861
          %v5878 = vmul.f32 %v5862, %v5862
          %v5879 = vmul.f32 %v5863, %v5863
          %v5880 = vadd.f32 %v5751, %v5864
          %v5881 = vadd.f32 %v5752, %v5865
          %v5882 = vadd.f32 %v5753, %v5866
          %v5883 = vadd.f32 %v5754, %v5867
          %v5884 = vadd.f32 %v5755, %v5868
          %v5885 = vadd.f32 %v5756, %v5869
          %v5886 = vadd.f32 %v5757, %v5870
          %v5887 = vadd.f32 %v5758, %v5871
          %v5888 = vadd.f32 %v5759, %v5872
          %v5889 = vadd.f32 %v5760, %v5873
          %v5890 = vadd.f32 %v5761, %v5874
          %v5891 = vadd.f32 %v5762, %v5875
          %v5892 = vadd.f32 %v5763, %v5876
          %v5893 = vadd.f32 %v5764, %v5877
          %v5894 = vadd.f32 %v5765, %v5878
          %v5895 = vadd.f32 %v5766, %v5879
          %s5896 = scalar_lea.vmem %s130, 384 [#allocation2]
          %v5897 = vld [vmem:[%s5896] sm:$0xff]
          %v5898 = vld [vmem:[%s5896 + $0x8] sm:$0xff]
          %v5899 = vld [vmem:[%s5896 + $0x10] sm:$0xff]
          %v5900 = vld [vmem:[%s5896 + $0x18] sm:$0xff]
          %v5901 = vld [vmem:[%s5896 + $0x20] sm:$0xff]
          %v5902 = vld [vmem:[%s5896 + $0x28] sm:$0xff]
          %v5903 = vld [vmem:[%s5896 + $0x30] sm:$0xff]
          %v5904 = vld [vmem:[%s5896 + $0x38] sm:$0xff]
          %v5905 = vld [vmem:[%s5896 + $0x40] sm:$0xff]
          %v5906 = vld [vmem:[%s5896 + $0x48] sm:$0xff]
          %v5907 = vld [vmem:[%s5896 + $0x50] sm:$0xff]
          %v5908 = vld [vmem:[%s5896 + $0x58] sm:$0xff]
          %v5909 = vld [vmem:[%s5896 + $0x60] sm:$0xff]
          %v5910 = vld [vmem:[%s5896 + $0x68] sm:$0xff]
          %v5911 = vld [vmem:[%s5896 + $0x70] sm:$0xff]
          %v5912 = vld [vmem:[%s5896 + $0x78] sm:$0xff]
          %v5913 = vrot.slane %v5897, 1
          %v5914 = vrot.slane %v5901, 1
          %v5915 = vrot.slane %v5905, 1
          %v5916 = vrot.slane %v5909, 1
          %v5917 = vrot.slane %v5898, 1
          %v5918 = vrot.slane %v5902, 1
          %v5919 = vrot.slane %v5906, 1
          %v5920 = vrot.slane %v5910, 1
          %v5921 = vrot.slane %v5899, 1
          %v5922 = vrot.slane %v5903, 1
          %v5923 = vrot.slane %v5907, 1
          %v5924 = vrot.slane %v5911, 1
          %v5925 = vrot.slane %v5900, 1
          %v5926 = vrot.slane %v5904, 1
          %v5927 = vrot.slane %v5908, 1
          %v5928 = vrot.slane %v5912, 1
          %v5929 = vsel %vm5541, %v5921, %v5925
          %v5930 = vsel %vm5541, %v5922, %v5926
          %v5931 = vsel %vm5541, %v5923, %v5927
          %v5932 = vsel %vm5541, %v5924, %v5928
          %v5933 = vsel %vm5541, %v5917, %v5921
          %v5934 = vsel %vm5541, %v5918, %v5922
          %v5935 = vsel %vm5541, %v5919, %v5923
          %v5936 = vsel %vm5541, %v5920, %v5924
          %v5937 = vsel %vm5541, %v5913, %v5917
          %v5938 = vsel %vm5541, %v5914, %v5918
          %v5939 = vsel %vm5541, %v5915, %v5919
          %v5940 = vsel %vm5541, %v5916, %v5920
          %v5941 = vsel %vm5541, %v5925, %v5913
          %v5942 = vsel %vm5541, %v5926, %v5914
          %v5943 = vsel %vm5541, %v5927, %v5915
          %v5944 = vsel %vm5541, %v5928, %v5916
          %5945 = vrot.lane.b32.xlu0 %v5933, 4
          %v5946 = vpop.permute.xlu0 %5945
          %5947 = vrot.lane.b32.xlu0 %v5929, 4
          %v5948 = vpop.permute.xlu0 %5947
          %5949 = vrot.lane.b32.xlu0 %v5941, 4
          %v5950 = vpop.permute.xlu0 %5949
          %5951 = vrot.lane.b32.xlu0 %v5937, 4
          %v5952 = vpop.permute.xlu0 %5951
          %5953 = vrot.lane.b32.xlu0 %v5934, 4
          %v5954 = vpop.permute.xlu0 %5953
          %5955 = vrot.lane.b32.xlu0 %v5930, 4
          %v5956 = vpop.permute.xlu0 %5955
          %5957 = vrot.lane.b32.xlu0 %v5942, 4
          %v5958 = vpop.permute.xlu0 %5957
          %5959 = vrot.lane.b32.xlu0 %v5938, 4
          %v5960 = vpop.permute.xlu0 %5959
          %5961 = vrot.lane.b32.xlu0 %v5935, 4
          %v5962 = vpop.permute.xlu0 %5961
          %5963 = vrot.lane.b32.xlu0 %v5931, 4
          %v5964 = vpop.permute.xlu0 %5963
          %5965 = vrot.lane.b32.xlu0 %v5943, 4
          %v5966 = vpop.permute.xlu0 %5965
          %5967 = vrot.lane.b32.xlu0 %v5939, 4
          %v5968 = vpop.permute.xlu0 %5967
          %5969 = vrot.lane.b32.xlu0 %v5936, 4
          %v5970 = vpop.permute.xlu0 %5969
          %5971 = vrot.lane.b32.xlu0 %v5932, 4
          %v5972 = vpop.permute.xlu0 %5971
          %5973 = vrot.lane.b32.xlu0 %v5944, 4
          %v5974 = vpop.permute.xlu0 %5973
          %5975 = vrot.lane.b32.xlu0 %v5940, 4
          %v5976 = vpop.permute.xlu0 %5975
          %v5977 = vsub.f32 %v5897, %v5946
          %v5978 = vsub.f32 %v5898, %v5948
          %v5979 = vsub.f32 %v5899, %v5950
          %v5980 = vsub.f32 %v5900, %v5952
          %v5981 = vsub.f32 %v5901, %v5954
          %v5982 = vsub.f32 %v5902, %v5956
          %v5983 = vsub.f32 %v5903, %v5958
          %v5984 = vsub.f32 %v5904, %v5960
          %v5985 = vsub.f32 %v5905, %v5962
          %v5986 = vsub.f32 %v5906, %v5964
          %v5987 = vsub.f32 %v5907, %v5966
          %v5988 = vsub.f32 %v5908, %v5968
          %v5989 = vsub.f32 %v5909, %v5970
          %v5990 = vsub.f32 %v5910, %v5972
          %v5991 = vsub.f32 %v5911, %v5974
          %v5992 = vsub.f32 %v5912, %v5976
          %v5993 = vmul.f32 %v5977, %v5977
          %v5994 = vmul.f32 %v5978, %v5978
          %v5995 = vmul.f32 %v5979, %v5979
          %v5996 = vmul.f32 %v5980, %v5980
          %v5997 = vmul.f32 %v5981, %v5981
          %v5998 = vmul.f32 %v5982, %v5982
          %v5999 = vmul.f32 %v5983, %v5983
          %v6000 = vmul.f32 %v5984, %v5984
          %v6001 = vmul.f32 %v5985, %v5985
          %v6002 = vmul.f32 %v5986, %v5986
          %v6003 = vmul.f32 %v5987, %v5987
          %v6004 = vmul.f32 %v5988, %v5988
          %v6005 = vmul.f32 %v5989, %v5989
          %v6006 = vmul.f32 %v5990, %v5990
          %v6007 = vmul.f32 %v5991, %v5991
          %v6008 = vmul.f32 %v5992, %v5992
          %v6009 = vadd.f32 %v5880, %v5993
          %v6010 = vadd.f32 %v5881, %v5994
          %v6011 = vadd.f32 %v5882, %v5995
          %v6012 = vadd.f32 %v5883, %v5996
          %v6013 = vadd.f32 %v5884, %v5997
          %v6014 = vadd.f32 %v5885, %v5998
          %v6015 = vadd.f32 %v5886, %v5999
          %v6016 = vadd.f32 %v5887, %v6000
          %v6017 = vadd.f32 %v5888, %v6001
          %v6018 = vadd.f32 %v5889, %v6002
          %v6019 = vadd.f32 %v5890, %v6003
          %v6020 = vadd.f32 %v5891, %v6004
          %v6021 = vadd.f32 %v5892, %v6005
          %v6022 = vadd.f32 %v5893, %v6006
          %v6023 = vadd.f32 %v5894, %v6007
          %v6024 = vadd.f32 %v5895, %v6008
          %v6025 = vmul.f32 %v6009, 25.0
          %v6026 = vmul.f32 %v6010, 25.0
          %v6027 = vmul.f32 %v6011, 25.0
          %v6028 = vmul.f32 %v6012, 25.0
          %v6029 = vmul.f32 %v6013, 25.0
          %v6030 = vmul.f32 %v6014, 25.0
          %v6031 = vmul.f32 %v6015, 25.0
          %v6032 = vmul.f32 %v6016, 25.0
          %v6033 = vmul.f32 %v6017, 25.0
          %v6034 = vmul.f32 %v6018, 25.0
          %v6035 = vmul.f32 %v6019, 25.0
          %v6036 = vmul.f32 %v6020, 25.0
          %v6037 = vmul.f32 %v6021, 25.0
          %v6038 = vmul.f32 %v6022, 25.0
          %v6039 = vmul.f32 %v6023, 25.0
          %v6040 = vmul.f32 %v6024, 25.0
          %v6041 = vtanh.pop %v6025
          %v6042 = vtanh.pop %v6026
          %v6043 = vtanh.pop %v6027
          %v6044 = vtanh.pop %v6028
          %v6045 = vtanh.pop %v6029
          %v6046 = vtanh.pop %v6030
          %v6047 = vtanh.pop %v6031
          %v6048 = vtanh.pop %v6032
          %v6049 = vtanh.pop %v6033
          %v6050 = vtanh.pop %v6034
          %v6051 = vtanh.pop %v6035
          %v6052 = vtanh.pop %v6036
          %v6053 = vtanh.pop %v6037
          %v6054 = vtanh.pop %v6038
          %v6055 = vtanh.pop %v6039
          %v6056 = vtanh.pop %v6040
          %v6057 = vsub.f32 1.0, %v6041
          %v6058 = vsub.f32 1.0, %v6042
          %v6059 = vsub.f32 1.0, %v6043
          %v6060 = vsub.f32 1.0, %v6044
          %v6061 = vsub.f32 1.0, %v6045
          %v6062 = vsub.f32 1.0, %v6046
          %v6063 = vsub.f32 1.0, %v6047
          %v6064 = vsub.f32 1.0, %v6048
          %v6065 = vsub.f32 1.0, %v6049
          %v6066 = vsub.f32 1.0, %v6050
          %v6067 = vsub.f32 1.0, %v6051
          %v6068 = vsub.f32 1.0, %v6052
          %v6069 = vsub.f32 1.0, %v6053
          %v6070 = vsub.f32 1.0, %v6054
          %v6071 = vsub.f32 1.0, %v6055
          %v6072 = vsub.f32 1.0, %v6056
          %v6073 = vadd.s32 %v5540, 8
          %v6074 = vadd.s32 %v5540, 16
          %v6075 = vadd.s32 %v5540, 24
          %vm6076 = vcmp.lt.s32.totalorder %v5540, 23
          %vm6077 = vcmp.lt.s32.totalorder %v6073, 23
          %vm6078 = vcmp.lt.s32.totalorder %v6074, 23
          %vm6079 = vcmp.lt.s32.totalorder %v6075, 23
          %v6080 = vlaneseq
          %v6081 = vand.u32 %v6080, 127
          %vm6082 = vcmp.ge.s32.totalorder %v6081, 4
          %vm6083 = vmand %vm6076, %vm6082
          %vm6084 = vmand %vm6077, %vm6082
          %vm6085 = vmand %vm6078, %vm6082
          %vm6086 = vmand %vm6079, %vm6082
          %v6087 = vsel %vm6083, 1, 0
          %v6088 = vsel %vm6084, 1, 0
          %v6089 = vsel %vm6085, 1, 0
          %v6090 = vsel %vm6086, 1, 0
          %vm6091 = vcmp.eq.s32.totalorder %v6087, 1
          %vm6092 = vcmp.eq.s32.totalorder %v6088, 1
          %vm6093 = vcmp.eq.s32.totalorder %v6089, 1
          %vm6094 = vcmp.eq.s32.totalorder %v6090, 1
          %v6095 = vsel %vm6091, %v6057, 1.0
          %v6096 = vsel %vm6092, %v6058, 1.0
          %v6097 = vsel %vm6093, %v6059, 1.0
          %v6098 = vsel %vm6094, %v6060, 1.0
          %v6099 = vsel %vm6091, %v6061, 1.0
          %v6100 = vsel %vm6092, %v6062, 1.0
          %v6101 = vsel %vm6093, %v6063, 1.0
          %v6102 = vsel %vm6094, %v6064, 1.0
          %v6103 = vsel %vm6091, %v6065, 1.0
          %v6104 = vsel %vm6092, %v6066, 1.0
          %v6105 = vsel %vm6093, %v6067, 1.0
          %v6106 = vsel %vm6094, %v6068, 1.0
          %v6107 = vsel %vm6091, %v6069, 1.0
          %v6108 = vsel %vm6092, %v6070, 1.0
          %v6109 = vsel %vm6093, %v6071, 1.0
          %v6110 = vsel %vm6094, %v6072, 1.0
          %6111 = vst [vmem:[%s148] sm:$0xff] %v6095
          %6112 = vst [vmem:[%s148 + $0x8] sm:$0xff] %v6096
          %6113 = vst [vmem:[%s148 + $0x10] sm:$0xff] %v6097
          %6114 = vst [vmem:[%s148 + $0x18] sm:$0xff] %v6098
          %6115 = vst [vmem:[%s148 + $0x20] sm:$0xff] %v6099
          %6116 = vst [vmem:[%s148 + $0x28] sm:$0xff] %v6100
          %6117 = vst [vmem:[%s148 + $0x30] sm:$0xff] %v6101
          %6118 = vst [vmem:[%s148 + $0x38] sm:$0xff] %v6102
          %6119 = vst [vmem:[%s148 + $0x40] sm:$0xff] %v6103
          %6120 = vst [vmem:[%s148 + $0x48] sm:$0xff] %v6104
          %6121 = vst [vmem:[%s148 + $0x50] sm:$0xff] %v6105
          %6122 = vst [vmem:[%s148 + $0x58] sm:$0xff] %v6106
          %6123 = vst [vmem:[%s148 + $0x60] sm:$0xff] %v6107
          %6124 = vst [vmem:[%s148 + $0x68] sm:$0xff] %v6108
          %6125 = vst [vmem:[%s148 + $0x70] sm:$0xff] %v6109
          %6126 = vst [vmem:[%s148 + $0x78] sm:$0xff] %v6110
        $region72: #{tpu_custom_call.1} parent=23 // pred_fallthru
          _
        %p6127 = scmp.eq.s32.totalorder %s23, 11
        // Predicated region
        $region73: #{tpu_custom_call.1} parent=23 // pred_check
          %p6128 = pneg %p6127
        $region74: #{tpu_custom_call.1} parent=23 // pred_check_branch
          %6130 = sbr.rel (%p6128) target = $region76
        $region75: #{tpu_custom_call.1} parent=23 // pred_region
          %s6131 = scalar_lea.vmem %s130, 32 [#allocation2]
          %v6132 = vld [vmem:[%s6131] sm:$0xff]
          %v6133 = vld [vmem:[%s6131 + $0x8] sm:$0xff]
          %v6134 = vld [vmem:[%s6131 + $0x10] sm:$0xff]
          %v6135 = vld [vmem:[%s6131 + $0x18] sm:$0xff]
          %v6136 = vld [vmem:[%s6131 + $0x20] sm:$0xff]
          %v6137 = vld [vmem:[%s6131 + $0x28] sm:$0xff]
          %v6138 = vld [vmem:[%s6131 + $0x30] sm:$0xff]
          %v6139 = vld [vmem:[%s6131 + $0x38] sm:$0xff]
          %v6140 = vld [vmem:[%s6131 + $0x40] sm:$0xff]
          %v6141 = vld [vmem:[%s6131 + $0x48] sm:$0xff]
          %v6142 = vld [vmem:[%s6131 + $0x50] sm:$0xff]
          %v6143 = vld [vmem:[%s6131 + $0x58] sm:$0xff]
          %v6144 = vld [vmem:[%s130] sm:$0xff]
          %v6145 = vld [vmem:[%s130 + $0x8] sm:$0xff]
          %v6146 = vld [vmem:[%s130 + $0x10] sm:$0xff]
          %v6147 = vld [vmem:[%s130 + $0x18] sm:$0xff]
          %v6148 = vld [vmem:[%s130 + $0x20] sm:$0xff]
          %v6149 = vld [vmem:[%s130 + $0x28] sm:$0xff]
          %v6150 = vld [vmem:[%s130 + $0x30] sm:$0xff]
          %v6151 = vld [vmem:[%s130 + $0x38] sm:$0xff]
          %v6152 = vld [vmem:[%s130 + $0x40] sm:$0xff]
          %v6153 = vld [vmem:[%s130 + $0x48] sm:$0xff]
          %v6154 = vld [vmem:[%s130 + $0x50] sm:$0xff]
          %v6155 = vld [vmem:[%s130 + $0x58] sm:$0xff]
          %v6156 = vrot.slane %v6144, 7
          %v6157 = vrot.slane %v6148, 7
          %v6158 = vrot.slane %v6152, 7
          %v6159 = vrot.slane %v6145, 7
          %v6160 = vrot.slane %v6149, 7
          %v6161 = vrot.slane %v6153, 7
          %v6162 = vrot.slane %v6146, 7
          %v6163 = vrot.slane %v6150, 7
          %v6164 = vrot.slane %v6154, 7
          %v6165 = vrot.slane %v6147, 7
          %v6166 = vrot.slane %v6151, 7
          %v6167 = vrot.slane %v6155, 7
          %v6168 = vlaneseq
          %v6169 = vshrl.u32 %v6168, 7
          %vm6170 = vcmp.lt.s32.totalorder %v6169, 1
          %v6171 = vsel %vm6170, %v6162, %v6165
          %v6172 = vsel %vm6170, %v6163, %v6166
          %v6173 = vsel %vm6170, %v6164, %v6167
          %v6174 = vsel %vm6170, %v6159, %v6162
          %v6175 = vsel %vm6170, %v6160, %v6163
          %v6176 = vsel %vm6170, %v6161, %v6164
          %v6177 = vsel %vm6170, %v6156, %v6159
          %v6178 = vsel %vm6170, %v6157, %v6160
          %v6179 = vsel %vm6170, %v6158, %v6161
          %v6180 = vsel %vm6170, %v6165, %v6156
          %v6181 = vsel %vm6170, %v6166, %v6157
          %v6182 = vsel %vm6170, %v6167, %v6158
          %v6183 = vsub.f32 %v6132, %v6180
          %v6184 = vsub.f32 %v6133, %v6177
          %v6185 = vsub.f32 %v6134, %v6174
          %v6186 = vsub.f32 %v6135, %v6171
          %v6187 = vsub.f32 %v6136, %v6181
          %v6188 = vsub.f32 %v6137, %v6178
          %v6189 = vsub.f32 %v6138, %v6175
          %v6190 = vsub.f32 %v6139, %v6172
          %v6191 = vsub.f32 %v6140, %v6182
          %v6192 = vsub.f32 %v6141, %v6179
          %v6193 = vsub.f32 %v6142, %v6176
          %v6194 = vsub.f32 %v6143, %v6173
          %v6195 = vmul.f32 %v6183, %v6183
          %v6196 = vmul.f32 %v6184, %v6184
          %v6197 = vmul.f32 %v6185, %v6185
          %v6198 = vmul.f32 %v6186, %v6186
          %v6199 = vmul.f32 %v6187, %v6187
          %v6200 = vmul.f32 %v6188, %v6188
          %v6201 = vmul.f32 %v6189, %v6189
          %v6202 = vmul.f32 %v6190, %v6190
          %v6203 = vmul.f32 %v6191, %v6191
          %v6204 = vmul.f32 %v6192, %v6192
          %v6205 = vmul.f32 %v6193, %v6193
          %v6206 = vmul.f32 %v6194, %v6194
          %v6207 = vadd.f32 %v6195, 0.0
          %v6208 = vadd.f32 %v6196, 0.0
          %v6209 = vadd.f32 %v6197, 0.0
          %v6210 = vadd.f32 %v6198, 0.0
          %v6211 = vadd.f32 %v6199, 0.0
          %v6212 = vadd.f32 %v6200, 0.0
          %v6213 = vadd.f32 %v6201, 0.0
          %v6214 = vadd.f32 %v6202, 0.0
          %v6215 = vadd.f32 %v6203, 0.0
          %v6216 = vadd.f32 %v6204, 0.0
          %v6217 = vadd.f32 %v6205, 0.0
          %v6218 = vadd.f32 %v6206, 0.0
          %s6219 = scalar_lea.vmem %s130, 160 [#allocation2]
          %v6220 = vld [vmem:[%s6219] sm:$0xff]
          %v6221 = vld [vmem:[%s6219 + $0x8] sm:$0xff]
          %v6222 = vld [vmem:[%s6219 + $0x10] sm:$0xff]
          %v6223 = vld [vmem:[%s6219 + $0x18] sm:$0xff]
          %v6224 = vld [vmem:[%s6219 + $0x20] sm:$0xff]
          %v6225 = vld [vmem:[%s6219 + $0x28] sm:$0xff]
          %v6226 = vld [vmem:[%s6219 + $0x30] sm:$0xff]
          %v6227 = vld [vmem:[%s6219 + $0x38] sm:$0xff]
          %v6228 = vld [vmem:[%s6219 + $0x40] sm:$0xff]
          %v6229 = vld [vmem:[%s6219 + $0x48] sm:$0xff]
          %v6230 = vld [vmem:[%s6219 + $0x50] sm:$0xff]
          %v6231 = vld [vmem:[%s6219 + $0x58] sm:$0xff]
          %s6232 = scalar_lea.vmem %s130, 128 [#allocation2]
          %v6233 = vld [vmem:[%s6232] sm:$0xff]
          %v6234 = vld [vmem:[%s6232 + $0x8] sm:$0xff]
          %v6235 = vld [vmem:[%s6232 + $0x10] sm:$0xff]
          %v6236 = vld [vmem:[%s6232 + $0x18] sm:$0xff]
          %v6237 = vld [vmem:[%s6232 + $0x20] sm:$0xff]
          %v6238 = vld [vmem:[%s6232 + $0x28] sm:$0xff]
          %v6239 = vld [vmem:[%s6232 + $0x30] sm:$0xff]
          %v6240 = vld [vmem:[%s6232 + $0x38] sm:$0xff]
          %v6241 = vld [vmem:[%s6232 + $0x40] sm:$0xff]
          %v6242 = vld [vmem:[%s6232 + $0x48] sm:$0xff]
          %v6243 = vld [vmem:[%s6232 + $0x50] sm:$0xff]
          %v6244 = vld [vmem:[%s6232 + $0x58] sm:$0xff]
          %v6245 = vrot.slane %v6233, 7
          %v6246 = vrot.slane %v6237, 7
          %v6247 = vrot.slane %v6241, 7
          %v6248 = vrot.slane %v6234, 7
          %v6249 = vrot.slane %v6238, 7
          %v6250 = vrot.slane %v6242, 7
          %v6251 = vrot.slane %v6235, 7
          %v6252 = vrot.slane %v6239, 7
          %v6253 = vrot.slane %v6243, 7
          %v6254 = vrot.slane %v6236, 7
          %v6255 = vrot.slane %v6240, 7
          %v6256 = vrot.slane %v6244, 7
          %v6257 = vsel %vm6170, %v6251, %v6254
          %v6258 = vsel %vm6170, %v6252, %v6255
          %v6259 = vsel %vm6170, %v6253, %v6256
          %v6260 = vsel %vm6170, %v6248, %v6251
          %v6261 = vsel %vm6170, %v6249, %v6252
          %v6262 = vsel %vm6170, %v6250, %v6253
          %v6263 = vsel %vm6170, %v6245, %v6248
          %v6264 = vsel %vm6170, %v6246, %v6249
          %v6265 = vsel %vm6170, %v6247, %v6250
          %v6266 = vsel %vm6170, %v6254, %v6245
          %v6267 = vsel %vm6170, %v6255, %v6246
          %v6268 = vsel %vm6170, %v6256, %v6247
          %v6269 = vsub.f32 %v6220, %v6266
          %v6270 = vsub.f32 %v6221, %v6263
          %v6271 = vsub.f32 %v6222, %v6260
          %v6272 = vsub.f32 %v6223, %v6257
          %v6273 = vsub.f32 %v6224, %v6267
          %v6274 = vsub.f32 %v6225, %v6264
          %v6275 = vsub.f32 %v6226, %v6261
          %v6276 = vsub.f32 %v6227, %v6258
          %v6277 = vsub.f32 %v6228, %v6268
          %v6278 = vsub.f32 %v6229, %v6265
          %v6279 = vsub.f32 %v6230, %v6262
          %v6280 = vsub.f32 %v6231, %v6259
          %v6281 = vmul.f32 %v6269, %v6269
          %v6282 = vmul.f32 %v6270, %v6270
          %v6283 = vmul.f32 %v6271, %v6271
          %v6284 = vmul.f32 %v6272, %v6272
          %v6285 = vmul.f32 %v6273, %v6273
          %v6286 = vmul.f32 %v6274, %v6274
          %v6287 = vmul.f32 %v6275, %v6275
          %v6288 = vmul.f32 %v6276, %v6276
          %v6289 = vmul.f32 %v6277, %v6277
          %v6290 = vmul.f32 %v6278, %v6278
          %v6291 = vmul.f32 %v6279, %v6279
          %v6292 = vmul.f32 %v6280, %v6280
          %v6293 = vadd.f32 %v6207, %v6281
          %v6294 = vadd.f32 %v6208, %v6282
          %v6295 = vadd.f32 %v6209, %v6283
          %v6296 = vadd.f32 %v6210, %v6284
          %v6297 = vadd.f32 %v6211, %v6285
          %v6298 = vadd.f32 %v6212, %v6286
          %v6299 = vadd.f32 %v6213, %v6287
          %v6300 = vadd.f32 %v6214, %v6288
          %v6301 = vadd.f32 %v6215, %v6289
          %v6302 = vadd.f32 %v6216, %v6290
          %v6303 = vadd.f32 %v6217, %v6291
          %v6304 = vadd.f32 %v6218, %v6292
          %s6305 = scalar_lea.vmem %s130, 288 [#allocation2]
          %v6306 = vld [vmem:[%s6305] sm:$0xff]
          %v6307 = vld [vmem:[%s6305 + $0x8] sm:$0xff]
          %v6308 = vld [vmem:[%s6305 + $0x10] sm:$0xff]
          %v6309 = vld [vmem:[%s6305 + $0x18] sm:$0xff]
          %v6310 = vld [vmem:[%s6305 + $0x20] sm:$0xff]
          %v6311 = vld [vmem:[%s6305 + $0x28] sm:$0xff]
          %v6312 = vld [vmem:[%s6305 + $0x30] sm:$0xff]
          %v6313 = vld [vmem:[%s6305 + $0x38] sm:$0xff]
          %v6314 = vld [vmem:[%s6305 + $0x40] sm:$0xff]
          %v6315 = vld [vmem:[%s6305 + $0x48] sm:$0xff]
          %v6316 = vld [vmem:[%s6305 + $0x50] sm:$0xff]
          %v6317 = vld [vmem:[%s6305 + $0x58] sm:$0xff]
          %s6318 = scalar_lea.vmem %s130, 256 [#allocation2]
          %v6319 = vld [vmem:[%s6318] sm:$0xff]
          %v6320 = vld [vmem:[%s6318 + $0x8] sm:$0xff]
          %v6321 = vld [vmem:[%s6318 + $0x10] sm:$0xff]
          %v6322 = vld [vmem:[%s6318 + $0x18] sm:$0xff]
          %v6323 = vld [vmem:[%s6318 + $0x20] sm:$0xff]
          %v6324 = vld [vmem:[%s6318 + $0x28] sm:$0xff]
          %v6325 = vld [vmem:[%s6318 + $0x30] sm:$0xff]
          %v6326 = vld [vmem:[%s6318 + $0x38] sm:$0xff]
          %v6327 = vld [vmem:[%s6318 + $0x40] sm:$0xff]
          %v6328 = vld [vmem:[%s6318 + $0x48] sm:$0xff]
          %v6329 = vld [vmem:[%s6318 + $0x50] sm:$0xff]
          %v6330 = vld [vmem:[%s6318 + $0x58] sm:$0xff]
          %v6331 = vrot.slane %v6319, 7
          %v6332 = vrot.slane %v6323, 7
          %v6333 = vrot.slane %v6327, 7
          %v6334 = vrot.slane %v6320, 7
          %v6335 = vrot.slane %v6324, 7
          %v6336 = vrot.slane %v6328, 7
          %v6337 = vrot.slane %v6321, 7
          %v6338 = vrot.slane %v6325, 7
          %v6339 = vrot.slane %v6329, 7
          %v6340 = vrot.slane %v6322, 7
          %v6341 = vrot.slane %v6326, 7
          %v6342 = vrot.slane %v6330, 7
          %v6343 = vsel %vm6170, %v6337, %v6340
          %v6344 = vsel %vm6170, %v6338, %v6341
          %v6345 = vsel %vm6170, %v6339, %v6342
          %v6346 = vsel %vm6170, %v6334, %v6337
          %v6347 = vsel %vm6170, %v6335, %v6338
          %v6348 = vsel %vm6170, %v6336, %v6339
          %v6349 = vsel %vm6170, %v6331, %v6334
          %v6350 = vsel %vm6170, %v6332, %v6335
          %v6351 = vsel %vm6170, %v6333, %v6336
          %v6352 = vsel %vm6170, %v6340, %v6331
          %v6353 = vsel %vm6170, %v6341, %v6332
          %v6354 = vsel %vm6170, %v6342, %v6333
          %v6355 = vsub.f32 %v6306, %v6352
          %v6356 = vsub.f32 %v6307, %v6349
          %v6357 = vsub.f32 %v6308, %v6346
          %v6358 = vsub.f32 %v6309, %v6343
          %v6359 = vsub.f32 %v6310, %v6353
          %v6360 = vsub.f32 %v6311, %v6350
          %v6361 = vsub.f32 %v6312, %v6347
          %v6362 = vsub.f32 %v6313, %v6344
          %v6363 = vsub.f32 %v6314, %v6354
          %v6364 = vsub.f32 %v6315, %v6351
          %v6365 = vsub.f32 %v6316, %v6348
          %v6366 = vsub.f32 %v6317, %v6345
          %v6367 = vmul.f32 %v6355, %v6355
          %v6368 = vmul.f32 %v6356, %v6356
          %v6369 = vmul.f32 %v6357, %v6357
          %v6370 = vmul.f32 %v6358, %v6358
          %v6371 = vmul.f32 %v6359, %v6359
          %v6372 = vmul.f32 %v6360, %v6360
          %v6373 = vmul.f32 %v6361, %v6361
          %v6374 = vmul.f32 %v6362, %v6362
          %v6375 = vmul.f32 %v6363, %v6363
          %v6376 = vmul.f32 %v6364, %v6364
          %v6377 = vmul.f32 %v6365, %v6365
          %v6378 = vmul.f32 %v6366, %v6366
          %v6379 = vadd.f32 %v6293, %v6367
          %v6380 = vadd.f32 %v6294, %v6368
          %v6381 = vadd.f32 %v6295, %v6369
          %v6382 = vadd.f32 %v6296, %v6370
          %v6383 = vadd.f32 %v6297, %v6371
          %v6384 = vadd.f32 %v6298, %v6372
          %v6385 = vadd.f32 %v6299, %v6373
          %v6386 = vadd.f32 %v6300, %v6374
          %v6387 = vadd.f32 %v6301, %v6375
          %v6388 = vadd.f32 %v6302, %v6376
          %v6389 = vadd.f32 %v6303, %v6377
          %v6390 = vadd.f32 %v6304, %v6378
          %s6391 = scalar_lea.vmem %s130, 416 [#allocation2]
          %v6392 = vld [vmem:[%s6391] sm:$0xff]
          %v6393 = vld [vmem:[%s6391 + $0x8] sm:$0xff]
          %v6394 = vld [vmem:[%s6391 + $0x10] sm:$0xff]
          %v6395 = vld [vmem:[%s6391 + $0x18] sm:$0xff]
          %v6396 = vld [vmem:[%s6391 + $0x20] sm:$0xff]
          %v6397 = vld [vmem:[%s6391 + $0x28] sm:$0xff]
          %v6398 = vld [vmem:[%s6391 + $0x30] sm:$0xff]
          %v6399 = vld [vmem:[%s6391 + $0x38] sm:$0xff]
          %v6400 = vld [vmem:[%s6391 + $0x40] sm:$0xff]
          %v6401 = vld [vmem:[%s6391 + $0x48] sm:$0xff]
          %v6402 = vld [vmem:[%s6391 + $0x50] sm:$0xff]
          %v6403 = vld [vmem:[%s6391 + $0x58] sm:$0xff]
          %s6404 = scalar_lea.vmem %s130, 384 [#allocation2]
          %v6405 = vld [vmem:[%s6404] sm:$0xff]
          %v6406 = vld [vmem:[%s6404 + $0x8] sm:$0xff]
          %v6407 = vld [vmem:[%s6404 + $0x10] sm:$0xff]
          %v6408 = vld [vmem:[%s6404 + $0x18] sm:$0xff]
          %v6409 = vld [vmem:[%s6404 + $0x20] sm:$0xff]
          %v6410 = vld [vmem:[%s6404 + $0x28] sm:$0xff]
          %v6411 = vld [vmem:[%s6404 + $0x30] sm:$0xff]
          %v6412 = vld [vmem:[%s6404 + $0x38] sm:$0xff]
          %v6413 = vld [vmem:[%s6404 + $0x40] sm:$0xff]
          %v6414 = vld [vmem:[%s6404 + $0x48] sm:$0xff]
          %v6415 = vld [vmem:[%s6404 + $0x50] sm:$0xff]
          %v6416 = vld [vmem:[%s6404 + $0x58] sm:$0xff]
          %v6417 = vrot.slane %v6405, 7
          %v6418 = vrot.slane %v6409, 7
          %v6419 = vrot.slane %v6413, 7
          %v6420 = vrot.slane %v6406, 7
          %v6421 = vrot.slane %v6410, 7
          %v6422 = vrot.slane %v6414, 7
          %v6423 = vrot.slane %v6407, 7
          %v6424 = vrot.slane %v6411, 7
          %v6425 = vrot.slane %v6415, 7
          %v6426 = vrot.slane %v6408, 7
          %v6427 = vrot.slane %v6412, 7
          %v6428 = vrot.slane %v6416, 7
          %v6429 = vsel %vm6170, %v6423, %v6426
          %v6430 = vsel %vm6170, %v6424, %v6427
          %v6431 = vsel %vm6170, %v6425, %v6428
          %v6432 = vsel %vm6170, %v6420, %v6423
          %v6433 = vsel %vm6170, %v6421, %v6424
          %v6434 = vsel %vm6170, %v6422, %v6425
          %v6435 = vsel %vm6170, %v6417, %v6420
          %v6436 = vsel %vm6170, %v6418, %v6421
          %v6437 = vsel %vm6170, %v6419, %v6422
          %v6438 = vsel %vm6170, %v6426, %v6417
          %v6439 = vsel %vm6170, %v6427, %v6418
          %v6440 = vsel %vm6170, %v6428, %v6419
          %v6441 = vsub.f32 %v6392, %v6438
          %v6442 = vsub.f32 %v6393, %v6435
          %v6443 = vsub.f32 %v6394, %v6432
          %v6444 = vsub.f32 %v6395, %v6429
          %v6445 = vsub.f32 %v6396, %v6439
          %v6446 = vsub.f32 %v6397, %v6436
          %v6447 = vsub.f32 %v6398, %v6433
          %v6448 = vsub.f32 %v6399, %v6430
          %v6449 = vsub.f32 %v6400, %v6440
          %v6450 = vsub.f32 %v6401, %v6437
          %v6451 = vsub.f32 %v6402, %v6434
          %v6452 = vsub.f32 %v6403, %v6431
          %v6453 = vmul.f32 %v6441, %v6441
          %v6454 = vmul.f32 %v6442, %v6442
          %v6455 = vmul.f32 %v6443, %v6443
          %v6456 = vmul.f32 %v6444, %v6444
          %v6457 = vmul.f32 %v6445, %v6445
          %v6458 = vmul.f32 %v6446, %v6446
          %v6459 = vmul.f32 %v6447, %v6447
          %v6460 = vmul.f32 %v6448, %v6448
          %v6461 = vmul.f32 %v6449, %v6449
          %v6462 = vmul.f32 %v6450, %v6450
          %v6463 = vmul.f32 %v6451, %v6451
          %v6464 = vmul.f32 %v6452, %v6452
          %v6465 = vadd.f32 %v6379, %v6453
          %v6466 = vadd.f32 %v6380, %v6454
          %v6467 = vadd.f32 %v6381, %v6455
          %v6468 = vadd.f32 %v6382, %v6456
          %v6469 = vadd.f32 %v6383, %v6457
          %v6470 = vadd.f32 %v6384, %v6458
          %v6471 = vadd.f32 %v6385, %v6459
          %v6472 = vadd.f32 %v6386, %v6460
          %v6473 = vadd.f32 %v6387, %v6461
          %v6474 = vadd.f32 %v6388, %v6462
          %v6475 = vadd.f32 %v6389, %v6463
          %v6476 = vadd.f32 %v6390, %v6464
          %v6477 = vmul.f32 %v6465, 25.0
          %v6478 = vmul.f32 %v6466, 25.0
          %v6479 = vmul.f32 %v6467, 25.0
          %v6480 = vmul.f32 %v6468, 25.0
          %v6481 = vmul.f32 %v6469, 25.0
          %v6482 = vmul.f32 %v6470, 25.0
          %v6483 = vmul.f32 %v6471, 25.0
          %v6484 = vmul.f32 %v6472, 25.0
          %v6485 = vmul.f32 %v6473, 25.0
          %v6486 = vmul.f32 %v6474, 25.0
          %v6487 = vmul.f32 %v6475, 25.0
          %v6488 = vmul.f32 %v6476, 25.0
          %v6489 = vtanh.pop %v6477
          %v6490 = vtanh.pop %v6478
          %v6491 = vtanh.pop %v6479
          %v6492 = vtanh.pop %v6480
          %v6493 = vtanh.pop %v6481
          %v6494 = vtanh.pop %v6482
          %v6495 = vtanh.pop %v6483
          %v6496 = vtanh.pop %v6484
          %v6497 = vtanh.pop %v6485
          %v6498 = vtanh.pop %v6486
          %v6499 = vtanh.pop %v6487
          %v6500 = vtanh.pop %v6488
          %v6501 = vsub.f32 1.0, %v6489
          %v6502 = vsub.f32 1.0, %v6490
          %v6503 = vsub.f32 1.0, %v6491
          %v6504 = vsub.f32 1.0, %v6492
          %v6505 = vsub.f32 1.0, %v6493
          %v6506 = vsub.f32 1.0, %v6494
          %v6507 = vsub.f32 1.0, %v6495
          %v6508 = vsub.f32 1.0, %v6496
          %v6509 = vsub.f32 1.0, %v6497
          %v6510 = vsub.f32 1.0, %v6498
          %v6511 = vsub.f32 1.0, %v6499
          %v6512 = vsub.f32 1.0, %v6500
          %v6513 = vadd.s32 %v6169, 8
          %v6514 = vadd.s32 %v6169, 16
          %v6515 = vadd.s32 %v6169, 24
          %vm6516 = vcmp.ge.s32.totalorder %v6169, 1
          %vm6517 = vcmp.ge.s32.totalorder %v6513, 1
          %vm6518 = vcmp.ge.s32.totalorder %v6514, 1
          %vm6519 = vcmp.ge.s32.totalorder %v6515, 1
          %v6520 = vsel %vm6516, 1, 0
          %v6521 = vsel %vm6517, 1, 0
          %v6522 = vsel %vm6518, 1, 0
          %v6523 = vsel %vm6519, 1, 0
          %vm6524 = vcmp.eq.s32.totalorder %v6520, 1
          %vm6525 = vcmp.eq.s32.totalorder %v6521, 1
          %vm6526 = vcmp.eq.s32.totalorder %v6522, 1
          %vm6527 = vcmp.eq.s32.totalorder %v6523, 1
          %v6528 = vsel %vm6524, %v6501, 1.0
          %v6529 = vsel %vm6525, %v6502, 1.0
          %v6530 = vsel %vm6526, %v6503, 1.0
          %v6531 = vsel %vm6527, %v6504, 1.0
          %v6532 = vsel %vm6524, %v6505, 1.0
          %v6533 = vsel %vm6525, %v6506, 1.0
          %v6534 = vsel %vm6526, %v6507, 1.0
          %v6535 = vsel %vm6527, %v6508, 1.0
          %v6536 = vsel %vm6524, %v6509, 1.0
          %v6537 = vsel %vm6525, %v6510, 1.0
          %v6538 = vsel %vm6526, %v6511, 1.0
          %v6539 = vsel %vm6527, %v6512, 1.0
          %s6540 = scalar_lea.vmem %s148, 32 [#allocation5]
          %6541 = vst [vmem:[%s6540] sm:$0xff] %v6528
          %6542 = vst [vmem:[%s6540 + $0x8] sm:$0xff] %v6529
          %6543 = vst [vmem:[%s6540 + $0x10] sm:$0xff] %v6530
          %6544 = vst [vmem:[%s6540 + $0x18] sm:$0xff] %v6531
          %6545 = vst [vmem:[%s6540 + $0x20] sm:$0xff] %v6532
          %6546 = vst [vmem:[%s6540 + $0x28] sm:$0xff] %v6533
          %6547 = vst [vmem:[%s6540 + $0x30] sm:$0xff] %v6534
          %6548 = vst [vmem:[%s6540 + $0x38] sm:$0xff] %v6535
          %6549 = vst [vmem:[%s6540 + $0x40] sm:$0xff] %v6536
          %6550 = vst [vmem:[%s6540 + $0x48] sm:$0xff] %v6537
          %6551 = vst [vmem:[%s6540 + $0x50] sm:$0xff] %v6538
          %6552 = vst [vmem:[%s6540 + $0x58] sm:$0xff] %v6539
          %6553 = vst [vmem:[%s148] sm:$0xff] 1.0
          %6554 = vst [vmem:[%s148 + $0x8] sm:$0xff] 1.0
          %6555 = vst [vmem:[%s148 + $0x10] sm:$0xff] 1.0
          %6556 = vst [vmem:[%s148 + $0x18] sm:$0xff] 1.0
        $region76: #{tpu_custom_call.1} parent=23 // pred_fallthru
          _
        %p6557 = scmp.eq.s32.totalorder %s23, 12
        // Predicated region
        $region77: #{tpu_custom_call.1} parent=23 // pred_check
          %p6558 = pneg %p6557
        $region78: #{tpu_custom_call.1} parent=23 // pred_check_branch
          %6560 = sbr.rel (%p6558) target = $region80
        $region79: #{tpu_custom_call.1} parent=23 // pred_region
          %s6561 = scalar_lea.vmem %s130, 32 [#allocation2]
          %v6562 = vld [vmem:[%s6561] sm:$0xff]
          %v6563 = vld [vmem:[%s6561 + $0x8] sm:$0xff]
          %v6564 = vld [vmem:[%s6561 + $0x10] sm:$0xff]
          %v6565 = vld [vmem:[%s6561 + $0x18] sm:$0xff]
          %v6566 = vld [vmem:[%s6561 + $0x20] sm:$0xff]
          %v6567 = vld [vmem:[%s6561 + $0x28] sm:$0xff]
          %v6568 = vld [vmem:[%s6561 + $0x30] sm:$0xff]
          %v6569 = vld [vmem:[%s6561 + $0x38] sm:$0xff]
          %v6570 = vld [vmem:[%s6561 + $0x40] sm:$0xff]
          %v6571 = vld [vmem:[%s6561 + $0x48] sm:$0xff]
          %v6572 = vld [vmem:[%s6561 + $0x50] sm:$0xff]
          %v6573 = vld [vmem:[%s6561 + $0x58] sm:$0xff]
          %v6574 = vld [vmem:[%s130] sm:$0xff]
          %v6575 = vld [vmem:[%s130 + $0x8] sm:$0xff]
          %v6576 = vld [vmem:[%s130 + $0x10] sm:$0xff]
          %v6577 = vld [vmem:[%s130 + $0x18] sm:$0xff]
          %v6578 = vld [vmem:[%s130 + $0x20] sm:$0xff]
          %v6579 = vld [vmem:[%s130 + $0x28] sm:$0xff]
          %v6580 = vld [vmem:[%s130 + $0x30] sm:$0xff]
          %v6581 = vld [vmem:[%s130 + $0x38] sm:$0xff]
          %v6582 = vld [vmem:[%s130 + $0x40] sm:$0xff]
          %v6583 = vld [vmem:[%s130 + $0x48] sm:$0xff]
          %v6584 = vld [vmem:[%s130 + $0x50] sm:$0xff]
          %v6585 = vld [vmem:[%s130 + $0x58] sm:$0xff]
          %6586 = vrot.lane.b32.xlu0 %v6574, 1
          %v6587 = vpop.permute.xlu0 %6586
          %6588 = vrot.lane.b32.xlu0 %v6575, 1
          %v6589 = vpop.permute.xlu0 %6588
          %6590 = vrot.lane.b32.xlu0 %v6576, 1
          %v6591 = vpop.permute.xlu0 %6590
          %6592 = vrot.lane.b32.xlu0 %v6577, 1
          %v6593 = vpop.permute.xlu0 %6592
          %6594 = vrot.lane.b32.xlu0 %v6578, 1
          %v6595 = vpop.permute.xlu0 %6594
          %6596 = vrot.lane.b32.xlu0 %v6579, 1
          %v6597 = vpop.permute.xlu0 %6596
          %6598 = vrot.lane.b32.xlu0 %v6580, 1
          %v6599 = vpop.permute.xlu0 %6598
          %6600 = vrot.lane.b32.xlu0 %v6581, 1
          %v6601 = vpop.permute.xlu0 %6600
          %6602 = vrot.lane.b32.xlu0 %v6582, 1
          %v6603 = vpop.permute.xlu0 %6602
          %6604 = vrot.lane.b32.xlu0 %v6583, 1
          %v6605 = vpop.permute.xlu0 %6604
          %6606 = vrot.lane.b32.xlu0 %v6584, 1
          %v6607 = vpop.permute.xlu0 %6606
          %6608 = vrot.lane.b32.xlu0 %v6585, 1
          %v6609 = vpop.permute.xlu0 %6608
          %v6610 = vsub.f32 %v6562, %v6587
          %v6611 = vsub.f32 %v6563, %v6589
          %v6612 = vsub.f32 %v6564, %v6591
          %v6613 = vsub.f32 %v6565, %v6593
          %v6614 = vsub.f32 %v6566, %v6595
          %v6615 = vsub.f32 %v6567, %v6597
          %v6616 = vsub.f32 %v6568, %v6599
          %v6617 = vsub.f32 %v6569, %v6601
          %v6618 = vsub.f32 %v6570, %v6603
          %v6619 = vsub.f32 %v6571, %v6605
          %v6620 = vsub.f32 %v6572, %v6607
          %v6621 = vsub.f32 %v6573, %v6609
          %v6622 = vmul.f32 %v6610, %v6610
          %v6623 = vmul.f32 %v6611, %v6611
          %v6624 = vmul.f32 %v6612, %v6612
          %v6625 = vmul.f32 %v6613, %v6613
          %v6626 = vmul.f32 %v6614, %v6614
          %v6627 = vmul.f32 %v6615, %v6615
          %v6628 = vmul.f32 %v6616, %v6616
          %v6629 = vmul.f32 %v6617, %v6617
          %v6630 = vmul.f32 %v6618, %v6618
          %v6631 = vmul.f32 %v6619, %v6619
          %v6632 = vmul.f32 %v6620, %v6620
          %v6633 = vmul.f32 %v6621, %v6621
          %v6634 = vadd.f32 %v6622, 0.0
          %v6635 = vadd.f32 %v6623, 0.0
          %v6636 = vadd.f32 %v6624, 0.0
          %v6637 = vadd.f32 %v6625, 0.0
          %v6638 = vadd.f32 %v6626, 0.0
          %v6639 = vadd.f32 %v6627, 0.0
          %v6640 = vadd.f32 %v6628, 0.0
          %v6641 = vadd.f32 %v6629, 0.0
          %v6642 = vadd.f32 %v6630, 0.0
          %v6643 = vadd.f32 %v6631, 0.0
          %v6644 = vadd.f32 %v6632, 0.0
          %v6645 = vadd.f32 %v6633, 0.0
          %s6646 = scalar_lea.vmem %s130, 160 [#allocation2]
          %v6647 = vld [vmem:[%s6646] sm:$0xff]
          %v6648 = vld [vmem:[%s6646 + $0x8] sm:$0xff]
          %v6649 = vld [vmem:[%s6646 + $0x10] sm:$0xff]
          %v6650 = vld [vmem:[%s6646 + $0x18] sm:$0xff]
          %v6651 = vld [vmem:[%s6646 + $0x20] sm:$0xff]
          %v6652 = vld [vmem:[%s6646 + $0x28] sm:$0xff]
          %v6653 = vld [vmem:[%s6646 + $0x30] sm:$0xff]
          %v6654 = vld [vmem:[%s6646 + $0x38] sm:$0xff]
          %v6655 = vld [vmem:[%s6646 + $0x40] sm:$0xff]
          %v6656 = vld [vmem:[%s6646 + $0x48] sm:$0xff]
          %v6657 = vld [vmem:[%s6646 + $0x50] sm:$0xff]
          %v6658 = vld [vmem:[%s6646 + $0x58] sm:$0xff]
          %s6659 = scalar_lea.vmem %s130, 128 [#allocation2]
          %v6660 = vld [vmem:[%s6659] sm:$0xff]
          %v6661 = vld [vmem:[%s6659 + $0x8] sm:$0xff]
          %v6662 = vld [vmem:[%s6659 + $0x10] sm:$0xff]
          %v6663 = vld [vmem:[%s6659 + $0x18] sm:$0xff]
          %v6664 = vld [vmem:[%s6659 + $0x20] sm:$0xff]
          %v6665 = vld [vmem:[%s6659 + $0x28] sm:$0xff]
          %v6666 = vld [vmem:[%s6659 + $0x30] sm:$0xff]
          %v6667 = vld [vmem:[%s6659 + $0x38] sm:$0xff]
          %v6668 = vld [vmem:[%s6659 + $0x40] sm:$0xff]
          %v6669 = vld [vmem:[%s6659 + $0x48] sm:$0xff]
          %v6670 = vld [vmem:[%s6659 + $0x50] sm:$0xff]
          %v6671 = vld [vmem:[%s6659 + $0x58] sm:$0xff]
          %6672 = vrot.lane.b32.xlu0 %v6660, 1
          %v6673 = vpop.permute.xlu0 %6672
          %6674 = vrot.lane.b32.xlu0 %v6661, 1
          %v6675 = vpop.permute.xlu0 %6674
          %6676 = vrot.lane.b32.xlu0 %v6662, 1
          %v6677 = vpop.permute.xlu0 %6676
          %6678 = vrot.lane.b32.xlu0 %v6663, 1
          %v6679 = vpop.permute.xlu0 %6678
          %6680 = vrot.lane.b32.xlu0 %v6664, 1
          %v6681 = vpop.permute.xlu0 %6680
          %6682 = vrot.lane.b32.xlu0 %v6665, 1
          %v6683 = vpop.permute.xlu0 %6682
          %6684 = vrot.lane.b32.xlu0 %v6666, 1
          %v6685 = vpop.permute.xlu0 %6684
          %6686 = vrot.lane.b32.xlu0 %v6667, 1
          %v6687 = vpop.permute.xlu0 %6686
          %6688 = vrot.lane.b32.xlu0 %v6668, 1
          %v6689 = vpop.permute.xlu0 %6688
          %6690 = vrot.lane.b32.xlu0 %v6669, 1
          %v6691 = vpop.permute.xlu0 %6690
          %6692 = vrot.lane.b32.xlu0 %v6670, 1
          %v6693 = vpop.permute.xlu0 %6692
          %6694 = vrot.lane.b32.xlu0 %v6671, 1
          %v6695 = vpop.permute.xlu0 %6694
          %v6696 = vsub.f32 %v6647, %v6673
          %v6697 = vsub.f32 %v6648, %v6675
          %v6698 = vsub.f32 %v6649, %v6677
          %v6699 = vsub.f32 %v6650, %v6679
          %v6700 = vsub.f32 %v6651, %v6681
          %v6701 = vsub.f32 %v6652, %v6683
          %v6702 = vsub.f32 %v6653, %v6685
          %v6703 = vsub.f32 %v6654, %v6687
          %v6704 = vsub.f32 %v6655, %v6689
          %v6705 = vsub.f32 %v6656, %v6691
          %v6706 = vsub.f32 %v6657, %v6693
          %v6707 = vsub.f32 %v6658, %v6695
          %v6708 = vmul.f32 %v6696, %v6696
          %v6709 = vmul.f32 %v6697, %v6697
          %v6710 = vmul.f32 %v6698, %v6698
          %v6711 = vmul.f32 %v6699, %v6699
          %v6712 = vmul.f32 %v6700, %v6700
          %v6713 = vmul.f32 %v6701, %v6701
          %v6714 = vmul.f32 %v6702, %v6702
          %v6715 = vmul.f32 %v6703, %v6703
          %v6716 = vmul.f32 %v6704, %v6704
          %v6717 = vmul.f32 %v6705, %v6705
          %v6718 = vmul.f32 %v6706, %v6706
          %v6719 = vmul.f32 %v6707, %v6707
          %v6720 = vadd.f32 %v6634, %v6708
          %v6721 = vadd.f32 %v6635, %v6709
          %v6722 = vadd.f32 %v6636, %v6710
          %v6723 = vadd.f32 %v6637, %v6711
          %v6724 = vadd.f32 %v6638, %v6712
          %v6725 = vadd.f32 %v6639, %v6713
          %v6726 = vadd.f32 %v6640, %v6714
          %v6727 = vadd.f32 %v6641, %v6715
          %v6728 = vadd.f32 %v6642, %v6716
          %v6729 = vadd.f32 %v6643, %v6717
          %v6730 = vadd.f32 %v6644, %v6718
          %v6731 = vadd.f32 %v6645, %v6719
          %s6732 = scalar_lea.vmem %s130, 288 [#allocation2]
          %v6733 = vld [vmem:[%s6732] sm:$0xff]
          %v6734 = vld [vmem:[%s6732 + $0x8] sm:$0xff]
          %v6735 = vld [vmem:[%s6732 + $0x10] sm:$0xff]
          %v6736 = vld [vmem:[%s6732 + $0x18] sm:$0xff]
          %v6737 = vld [vmem:[%s6732 + $0x20] sm:$0xff]
          %v6738 = vld [vmem:[%s6732 + $0x28] sm:$0xff]
          %v6739 = vld [vmem:[%s6732 + $0x30] sm:$0xff]
          %v6740 = vld [vmem:[%s6732 + $0x38] sm:$0xff]
          %v6741 = vld [vmem:[%s6732 + $0x40] sm:$0xff]
          %v6742 = vld [vmem:[%s6732 + $0x48] sm:$0xff]
          %v6743 = vld [vmem:[%s6732 + $0x50] sm:$0xff]
          %v6744 = vld [vmem:[%s6732 + $0x58] sm:$0xff]
          %s6745 = scalar_lea.vmem %s130, 256 [#allocation2]
          %v6746 = vld [vmem:[%s6745] sm:$0xff]
          %v6747 = vld [vmem:[%s6745 + $0x8] sm:$0xff]
          %v6748 = vld [vmem:[%s6745 + $0x10] sm:$0xff]
          %v6749 = vld [vmem:[%s6745 + $0x18] sm:$0xff]
          %v6750 = vld [vmem:[%s6745 + $0x20] sm:$0xff]
          %v6751 = vld [vmem:[%s6745 + $0x28] sm:$0xff]
          %v6752 = vld [vmem:[%s6745 + $0x30] sm:$0xff]
          %v6753 = vld [vmem:[%s6745 + $0x38] sm:$0xff]
          %v6754 = vld [vmem:[%s6745 + $0x40] sm:$0xff]
          %v6755 = vld [vmem:[%s6745 + $0x48] sm:$0xff]
          %v6756 = vld [vmem:[%s6745 + $0x50] sm:$0xff]
          %v6757 = vld [vmem:[%s6745 + $0x58] sm:$0xff]
          %6758 = vrot.lane.b32.xlu0 %v6746, 1
          %v6759 = vpop.permute.xlu0 %6758
          %6760 = vrot.lane.b32.xlu0 %v6747, 1
          %v6761 = vpop.permute.xlu0 %6760
          %6762 = vrot.lane.b32.xlu0 %v6748, 1
          %v6763 = vpop.permute.xlu0 %6762
          %6764 = vrot.lane.b32.xlu0 %v6749, 1
          %v6765 = vpop.permute.xlu0 %6764
          %6766 = vrot.lane.b32.xlu0 %v6750, 1
          %v6767 = vpop.permute.xlu0 %6766
          %6768 = vrot.lane.b32.xlu0 %v6751, 1
          %v6769 = vpop.permute.xlu0 %6768
          %6770 = vrot.lane.b32.xlu0 %v6752, 1
          %v6771 = vpop.permute.xlu0 %6770
          %6772 = vrot.lane.b32.xlu0 %v6753, 1
          %v6773 = vpop.permute.xlu0 %6772
          %6774 = vrot.lane.b32.xlu0 %v6754, 1
          %v6775 = vpop.permute.xlu0 %6774
          %6776 = vrot.lane.b32.xlu0 %v6755, 1
          %v6777 = vpop.permute.xlu0 %6776
          %6778 = vrot.lane.b32.xlu0 %v6756, 1
          %v6779 = vpop.permute.xlu0 %6778
          %6780 = vrot.lane.b32.xlu0 %v6757, 1
          %v6781 = vpop.permute.xlu0 %6780
          %v6782 = vsub.f32 %v6733, %v6759
          %v6783 = vsub.f32 %v6734, %v6761
          %v6784 = vsub.f32 %v6735, %v6763
          %v6785 = vsub.f32 %v6736, %v6765
          %v6786 = vsub.f32 %v6737, %v6767
          %v6787 = vsub.f32 %v6738, %v6769
          %v6788 = vsub.f32 %v6739, %v6771
          %v6789 = vsub.f32 %v6740, %v6773
          %v6790 = vsub.f32 %v6741, %v6775
          %v6791 = vsub.f32 %v6742, %v6777
          %v6792 = vsub.f32 %v6743, %v6779
          %v6793 = vsub.f32 %v6744, %v6781
          %v6794 = vmul.f32 %v6782, %v6782
          %v6795 = vmul.f32 %v6783, %v6783
          %v6796 = vmul.f32 %v6784, %v6784
          %v6797 = vmul.f32 %v6785, %v6785
          %v6798 = vmul.f32 %v6786, %v6786
          %v6799 = vmul.f32 %v6787, %v6787
          %v6800 = vmul.f32 %v6788, %v6788
          %v6801 = vmul.f32 %v6789, %v6789
          %v6802 = vmul.f32 %v6790, %v6790
          %v6803 = vmul.f32 %v6791, %v6791
          %v6804 = vmul.f32 %v6792, %v6792
          %v6805 = vmul.f32 %v6793, %v6793
          %v6806 = vadd.f32 %v6720, %v6794
          %v6807 = vadd.f32 %v6721, %v6795
          %v6808 = vadd.f32 %v6722, %v6796
          %v6809 = vadd.f32 %v6723, %v6797
          %v6810 = vadd.f32 %v6724, %v6798
          %v6811 = vadd.f32 %v6725, %v6799
          %v6812 = vadd.f32 %v6726, %v6800
          %v6813 = vadd.f32 %v6727, %v6801
          %v6814 = vadd.f32 %v6728, %v6802
          %v6815 = vadd.f32 %v6729, %v6803
          %v6816 = vadd.f32 %v6730, %v6804
          %v6817 = vadd.f32 %v6731, %v6805
          %s6818 = scalar_lea.vmem %s130, 416 [#allocation2]
          %v6819 = vld [vmem:[%s6818] sm:$0xff]
          %v6820 = vld [vmem:[%s6818 + $0x8] sm:$0xff]
          %v6821 = vld [vmem:[%s6818 + $0x10] sm:$0xff]
          %v6822 = vld [vmem:[%s6818 + $0x18] sm:$0xff]
          %v6823 = vld [vmem:[%s6818 + $0x20] sm:$0xff]
          %v6824 = vld [vmem:[%s6818 + $0x28] sm:$0xff]
          %v6825 = vld [vmem:[%s6818 + $0x30] sm:$0xff]
          %v6826 = vld [vmem:[%s6818 + $0x38] sm:$0xff]
          %v6827 = vld [vmem:[%s6818 + $0x40] sm:$0xff]
          %v6828 = vld [vmem:[%s6818 + $0x48] sm:$0xff]
          %v6829 = vld [vmem:[%s6818 + $0x50] sm:$0xff]
          %v6830 = vld [vmem:[%s6818 + $0x58] sm:$0xff]
          %s6831 = scalar_lea.vmem %s130, 384 [#allocation2]
          %v6832 = vld [vmem:[%s6831] sm:$0xff]
          %v6833 = vld [vmem:[%s6831 + $0x8] sm:$0xff]
          %v6834 = vld [vmem:[%s6831 + $0x10] sm:$0xff]
          %v6835 = vld [vmem:[%s6831 + $0x18] sm:$0xff]
          %v6836 = vld [vmem:[%s6831 + $0x20] sm:$0xff]
          %v6837 = vld [vmem:[%s6831 + $0x28] sm:$0xff]
          %v6838 = vld [vmem:[%s6831 + $0x30] sm:$0xff]
          %v6839 = vld [vmem:[%s6831 + $0x38] sm:$0xff]
          %v6840 = vld [vmem:[%s6831 + $0x40] sm:$0xff]
          %v6841 = vld [vmem:[%s6831 + $0x48] sm:$0xff]
          %v6842 = vld [vmem:[%s6831 + $0x50] sm:$0xff]
          %v6843 = vld [vmem:[%s6831 + $0x58] sm:$0xff]
          %6844 = vrot.lane.b32.xlu0 %v6832, 1
          %v6845 = vpop.permute.xlu0 %6844
          %6846 = vrot.lane.b32.xlu0 %v6833, 1
          %v6847 = vpop.permute.xlu0 %6846
          %6848 = vrot.lane.b32.xlu0 %v6834, 1
          %v6849 = vpop.permute.xlu0 %6848
          %6850 = vrot.lane.b32.xlu0 %v6835, 1
          %v6851 = vpop.permute.xlu0 %6850
          %6852 = vrot.lane.b32.xlu0 %v6836, 1
          %v6853 = vpop.permute.xlu0 %6852
          %6854 = vrot.lane.b32.xlu0 %v6837, 1
          %v6855 = vpop.permute.xlu0 %6854
          %6856 = vrot.lane.b32.xlu0 %v6838, 1
          %v6857 = vpop.permute.xlu0 %6856
          %6858 = vrot.lane.b32.xlu0 %v6839, 1
          %v6859 = vpop.permute.xlu0 %6858
          %6860 = vrot.lane.b32.xlu0 %v6840, 1
          %v6861 = vpop.permute.xlu0 %6860
          %6862 = vrot.lane.b32.xlu0 %v6841, 1
          %v6863 = vpop.permute.xlu0 %6862
          %6864 = vrot.lane.b32.xlu0 %v6842, 1
          %v6865 = vpop.permute.xlu0 %6864
          %6866 = vrot.lane.b32.xlu0 %v6843, 1
          %v6867 = vpop.permute.xlu0 %6866
          %v6868 = vsub.f32 %v6819, %v6845
          %v6869 = vsub.f32 %v6820, %v6847
          %v6870 = vsub.f32 %v6821, %v6849
          %v6871 = vsub.f32 %v6822, %v6851
          %v6872 = vsub.f32 %v6823, %v6853
          %v6873 = vsub.f32 %v6824, %v6855
          %v6874 = vsub.f32 %v6825, %v6857
          %v6875 = vsub.f32 %v6826, %v6859
          %v6876 = vsub.f32 %v6827, %v6861
          %v6877 = vsub.f32 %v6828, %v6863
          %v6878 = vsub.f32 %v6829, %v6865
          %v6879 = vsub.f32 %v6830, %v6867
          %v6880 = vmul.f32 %v6868, %v6868
          %v6881 = vmul.f32 %v6869, %v6869
          %v6882 = vmul.f32 %v6870, %v6870
          %v6883 = vmul.f32 %v6871, %v6871
          %v6884 = vmul.f32 %v6872, %v6872
          %v6885 = vmul.f32 %v6873, %v6873
          %v6886 = vmul.f32 %v6874, %v6874
          %v6887 = vmul.f32 %v6875, %v6875
          %v6888 = vmul.f32 %v6876, %v6876
          %v6889 = vmul.f32 %v6877, %v6877
          %v6890 = vmul.f32 %v6878, %v6878
          %v6891 = vmul.f32 %v6879, %v6879
          %v6892 = vadd.f32 %v6806, %v6880
          %v6893 = vadd.f32 %v6807, %v6881
          %v6894 = vadd.f32 %v6808, %v6882
          %v6895 = vadd.f32 %v6809, %v6883
          %v6896 = vadd.f32 %v6810, %v6884
          %v6897 = vadd.f32 %v6811, %v6885
          %v6898 = vadd.f32 %v6812, %v6886
          %v6899 = vadd.f32 %v6813, %v6887
          %v6900 = vadd.f32 %v6814, %v6888
          %v6901 = vadd.f32 %v6815, %v6889
          %v6902 = vadd.f32 %v6816, %v6890
          %v6903 = vadd.f32 %v6817, %v6891
          %v6904 = vmul.f32 %v6892, 25.0
          %v6905 = vmul.f32 %v6893, 25.0
          %v6906 = vmul.f32 %v6894, 25.0
          %v6907 = vmul.f32 %v6895, 25.0
          %v6908 = vmul.f32 %v6896, 25.0
          %v6909 = vmul.f32 %v6897, 25.0
          %v6910 = vmul.f32 %v6898, 25.0
          %v6911 = vmul.f32 %v6899, 25.0
          %v6912 = vmul.f32 %v6900, 25.0
          %v6913 = vmul.f32 %v6901, 25.0
          %v6914 = vmul.f32 %v6902, 25.0
          %v6915 = vmul.f32 %v6903, 25.0
          %v6916 = vtanh.pop %v6904
          %v6917 = vtanh.pop %v6905
          %v6918 = vtanh.pop %v6906
          %v6919 = vtanh.pop %v6907
          %v6920 = vtanh.pop %v6908
          %v6921 = vtanh.pop %v6909
          %v6922 = vtanh.pop %v6910
          %v6923 = vtanh.pop %v6911
          %v6924 = vtanh.pop %v6912
          %v6925 = vtanh.pop %v6913
          %v6926 = vtanh.pop %v6914
          %v6927 = vtanh.pop %v6915
          %v6928 = vsub.f32 1.0, %v6916
          %v6929 = vsub.f32 1.0, %v6917
          %v6930 = vsub.f32 1.0, %v6918
          %v6931 = vsub.f32 1.0, %v6919
          %v6932 = vsub.f32 1.0, %v6920
          %v6933 = vsub.f32 1.0, %v6921
          %v6934 = vsub.f32 1.0, %v6922
          %v6935 = vsub.f32 1.0, %v6923
          %v6936 = vsub.f32 1.0, %v6924
          %v6937 = vsub.f32 1.0, %v6925
          %v6938 = vsub.f32 1.0, %v6926
          %v6939 = vsub.f32 1.0, %v6927
          %v6940 = vlaneseq
          %v6941 = vand.u32 %v6940, 127
          %vm6942 = vcmp.ge.s32.totalorder %v6941, 1
          %v6943 = vsel %vm6942, 1, 0
          %vm6944 = vcmp.eq.s32.totalorder %v6943, 1
          %v6945 = vsel %vm6944, %v6928, 1.0
          %v6946 = vsel %vm6944, %v6929, 1.0
          %v6947 = vsel %vm6944, %v6930, 1.0
          %v6948 = vsel %vm6944, %v6931, 1.0
          %v6949 = vsel %vm6944, %v6932, 1.0
          %v6950 = vsel %vm6944, %v6933, 1.0
          %v6951 = vsel %vm6944, %v6934, 1.0
          %v6952 = vsel %vm6944, %v6935, 1.0
          %v6953 = vsel %vm6944, %v6936, 1.0
          %v6954 = vsel %vm6944, %v6937, 1.0
          %v6955 = vsel %vm6944, %v6938, 1.0
          %v6956 = vsel %vm6944, %v6939, 1.0
          %s6957 = scalar_lea.vmem %s148, 32 [#allocation5]
          %6958 = vst [vmem:[%s6957] sm:$0xff] %v6945
          %6959 = vst [vmem:[%s6957 + $0x8] sm:$0xff] %v6946
          %6960 = vst [vmem:[%s6957 + $0x10] sm:$0xff] %v6947
          %6961 = vst [vmem:[%s6957 + $0x18] sm:$0xff] %v6948
          %6962 = vst [vmem:[%s6957 + $0x20] sm:$0xff] %v6949
          %6963 = vst [vmem:[%s6957 + $0x28] sm:$0xff] %v6950
          %6964 = vst [vmem:[%s6957 + $0x30] sm:$0xff] %v6951
          %6965 = vst [vmem:[%s6957 + $0x38] sm:$0xff] %v6952
          %6966 = vst [vmem:[%s6957 + $0x40] sm:$0xff] %v6953
          %6967 = vst [vmem:[%s6957 + $0x48] sm:$0xff] %v6954
          %6968 = vst [vmem:[%s6957 + $0x50] sm:$0xff] %v6955
          %6969 = vst [vmem:[%s6957 + $0x58] sm:$0xff] %v6956
          %6970 = vst [vmem:[%s148] sm:$0xff] 1.0
          %6971 = vst [vmem:[%s148 + $0x8] sm:$0xff] 1.0
          %6972 = vst [vmem:[%s148 + $0x10] sm:$0xff] 1.0
          %6973 = vst [vmem:[%s148 + $0x18] sm:$0xff] 1.0
        $region80: #{tpu_custom_call.1} parent=23 // pred_fallthru
          _
        %p6974 = scmp.eq.s32.totalorder %s23, 13
        // Predicated region
        $region81: #{tpu_custom_call.1} parent=23 // pred_check
          %p6975 = pneg %p6974
        $region82: #{tpu_custom_call.1} parent=23 // pred_check_branch
          %6977 = sbr.rel (%p6975) target = $region84
        $region83: #{tpu_custom_call.1} parent=23 // pred_region
          %v6978 = vld [vmem:[%s130] sm:$0xff]
          %v6979 = vld [vmem:[%s130 + $0x8] sm:$0xff]
          %v6980 = vld [vmem:[%s130 + $0x10] sm:$0xff]
          %v6981 = vld [vmem:[%s130 + $0x18] sm:$0xff]
          %v6982 = vld [vmem:[%s130 + $0x20] sm:$0xff]
          %v6983 = vld [vmem:[%s130 + $0x28] sm:$0xff]
          %v6984 = vld [vmem:[%s130 + $0x30] sm:$0xff]
          %v6985 = vld [vmem:[%s130 + $0x38] sm:$0xff]
          %v6986 = vld [vmem:[%s130 + $0x40] sm:$0xff]
          %v6987 = vld [vmem:[%s130 + $0x48] sm:$0xff]
          %v6988 = vld [vmem:[%s130 + $0x50] sm:$0xff]
          %v6989 = vld [vmem:[%s130 + $0x58] sm:$0xff]
          %v6990 = vld [vmem:[%s130 + $0x60] sm:$0xff]
          %v6991 = vld [vmem:[%s130 + $0x68] sm:$0xff]
          %v6992 = vld [vmem:[%s130 + $0x70] sm:$0xff]
          %v6993 = vld [vmem:[%s130 + $0x78] sm:$0xff]
          %v6994 = vrot.slane %v6978, 5
          %v6995 = vrot.slane %v6982, 5
          %v6996 = vrot.slane %v6986, 5
          %v6997 = vrot.slane %v6990, 5
          %v6998 = vrot.slane %v6979, 5
          %v6999 = vrot.slane %v6983, 5
          %v7000 = vrot.slane %v6987, 5
          %v7001 = vrot.slane %v6991, 5
          %v7002 = vrot.slane %v6980, 5
          %v7003 = vrot.slane %v6984, 5
          %v7004 = vrot.slane %v6988, 5
          %v7005 = vrot.slane %v6992, 5
          %v7006 = vrot.slane %v6981, 5
          %v7007 = vrot.slane %v6985, 5
          %v7008 = vrot.slane %v6989, 5
          %v7009 = vrot.slane %v6993, 5
          %v7010 = vlaneseq
          %v7011 = vshrl.u32 %v7010, 7
          %vm7012 = vcmp.lt.s32.totalorder %v7011, 3
          %v7013 = vsel %vm7012, %v7002, %v7006
          %v7014 = vsel %vm7012, %v7003, %v7007
          %v7015 = vsel %vm7012, %v7004, %v7008
          %v7016 = vsel %vm7012, %v7005, %v7009
          %v7017 = vsel %vm7012, %v6998, %v7002
          %v7018 = vsel %vm7012, %v6999, %v7003
          %v7019 = vsel %vm7012, %v7000, %v7004
          %v7020 = vsel %vm7012, %v7001, %v7005
          %v7021 = vsel %vm7012, %v6994, %v6998
          %v7022 = vsel %vm7012, %v6995, %v6999
          %v7023 = vsel %vm7012, %v6996, %v7000
          %v7024 = vsel %vm7012, %v6997, %v7001
          %v7025 = vsel %vm7012, %v7006, %v6994
          %v7026 = vsel %vm7012, %v7007, %v6995
          %v7027 = vsel %vm7012, %v7008, %v6996
          %v7028 = vsel %vm7012, %v7009, %v6997
          %v7029 = vsub.f32 %v6978, %v7021
          %v7030 = vsub.f32 %v6979, %v7017
          %v7031 = vsub.f32 %v6980, %v7013
          %v7032 = vsub.f32 %v6981, %v7025
          %v7033 = vsub.f32 %v6982, %v7022
          %v7034 = vsub.f32 %v6983, %v7018
          %v7035 = vsub.f32 %v6984, %v7014
          %v7036 = vsub.f32 %v6985, %v7026
          %v7037 = vsub.f32 %v6986, %v7023
          %v7038 = vsub.f32 %v6987, %v7019
          %v7039 = vsub.f32 %v6988, %v7015
          %v7040 = vsub.f32 %v6989, %v7027
          %v7041 = vsub.f32 %v6990, %v7024
          %v7042 = vsub.f32 %v6991, %v7020
          %v7043 = vsub.f32 %v6992, %v7016
          %v7044 = vsub.f32 %v6993, %v7028
          %v7045 = vmul.f32 %v7029, %v7029
          %v7046 = vmul.f32 %v7030, %v7030
          %v7047 = vmul.f32 %v7031, %v7031
          %v7048 = vmul.f32 %v7032, %v7032
          %v7049 = vmul.f32 %v7033, %v7033
          %v7050 = vmul.f32 %v7034, %v7034
          %v7051 = vmul.f32 %v7035, %v7035
          %v7052 = vmul.f32 %v7036, %v7036
          %v7053 = vmul.f32 %v7037, %v7037
          %v7054 = vmul.f32 %v7038, %v7038
          %v7055 = vmul.f32 %v7039, %v7039
          %v7056 = vmul.f32 %v7040, %v7040
          %v7057 = vmul.f32 %v7041, %v7041
          %v7058 = vmul.f32 %v7042, %v7042
          %v7059 = vmul.f32 %v7043, %v7043
          %v7060 = vmul.f32 %v7044, %v7044
          %v7061 = vadd.f32 %v7045, 0.0
          %v7062 = vadd.f32 %v7046, 0.0
          %v7063 = vadd.f32 %v7047, 0.0
          %v7064 = vadd.f32 %v7048, 0.0
          %v7065 = vadd.f32 %v7049, 0.0
          %v7066 = vadd.f32 %v7050, 0.0
          %v7067 = vadd.f32 %v7051, 0.0
          %v7068 = vadd.f32 %v7052, 0.0
          %v7069 = vadd.f32 %v7053, 0.0
          %v7070 = vadd.f32 %v7054, 0.0
          %v7071 = vadd.f32 %v7055, 0.0
          %v7072 = vadd.f32 %v7056, 0.0
          %v7073 = vadd.f32 %v7057, 0.0
          %v7074 = vadd.f32 %v7058, 0.0
          %v7075 = vadd.f32 %v7059, 0.0
          %v7076 = vadd.f32 %v7060, 0.0
          %s7077 = scalar_lea.vmem %s130, 128 [#allocation2]
          %v7078 = vld [vmem:[%s7077] sm:$0xff]
          %v7079 = vld [vmem:[%s7077 + $0x8] sm:$0xff]
          %v7080 = vld [vmem:[%s7077 + $0x10] sm:$0xff]
          %v7081 = vld [vmem:[%s7077 + $0x18] sm:$0xff]
          %v7082 = vld [vmem:[%s7077 + $0x20] sm:$0xff]
          %v7083 = vld [vmem:[%s7077 + $0x28] sm:$0xff]
          %v7084 = vld [vmem:[%s7077 + $0x30] sm:$0xff]
          %v7085 = vld [vmem:[%s7077 + $0x38] sm:$0xff]
          %v7086 = vld [vmem:[%s7077 + $0x40] sm:$0xff]
          %v7087 = vld [vmem:[%s7077 + $0x48] sm:$0xff]
          %v7088 = vld [vmem:[%s7077 + $0x50] sm:$0xff]
          %v7089 = vld [vmem:[%s7077 + $0x58] sm:$0xff]
          %v7090 = vld [vmem:[%s7077 + $0x60] sm:$0xff]
          %v7091 = vld [vmem:[%s7077 + $0x68] sm:$0xff]
          %v7092 = vld [vmem:[%s7077 + $0x70] sm:$0xff]
          %v7093 = vld [vmem:[%s7077 + $0x78] sm:$0xff]
          %v7094 = vrot.slane %v7078, 5
          %v7095 = vrot.slane %v7082, 5
          %v7096 = vrot.slane %v7086, 5
          %v7097 = vrot.slane %v7090, 5
          %v7098 = vrot.slane %v7079, 5
          %v7099 = vrot.slane %v7083, 5
          %v7100 = vrot.slane %v7087, 5
          %v7101 = vrot.slane %v7091, 5
          %v7102 = vrot.slane %v7080, 5
          %v7103 = vrot.slane %v7084, 5
          %v7104 = vrot.slane %v7088, 5
          %v7105 = vrot.slane %v7092, 5
          %v7106 = vrot.slane %v7081, 5
          %v7107 = vrot.slane %v7085, 5
          %v7108 = vrot.slane %v7089, 5
          %v7109 = vrot.slane %v7093, 5
          %v7110 = vsel %vm7012, %v7102, %v7106
          %v7111 = vsel %vm7012, %v7103, %v7107
          %v7112 = vsel %vm7012, %v7104, %v7108
          %v7113 = vsel %vm7012, %v7105, %v7109
          %v7114 = vsel %vm7012, %v7098, %v7102
          %v7115 = vsel %vm7012, %v7099, %v7103
          %v7116 = vsel %vm7012, %v7100, %v7104
          %v7117 = vsel %vm7012, %v7101, %v7105
          %v7118 = vsel %vm7012, %v7094, %v7098
          %v7119 = vsel %vm7012, %v7095, %v7099
          %v7120 = vsel %vm7012, %v7096, %v7100
          %v7121 = vsel %vm7012, %v7097, %v7101
          %v7122 = vsel %vm7012, %v7106, %v7094
          %v7123 = vsel %vm7012, %v7107, %v7095
          %v7124 = vsel %vm7012, %v7108, %v7096
          %v7125 = vsel %vm7012, %v7109, %v7097
          %v7126 = vsub.f32 %v7078, %v7118
          %v7127 = vsub.f32 %v7079, %v7114
          %v7128 = vsub.f32 %v7080, %v7110
          %v7129 = vsub.f32 %v7081, %v7122
          %v7130 = vsub.f32 %v7082, %v7119
          %v7131 = vsub.f32 %v7083, %v7115
          %v7132 = vsub.f32 %v7084, %v7111
          %v7133 = vsub.f32 %v7085, %v7123
          %v7134 = vsub.f32 %v7086, %v7120
          %v7135 = vsub.f32 %v7087, %v7116
          %v7136 = vsub.f32 %v7088, %v7112
          %v7137 = vsub.f32 %v7089, %v7124
          %v7138 = vsub.f32 %v7090, %v7121
          %v7139 = vsub.f32 %v7091, %v7117
          %v7140 = vsub.f32 %v7092, %v7113
          %v7141 = vsub.f32 %v7093, %v7125
          %v7142 = vmul.f32 %v7126, %v7126
          %v7143 = vmul.f32 %v7127, %v7127
          %v7144 = vmul.f32 %v7128, %v7128
          %v7145 = vmul.f32 %v7129, %v7129
          %v7146 = vmul.f32 %v7130, %v7130
          %v7147 = vmul.f32 %v7131, %v7131
          %v7148 = vmul.f32 %v7132, %v7132
          %v7149 = vmul.f32 %v7133, %v7133
          %v7150 = vmul.f32 %v7134, %v7134
          %v7151 = vmul.f32 %v7135, %v7135
          %v7152 = vmul.f32 %v7136, %v7136
          %v7153 = vmul.f32 %v7137, %v7137
          %v7154 = vmul.f32 %v7138, %v7138
          %v7155 = vmul.f32 %v7139, %v7139
          %v7156 = vmul.f32 %v7140, %v7140
          %v7157 = vmul.f32 %v7141, %v7141
          %v7158 = vadd.f32 %v7061, %v7142
          %v7159 = vadd.f32 %v7062, %v7143
          %v7160 = vadd.f32 %v7063, %v7144
          %v7161 = vadd.f32 %v7064, %v7145
          %v7162 = vadd.f32 %v7065, %v7146
          %v7163 = vadd.f32 %v7066, %v7147
          %v7164 = vadd.f32 %v7067, %v7148
          %v7165 = vadd.f32 %v7068, %v7149
          %v7166 = vadd.f32 %v7069, %v7150
          %v7167 = vadd.f32 %v7070, %v7151
          %v7168 = vadd.f32 %v7071, %v7152
          %v7169 = vadd.f32 %v7072, %v7153
          %v7170 = vadd.f32 %v7073, %v7154
          %v7171 = vadd.f32 %v7074, %v7155
          %v7172 = vadd.f32 %v7075, %v7156
          %v7173 = vadd.f32 %v7076, %v7157
          %s7174 = scalar_lea.vmem %s130, 256 [#allocation2]
          %v7175 = vld [vmem:[%s7174] sm:$0xff]
          %v7176 = vld [vmem:[%s7174 + $0x8] sm:$0xff]
          %v7177 = vld [vmem:[%s7174 + $0x10] sm:$0xff]
          %v7178 = vld [vmem:[%s7174 + $0x18] sm:$0xff]
          %v7179 = vld [vmem:[%s7174 + $0x20] sm:$0xff]
          %v7180 = vld [vmem:[%s7174 + $0x28] sm:$0xff]
          %v7181 = vld [vmem:[%s7174 + $0x30] sm:$0xff]
          %v7182 = vld [vmem:[%s7174 + $0x38] sm:$0xff]
          %v7183 = vld [vmem:[%s7174 + $0x40] sm:$0xff]
          %v7184 = vld [vmem:[%s7174 + $0x48] sm:$0xff]
          %v7185 = vld [vmem:[%s7174 + $0x50] sm:$0xff]
          %v7186 = vld [vmem:[%s7174 + $0x58] sm:$0xff]
          %v7187 = vld [vmem:[%s7174 + $0x60] sm:$0xff]
          %v7188 = vld [vmem:[%s7174 + $0x68] sm:$0xff]
          %v7189 = vld [vmem:[%s7174 + $0x70] sm:$0xff]
          %v7190 = vld [vmem:[%s7174 + $0x78] sm:$0xff]
          %v7191 = vrot.slane %v7175, 5
          %v7192 = vrot.slane %v7179, 5
          %v7193 = vrot.slane %v7183, 5
          %v7194 = vrot.slane %v7187, 5
          %v7195 = vrot.slane %v7176, 5
          %v7196 = vrot.slane %v7180, 5
          %v7197 = vrot.slane %v7184, 5
          %v7198 = vrot.slane %v7188, 5
          %v7199 = vrot.slane %v7177, 5
          %v7200 = vrot.slane %v7181, 5
          %v7201 = vrot.slane %v7185, 5
          %v7202 = vrot.slane %v7189, 5
          %v7203 = vrot.slane %v7178, 5
          %v7204 = vrot.slane %v7182, 5
          %v7205 = vrot.slane %v7186, 5
          %v7206 = vrot.slane %v7190, 5
          %v7207 = vsel %vm7012, %v7199, %v7203
          %v7208 = vsel %vm7012, %v7200, %v7204
          %v7209 = vsel %vm7012, %v7201, %v7205
          %v7210 = vsel %vm7012, %v7202, %v7206
          %v7211 = vsel %vm7012, %v7195, %v7199
          %v7212 = vsel %vm7012, %v7196, %v7200
          %v7213 = vsel %vm7012, %v7197, %v7201
          %v7214 = vsel %vm7012, %v7198, %v7202
          %v7215 = vsel %vm7012, %v7191, %v7195
          %v7216 = vsel %vm7012, %v7192, %v7196
          %v7217 = vsel %vm7012, %v7193, %v7197
          %v7218 = vsel %vm7012, %v7194, %v7198
          %v7219 = vsel %vm7012, %v7203, %v7191
          %v7220 = vsel %vm7012, %v7204, %v7192
          %v7221 = vsel %vm7012, %v7205, %v7193
          %v7222 = vsel %vm7012, %v7206, %v7194
          %v7223 = vsub.f32 %v7175, %v7215
          %v7224 = vsub.f32 %v7176, %v7211
          %v7225 = vsub.f32 %v7177, %v7207
          %v7226 = vsub.f32 %v7178, %v7219
          %v7227 = vsub.f32 %v7179, %v7216
          %v7228 = vsub.f32 %v7180, %v7212
          %v7229 = vsub.f32 %v7181, %v7208
          %v7230 = vsub.f32 %v7182, %v7220
          %v7231 = vsub.f32 %v7183, %v7217
          %v7232 = vsub.f32 %v7184, %v7213
          %v7233 = vsub.f32 %v7185, %v7209
          %v7234 = vsub.f32 %v7186, %v7221
          %v7235 = vsub.f32 %v7187, %v7218
          %v7236 = vsub.f32 %v7188, %v7214
          %v7237 = vsub.f32 %v7189, %v7210
          %v7238 = vsub.f32 %v7190, %v7222
          %v7239 = vmul.f32 %v7223, %v7223
          %v7240 = vmul.f32 %v7224, %v7224
          %v7241 = vmul.f32 %v7225, %v7225
          %v7242 = vmul.f32 %v7226, %v7226
          %v7243 = vmul.f32 %v7227, %v7227
          %v7244 = vmul.f32 %v7228, %v7228
          %v7245 = vmul.f32 %v7229, %v7229
          %v7246 = vmul.f32 %v7230, %v7230
          %v7247 = vmul.f32 %v7231, %v7231
          %v7248 = vmul.f32 %v7232, %v7232
          %v7249 = vmul.f32 %v7233, %v7233
          %v7250 = vmul.f32 %v7234, %v7234
          %v7251 = vmul.f32 %v7235, %v7235
          %v7252 = vmul.f32 %v7236, %v7236
          %v7253 = vmul.f32 %v7237, %v7237
          %v7254 = vmul.f32 %v7238, %v7238
          %v7255 = vadd.f32 %v7158, %v7239
          %v7256 = vadd.f32 %v7159, %v7240
          %v7257 = vadd.f32 %v7160, %v7241
          %v7258 = vadd.f32 %v7161, %v7242
          %v7259 = vadd.f32 %v7162, %v7243
          %v7260 = vadd.f32 %v7163, %v7244
          %v7261 = vadd.f32 %v7164, %v7245
          %v7262 = vadd.f32 %v7165, %v7246
          %v7263 = vadd.f32 %v7166, %v7247
          %v7264 = vadd.f32 %v7167, %v7248
          %v7265 = vadd.f32 %v7168, %v7249
          %v7266 = vadd.f32 %v7169, %v7250
          %v7267 = vadd.f32 %v7170, %v7251
          %v7268 = vadd.f32 %v7171, %v7252
          %v7269 = vadd.f32 %v7172, %v7253
          %v7270 = vadd.f32 %v7173, %v7254
          %s7271 = scalar_lea.vmem %s130, 384 [#allocation2]
          %v7272 = vld [vmem:[%s7271] sm:$0xff]
          %v7273 = vld [vmem:[%s7271 + $0x8] sm:$0xff]
          %v7274 = vld [vmem:[%s7271 + $0x10] sm:$0xff]
          %v7275 = vld [vmem:[%s7271 + $0x18] sm:$0xff]
          %v7276 = vld [vmem:[%s7271 + $0x20] sm:$0xff]
          %v7277 = vld [vmem:[%s7271 + $0x28] sm:$0xff]
          %v7278 = vld [vmem:[%s7271 + $0x30] sm:$0xff]
          %v7279 = vld [vmem:[%s7271 + $0x38] sm:$0xff]
          %v7280 = vld [vmem:[%s7271 + $0x40] sm:$0xff]
          %v7281 = vld [vmem:[%s7271 + $0x48] sm:$0xff]
          %v7282 = vld [vmem:[%s7271 + $0x50] sm:$0xff]
          %v7283 = vld [vmem:[%s7271 + $0x58] sm:$0xff]
          %v7284 = vld [vmem:[%s7271 + $0x60] sm:$0xff]
          %v7285 = vld [vmem:[%s7271 + $0x68] sm:$0xff]
          %v7286 = vld [vmem:[%s7271 + $0x70] sm:$0xff]
          %v7287 = vld [vmem:[%s7271 + $0x78] sm:$0xff]
          %v7288 = vrot.slane %v7272, 5
          %v7289 = vrot.slane %v7276, 5
          %v7290 = vrot.slane %v7280, 5
          %v7291 = vrot.slane %v7284, 5
          %v7292 = vrot.slane %v7273, 5
          %v7293 = vrot.slane %v7277, 5
          %v7294 = vrot.slane %v7281, 5
          %v7295 = vrot.slane %v7285, 5
          %v7296 = vrot.slane %v7274, 5
          %v7297 = vrot.slane %v7278, 5
          %v7298 = vrot.slane %v7282, 5
          %v7299 = vrot.slane %v7286, 5
          %v7300 = vrot.slane %v7275, 5
          %v7301 = vrot.slane %v7279, 5
          %v7302 = vrot.slane %v7283, 5
          %v7303 = vrot.slane %v7287, 5
          %v7304 = vsel %vm7012, %v7296, %v7300
          %v7305 = vsel %vm7012, %v7297, %v7301
          %v7306 = vsel %vm7012, %v7298, %v7302
          %v7307 = vsel %vm7012, %v7299, %v7303
          %v7308 = vsel %vm7012, %v7292, %v7296
          %v7309 = vsel %vm7012, %v7293, %v7297
          %v7310 = vsel %vm7012, %v7294, %v7298
          %v7311 = vsel %vm7012, %v7295, %v7299
          %v7312 = vsel %vm7012, %v7288, %v7292
          %v7313 = vsel %vm7012, %v7289, %v7293
          %v7314 = vsel %vm7012, %v7290, %v7294
          %v7315 = vsel %vm7012, %v7291, %v7295
          %v7316 = vsel %vm7012, %v7300, %v7288
          %v7317 = vsel %vm7012, %v7301, %v7289
          %v7318 = vsel %vm7012, %v7302, %v7290
          %v7319 = vsel %vm7012, %v7303, %v7291
          %v7320 = vsub.f32 %v7272, %v7312
          %v7321 = vsub.f32 %v7273, %v7308
          %v7322 = vsub.f32 %v7274, %v7304
          %v7323 = vsub.f32 %v7275, %v7316
          %v7324 = vsub.f32 %v7276, %v7313
          %v7325 = vsub.f32 %v7277, %v7309
          %v7326 = vsub.f32 %v7278, %v7305
          %v7327 = vsub.f32 %v7279, %v7317
          %v7328 = vsub.f32 %v7280, %v7314
          %v7329 = vsub.f32 %v7281, %v7310
          %v7330 = vsub.f32 %v7282, %v7306
          %v7331 = vsub.f32 %v7283, %v7318
          %v7332 = vsub.f32 %v7284, %v7315
          %v7333 = vsub.f32 %v7285, %v7311
          %v7334 = vsub.f32 %v7286, %v7307
          %v7335 = vsub.f32 %v7287, %v7319
          %v7336 = vmul.f32 %v7320, %v7320
          %v7337 = vmul.f32 %v7321, %v7321
          %v7338 = vmul.f32 %v7322, %v7322
          %v7339 = vmul.f32 %v7323, %v7323
          %v7340 = vmul.f32 %v7324, %v7324
          %v7341 = vmul.f32 %v7325, %v7325
          %v7342 = vmul.f32 %v7326, %v7326
          %v7343 = vmul.f32 %v7327, %v7327
          %v7344 = vmul.f32 %v7328, %v7328
          %v7345 = vmul.f32 %v7329, %v7329
          %v7346 = vmul.f32 %v7330, %v7330
          %v7347 = vmul.f32 %v7331, %v7331
          %v7348 = vmul.f32 %v7332, %v7332
          %v7349 = vmul.f32 %v7333, %v7333
          %v7350 = vmul.f32 %v7334, %v7334
          %v7351 = vmul.f32 %v7335, %v7335
          %v7352 = vadd.f32 %v7255, %v7336
          %v7353 = vadd.f32 %v7256, %v7337
          %v7354 = vadd.f32 %v7257, %v7338
          %v7355 = vadd.f32 %v7258, %v7339
          %v7356 = vadd.f32 %v7259, %v7340
          %v7357 = vadd.f32 %v7260, %v7341
          %v7358 = vadd.f32 %v7261, %v7342
          %v7359 = vadd.f32 %v7262, %v7343
          %v7360 = vadd.f32 %v7263, %v7344
          %v7361 = vadd.f32 %v7264, %v7345
          %v7362 = vadd.f32 %v7265, %v7346
          %v7363 = vadd.f32 %v7266, %v7347
          %v7364 = vadd.f32 %v7267, %v7348
          %v7365 = vadd.f32 %v7268, %v7349
          %v7366 = vadd.f32 %v7269, %v7350
          %v7367 = vadd.f32 %v7270, %v7351
          %v7368 = vmul.f32 %v7352, 25.0
          %v7369 = vmul.f32 %v7353, 25.0
          %v7370 = vmul.f32 %v7354, 25.0
          %v7371 = vmul.f32 %v7355, 25.0
          %v7372 = vmul.f32 %v7356, 25.0
          %v7373 = vmul.f32 %v7357, 25.0
          %v7374 = vmul.f32 %v7358, 25.0
          %v7375 = vmul.f32 %v7359, 25.0
          %v7376 = vmul.f32 %v7360, 25.0
          %v7377 = vmul.f32 %v7361, 25.0
          %v7378 = vmul.f32 %v7362, 25.0
          %v7379 = vmul.f32 %v7363, 25.0
          %v7380 = vmul.f32 %v7364, 25.0
          %v7381 = vmul.f32 %v7365, 25.0
          %v7382 = vmul.f32 %v7366, 25.0
          %v7383 = vmul.f32 %v7367, 25.0
          %v7384 = vtanh.pop %v7368
          %v7385 = vtanh.pop %v7369
          %v7386 = vtanh.pop %v7370
          %v7387 = vtanh.pop %v7371
          %v7388 = vtanh.pop %v7372
          %v7389 = vtanh.pop %v7373
          %v7390 = vtanh.pop %v7374
          %v7391 = vtanh.pop %v7375
          %v7392 = vtanh.pop %v7376
          %v7393 = vtanh.pop %v7377
          %v7394 = vtanh.pop %v7378
          %v7395 = vtanh.pop %v7379
          %v7396 = vtanh.pop %v7380
          %v7397 = vtanh.pop %v7381
          %v7398 = vtanh.pop %v7382
          %v7399 = vtanh.pop %v7383
          %v7400 = vsub.f32 1.0, %v7384
          %v7401 = vsub.f32 1.0, %v7385
          %v7402 = vsub.f32 1.0, %v7386
          %v7403 = vsub.f32 1.0, %v7387
          %v7404 = vsub.f32 1.0, %v7388
          %v7405 = vsub.f32 1.0, %v7389
          %v7406 = vsub.f32 1.0, %v7390
          %v7407 = vsub.f32 1.0, %v7391
          %v7408 = vsub.f32 1.0, %v7392
          %v7409 = vsub.f32 1.0, %v7393
          %v7410 = vsub.f32 1.0, %v7394
          %v7411 = vsub.f32 1.0, %v7395
          %v7412 = vsub.f32 1.0, %v7396
          %v7413 = vsub.f32 1.0, %v7397
          %v7414 = vsub.f32 1.0, %v7398
          %v7415 = vsub.f32 1.0, %v7399
          %v7416 = vadd.s32 %v7011, 8
          %v7417 = vadd.s32 %v7011, 16
          %v7418 = vadd.s32 %v7011, 24
          %vm7419 = vcmp.ge.s32.totalorder %v7011, 27
          %vm7420 = vcmp.ge.s32.totalorder %v7416, 27
          %vm7421 = vcmp.ge.s32.totalorder %v7417, 27
          %vm7422 = vcmp.ge.s32.totalorder %v7418, 27
          %v7423 = vsel %vm7419, 1, 0
          %v7424 = vsel %vm7420, 1, 0
          %v7425 = vsel %vm7421, 1, 0
          %v7426 = vsel %vm7422, 1, 0
          %vm7427 = vcmp.eq.s32.totalorder %v7423, 1
          %vm7428 = vcmp.eq.s32.totalorder %v7424, 1
          %vm7429 = vcmp.eq.s32.totalorder %v7425, 1
          %vm7430 = vcmp.eq.s32.totalorder %v7426, 1
          %v7431 = vsel %vm7427, %v7400, 1.0
          %v7432 = vsel %vm7428, %v7401, 1.0
          %v7433 = vsel %vm7429, %v7402, 1.0
          %v7434 = vsel %vm7430, %v7403, 1.0
          %v7435 = vsel %vm7427, %v7404, 1.0
          %v7436 = vsel %vm7428, %v7405, 1.0
          %v7437 = vsel %vm7429, %v7406, 1.0
          %v7438 = vsel %vm7430, %v7407, 1.0
          %v7439 = vsel %vm7427, %v7408, 1.0
          %v7440 = vsel %vm7428, %v7409, 1.0
          %v7441 = vsel %vm7429, %v7410, 1.0
          %v7442 = vsel %vm7430, %v7411, 1.0
          %v7443 = vsel %vm7427, %v7412, 1.0
          %v7444 = vsel %vm7428, %v7413, 1.0
          %v7445 = vsel %vm7429, %v7414, 1.0
          %v7446 = vsel %vm7430, %v7415, 1.0
          %7447 = vst [vmem:[%s148] sm:$0xff] %v7431
          %7448 = vst [vmem:[%s148 + $0x8] sm:$0xff] %v7432
          %7449 = vst [vmem:[%s148 + $0x10] sm:$0xff] %v7433
          %7450 = vst [vmem:[%s148 + $0x18] sm:$0xff] %v7434
          %7451 = vst [vmem:[%s148 + $0x20] sm:$0xff] %v7435
          %7452 = vst [vmem:[%s148 + $0x28] sm:$0xff] %v7436
          %7453 = vst [vmem:[%s148 + $0x30] sm:$0xff] %v7437
          %7454 = vst [vmem:[%s148 + $0x38] sm:$0xff] %v7438
          %7455 = vst [vmem:[%s148 + $0x40] sm:$0xff] %v7439
          %7456 = vst [vmem:[%s148 + $0x48] sm:$0xff] %v7440
          %7457 = vst [vmem:[%s148 + $0x50] sm:$0xff] %v7441
          %7458 = vst [vmem:[%s148 + $0x58] sm:$0xff] %v7442
          %7459 = vst [vmem:[%s148 + $0x60] sm:$0xff] %v7443
          %7460 = vst [vmem:[%s148 + $0x68] sm:$0xff] %v7444
          %7461 = vst [vmem:[%s148 + $0x70] sm:$0xff] %v7445
          %7462 = vst [vmem:[%s148 + $0x78] sm:$0xff] %v7446
        $region84: #{tpu_custom_call.1} parent=23 // pred_fallthru
          _
        %p7463 = scmp.eq.s32.totalorder %s23, 14
        // Predicated region
        $region85: #{tpu_custom_call.1} parent=23 // pred_check
          %p7464 = pneg %p7463
        $region86: #{tpu_custom_call.1} parent=23 // pred_check_branch
          %7466 = sbr.rel (%p7464) target = $region88
        $region87: #{tpu_custom_call.1} parent=23 // pred_region
          %v7467 = vld [vmem:[%s130] sm:$0xff]
          %v7468 = vld [vmem:[%s130 + $0x8] sm:$0xff]
          %v7469 = vld [vmem:[%s130 + $0x10] sm:$0xff]
          %v7470 = vld [vmem:[%s130 + $0x18] sm:$0xff]
          %v7471 = vld [vmem:[%s130 + $0x20] sm:$0xff]
          %v7472 = vld [vmem:[%s130 + $0x28] sm:$0xff]
          %v7473 = vld [vmem:[%s130 + $0x30] sm:$0xff]
          %v7474 = vld [vmem:[%s130 + $0x38] sm:$0xff]
          %v7475 = vld [vmem:[%s130 + $0x40] sm:$0xff]
          %v7476 = vld [vmem:[%s130 + $0x48] sm:$0xff]
          %v7477 = vld [vmem:[%s130 + $0x50] sm:$0xff]
          %v7478 = vld [vmem:[%s130 + $0x58] sm:$0xff]
          %v7479 = vld [vmem:[%s130 + $0x60] sm:$0xff]
          %v7480 = vld [vmem:[%s130 + $0x68] sm:$0xff]
          %v7481 = vld [vmem:[%s130 + $0x70] sm:$0xff]
          %v7482 = vld [vmem:[%s130 + $0x78] sm:$0xff]
          %7483 = vrot.lane.b32.xlu0 %v7467, 27
          %v7484 = vpop.permute.xlu0 %7483
          %7485 = vrot.lane.b32.xlu0 %v7468, 27
          %v7486 = vpop.permute.xlu0 %7485
          %7487 = vrot.lane.b32.xlu0 %v7469, 27
          %v7488 = vpop.permute.xlu0 %7487
          %7489 = vrot.lane.b32.xlu0 %v7470, 27
          %v7490 = vpop.permute.xlu0 %7489
          %7491 = vrot.lane.b32.xlu0 %v7471, 27
          %v7492 = vpop.permute.xlu0 %7491
          %7493 = vrot.lane.b32.xlu0 %v7472, 27
          %v7494 = vpop.permute.xlu0 %7493
          %7495 = vrot.lane.b32.xlu0 %v7473, 27
          %v7496 = vpop.permute.xlu0 %7495
          %7497 = vrot.lane.b32.xlu0 %v7474, 27
          %v7498 = vpop.permute.xlu0 %7497
          %7499 = vrot.lane.b32.xlu0 %v7475, 27
          %v7500 = vpop.permute.xlu0 %7499
          %7501 = vrot.lane.b32.xlu0 %v7476, 27
          %v7502 = vpop.permute.xlu0 %7501
          %7503 = vrot.lane.b32.xlu0 %v7477, 27
          %v7504 = vpop.permute.xlu0 %7503
          %7505 = vrot.lane.b32.xlu0 %v7478, 27
          %v7506 = vpop.permute.xlu0 %7505
          %7507 = vrot.lane.b32.xlu0 %v7479, 27
          %v7508 = vpop.permute.xlu0 %7507
          %7509 = vrot.lane.b32.xlu0 %v7480, 27
          %v7510 = vpop.permute.xlu0 %7509
          %7511 = vrot.lane.b32.xlu0 %v7481, 27
          %v7512 = vpop.permute.xlu0 %7511
          %7513 = vrot.lane.b32.xlu0 %v7482, 27
          %v7514 = vpop.permute.xlu0 %7513
          %v7515 = vsub.f32 %v7467, %v7484
          %v7516 = vsub.f32 %v7468, %v7486
          %v7517 = vsub.f32 %v7469, %v7488
          %v7518 = vsub.f32 %v7470, %v7490
          %v7519 = vsub.f32 %v7471, %v7492
          %v7520 = vsub.f32 %v7472, %v7494
          %v7521 = vsub.f32 %v7473, %v7496
          %v7522 = vsub.f32 %v7474, %v7498
          %v7523 = vsub.f32 %v7475, %v7500
          %v7524 = vsub.f32 %v7476, %v7502
          %v7525 = vsub.f32 %v7477, %v7504
          %v7526 = vsub.f32 %v7478, %v7506
          %v7527 = vsub.f32 %v7479, %v7508
          %v7528 = vsub.f32 %v7480, %v7510
          %v7529 = vsub.f32 %v7481, %v7512
          %v7530 = vsub.f32 %v7482, %v7514
          %v7531 = vmul.f32 %v7515, %v7515
          %v7532 = vmul.f32 %v7516, %v7516
          %v7533 = vmul.f32 %v7517, %v7517
          %v7534 = vmul.f32 %v7518, %v7518
          %v7535 = vmul.f32 %v7519, %v7519
          %v7536 = vmul.f32 %v7520, %v7520
          %v7537 = vmul.f32 %v7521, %v7521
          %v7538 = vmul.f32 %v7522, %v7522
          %v7539 = vmul.f32 %v7523, %v7523
          %v7540 = vmul.f32 %v7524, %v7524
          %v7541 = vmul.f32 %v7525, %v7525
          %v7542 = vmul.f32 %v7526, %v7526
          %v7543 = vmul.f32 %v7527, %v7527
          %v7544 = vmul.f32 %v7528, %v7528
          %v7545 = vmul.f32 %v7529, %v7529
          %v7546 = vmul.f32 %v7530, %v7530
          %v7547 = vadd.f32 %v7531, 0.0
          %v7548 = vadd.f32 %v7532, 0.0
          %v7549 = vadd.f32 %v7533, 0.0
          %v7550 = vadd.f32 %v7534, 0.0
          %v7551 = vadd.f32 %v7535, 0.0
          %v7552 = vadd.f32 %v7536, 0.0
          %v7553 = vadd.f32 %v7537, 0.0
          %v7554 = vadd.f32 %v7538, 0.0
          %v7555 = vadd.f32 %v7539, 0.0
          %v7556 = vadd.f32 %v7540, 0.0
          %v7557 = vadd.f32 %v7541, 0.0
          %v7558 = vadd.f32 %v7542, 0.0
          %v7559 = vadd.f32 %v7543, 0.0
          %v7560 = vadd.f32 %v7544, 0.0
          %v7561 = vadd.f32 %v7545, 0.0
          %v7562 = vadd.f32 %v7546, 0.0
          %s7563 = scalar_lea.vmem %s130, 128 [#allocation2]
          %v7564 = vld [vmem:[%s7563] sm:$0xff]
          %v7565 = vld [vmem:[%s7563 + $0x8] sm:$0xff]
          %v7566 = vld [vmem:[%s7563 + $0x10] sm:$0xff]
          %v7567 = vld [vmem:[%s7563 + $0x18] sm:$0xff]
          %v7568 = vld [vmem:[%s7563 + $0x20] sm:$0xff]
          %v7569 = vld [vmem:[%s7563 + $0x28] sm:$0xff]
          %v7570 = vld [vmem:[%s7563 + $0x30] sm:$0xff]
          %v7571 = vld [vmem:[%s7563 + $0x38] sm:$0xff]
          %v7572 = vld [vmem:[%s7563 + $0x40] sm:$0xff]
          %v7573 = vld [vmem:[%s7563 + $0x48] sm:$0xff]
          %v7574 = vld [vmem:[%s7563 + $0x50] sm:$0xff]
          %v7575 = vld [vmem:[%s7563 + $0x58] sm:$0xff]
          %v7576 = vld [vmem:[%s7563 + $0x60] sm:$0xff]
          %v7577 = vld [vmem:[%s7563 + $0x68] sm:$0xff]
          %v7578 = vld [vmem:[%s7563 + $0x70] sm:$0xff]
          %v7579 = vld [vmem:[%s7563 + $0x78] sm:$0xff]
          %7580 = vrot.lane.b32.xlu0 %v7564, 27
          %v7581 = vpop.permute.xlu0 %7580
          %7582 = vrot.lane.b32.xlu0 %v7565, 27
          %v7583 = vpop.permute.xlu0 %7582
          %7584 = vrot.lane.b32.xlu0 %v7566, 27
          %v7585 = vpop.permute.xlu0 %7584
          %7586 = vrot.lane.b32.xlu0 %v7567, 27
          %v7587 = vpop.permute.xlu0 %7586
          %7588 = vrot.lane.b32.xlu0 %v7568, 27
          %v7589 = vpop.permute.xlu0 %7588
          %7590 = vrot.lane.b32.xlu0 %v7569, 27
          %v7591 = vpop.permute.xlu0 %7590
          %7592 = vrot.lane.b32.xlu0 %v7570, 27
          %v7593 = vpop.permute.xlu0 %7592
          %7594 = vrot.lane.b32.xlu0 %v7571, 27
          %v7595 = vpop.permute.xlu0 %7594
          %7596 = vrot.lane.b32.xlu0 %v7572, 27
          %v7597 = vpop.permute.xlu0 %7596
          %7598 = vrot.lane.b32.xlu0 %v7573, 27
          %v7599 = vpop.permute.xlu0 %7598
          %7600 = vrot.lane.b32.xlu0 %v7574, 27
          %v7601 = vpop.permute.xlu0 %7600
          %7602 = vrot.lane.b32.xlu0 %v7575, 27
          %v7603 = vpop.permute.xlu0 %7602
          %7604 = vrot.lane.b32.xlu0 %v7576, 27
          %v7605 = vpop.permute.xlu0 %7604
          %7606 = vrot.lane.b32.xlu0 %v7577, 27
          %v7607 = vpop.permute.xlu0 %7606
          %7608 = vrot.lane.b32.xlu0 %v7578, 27
          %v7609 = vpop.permute.xlu0 %7608
          %7610 = vrot.lane.b32.xlu0 %v7579, 27
          %v7611 = vpop.permute.xlu0 %7610
          %v7612 = vsub.f32 %v7564, %v7581
          %v7613 = vsub.f32 %v7565, %v7583
          %v7614 = vsub.f32 %v7566, %v7585
          %v7615 = vsub.f32 %v7567, %v7587
          %v7616 = vsub.f32 %v7568, %v7589
          %v7617 = vsub.f32 %v7569, %v7591
          %v7618 = vsub.f32 %v7570, %v7593
          %v7619 = vsub.f32 %v7571, %v7595
          %v7620 = vsub.f32 %v7572, %v7597
          %v7621 = vsub.f32 %v7573, %v7599
          %v7622 = vsub.f32 %v7574, %v7601
          %v7623 = vsub.f32 %v7575, %v7603
          %v7624 = vsub.f32 %v7576, %v7605
          %v7625 = vsub.f32 %v7577, %v7607
          %v7626 = vsub.f32 %v7578, %v7609
          %v7627 = vsub.f32 %v7579, %v7611
          %v7628 = vmul.f32 %v7612, %v7612
          %v7629 = vmul.f32 %v7613, %v7613
          %v7630 = vmul.f32 %v7614, %v7614
          %v7631 = vmul.f32 %v7615, %v7615
          %v7632 = vmul.f32 %v7616, %v7616
          %v7633 = vmul.f32 %v7617, %v7617
          %v7634 = vmul.f32 %v7618, %v7618
          %v7635 = vmul.f32 %v7619, %v7619
          %v7636 = vmul.f32 %v7620, %v7620
          %v7637 = vmul.f32 %v7621, %v7621
          %v7638 = vmul.f32 %v7622, %v7622
          %v7639 = vmul.f32 %v7623, %v7623
          %v7640 = vmul.f32 %v7624, %v7624
          %v7641 = vmul.f32 %v7625, %v7625
          %v7642 = vmul.f32 %v7626, %v7626
          %v7643 = vmul.f32 %v7627, %v7627
          %v7644 = vadd.f32 %v7547, %v7628
          %v7645 = vadd.f32 %v7548, %v7629
          %v7646 = vadd.f32 %v7549, %v7630
          %v7647 = vadd.f32 %v7550, %v7631
          %v7648 = vadd.f32 %v7551, %v7632
          %v7649 = vadd.f32 %v7552, %v7633
          %v7650 = vadd.f32 %v7553, %v7634
          %v7651 = vadd.f32 %v7554, %v7635
          %v7652 = vadd.f32 %v7555, %v7636
          %v7653 = vadd.f32 %v7556, %v7637
          %v7654 = vadd.f32 %v7557, %v7638
          %v7655 = vadd.f32 %v7558, %v7639
          %v7656 = vadd.f32 %v7559, %v7640
          %v7657 = vadd.f32 %v7560, %v7641
          %v7658 = vadd.f32 %v7561, %v7642
          %v7659 = vadd.f32 %v7562, %v7643
          %s7660 = scalar_lea.vmem %s130, 256 [#allocation2]
          %v7661 = vld [vmem:[%s7660] sm:$0xff]
          %v7662 = vld [vmem:[%s7660 + $0x8] sm:$0xff]
          %v7663 = vld [vmem:[%s7660 + $0x10] sm:$0xff]
          %v7664 = vld [vmem:[%s7660 + $0x18] sm:$0xff]
          %v7665 = vld [vmem:[%s7660 + $0x20] sm:$0xff]
          %v7666 = vld [vmem:[%s7660 + $0x28] sm:$0xff]
          %v7667 = vld [vmem:[%s7660 + $0x30] sm:$0xff]
          %v7668 = vld [vmem:[%s7660 + $0x38] sm:$0xff]
          %v7669 = vld [vmem:[%s7660 + $0x40] sm:$0xff]
          %v7670 = vld [vmem:[%s7660 + $0x48] sm:$0xff]
          %v7671 = vld [vmem:[%s7660 + $0x50] sm:$0xff]
          %v7672 = vld [vmem:[%s7660 + $0x58] sm:$0xff]
          %v7673 = vld [vmem:[%s7660 + $0x60] sm:$0xff]
          %v7674 = vld [vmem:[%s7660 + $0x68] sm:$0xff]
          %v7675 = vld [vmem:[%s7660 + $0x70] sm:$0xff]
          %v7676 = vld [vmem:[%s7660 + $0x78] sm:$0xff]
          %7677 = vrot.lane.b32.xlu0 %v7661, 27
          %v7678 = vpop.permute.xlu0 %7677
          %7679 = vrot.lane.b32.xlu0 %v7662, 27
          %v7680 = vpop.permute.xlu0 %7679
          %7681 = vrot.lane.b32.xlu0 %v7663, 27
          %v7682 = vpop.permute.xlu0 %7681
          %7683 = vrot.lane.b32.xlu0 %v7664, 27
          %v7684 = vpop.permute.xlu0 %7683
          %7685 = vrot.lane.b32.xlu0 %v7665, 27
          %v7686 = vpop.permute.xlu0 %7685
          %7687 = vrot.lane.b32.xlu0 %v7666, 27
          %v7688 = vpop.permute.xlu0 %7687
          %7689 = vrot.lane.b32.xlu0 %v7667, 27
          %v7690 = vpop.permute.xlu0 %7689
          %7691 = vrot.lane.b32.xlu0 %v7668, 27
          %v7692 = vpop.permute.xlu0 %7691
          %7693 = vrot.lane.b32.xlu0 %v7669, 27
          %v7694 = vpop.permute.xlu0 %7693
          %7695 = vrot.lane.b32.xlu0 %v7670, 27
          %v7696 = vpop.permute.xlu0 %7695
          %7697 = vrot.lane.b32.xlu0 %v7671, 27
          %v7698 = vpop.permute.xlu0 %7697
          %7699 = vrot.lane.b32.xlu0 %v7672, 27
          %v7700 = vpop.permute.xlu0 %7699
          %7701 = vrot.lane.b32.xlu0 %v7673, 27
          %v7702 = vpop.permute.xlu0 %7701
          %7703 = vrot.lane.b32.xlu0 %v7674, 27
          %v7704 = vpop.permute.xlu0 %7703
          %7705 = vrot.lane.b32.xlu0 %v7675, 27
          %v7706 = vpop.permute.xlu0 %7705
          %7707 = vrot.lane.b32.xlu0 %v7676, 27
          %v7708 = vpop.permute.xlu0 %7707
          %v7709 = vsub.f32 %v7661, %v7678
          %v7710 = vsub.f32 %v7662, %v7680
          %v7711 = vsub.f32 %v7663, %v7682
          %v7712 = vsub.f32 %v7664, %v7684
          %v7713 = vsub.f32 %v7665, %v7686
          %v7714 = vsub.f32 %v7666, %v7688
          %v7715 = vsub.f32 %v7667, %v7690
          %v7716 = vsub.f32 %v7668, %v7692
          %v7717 = vsub.f32 %v7669, %v7694
          %v7718 = vsub.f32 %v7670, %v7696
          %v7719 = vsub.f32 %v7671, %v7698
          %v7720 = vsub.f32 %v7672, %v7700
          %v7721 = vsub.f32 %v7673, %v7702
          %v7722 = vsub.f32 %v7674, %v7704
          %v7723 = vsub.f32 %v7675, %v7706
          %v7724 = vsub.f32 %v7676, %v7708
          %v7725 = vmul.f32 %v7709, %v7709
          %v7726 = vmul.f32 %v7710, %v7710
          %v7727 = vmul.f32 %v7711, %v7711
          %v7728 = vmul.f32 %v7712, %v7712
          %v7729 = vmul.f32 %v7713, %v7713
          %v7730 = vmul.f32 %v7714, %v7714
          %v7731 = vmul.f32 %v7715, %v7715
          %v7732 = vmul.f32 %v7716, %v7716
          %v7733 = vmul.f32 %v7717, %v7717
          %v7734 = vmul.f32 %v7718, %v7718
          %v7735 = vmul.f32 %v7719, %v7719
          %v7736 = vmul.f32 %v7720, %v7720
          %v7737 = vmul.f32 %v7721, %v7721
          %v7738 = vmul.f32 %v7722, %v7722
          %v7739 = vmul.f32 %v7723, %v7723
          %v7740 = vmul.f32 %v7724, %v7724
          %v7741 = vadd.f32 %v7644, %v7725
          %v7742 = vadd.f32 %v7645, %v7726
          %v7743 = vadd.f32 %v7646, %v7727
          %v7744 = vadd.f32 %v7647, %v7728
          %v7745 = vadd.f32 %v7648, %v7729
          %v7746 = vadd.f32 %v7649, %v7730
          %v7747 = vadd.f32 %v7650, %v7731
          %v7748 = vadd.f32 %v7651, %v7732
          %v7749 = vadd.f32 %v7652, %v7733
          %v7750 = vadd.f32 %v7653, %v7734
          %v7751 = vadd.f32 %v7654, %v7735
          %v7752 = vadd.f32 %v7655, %v7736
          %v7753 = vadd.f32 %v7656, %v7737
          %v7754 = vadd.f32 %v7657, %v7738
          %v7755 = vadd.f32 %v7658, %v7739
          %v7756 = vadd.f32 %v7659, %v7740
          %s7757 = scalar_lea.vmem %s130, 384 [#allocation2]
          %v7758 = vld [vmem:[%s7757] sm:$0xff]
          %v7759 = vld [vmem:[%s7757 + $0x8] sm:$0xff]
          %v7760 = vld [vmem:[%s7757 + $0x10] sm:$0xff]
          %v7761 = vld [vmem:[%s7757 + $0x18] sm:$0xff]
          %v7762 = vld [vmem:[%s7757 + $0x20] sm:$0xff]
          %v7763 = vld [vmem:[%s7757 + $0x28] sm:$0xff]
          %v7764 = vld [vmem:[%s7757 + $0x30] sm:$0xff]
          %v7765 = vld [vmem:[%s7757 + $0x38] sm:$0xff]
          %v7766 = vld [vmem:[%s7757 + $0x40] sm:$0xff]
          %v7767 = vld [vmem:[%s7757 + $0x48] sm:$0xff]
          %v7768 = vld [vmem:[%s7757 + $0x50] sm:$0xff]
          %v7769 = vld [vmem:[%s7757 + $0x58] sm:$0xff]
          %v7770 = vld [vmem:[%s7757 + $0x60] sm:$0xff]
          %v7771 = vld [vmem:[%s7757 + $0x68] sm:$0xff]
          %v7772 = vld [vmem:[%s7757 + $0x70] sm:$0xff]
          %v7773 = vld [vmem:[%s7757 + $0x78] sm:$0xff]
          %7774 = vrot.lane.b32.xlu0 %v7758, 27
          %v7775 = vpop.permute.xlu0 %7774
          %7776 = vrot.lane.b32.xlu0 %v7759, 27
          %v7777 = vpop.permute.xlu0 %7776
          %7778 = vrot.lane.b32.xlu0 %v7760, 27
          %v7779 = vpop.permute.xlu0 %7778
          %7780 = vrot.lane.b32.xlu0 %v7761, 27
          %v7781 = vpop.permute.xlu0 %7780
          %7782 = vrot.lane.b32.xlu0 %v7762, 27
          %v7783 = vpop.permute.xlu0 %7782
          %7784 = vrot.lane.b32.xlu0 %v7763, 27
          %v7785 = vpop.permute.xlu0 %7784
          %7786 = vrot.lane.b32.xlu0 %v7764, 27
          %v7787 = vpop.permute.xlu0 %7786
          %7788 = vrot.lane.b32.xlu0 %v7765, 27
          %v7789 = vpop.permute.xlu0 %7788
          %7790 = vrot.lane.b32.xlu0 %v7766, 27
          %v7791 = vpop.permute.xlu0 %7790
          %7792 = vrot.lane.b32.xlu0 %v7767, 27
          %v7793 = vpop.permute.xlu0 %7792
          %7794 = vrot.lane.b32.xlu0 %v7768, 27
          %v7795 = vpop.permute.xlu0 %7794
          %7796 = vrot.lane.b32.xlu0 %v7769, 27
          %v7797 = vpop.permute.xlu0 %7796
          %7798 = vrot.lane.b32.xlu0 %v7770, 27
          %v7799 = vpop.permute.xlu0 %7798
          %7800 = vrot.lane.b32.xlu0 %v7771, 27
          %v7801 = vpop.permute.xlu0 %7800
          %7802 = vrot.lane.b32.xlu0 %v7772, 27
          %v7803 = vpop.permute.xlu0 %7802
          %7804 = vrot.lane.b32.xlu0 %v7773, 27
          %v7805 = vpop.permute.xlu0 %7804
          %v7806 = vsub.f32 %v7758, %v7775
          %v7807 = vsub.f32 %v7759, %v7777
          %v7808 = vsub.f32 %v7760, %v7779
          %v7809 = vsub.f32 %v7761, %v7781
          %v7810 = vsub.f32 %v7762, %v7783
          %v7811 = vsub.f32 %v7763, %v7785
          %v7812 = vsub.f32 %v7764, %v7787
          %v7813 = vsub.f32 %v7765, %v7789
          %v7814 = vsub.f32 %v7766, %v7791
          %v7815 = vsub.f32 %v7767, %v7793
          %v7816 = vsub.f32 %v7768, %v7795
          %v7817 = vsub.f32 %v7769, %v7797
          %v7818 = vsub.f32 %v7770, %v7799
          %v7819 = vsub.f32 %v7771, %v7801
          %v7820 = vsub.f32 %v7772, %v7803
          %v7821 = vsub.f32 %v7773, %v7805
          %v7822 = vmul.f32 %v7806, %v7806
          %v7823 = vmul.f32 %v7807, %v7807
          %v7824 = vmul.f32 %v7808, %v7808
          %v7825 = vmul.f32 %v7809, %v7809
          %v7826 = vmul.f32 %v7810, %v7810
          %v7827 = vmul.f32 %v7811, %v7811
          %v7828 = vmul.f32 %v7812, %v7812
          %v7829 = vmul.f32 %v7813, %v7813
          %v7830 = vmul.f32 %v7814, %v7814
          %v7831 = vmul.f32 %v7815, %v7815
          %v7832 = vmul.f32 %v7816, %v7816
          %v7833 = vmul.f32 %v7817, %v7817
          %v7834 = vmul.f32 %v7818, %v7818
          %v7835 = vmul.f32 %v7819, %v7819
          %v7836 = vmul.f32 %v7820, %v7820
          %v7837 = vmul.f32 %v7821, %v7821
          %v7838 = vadd.f32 %v7741, %v7822
          %v7839 = vadd.f32 %v7742, %v7823
          %v7840 = vadd.f32 %v7743, %v7824
          %v7841 = vadd.f32 %v7744, %v7825
          %v7842 = vadd.f32 %v7745, %v7826
          %v7843 = vadd.f32 %v7746, %v7827
          %v7844 = vadd.f32 %v7747, %v7828
          %v7845 = vadd.f32 %v7748, %v7829
          %v7846 = vadd.f32 %v7749, %v7830
          %v7847 = vadd.f32 %v7750, %v7831
          %v7848 = vadd.f32 %v7751, %v7832
          %v7849 = vadd.f32 %v7752, %v7833
          %v7850 = vadd.f32 %v7753, %v7834
          %v7851 = vadd.f32 %v7754, %v7835
          %v7852 = vadd.f32 %v7755, %v7836
          %v7853 = vadd.f32 %v7756, %v7837
          %v7854 = vmul.f32 %v7838, 25.0
          %v7855 = vmul.f32 %v7839, 25.0
          %v7856 = vmul.f32 %v7840, 25.0
          %v7857 = vmul.f32 %v7841, 25.0
          %v7858 = vmul.f32 %v7842, 25.0
          %v7859 = vmul.f32 %v7843, 25.0
          %v7860 = vmul.f32 %v7844, 25.0
          %v7861 = vmul.f32 %v7845, 25.0
          %v7862 = vmul.f32 %v7846, 25.0
          %v7863 = vmul.f32 %v7847, 25.0
          %v7864 = vmul.f32 %v7848, 25.0
          %v7865 = vmul.f32 %v7849, 25.0
          %v7866 = vmul.f32 %v7850, 25.0
          %v7867 = vmul.f32 %v7851, 25.0
          %v7868 = vmul.f32 %v7852, 25.0
          %v7869 = vmul.f32 %v7853, 25.0
          %v7870 = vtanh.pop %v7854
          %v7871 = vtanh.pop %v7855
          %v7872 = vtanh.pop %v7856
          %v7873 = vtanh.pop %v7857
          %v7874 = vtanh.pop %v7858
          %v7875 = vtanh.pop %v7859
          %v7876 = vtanh.pop %v7860
          %v7877 = vtanh.pop %v7861
          %v7878 = vtanh.pop %v7862
          %v7879 = vtanh.pop %v7863
          %v7880 = vtanh.pop %v7864
          %v7881 = vtanh.pop %v7865
          %v7882 = vtanh.pop %v7866
          %v7883 = vtanh.pop %v7867
          %v7884 = vtanh.pop %v7868
          %v7885 = vtanh.pop %v7869
          %v7886 = vsub.f32 1.0, %v7870
          %v7887 = vsub.f32 1.0, %v7871
          %v7888 = vsub.f32 1.0, %v7872
          %v7889 = vsub.f32 1.0, %v7873
          %v7890 = vsub.f32 1.0, %v7874
          %v7891 = vsub.f32 1.0, %v7875
          %v7892 = vsub.f32 1.0, %v7876
          %v7893 = vsub.f32 1.0, %v7877
          %v7894 = vsub.f32 1.0, %v7878
          %v7895 = vsub.f32 1.0, %v7879
          %v7896 = vsub.f32 1.0, %v7880
          %v7897 = vsub.f32 1.0, %v7881
          %v7898 = vsub.f32 1.0, %v7882
          %v7899 = vsub.f32 1.0, %v7883
          %v7900 = vsub.f32 1.0, %v7884
          %v7901 = vsub.f32 1.0, %v7885
          %v7902 = vlaneseq
          %v7903 = vand.u32 %v7902, 127
          %vm7904 = vcmp.ge.s32.totalorder %v7903, 27
          %v7905 = vsel %vm7904, 1, 0
          %vm7906 = vcmp.eq.s32.totalorder %v7905, 1
          %v7907 = vsel %vm7906, %v7886, 1.0
          %v7908 = vsel %vm7906, %v7887, 1.0
          %v7909 = vsel %vm7906, %v7888, 1.0
          %v7910 = vsel %vm7906, %v7889, 1.0
          %v7911 = vsel %vm7906, %v7890, 1.0
          %v7912 = vsel %vm7906, %v7891, 1.0
          %v7913 = vsel %vm7906, %v7892, 1.0
          %v7914 = vsel %vm7906, %v7893, 1.0
          %v7915 = vsel %vm7906, %v7894, 1.0
          %v7916 = vsel %vm7906, %v7895, 1.0
          %v7917 = vsel %vm7906, %v7896, 1.0
          %v7918 = vsel %vm7906, %v7897, 1.0
          %v7919 = vsel %vm7906, %v7898, 1.0
          %v7920 = vsel %vm7906, %v7899, 1.0
          %v7921 = vsel %vm7906, %v7900, 1.0
          %v7922 = vsel %vm7906, %v7901, 1.0
          %7923 = vst [vmem:[%s148] sm:$0xff] %v7907
          %7924 = vst [vmem:[%s148 + $0x8] sm:$0xff] %v7908
          %7925 = vst [vmem:[%s148 + $0x10] sm:$0xff] %v7909
          %7926 = vst [vmem:[%s148 + $0x18] sm:$0xff] %v7910
          %7927 = vst [vmem:[%s148 + $0x20] sm:$0xff] %v7911
          %7928 = vst [vmem:[%s148 + $0x28] sm:$0xff] %v7912
          %7929 = vst [vmem:[%s148 + $0x30] sm:$0xff] %v7913
          %7930 = vst [vmem:[%s148 + $0x38] sm:$0xff] %v7914
          %7931 = vst [vmem:[%s148 + $0x40] sm:$0xff] %v7915
          %7932 = vst [vmem:[%s148 + $0x48] sm:$0xff] %v7916
          %7933 = vst [vmem:[%s148 + $0x50] sm:$0xff] %v7917
          %7934 = vst [vmem:[%s148 + $0x58] sm:$0xff] %v7918
          %7935 = vst [vmem:[%s148 + $0x60] sm:$0xff] %v7919
          %7936 = vst [vmem:[%s148 + $0x68] sm:$0xff] %v7920
          %7937 = vst [vmem:[%s148 + $0x70] sm:$0xff] %v7921
          %7938 = vst [vmem:[%s148 + $0x78] sm:$0xff] %v7922
        $region88: #{tpu_custom_call.1} parent=23 // pred_fallthru
          _
        %s7939 = sand.u32 %s66, 1
        %s7940 = scalar_lea.sflag [#allocation4], %s7939
        %s7941 = sand.u32 %s66, 1
        %s7942 = smul.addr %s7941, 128
        %s7943 = scalar_lea.vmem [#allocation5], %s7942
        // Predicated region
        $region89: #{tpu_custom_call.1} parent=23 // pred_check
          %p7944 = pneg %p76
        $region90: #{tpu_custom_call.1} parent=23 // pred_check_branch
          %7946 = sbr.rel (%p7944) target = $region92
        $region91: #{tpu_custom_call.1} parent=23 // pred_region
          %s7948 = ssub.s32 2048, 2048
          %7949 = vsyncadd %s7940, %s7948
          %s7950 = smul.addr %s23, 16
          %s7951 = smul.addr %s22, 240
          %s7952 = sadd.s32 %s7950, %s7951
          %s7953 = smul.addr %s7952, 128
          %s7954 = scalar_lea.hbm %s1, %s7953
          %s7955 = sshll.u32 %s7943, 4
          %s7956 = int_to_ptr.vmem [resolvable:$true] %s7955
          %7961 = dma.vmem_to_hbm [thread:$0]  %s7956, 2048, %s7954, %s7940, 128, 128, 8
        $region92: #{tpu_custom_call.1} parent=23 // pred_fallthru
          _
      $region24: #{tpu_custom_call.1} parent=5 // pred_fallthru
        _
      %p7962 = scmp.le.s32.totalorder 2, %s13
      // Predicated region
      $region93: #{tpu_custom_call.1} parent=5 // pred_check
        %p7963 = pneg %p7962
      $region94: #{tpu_custom_call.1} parent=5 // pred_check_branch
        %7965 = sbr.rel (%p7963) target = $region96
      $region95: #{tpu_custom_call.1} parent=5 // pred_region
        %s7966 = ssub.s32 %s13, 2
        // Predicated region
        $region97: #{tpu_custom_call.1} parent=95 // pred_check
          %p7967 = pneg %p82
        $region98: #{tpu_custom_call.1} parent=95 // pred_check_branch
          %7969 = sbr.rel (%p7967) target = $region100
        $region99: #{tpu_custom_call.1} parent=95 // pred_region
          %s7970 = sand.u32 %s67, 1
          %s7971 = scalar_lea.sflag [#allocation4], %s7970
          %s7972 = sand.u32 %s67, 1
          %s7973 = smul.addr %s7972, 128
          %s7974 = scalar_lea.vmem [#allocation5], %s7973
          %7975 = dma.done %s7971, 2048
        $region100: #{tpu_custom_call.1} parent=95 // pred_fallthru
          _
      $region96: #{tpu_custom_call.1} parent=5 // pred_fallthru
        _
    $region6: #{tpu_custom_call.1} parent=1 // loop_footer
      %s17 = sadd.s32 1, %s13
    $region7: #{tpu_custom_call.1} parent=1 // loop_footer_branch
      %12 = sbr.rel target = $region3
    $region8: #{tpu_custom_call.1} parent=1 // loop_exit
      _
    %7976 = vsyncpa [#allocation3], 1
    %s7977 = scalar_lea.sflag [#allocation3], 1
    %7978 = vsyncpa %s7977, 1
    %7979 = vsyncpa [#allocation4], 1
    %s7980 = scalar_lea.sflag [#allocation4], 1
    %7981 = vsyncpa %s7980, 1

</llo_original>
